<compile_context>
chip_gen: v6e
topology: v6e:2x2x1
jax: 0.10.0
libtpu: 0.0.40
codegen_flags: <defaults>
</compile_context>

<pallas_src>
import math

import jax
import jax.numpy as jnp
from jax.experimental import pallas as pl
from jax.experimental.pallas import tpu as pltpu

F32 = jnp.float32

# (size_in, size_out, rank) per TT layer, exactly as in BasicTT.__init__.
TT_LAYERS = [
    ((3, 8, 8, 8, 8), (8, 10, 10, 10, 10), (1, 2, 2, 2, 2, 1)),
    ((8, 10, 10, 10, 10), (8, 4, 4, 4, 4), (1, 2, 2, 2, 2, 1)),
    ((8, 4, 4, 4, 4), (3, 3, 3, 3, 3), (1, 2, 2, 2, 2, 1)),
    ((3, 3, 3, 3, 3), (3, 3, 3, 3, 3), (1, 1, 1, 1, 1, 1)),
    ((3, 3, 3, 3, 3), (3, 3, 3, 3, 3), (1, 1, 1, 1, 1, 1)),
]
NUM_CLASSES = 2
FEATURES = 3 ** 5  # 243


# --------------------------- fused Pallas kernel ---------------------------- #

def _fused_kernel(x_ref,
                  w1a_ref, w1b_ref, b1_ref,
                  w2a_ref, w2b_ref, b2_ref,
                  w3a_ref, w3b_ref, b3_ref,
                  w4a_ref, w4b_ref, b4_ref,
                  w5a_ref, w5b_ref, b5_ref,
                  wl_ref, bl_ref, o_ref):
    """Whole BasicTT forward for one batch-block.

    Per TT layer (cores merged at init into A=[r,NA,MA], B=[r,NB,MB]):
      y[b, nA, nB] = relu( sum_rho sum_{mA,mB} A[rho,nA,mA] B[rho,nB,mB] x[b,mA,mB]
                           + bias[nA, nB] )
    evaluated as two batched matmuls per rank value; both matmuls contract the
    minor (lane) axis of both operands, so no layout shuffles are needed.
    """

    def tt_layer(h, wa_ref, wb_ref, b_ref, flip_out):
        # h: [bb, MA, MB];  wa: [r, NA, MA];  wb: [r, NB, MB];  b: [NA, NB] ([NB, NA] if flip)
        bb = h.shape[0]
        r = wa_ref.shape[0]
        acc = None
        for rho in range(r):                               # r is 1 or 2 -> unrolled
            wb = jnp.broadcast_to(wb_ref[rho][None], (bb,) + tuple(wb_ref.shape[1:]))
            wa = jnp.broadcast_to(wa_ref[rho][None], (bb,) + tuple(wa_ref.shape[1:]))
            # Z[b, nB, mA] = sum_mB wb[nB, mB] * h[b, mA, mB]
            z = jnp.einsum('bnm,bam->bna', wb, h,
                           preferred_element_type=jnp.float32)
            if flip_out:
                # Y[b, nB, nA] = sum_mA z[b, nB, mA] * wa[nA, mA]
                y = jnp.einsum('bnm,bam->bna', z, wa,
                               preferred_element_type=jnp.float32)
            else:
                # Y[b, nA, nB] = sum_mA wa[nA, mA] * z[b, nB, mA]
                y = jnp.einsum('bnm,bam->bna', wa, z,
                               preferred_element_type=jnp.float32)
            acc = y if acc is None else acc + y
        acc = acc + b_ref[...][None]
        return jnp.maximum(acc, 0.0)

    h = x_ref[...].astype(jnp.float32)                     # [bb, 192, 64]
    h = tt_layer(h, w1a_ref, w1b_ref, b1_ref, False)       # [bb, 800, 100]
    h = tt_layer(h, w2a_ref, w2b_ref, b2_ref, False)       # [bb, 128, 16]
    h = tt_layer(h, w3a_ref, w3b_ref, b3_ref, False)       # [bb, 27, 9]
    h = tt_layer(h, w4a_ref, w4b_ref, b4_ref, False)       # [bb, 27, 9]
    h = tt_layer(h, w5a_ref, w5b_ref, b5_ref, True)        # [bb, 9, 27]  (flipped)

    # Final Linear(243, 2): weight pre-grouped at init as wl[j, c, i] with
    # j = (n3,n4) group (9), i = (n0,n1,n2) group (27), matching h's layout.
    bb = h.shape[0]
    logits = jnp.broadcast_to(bl_ref[...], (bb, NUM_CLASSES))   # [bb, 2]
    for j in range(h.shape[1]):                                 # 9 tiny dots, unrolled
        hj = h[:, j, :]                                         # [bb, 27]
        logits = logits + jax.lax.dot_general(
            hj, wl_ref[j],
            dimension_numbers=(((1,), (1,)), ((), ())),
            preferred_element_type=jnp.float32)

    # LogSoftmax over the 2 classes (max-stabilized).
    m = jnp.max(logits, axis=1, keepdims=True)
    zc = logits - m
    lse = jnp.log(jnp.sum(jnp.exp(zc), axis=1, keepdims=True))
    o_ref[...] = (zc - lse)[:, None, :]                         # [bb, 1, 2]


def _full_spec(arr):
    nd = arr.ndim
    return pl.BlockSpec(arr.shape, lambda b, _nd=nd: (0,) * _nd)


def basic_tt_forward(params, x):
    """params: output of prepare_params().  x: [B, 3, 8, 8, 8, 8] -> [B, 2] log-probs."""
    B = x.shape[0]
    m_in = TT_LAYERS[0][0]
    ma = m_in[0] * m_in[1] * m_in[2]            # 192
    mb = m_in[3] * m_in[4]                      # 64
    x3 = x.astype(F32).reshape(B, ma, mb)

    flat_inputs = [x3]
    in_specs = [pl.BlockSpec((1, ma, mb), lambda b: (b, 0, 0))]
    for (wa, wb, b2d) in params["layers"]:
        for arr in (wa, wb, b2d):
            flat_inputs.append(arr)
            in_specs.append(_full_spec(arr))
    for arr in (params["wl"], params["bl"]):
        flat_inputs.append(arr)
        in_specs.append(_full_spec(arr))

    out = pl.pallas_call(
        _fused_kernel,
        out_shape=jax.ShapeDtypeStruct((B, 1, NUM_CLASSES), F32),
        grid=(B,),
        in_specs=in_specs,
        out_specs=pl.BlockSpec((1, 1, NUM_CLASSES), lambda b: (b, 0, 0)),
        compiler_params=pltpu.CompilerParams(
            dimension_semantics=("parallel",),
            vmem_limit_bytes=32 * 1024 * 1024),
    )(*flat_inputs)
    # TODO(synk): the PyTorch reference's x.view(-1, 2**5) is a shape bug
    # (nn.Linear expects 3**5 = 243 features); we use the consistent 243 features.
    return out.reshape(B, NUM_CLASSES)


# ----------------------- init + one-time weight prep ------------------------ #

def init_params(key):
    """Raw parameters in torchtt layout: cores [r_k, N_k, M_k, r_{k+1}], dense bias."""
    tt_params = []
    for size_in, size_out, rank in TT_LAYERS:
        d = len(size_in)
        key, *subkeys = jax.random.split(key, d + 2)
        std = (2.0 / float(math.prod(size_in))) ** (1.0 / (2 * d))  # He-like spread
        cores = [std * jax.random.normal(
                     subkeys[k],
                     (rank[k], size_out[k], size_in[k], rank[k + 1]),
                     dtype=F32)
                 for k in range(d)]
        bias = 0.01 * jax.random.normal(subkeys[d], tuple(size_out), dtype=F32)
        tt_params.append((cores, bias))
    key, kw, kb = jax.random.split(key, 3)
    lw = jax.random.normal(kw, (NUM_CLASSES, FEATURES), dtype=F32) / jnp.sqrt(float(FEATURES))
    lb = 0.01 * jax.random.normal(kb, (NUM_CLASSES,), dtype=F32)
    return {"tt": tt_params, "linear_w": lw, "linear_b": lb}


def prepare_params(raw):
    """One-time (outside the forward) merge of TT cores into the 2-group kernel layout."""
    layers = []
    n_layers = len(TT_LAYERS)
    for idx, ((cores, bias), (size_in, size_out, rank)) in enumerate(zip(raw["tt"], TT_LAYERS)):
        c0, c1, c2, c3, c4 = cores
        # A group = cores 0,1,2 contracted over r1, r2 -> [r0=1, N0*N1*N2, M0*M1*M2, r3]
        ga = jnp.einsum('aijb,bklc,cpqd->aikpjlqd', c0, c1, c2)
        r0, n0, n1, n2, m0, m1, m2, r3 = ga.shape
        ga = ga.reshape(r0, n0 * n1 * n2, m0 * m1 * m2, r3)
        # B group = cores 3,4 contracted over r4 -> [r3, N3*N4, M3*M4, r5=1]
        gb = jnp.einsum('aijb,bklc->aikjlc', c3, c4)
        r3b, n3, n4, m3, m4, r5 = gb.shape
        gb = gb.reshape(r3b, n3 * n4, m3 * m4, r5)

        wa = jnp.transpose(ga[0], (2, 0, 1)).astype(F32)    # [r3, NA, MA]
        wb = gb[:, :, :, 0].astype(F32)                     # [r3, NB, MB]
        na, nb = n0 * n1 * n2, n3 * n4
        b2d = bias.reshape(na, nb).astype(F32)              # canonical (nA, nB)
        if idx == n_layers - 1:
            b2d = b2d.T                                      # last layer outputs (nB, nA)
        layers.append((wa, wb, b2d))

    # Final linear: [2, 243] -> [9, 2, 27] = (j=(n3,n4), class, i=(n0,n1,n2)),
    # matching the (flipped) layout of the last TT layer's output.
    wl = raw["linear_w"].astype(F32).reshape(NUM_CLASSES, 27, 9)
    wl_g = jnp.transpose(wl, (2, 0, 1))                      # [9, 2, 27]
    bl = raw["linear_b"].astype(F32).reshape(1, NUM_CLASSES)
    return {"layers": layers, "wl": wl_g, "bl": bl}


# ----------------------- pure-JAX reference (no Pallas) --------------------- #

def reference_forward(raw, x):
    h = x
    for (cores, bias), (size_in, size_out, _) in zip(raw["tt"], TT_LAYERS):
        d = len(size_in)
        bsz = h.shape[0]
        u = jnp.transpose(h, tuple(range(1, d + 1)) + (0,))[None]
        for k in range(d):
            rk, nk, mk, rk1 = cores[k].shape
            rest = u.size // (rk * mk)
            a = u.reshape(rk * mk, rest)
            w = jnp.transpose(cores[k], (1, 3, 0, 2)).reshape(nk * rk1, rk * mk)
            v = (w @ a).reshape((nk, rk1) + u.shape[2:])
            u = jnp.moveaxis(v, 0, -1)
        y = u.reshape(bsz, -1) + bias.reshape(1, -1)
        h = jnp.maximum(y, 0.0).reshape((bsz,) + tuple(size_out))
    logits = h.reshape(-1, FEATURES) @ raw["linear_w"].T + raw["linear_b"]
    return jax.nn.log_softmax(logits, axis=1)


# ------------------------------------ main ----------------------------------- #

if __name__ == "__main__":
    key = jax.random.PRNGKey(0)
    k_x, k_p = jax.random.split(key)
    B = 2
    x = jax.random.normal(k_x, (B, 3, 8, 8, 8, 8), dtype=F32)  # [batch, *in_modes of ttl1]

    raw = init_params(k_p)
    params = prepare_params(raw)          # one-time weight layout prep (hoisted out of forward)

    fwd = jax.jit(basic_tt_forward)
    out = jax.block_until_ready(fwd(params, x))

    assert out.shape == (B, NUM_CLASSES), out.shape
    assert out.dtype == jnp.float32
    probs = jnp.exp(out)
    # log-softmax rows must (log-)sum to ~1
    assert bool(jnp.all(jnp.abs(jnp.sum(probs, axis=1) - 1.0) < 1e-4))

    # cross-check against a plain-JAX (unmerged-core) reference; loose tol to
    # allow for TPU matmul precision / reassociation differences.
    ref_probs = jnp.exp(jax.block_until_ready(jax.jit(reference_forward)(raw, x)))
    assert bool(jnp.allclose(probs, ref_probs, atol=5e-2)), (probs, ref_probs)

    print("KERNEL_OK")
</pallas_src>

<mosaic_0001>
module attributes {stable_mosaic.version = 11 : i64} {
  func.func @_fused_kernel(%arg0: i32, %arg1: memref<1x192x64xf32, #tpu.memory_space<vmem>>, %arg2: memref<2x800x192xf32, #tpu.memory_space<vmem>>, %arg3: memref<2x100x64xf32, #tpu.memory_space<vmem>>, %arg4: memref<800x100xf32, #tpu.memory_space<vmem>>, %arg5: memref<2x128x800xf32, #tpu.memory_space<vmem>>, %arg6: memref<2x16x100xf32, #tpu.memory_space<vmem>>, %arg7: memref<128x16xf32, #tpu.memory_space<vmem>>, %arg8: memref<2x27x128xf32, #tpu.memory_space<vmem>>, %arg9: memref<2x9x16xf32, #tpu.memory_space<vmem>>, %arg10: memref<27x9xf32, #tpu.memory_space<vmem>>, %arg11: memref<1x27x27xf32, #tpu.memory_space<vmem>>, %arg12: memref<1x9x9xf32, #tpu.memory_space<vmem>>, %arg13: memref<27x9xf32, #tpu.memory_space<vmem>>, %arg14: memref<1x27x27xf32, #tpu.memory_space<vmem>>, %arg15: memref<1x9x9xf32, #tpu.memory_space<vmem>>, %arg16: memref<9x27xf32, #tpu.memory_space<vmem>>, %arg17: memref<9x2x27xf32, #tpu.memory_space<vmem>>, %arg18: memref<1x2xf32, #tpu.memory_space<vmem>>, %arg19: memref<1x1x2xf32, #tpu.memory_space<vmem>>) attributes {dimension_semantics = [#tpu.dimension_semantics<parallel>], iteration_bounds = array<i64: 2>, scalar_prefetch = 0 : i64, scratch_operands = 0 : i64, tpu.core_type = #tpu.core_type<tc>, window_params = [{transform_indices = @transform_0, window_bounds = array<i64: 1, 192, 64>}, {pipeline_mode = #tpu.pipeline_mode<synchronous>, transform_indices = @transform_1, window_bounds = array<i64: 2, 800, 192>}, {pipeline_mode = #tpu.pipeline_mode<synchronous>, transform_indices = @transform_2, window_bounds = array<i64: 2, 100, 64>}, {pipeline_mode = #tpu.pipeline_mode<synchronous>, transform_indices = @transform_3, window_bounds = array<i64: 800, 100>}, {pipeline_mode = #tpu.pipeline_mode<synchronous>, transform_indices = @transform_4, window_bounds = array<i64: 2, 128, 800>}, {pipeline_mode = #tpu.pipeline_mode<synchronous>, transform_indices = @transform_5, window_bounds = array<i64: 2, 16, 100>}, {pipeline_mode = #tpu.pipeline_mode<synchronous>, transform_indices = @transform_6, window_bounds = array<i64: 128, 16>}, {pipeline_mode = #tpu.pipeline_mode<synchronous>, transform_indices = @transform_7, window_bounds = array<i64: 2, 27, 128>}, {pipeline_mode = #tpu.pipeline_mode<synchronous>, transform_indices = @transform_8, window_bounds = array<i64: 2, 9, 16>}, {pipeline_mode = #tpu.pipeline_mode<synchronous>, transform_indices = @transform_9, window_bounds = array<i64: 27, 9>}, {pipeline_mode = #tpu.pipeline_mode<synchronous>, transform_indices = @transform_10, window_bounds = array<i64: 1, 27, 27>}, {pipeline_mode = #tpu.pipeline_mode<synchronous>, transform_indices = @transform_11, window_bounds = array<i64: 1, 9, 9>}, {pipeline_mode = #tpu.pipeline_mode<synchronous>, transform_indices = @transform_12, window_bounds = array<i64: 27, 9>}, {pipeline_mode = #tpu.pipeline_mode<synchronous>, transform_indices = @transform_13, window_bounds = array<i64: 1, 27, 27>}, {pipeline_mode = #tpu.pipeline_mode<synchronous>, transform_indices = @transform_14, window_bounds = array<i64: 1, 9, 9>}, {pipeline_mode = #tpu.pipeline_mode<synchronous>, transform_indices = @transform_15, window_bounds = array<i64: 9, 27>}, {pipeline_mode = #tpu.pipeline_mode<synchronous>, transform_indices = @transform_16, window_bounds = array<i64: 9, 2, 27>}, {pipeline_mode = #tpu.pipeline_mode<synchronous>, transform_indices = @transform_17, window_bounds = array<i64: 1, 2>}, {transform_indices = @transform_18, window_bounds = array<i64: 1, 1, 2>}]} {
    %c0 = arith.constant 0 : index
    %c0_0 = arith.constant 0 : index
    %c0_1 = arith.constant 0 : index
    %0 = vector.load %arg1[%c0, %c0_0, %c0_1] : memref<1x192x64xf32, #tpu.memory_space<vmem>>, vector<1x192x64xf32>
    %c0_2 = arith.constant 0 : index
    %c0_3 = arith.constant 0 : index
    %c0_4 = arith.constant 0 : index
    %1 = vector.load %arg3[%c0_2, %c0_3, %c0_4] : memref<2x100x64xf32, #tpu.memory_space<vmem>>, vector<1x100x64xf32>
    %2 = vector.shape_cast %1 : vector<1x100x64xf32> to vector<100x64xf32>
    %3 = vector.shape_cast %2 : vector<100x64xf32> to vector<1x100x64xf32>
    %c0_5 = arith.constant 0 : index
    %c0_6 = arith.constant 0 : index
    %c0_7 = arith.constant 0 : index
    %4 = vector.load %arg2[%c0_5, %c0_6, %c0_7] : memref<2x800x192xf32, #tpu.memory_space<vmem>>, vector<1x800x192xf32>
    %5 = vector.shape_cast %4 : vector<1x800x192xf32> to vector<800x192xf32>
    %6 = vector.shape_cast %5 : vector<800x192xf32> to vector<1x800x192xf32>
    "tpu.trace_start"() <{level = 10 : i32, message = "bnm,bam->bna"}> : () -> ()
    %cst = arith.constant dense<0.000000e+00> : vector<1x100x192xf32>
    %7 = tpu.matmul %3, %0, %cst {dimension_numbers = #tpu.dot_dimension_numbers<[2], [2], [1], [1], [0, 0, 0, 1, 1, 1], [0], [0]>} : vector<1x100x64xf32>, vector<1x192x64xf32>, vector<1x100x192xf32> -> vector<1x100x192xf32>
    %cst_8 = arith.constant dense<0.000000e+00> : vector<1x800x100xf32>
    %8 = tpu.matmul %6, %7, %cst_8 {dimension_numbers = #tpu.dot_dimension_numbers<[2], [2], [1], [1], [0, 0, 0, 1, 1, 1], [0], [0]>} : vector<1x800x192xf32>, vector<1x100x192xf32>, vector<1x800x100xf32> -> vector<1x800x100xf32>
    "tpu.trace_stop"() : () -> ()
    %c1 = arith.constant 1 : index
    %c0_9 = arith.constant 0 : index
    %c0_10 = arith.constant 0 : index
    %9 = vector.load %arg3[%c1, %c0_9, %c0_10] : memref<2x100x64xf32, #tpu.memory_space<vmem>>, vector<1x100x64xf32>
    %10 = vector.shape_cast %9 : vector<1x100x64xf32> to vector<100x64xf32>
    %11 = vector.shape_cast %10 : vector<100x64xf32> to vector<1x100x64xf32>
    %c1_11 = arith.constant 1 : index
    %c0_12 = arith.constant 0 : index
    %c0_13 = arith.constant 0 : index
    %12 = vector.load %arg2[%c1_11, %c0_12, %c0_13] : memref<2x800x192xf32, #tpu.memory_space<vmem>>, vector<1x800x192xf32>
    %13 = vector.shape_cast %12 : vector<1x800x192xf32> to vector<800x192xf32>
    %14 = vector.shape_cast %13 : vector<800x192xf32> to vector<1x800x192xf32>
    "tpu.trace_start"() <{level = 10 : i32, message = "bnm,bam->bna"}> : () -> ()
    %cst_14 = arith.constant dense<0.000000e+00> : vector<1x100x192xf32>
    %15 = tpu.matmul %11, %0, %cst_14 {dimension_numbers = #tpu.dot_dimension_numbers<[2], [2], [1], [1], [0, 0, 0, 1, 1, 1], [0], [0]>} : vector<1x100x64xf32>, vector<1x192x64xf32>, vector<1x100x192xf32> -> vector<1x100x192xf32>
    %cst_15 = arith.constant dense<0.000000e+00> : vector<1x800x100xf32>
    %16 = tpu.matmul %14, %15, %cst_15 {dimension_numbers = #tpu.dot_dimension_numbers<[2], [2], [1], [1], [0, 0, 0, 1, 1, 1], [0], [0]>} : vector<1x800x192xf32>, vector<1x100x192xf32>, vector<1x800x100xf32> -> vector<1x800x100xf32>
    "tpu.trace_stop"() : () -> ()
    %17 = arith.addf %8, %16 : vector<1x800x100xf32>
    %c0_16 = arith.constant 0 : index
    %c0_17 = arith.constant 0 : index
    %18 = vector.load %arg4[%c0_16, %c0_17] : memref<800x100xf32, #tpu.memory_space<vmem>>, vector<800x100xf32>
    %19 = vector.shape_cast %18 : vector<800x100xf32> to vector<1x800x100xf32>
    %20 = arith.addf %17, %19 : vector<1x800x100xf32>
    %cst_18 = arith.constant 0.000000e+00 : f32
    %21 = vector.broadcast %cst_18 : f32 to vector<1x800x100xf32>
    %22 = arith.maximumf %20, %21 : vector<1x800x100xf32>
    %c0_19 = arith.constant 0 : index
    %c0_20 = arith.constant 0 : index
    %c0_21 = arith.constant 0 : index
    %23 = vector.load %arg6[%c0_19, %c0_20, %c0_21] : memref<2x16x100xf32, #tpu.memory_space<vmem>>, vector<1x16x100xf32>
    %24 = vector.shape_cast %23 : vector<1x16x100xf32> to vector<16x100xf32>
    %25 = vector.shape_cast %24 : vector<16x100xf32> to vector<1x16x100xf32>
    %c0_22 = arith.constant 0 : index
    %c0_23 = arith.constant 0 : index
    %c0_24 = arith.constant 0 : index
    %26 = vector.load %arg5[%c0_22, %c0_23, %c0_24] : memref<2x128x800xf32, #tpu.memory_space<vmem>>, vector<1x128x800xf32>
    %27 = vector.shape_cast %26 : vector<1x128x800xf32> to vector<128x800xf32>
    %28 = vector.shape_cast %27 : vector<128x800xf32> to vector<1x128x800xf32>
    "tpu.trace_start"() <{level = 10 : i32, message = "bnm,bam->bna"}> : () -> ()
    %cst_25 = arith.constant dense<0.000000e+00> : vector<1x16x800xf32>
    %29 = tpu.matmul %25, %22, %cst_25 {dimension_numbers = #tpu.dot_dimension_numbers<[2], [2], [1], [1], [0, 0, 0, 1, 1, 1], [0], [0]>} : vector<1x16x100xf32>, vector<1x800x100xf32>, vector<1x16x800xf32> -> vector<1x16x800xf32>
    %cst_26 = arith.constant dense<0.000000e+00> : vector<1x128x16xf32>
    %30 = tpu.matmul %28, %29, %cst_26 {dimension_numbers = #tpu.dot_dimension_numbers<[2], [2], [1], [1], [0, 0, 0, 1, 1, 1], [0], [0]>} : vector<1x128x800xf32>, vector<1x16x800xf32>, vector<1x128x16xf32> -> vector<1x128x16xf32>
    "tpu.trace_stop"() : () -> ()
    %c1_27 = arith.constant 1 : index
    %c0_28 = arith.constant 0 : index
    %c0_29 = arith.constant 0 : index
    %31 = vector.load %arg6[%c1_27, %c0_28, %c0_29] : memref<2x16x100xf32, #tpu.memory_space<vmem>>, vector<1x16x100xf32>
    %32 = vector.shape_cast %31 : vector<1x16x100xf32> to vector<16x100xf32>
    %33 = vector.shape_cast %32 : vector<16x100xf32> to vector<1x16x100xf32>
    %c1_30 = arith.constant 1 : index
    %c0_31 = arith.constant 0 : index
    %c0_32 = arith.constant 0 : index
    %34 = vector.load %arg5[%c1_30, %c0_31, %c0_32] : memref<2x128x800xf32, #tpu.memory_space<vmem>>, vector<1x128x800xf32>
    %35 = vector.shape_cast %34 : vector<1x128x800xf32> to vector<128x800xf32>
    %36 = vector.shape_cast %35 : vector<128x800xf32> to vector<1x128x800xf32>
    "tpu.trace_start"() <{level = 10 : i32, message = "bnm,bam->bna"}> : () -> ()
    %cst_33 = arith.constant dense<0.000000e+00> : vector<1x16x800xf32>
    %37 = tpu.matmul %33, %22, %cst_33 {dimension_numbers = #tpu.dot_dimension_numbers<[2], [2], [1], [1], [0, 0, 0, 1, 1, 1], [0], [0]>} : vector<1x16x100xf32>, vector<1x800x100xf32>, vector<1x16x800xf32> -> vector<1x16x800xf32>
    %cst_34 = arith.constant dense<0.000000e+00> : vector<1x128x16xf32>
    %38 = tpu.matmul %36, %37, %cst_34 {dimension_numbers = #tpu.dot_dimension_numbers<[2], [2], [1], [1], [0, 0, 0, 1, 1, 1], [0], [0]>} : vector<1x128x800xf32>, vector<1x16x800xf32>, vector<1x128x16xf32> -> vector<1x128x16xf32>
    "tpu.trace_stop"() : () -> ()
    %39 = arith.addf %30, %38 : vector<1x128x16xf32>
    %c0_35 = arith.constant 0 : index
    %c0_36 = arith.constant 0 : index
    %40 = vector.load %arg7[%c0_35, %c0_36] : memref<128x16xf32, #tpu.memory_space<vmem>>, vector<128x16xf32>
    %41 = vector.shape_cast %40 : vector<128x16xf32> to vector<1x128x16xf32>
    %42 = arith.addf %39, %41 : vector<1x128x16xf32>
    %cst_37 = arith.constant 0.000000e+00 : f32
    %43 = vector.broadcast %cst_37 : f32 to vector<1x128x16xf32>
    %44 = arith.maximumf %42, %43 : vector<1x128x16xf32>
    %c0_38 = arith.constant 0 : index
    %c0_39 = arith.constant 0 : index
    %c0_40 = arith.constant 0 : index
    %45 = vector.load %arg9[%c0_38, %c0_39, %c0_40] : memref<2x9x16xf32, #tpu.memory_space<vmem>>, vector<1x9x16xf32>
    %46 = vector.shape_cast %45 : vector<1x9x16xf32> to vector<9x16xf32>
    %47 = vector.shape_cast %46 : vector<9x16xf32> to vector<1x9x16xf32>
    %c0_41 = arith.constant 0 : index
    %c0_42 = arith.constant 0 : index
    %c0_43 = arith.constant 0 : index
    %48 = vector.load %arg8[%c0_41, %c0_42, %c0_43] : memref<2x27x128xf32, #tpu.memory_space<vmem>>, vector<1x27x128xf32>
    %49 = vector.shape_cast %48 : vector<1x27x128xf32> to vector<27x128xf32>
    %50 = vector.shape_cast %49 : vector<27x128xf32> to vector<1x27x128xf32>
    "tpu.trace_start"() <{level = 10 : i32, message = "bnm,bam->bna"}> : () -> ()
    %cst_44 = arith.constant dense<0.000000e+00> : vector<1x9x128xf32>
    %51 = tpu.matmul %47, %44, %cst_44 {dimension_numbers = #tpu.dot_dimension_numbers<[2], [2], [1], [1], [0, 0, 0, 1, 1, 1], [0], [0]>} : vector<1x9x16xf32>, vector<1x128x16xf32>, vector<1x9x128xf32> -> vector<1x9x128xf32>
    %cst_45 = arith.constant dense<0.000000e+00> : vector<1x27x9xf32>
    %52 = tpu.matmul %50, %51, %cst_45 {dimension_numbers = #tpu.dot_dimension_numbers<[2], [2], [1], [1], [0, 0, 0, 1, 1, 1], [0], [0]>} : vector<1x27x128xf32>, vector<1x9x128xf32>, vector<1x27x9xf32> -> vector<1x27x9xf32>
    "tpu.trace_stop"() : () -> ()
    %c1_46 = arith.constant 1 : index
    %c0_47 = arith.constant 0 : index
    %c0_48 = arith.constant 0 : index
    %53 = vector.load %arg9[%c1_46, %c0_47, %c0_48] : memref<2x9x16xf32, #tpu.memory_space<vmem>>, vector<1x9x16xf32>
    %54 = vector.shape_cast %53 : vector<1x9x16xf32> to vector<9x16xf32>
    %55 = vector.shape_cast %54 : vector<9x16xf32> to vector<1x9x16xf32>
    %c1_49 = arith.constant 1 : index
    %c0_50 = arith.constant 0 : index
    %c0_51 = arith.constant 0 : index
    %56 = vector.load %arg8[%c1_49, %c0_50, %c0_51] : memref<2x27x128xf32, #tpu.memory_space<vmem>>, vector<1x27x128xf32>
    %57 = vector.shape_cast %56 : vector<1x27x128xf32> to vector<27x128xf32>
    %58 = vector.shape_cast %57 : vector<27x128xf32> to vector<1x27x128xf32>
    "tpu.trace_start"() <{level = 10 : i32, message = "bnm,bam->bna"}> : () -> ()
    %cst_52 = arith.constant dense<0.000000e+00> : vector<1x9x128xf32>
    %59 = tpu.matmul %55, %44, %cst_52 {dimension_numbers = #tpu.dot_dimension_numbers<[2], [2], [1], [1], [0, 0, 0, 1, 1, 1], [0], [0]>} : vector<1x9x16xf32>, vector<1x128x16xf32>, vector<1x9x128xf32> -> vector<1x9x128xf32>
    %cst_53 = arith.constant dense<0.000000e+00> : vector<1x27x9xf32>
    %60 = tpu.matmul %58, %59, %cst_53 {dimension_numbers = #tpu.dot_dimension_numbers<[2], [2], [1], [1], [0, 0, 0, 1, 1, 1], [0], [0]>} : vector<1x27x128xf32>, vector<1x9x128xf32>, vector<1x27x9xf32> -> vector<1x27x9xf32>
    "tpu.trace_stop"() : () -> ()
    %61 = arith.addf %52, %60 : vector<1x27x9xf32>
    %c0_54 = arith.constant 0 : index
    %c0_55 = arith.constant 0 : index
    %62 = vector.load %arg10[%c0_54, %c0_55] : memref<27x9xf32, #tpu.memory_space<vmem>>, vector<27x9xf32>
    %63 = vector.shape_cast %62 : vector<27x9xf32> to vector<1x27x9xf32>
    %64 = arith.addf %61, %63 : vector<1x27x9xf32>
    %cst_56 = arith.constant 0.000000e+00 : f32
    %65 = vector.broadcast %cst_56 : f32 to vector<1x27x9xf32>
    %66 = arith.maximumf %64, %65 : vector<1x27x9xf32>
    %c0_57 = arith.constant 0 : index
    %c0_58 = arith.constant 0 : index
    %c0_59 = arith.constant 0 : index
    %67 = vector.load %arg12[%c0_57, %c0_58, %c0_59] : memref<1x9x9xf32, #tpu.memory_space<vmem>>, vector<1x9x9xf32>
    %68 = vector.shape_cast %67 : vector<1x9x9xf32> to vector<9x9xf32>
    %69 = vector.shape_cast %68 : vector<9x9xf32> to vector<1x9x9xf32>
    %c0_60 = arith.constant 0 : index
    %c0_61 = arith.constant 0 : index
    %c0_62 = arith.constant 0 : index
    %70 = vector.load %arg11[%c0_60, %c0_61, %c0_62] : memref<1x27x27xf32, #tpu.memory_space<vmem>>, vector<1x27x27xf32>
    %71 = vector.shape_cast %70 : vector<1x27x27xf32> to vector<27x27xf32>
    %72 = vector.shape_cast %71 : vector<27x27xf32> to vector<1x27x27xf32>
    "tpu.trace_start"() <{level = 10 : i32, message = "bnm,bam->bna"}> : () -> ()
    %cst_63 = arith.constant dense<0.000000e+00> : vector<1x9x27xf32>
    %73 = tpu.matmul %69, %66, %cst_63 {dimension_numbers = #tpu.dot_dimension_numbers<[2], [2], [1], [1], [0, 0, 0, 1, 1, 1], [0], [0]>} : vector<1x9x9xf32>, vector<1x27x9xf32>, vector<1x9x27xf32> -> vector<1x9x27xf32>
    %cst_64 = arith.constant dense<0.000000e+00> : vector<1x27x9xf32>
    %74 = tpu.matmul %72, %73, %cst_64 {dimension_numbers = #tpu.dot_dimension_numbers<[2], [2], [1], [1], [0, 0, 0, 1, 1, 1], [0], [0]>} : vector<1x27x27xf32>, vector<1x9x27xf32>, vector<1x27x9xf32> -> vector<1x27x9xf32>
    "tpu.trace_stop"() : () -> ()
    %c0_65 = arith.constant 0 : index
    %c0_66 = arith.constant 0 : index
    %75 = vector.load %arg13[%c0_65, %c0_66] : memref<27x9xf32, #tpu.memory_space<vmem>>, vector<27x9xf32>
    %76 = vector.shape_cast %75 : vector<27x9xf32> to vector<1x27x9xf32>
    %77 = arith.addf %74, %76 : vector<1x27x9xf32>
    %cst_67 = arith.constant 0.000000e+00 : f32
    %78 = vector.broadcast %cst_67 : f32 to vector<1x27x9xf32>
    %79 = arith.maximumf %77, %78 : vector<1x27x9xf32>
    %c0_68 = arith.constant 0 : index
    %c0_69 = arith.constant 0 : index
    %c0_70 = arith.constant 0 : index
    %80 = vector.load %arg15[%c0_68, %c0_69, %c0_70] : memref<1x9x9xf32, #tpu.memory_space<vmem>>, vector<1x9x9xf32>
    %81 = vector.shape_cast %80 : vector<1x9x9xf32> to vector<9x9xf32>
    %82 = vector.shape_cast %81 : vector<9x9xf32> to vector<1x9x9xf32>
    %c0_71 = arith.constant 0 : index
    %c0_72 = arith.constant 0 : index
    %c0_73 = arith.constant 0 : index
    %83 = vector.load %arg14[%c0_71, %c0_72, %c0_73] : memref<1x27x27xf32, #tpu.memory_space<vmem>>, vector<1x27x27xf32>
    %84 = vector.shape_cast %83 : vector<1x27x27xf32> to vector<27x27xf32>
    %85 = vector.shape_cast %84 : vector<27x27xf32> to vector<1x27x27xf32>
    "tpu.trace_start"() <{level = 10 : i32, message = "bnm,bam->bna"}> : () -> ()
    %cst_74 = arith.constant dense<0.000000e+00> : vector<1x9x27xf32>
    %86 = tpu.matmul %82, %79, %cst_74 {dimension_numbers = #tpu.dot_dimension_numbers<[2], [2], [1], [1], [0, 0, 0, 1, 1, 1], [0], [0]>} : vector<1x9x9xf32>, vector<1x27x9xf32>, vector<1x9x27xf32> -> vector<1x9x27xf32>
    %cst_75 = arith.constant dense<0.000000e+00> : vector<1x9x27xf32>
    %87 = tpu.matmul %86, %85, %cst_75 {dimension_numbers = #tpu.dot_dimension_numbers<[2], [2], [1], [1], [0, 0, 0, 1, 1, 1], [0], [0]>} : vector<1x9x27xf32>, vector<1x27x27xf32>, vector<1x9x27xf32> -> vector<1x9x27xf32>
    "tpu.trace_stop"() : () -> ()
    %c0_76 = arith.constant 0 : index
    %c0_77 = arith.constant 0 : index
    %88 = vector.load %arg16[%c0_76, %c0_77] : memref<9x27xf32, #tpu.memory_space<vmem>>, vector<9x27xf32>
    %89 = vector.shape_cast %88 : vector<9x27xf32> to vector<1x9x27xf32>
    %90 = arith.addf %87, %89 : vector<1x9x27xf32>
    %cst_78 = arith.constant 0.000000e+00 : f32
    %91 = vector.broadcast %cst_78 : f32 to vector<1x9x27xf32>
    %92 = arith.maximumf %90, %91 : vector<1x9x27xf32>
    %c0_79 = arith.constant 0 : index
    %c0_80 = arith.constant 0 : index
    %93 = vector.load %arg18[%c0_79, %c0_80] : memref<1x2xf32, #tpu.memory_space<vmem>>, vector<1x2xf32>
    %94 = vector.extract_strided_slice %92 {offsets = [0, 0, 0], sizes = [1, 1, 27], strides = [1, 1, 1]} : vector<1x9x27xf32> to vector<1x1x27xf32>
    %95 = vector.shape_cast %94 : vector<1x1x27xf32> to vector<1x27xf32>
    %c0_81 = arith.constant 0 : index
    %c0_82 = arith.constant 0 : index
    %c0_83 = arith.constant 0 : index
    %96 = vector.load %arg17[%c0_81, %c0_82, %c0_83] : memref<9x2x27xf32, #tpu.memory_space<vmem>>, vector<1x2x27xf32>
    %97 = vector.shape_cast %96 : vector<1x2x27xf32> to vector<2x27xf32>
    %cst_84 = arith.constant dense<0.000000e+00> : vector<1x2xf32>
    %98 = tpu.matmul %95, %97, %cst_84 {dimension_numbers = #tpu.dot_dimension_numbers<[1], [1], [0], [0], [0, 0, 1, 0], [], []>} : vector<1x27xf32>, vector<2x27xf32>, vector<1x2xf32> -> vector<1x2xf32>
    %99 = arith.addf %93, %98 : vector<1x2xf32>
    %100 = vector.extract_strided_slice %92 {offsets = [0, 1, 0], sizes = [1, 1, 27], strides = [1, 1, 1]} : vector<1x9x27xf32> to vector<1x1x27xf32>
    %101 = vector.shape_cast %100 : vector<1x1x27xf32> to vector<1x27xf32>
    %c1_85 = arith.constant 1 : index
    %c0_86 = arith.constant 0 : index
    %c0_87 = arith.constant 0 : index
    %102 = vector.load %arg17[%c1_85, %c0_86, %c0_87] : memref<9x2x27xf32, #tpu.memory_space<vmem>>, vector<1x2x27xf32>
    %103 = vector.shape_cast %102 : vector<1x2x27xf32> to vector<2x27xf32>
    %cst_88 = arith.constant dense<0.000000e+00> : vector<1x2xf32>
    %104 = tpu.matmul %101, %103, %cst_88 {dimension_numbers = #tpu.dot_dimension_numbers<[1], [1], [0], [0], [0, 0, 1, 0], [], []>} : vector<1x27xf32>, vector<2x27xf32>, vector<1x2xf32> -> vector<1x2xf32>
    %105 = arith.addf %99, %104 : vector<1x2xf32>
    %106 = vector.extract_strided_slice %92 {offsets = [0, 2, 0], sizes = [1, 1, 27], strides = [1, 1, 1]} : vector<1x9x27xf32> to vector<1x1x27xf32>
    %107 = vector.shape_cast %106 : vector<1x1x27xf32> to vector<1x27xf32>
    %c2 = arith.constant 2 : index
    %c0_89 = arith.constant 0 : index
    %c0_90 = arith.constant 0 : index
    %108 = vector.load %arg17[%c2, %c0_89, %c0_90] : memref<9x2x27xf32, #tpu.memory_space<vmem>>, vector<1x2x27xf32>
    %109 = vector.shape_cast %108 : vector<1x2x27xf32> to vector<2x27xf32>
    %cst_91 = arith.constant dense<0.000000e+00> : vector<1x2xf32>
    %110 = tpu.matmul %107, %109, %cst_91 {dimension_numbers = #tpu.dot_dimension_numbers<[1], [1], [0], [0], [0, 0, 1, 0], [], []>} : vector<1x27xf32>, vector<2x27xf32>, vector<1x2xf32> -> vector<1x2xf32>
    %111 = arith.addf %105, %110 : vector<1x2xf32>
    %112 = vector.extract_strided_slice %92 {offsets = [0, 3, 0], sizes = [1, 1, 27], strides = [1, 1, 1]} : vector<1x9x27xf32> to vector<1x1x27xf32>
    %113 = vector.shape_cast %112 : vector<1x1x27xf32> to vector<1x27xf32>
    %c3 = arith.constant 3 : index
    %c0_92 = arith.constant 0 : index
    %c0_93 = arith.constant 0 : index
    %114 = vector.load %arg17[%c3, %c0_92, %c0_93] : memref<9x2x27xf32, #tpu.memory_space<vmem>>, vector<1x2x27xf32>
    %115 = vector.shape_cast %114 : vector<1x2x27xf32> to vector<2x27xf32>
    %cst_94 = arith.constant dense<0.000000e+00> : vector<1x2xf32>
    %116 = tpu.matmul %113, %115, %cst_94 {dimension_numbers = #tpu.dot_dimension_numbers<[1], [1], [0], [0], [0, 0, 1, 0], [], []>} : vector<1x27xf32>, vector<2x27xf32>, vector<1x2xf32> -> vector<1x2xf32>
    %117 = arith.addf %111, %116 : vector<1x2xf32>
    %118 = vector.extract_strided_slice %92 {offsets = [0, 4, 0], sizes = [1, 1, 27], strides = [1, 1, 1]} : vector<1x9x27xf32> to vector<1x1x27xf32>
    %119 = vector.shape_cast %118 : vector<1x1x27xf32> to vector<1x27xf32>
    %c4 = arith.constant 4 : index
    %c0_95 = arith.constant 0 : index
    %c0_96 = arith.constant 0 : index
    %120 = vector.load %arg17[%c4, %c0_95, %c0_96] : memref<9x2x27xf32, #tpu.memory_space<vmem>>, vector<1x2x27xf32>
    %121 = vector.shape_cast %120 : vector<1x2x27xf32> to vector<2x27xf32>
    %cst_97 = arith.constant dense<0.000000e+00> : vector<1x2xf32>
    %122 = tpu.matmul %119, %121, %cst_97 {dimension_numbers = #tpu.dot_dimension_numbers<[1], [1], [0], [0], [0, 0, 1, 0], [], []>} : vector<1x27xf32>, vector<2x27xf32>, vector<1x2xf32> -> vector<1x2xf32>
    %123 = arith.addf %117, %122 : vector<1x2xf32>
    %124 = vector.extract_strided_slice %92 {offsets = [0, 5, 0], sizes = [1, 1, 27], strides = [1, 1, 1]} : vector<1x9x27xf32> to vector<1x1x27xf32>
    %125 = vector.shape_cast %124 : vector<1x1x27xf32> to vector<1x27xf32>
    %c5 = arith.constant 5 : index
    %c0_98 = arith.constant 0 : index
    %c0_99 = arith.constant 0 : index
    %126 = vector.load %arg17[%c5, %c0_98, %c0_99] : memref<9x2x27xf32, #tpu.memory_space<vmem>>, vector<1x2x27xf32>
    %127 = vector.shape_cast %126 : vector<1x2x27xf32> to vector<2x27xf32>
    %cst_100 = arith.constant dense<0.000000e+00> : vector<1x2xf32>
    %128 = tpu.matmul %125, %127, %cst_100 {dimension_numbers = #tpu.dot_dimension_numbers<[1], [1], [0], [0], [0, 0, 1, 0], [], []>} : vector<1x27xf32>, vector<2x27xf32>, vector<1x2xf32> -> vector<1x2xf32>
    %129 = arith.addf %123, %128 : vector<1x2xf32>
    %130 = vector.extract_strided_slice %92 {offsets = [0, 6, 0], sizes = [1, 1, 27], strides = [1, 1, 1]} : vector<1x9x27xf32> to vector<1x1x27xf32>
    %131 = vector.shape_cast %130 : vector<1x1x27xf32> to vector<1x27xf32>
    %c6 = arith.constant 6 : index
    %c0_101 = arith.constant 0 : index
    %c0_102 = arith.constant 0 : index
    %132 = vector.load %arg17[%c6, %c0_101, %c0_102] : memref<9x2x27xf32, #tpu.memory_space<vmem>>, vector<1x2x27xf32>
    %133 = vector.shape_cast %132 : vector<1x2x27xf32> to vector<2x27xf32>
    %cst_103 = arith.constant dense<0.000000e+00> : vector<1x2xf32>
    %134 = tpu.matmul %131, %133, %cst_103 {dimension_numbers = #tpu.dot_dimension_numbers<[1], [1], [0], [0], [0, 0, 1, 0], [], []>} : vector<1x27xf32>, vector<2x27xf32>, vector<1x2xf32> -> vector<1x2xf32>
    %135 = arith.addf %129, %134 : vector<1x2xf32>
    %136 = vector.extract_strided_slice %92 {offsets = [0, 7, 0], sizes = [1, 1, 27], strides = [1, 1, 1]} : vector<1x9x27xf32> to vector<1x1x27xf32>
    %137 = vector.shape_cast %136 : vector<1x1x27xf32> to vector<1x27xf32>
    %c7 = arith.constant 7 : index
    %c0_104 = arith.constant 0 : index
    %c0_105 = arith.constant 0 : index
    %138 = vector.load %arg17[%c7, %c0_104, %c0_105] : memref<9x2x27xf32, #tpu.memory_space<vmem>>, vector<1x2x27xf32>
    %139 = vector.shape_cast %138 : vector<1x2x27xf32> to vector<2x27xf32>
    %cst_106 = arith.constant dense<0.000000e+00> : vector<1x2xf32>
    %140 = tpu.matmul %137, %139, %cst_106 {dimension_numbers = #tpu.dot_dimension_numbers<[1], [1], [0], [0], [0, 0, 1, 0], [], []>} : vector<1x27xf32>, vector<2x27xf32>, vector<1x2xf32> -> vector<1x2xf32>
    %141 = arith.addf %135, %140 : vector<1x2xf32>
    %142 = vector.extract_strided_slice %92 {offsets = [0, 8, 0], sizes = [1, 1, 27], strides = [1, 1, 1]} : vector<1x9x27xf32> to vector<1x1x27xf32>
    %143 = vector.shape_cast %142 : vector<1x1x27xf32> to vector<1x27xf32>
    %c8 = arith.constant 8 : index
    %c0_107 = arith.constant 0 : index
    %c0_108 = arith.constant 0 : index
    %144 = vector.load %arg17[%c8, %c0_107, %c0_108] : memref<9x2x27xf32, #tpu.memory_space<vmem>>, vector<1x2x27xf32>
    %145 = vector.shape_cast %144 : vector<1x2x27xf32> to vector<2x27xf32>
    %cst_109 = arith.constant dense<0.000000e+00> : vector<1x2xf32>
    %146 = tpu.matmul %143, %145, %cst_109 {dimension_numbers = #tpu.dot_dimension_numbers<[1], [1], [0], [0], [0, 0, 1, 0], [], []>} : vector<1x27xf32>, vector<2x27xf32>, vector<1x2xf32> -> vector<1x2xf32>
    %147 = arith.addf %141, %146 : vector<1x2xf32>
    %cst_110 = arith.constant dense<0xFF800000> : vector<1xf32>
    %148 = vector.multi_reduction <maximumf>, %147, %cst_110 [1] : vector<1x2xf32> to vector<1xf32>
    %149 = vector.shape_cast %148 : vector<1xf32> to vector<1x1xf32>
    %150 = vector.broadcast %149 : vector<1x1xf32> to vector<1x2xf32>
    %151 = arith.subf %147, %150 : vector<1x2xf32>
    %152 = math.exp %151 : vector<1x2xf32>
    %cst_111 = arith.constant dense<0.000000e+00> : vector<1xf32>
    %153 = vector.multi_reduction <add>, %152, %cst_111 [1] : vector<1x2xf32> to vector<1xf32>
    %154 = vector.shape_cast %153 : vector<1xf32> to vector<1x1xf32>
    %155 = math.log %154 : vector<1x1xf32>
    %156 = vector.broadcast %155 : vector<1x1xf32> to vector<1x2xf32>
    %157 = arith.subf %151, %156 : vector<1x2xf32>
    %158 = vector.shape_cast %157 : vector<1x2xf32> to vector<1x1x2xf32>
    %c0_112 = arith.constant 0 : index
    %c0_113 = arith.constant 0 : index
    %c0_114 = arith.constant 0 : index
    %159 = vector.load %arg19[%c0_112, %c0_113, %c0_114] : memref<1x1x2xf32, #tpu.memory_space<vmem>>, vector<1x1x2xf32>
    tpu.vector_store %arg19[%c0_112, %c0_113, %c0_114], %158 {strides = array<i32>} : memref<1x1x2xf32, #tpu.memory_space<vmem>>, vector<1x1x2xf32>,
    return
  }
  func.func @transform_0(%arg0: i32) -> (i32, i32, i32) {
    %c0_i32 = arith.constant 0 : i32
    %c0_i32_0 = arith.constant 0 : i32
    %c0_i32_1 = arith.constant 0 : i32
    return %arg0, %c0_i32, %c0_i32_0 : i32, i32, i32
  }
  func.func @transform_1(%arg0: i32) -> (i32, i32, i32) {
    %c0_i32 = arith.constant 0 : i32
    %c0_i32_0 = arith.constant 0 : i32
    %c0_i32_1 = arith.constant 0 : i32
    %c0_i32_2 = arith.constant 0 : i32
    return %c0_i32, %c0_i32_0, %c0_i32_1 : i32, i32, i32
  }
  func.func @transform_2(%arg0: i32) -> (i32, i32, i32) {
    %c0_i32 = arith.constant 0 : i32
    %c0_i32_0 = arith.constant 0 : i32
    %c0_i32_1 = arith.constant 0 : i32
    %c0_i32_2 = arith.constant 0 : i32
    return %c0_i32, %c0_i32_0, %c0_i32_1 : i32, i32, i32
  }
  func.func @transform_3(%arg0: i32) -> (i32, i32) {
    %c0_i32 = arith.constant 0 : i32
    %c0_i32_0 = arith.constant 0 : i32
    %c0_i32_1 = arith.constant 0 : i32
    return %c0_i32, %c0_i32_0 : i32, i32
  }
  func.func @transform_4(%arg0: i32) -> (i32, i32, i32) {
    %c0_i32 = arith.constant 0 : i32
    %c0_i32_0 = arith.constant 0 : i32
    %c0_i32_1 = arith.constant 0 : i32
    %c0_i32_2 = arith.constant 0 : i32
    return %c0_i32, %c0_i32_0, %c0_i32_1 : i32, i32, i32
  }
  func.func @transform_5(%arg0: i32) -> (i32, i32, i32) {
    %c0_i32 = arith.constant 0 : i32
    %c0_i32_0 = arith.constant 0 : i32
    %c0_i32_1 = arith.constant 0 : i32
    %c0_i32_2 = arith.constant 0 : i32
    return %c0_i32, %c0_i32_0, %c0_i32_1 : i32, i32, i32
  }
  func.func @transform_6(%arg0: i32) -> (i32, i32) {
    %c0_i32 = arith.constant 0 : i32
    %c0_i32_0 = arith.constant 0 : i32
    %c0_i32_1 = arith.constant 0 : i32
    return %c0_i32, %c0_i32_0 : i32, i32
  }
  func.func @transform_7(%arg0: i32) -> (i32, i32, i32) {
    %c0_i32 = arith.constant 0 : i32
    %c0_i32_0 = arith.constant 0 : i32
    %c0_i32_1 = arith.constant 0 : i32
    %c0_i32_2 = arith.constant 0 : i32
    return %c0_i32, %c0_i32_0, %c0_i32_1 : i32, i32, i32
  }
  func.func @transform_8(%arg0: i32) -> (i32, i32, i32) {
    %c0_i32 = arith.constant 0 : i32
    %c0_i32_0 = arith.constant 0 : i32
    %c0_i32_1 = arith.constant 0 : i32
    %c0_i32_2 = arith.constant 0 : i32
    return %c0_i32, %c0_i32_0, %c0_i32_1 : i32, i32, i32
  }
  func.func @transform_9(%arg0: i32) -> (i32, i32) {
    %c0_i32 = arith.constant 0 : i32
    %c0_i32_0 = arith.constant 0 : i32
    %c0_i32_1 = arith.constant 0 : i32
    return %c0_i32, %c0_i32_0 : i32, i32
  }
  func.func @transform_10(%arg0: i32) -> (i32, i32, i32) {
    %c0_i32 = arith.constant 0 : i32
    %c0_i32_0 = arith.constant 0 : i32
    %c0_i32_1 = arith.constant 0 : i32
    %c0_i32_2 = arith.constant 0 : i32
    return %c0_i32, %c0_i32_0, %c0_i32_1 : i32, i32, i32
  }
  func.func @transform_11(%arg0: i32) -> (i32, i32, i32) {
    %c0_i32 = arith.constant 0 : i32
    %c0_i32_0 = arith.constant 0 : i32
    %c0_i32_1 = arith.constant 0 : i32
    %c0_i32_2 = arith.constant 0 : i32
    return %c0_i32, %c0_i32_0, %c0_i32_1 : i32, i32, i32
  }
  func.func @transform_12(%arg0: i32) -> (i32, i32) {
    %c0_i32 = arith.constant 0 : i32
    %c0_i32_0 = arith.constant 0 : i32
    %c0_i32_1 = arith.constant 0 : i32
    return %c0_i32, %c0_i32_0 : i32, i32
  }
  func.func @transform_13(%arg0: i32) -> (i32, i32, i32) {
    %c0_i32 = arith.constant 0 : i32
    %c0_i32_0 = arith.constant 0 : i32
    %c0_i32_1 = arith.constant 0 : i32
    %c0_i32_2 = arith.constant 0 : i32
    return %c0_i32, %c0_i32_0, %c0_i32_1 : i32, i32, i32
  }
  func.func @transform_14(%arg0: i32) -> (i32, i32, i32) {
    %c0_i32 = arith.constant 0 : i32
    %c0_i32_0 = arith.constant 0 : i32
    %c0_i32_1 = arith.constant 0 : i32
    %c0_i32_2 = arith.constant 0 : i32
    return %c0_i32, %c0_i32_0, %c0_i32_1 : i32, i32, i32
  }
  func.func @transform_15(%arg0: i32) -> (i32, i32) {
    %c0_i32 = arith.constant 0 : i32
    %c0_i32_0 = arith.constant 0 : i32
    %c0_i32_1 = arith.constant 0 : i32
    return %c0_i32, %c0_i32_0 : i32, i32
  }
  func.func @transform_16(%arg0: i32) -> (i32, i32, i32) {
    %c0_i32 = arith.constant 0 : i32
    %c0_i32_0 = arith.constant 0 : i32
    %c0_i32_1 = arith.constant 0 : i32
    %c0_i32_2 = arith.constant 0 : i32
    return %c0_i32, %c0_i32_0, %c0_i32_1 : i32, i32, i32
  }
  func.func @transform_17(%arg0: i32) -> (i32, i32) {
    %c0_i32 = arith.constant 0 : i32
    %c0_i32_0 = arith.constant 0 : i32
    %c0_i32_1 = arith.constant 0 : i32
    return %c0_i32, %c0_i32_0 : i32, i32
  }
  func.func @transform_18(%arg0: i32) -> (i32, i32, i32) {
    %c0_i32 = arith.constant 0 : i32
    %c0_i32_0 = arith.constant 0 : i32
    %c0_i32_1 = arith.constant 0 : i32
    return %arg0, %c0_i32, %c0_i32_0 : i32, i32, i32
  }
}

</mosaic_0001>

<llo_original>
// kernel: basic_tt_forward.1
$region0: #{basic_tt_forward.1}
  #allocation0 [shape = 'u32[]', space=smem, size = 0x4, offset = 0x4, fixed_abs, tag = 'smem constant byte address 0x4 - core index']
  #allocation1 [shape = 'u32[144,128]{1,0:T(1,128)}', space=vmem, size = 0x12000, scoped, tag = 'internal scratch']
  %s0 = inlined_call_operand.vmem [shape: f32[2,192,64], index: 0, kind: input, shape index: {}]
  %s1 = inlined_call_operand.vmem [shape: f32[2,800,192], index: 1, kind: input, shape index: {}]
  %s2 = inlined_call_operand.vmem [shape: f32[2,100,64], index: 2, kind: input, shape index: {}]
  %s3 = inlined_call_operand.vmem [shape: f32[800,100], index: 3, kind: input, shape index: {}]
  %s4 = inlined_call_operand.vmem [shape: f32[2,128,800], index: 4, kind: input, shape index: {}]
  %s5 = inlined_call_operand.vmem [shape: f32[2,16,100], index: 5, kind: input, shape index: {}]
  %s6 = inlined_call_operand.vmem [shape: f32[128,16], index: 6, kind: input, shape index: {}]
  %s7 = inlined_call_operand.vmem [shape: f32[2,27,128], index: 7, kind: input, shape index: {}]
  %s8 = inlined_call_operand.vmem [shape: f32[2,9,16], index: 8, kind: input, shape index: {}]
  %s9 = inlined_call_operand.vmem [shape: f32[27,9], index: 9, kind: input, shape index: {}]
  %s10 = inlined_call_operand.vmem [shape: f32[1,27,27], index: 10, kind: input, shape index: {}]
  %s11 = inlined_call_operand.vmem [shape: f32[1,9,9], index: 11, kind: input, shape index: {}]
  %s12 = inlined_call_operand.vmem [shape: f32[27,9], index: 12, kind: input, shape index: {}]
  %s13 = inlined_call_operand.vmem [shape: f32[1,27,27], index: 13, kind: input, shape index: {}]
  %s14 = inlined_call_operand.vmem [shape: f32[1,9,9], index: 14, kind: input, shape index: {}]
  %s15 = inlined_call_operand.vmem [shape: f32[9,27], index: 15, kind: input, shape index: {}]
  %s16 = inlined_call_operand.vmem [shape: f32[9,2,27], index: 16, kind: input, shape index: {}]
  %s17 = inlined_call_operand.vmem [shape: f32[1,2], index: 17, kind: input, shape index: {}]
  %s18 = inlined_call_operand.hbm [shape: f32[2,1,2], index: 18, kind: output, shape index: {}]
  %s19 = sld [smem:[#allocation0]]
  $region105: #{basic_tt_forward.1} parent=0
    _
  %s21 = ssub.s32 1, %s19
  %s22 = scalar_select 0, %s21, %s19
  $region1: #{basic_tt_forward.1} parent=0
    #allocation2 [shape = 'u8[1024]{0}', space=vmem, size = 0x400, scoped, tag = 'output window, operand 0']
    #allocation3 [shape = 's32[2]{0}', space=sflag, size = 0x8, scoped, tag = 'scoped memory for basic_tt_forward.1']
    %23 = vsyncpa [#allocation3], 0
    %s24 = scalar_lea.sflag [#allocation3], 1
    %25 = vsyncpa %s24, 0
    loop: start=0, step=1, limit=4
    $region2: #{basic_tt_forward.1} parent=1 // loop_pre_header
      _
    $region3: #{basic_tt_forward.1} parent=1 // loop_header
      %s27 = sphi 0, %s31
      %p28 = scmp.ge.s32.totalorder %s27, 4
      %s37 = sphi 0, %s39
      %s40 = sphi 0, %s37
      %s41 = sphi 0, %s40
      %s57 = sphi 0, %s41
      %s61 = sphi 0, %s61
      %s63 = sphi 0, %s61
      %s64 = sphi 0, %s63
      %s78 = sphi 0, %s64
      %s82 = sphi 0, %s82
      %s84 = sphi 0, %s82
      %s85 = sphi 0, %s84
      %s99 = sphi 0, %s85
      %s103 = sphi 0, %s103
      %s105 = sphi 0, %s103
      %s106 = sphi 0, %s105
      %s120 = sphi 0, %s106
      %s124 = sphi 0, %s124
      %s126 = sphi 0, %s124
      %s127 = sphi 0, %s126
      %s141 = sphi 0, %s127
      %s145 = sphi 0, %s145
      %s147 = sphi 0, %s145
      %s148 = sphi 0, %s147
      %s162 = sphi 0, %s148
      %s166 = sphi 0, %s166
      %s168 = sphi 0, %s166
      %s169 = sphi 0, %s168
      %s183 = sphi 0, %s169
      %s187 = sphi 0, %s187
      %s189 = sphi 0, %s187
      %s190 = sphi 0, %s189
      %s204 = sphi 0, %s190
      %s208 = sphi 0, %s208
      %s210 = sphi 0, %s208
      %s211 = sphi 0, %s210
      %s225 = sphi 0, %s211
      %s229 = sphi 0, %s229
      %s231 = sphi 0, %s229
      %s232 = sphi 0, %s231
      %s246 = sphi 0, %s232
      %s250 = sphi 0, %s250
      %s252 = sphi 0, %s250
      %s253 = sphi 0, %s252
      %s267 = sphi 0, %s253
      %s271 = sphi 0, %s271
      %s273 = sphi 0, %s271
      %s274 = sphi 0, %s273
      %s288 = sphi 0, %s274
      %s292 = sphi 0, %s292
      %s294 = sphi 0, %s292
      %s295 = sphi 0, %s294
      %s309 = sphi 0, %s295
      %s313 = sphi 0, %s313
      %s315 = sphi 0, %s313
      %s316 = sphi 0, %s315
      %s330 = sphi 0, %s316
      %s334 = sphi 0, %s334
      %s336 = sphi 0, %s334
      %s337 = sphi 0, %s336
      %s351 = sphi 0, %s337
      %s355 = sphi 0, %s355
      %s357 = sphi 0, %s355
      %s358 = sphi 0, %s357
      %s372 = sphi 0, %s358
      %s376 = sphi 0, %s376
      %s378 = sphi 0, %s376
      %s379 = sphi 0, %s378
      %s393 = sphi 0, %s379
      %s397 = sphi 0, %s397
      %s399 = sphi 0, %s397
      %s400 = sphi 0, %s399
      %s414 = sphi 0, %s400
      %s420 = sphi 0, %s422
      %s423 = sphi 0, %s420
      %s424 = sphi 0, %s423
      %s440 = sphi 0, %s424
    $region4: #{basic_tt_forward.1} parent=1 // loop_header_branch
      %30 = sbr.rel (%p28) target = $region8
    $region5: #{basic_tt_forward.1} parent=1 // loop_body
      %s32 = ssub.s32 %s27, 1
      %s33 = ssub.s32 %s27, 2
      %s34 = sadd.s32 %s27, 1
      %s35 = ssub.s32 %s27, %s34
      %p36 = scmp.eq.s32.totalorder %s35, 0
      %s38 = sadd.s32 %s37, 1
      %s39 = scalar_select %p36, %s37, %s38
      %p42 = pneg %p36
      %p43 = scmp.eq.s32.totalorder %s27, 1
      %p44 = por %p42, %p43
      %p45 = scmp.ne.s32.totalorder %s37, %s40
      %p46 = scmp.eq.s32.totalorder %s27, 0
      %p47 = por %p45, %p46
      %p48 = scmp.ne.s32.totalorder %s37, %s40
      %p49 = scmp.eq.s32.totalorder %s32, 1
      %p50 = por %p48, %p49
      %p51 = scmp.ne.s32.totalorder %s40, %s41
      %p52 = scmp.eq.s32.totalorder %s32, 0
      %p53 = por %p51, %p52
      %p54 = scmp.ne.s32.totalorder %s40, %s41
      %p55 = scmp.eq.s32.totalorder %s33, 1
      %p56 = por %p54, %p55
      %p58 = scmp.ne.s32.totalorder %s41, %s57
      %p59 = scmp.eq.s32.totalorder %s33, 0
      %p60 = por %p58, %p59
      %s62 = sadd.s32 %s61, 1
      %p65 = scmp.eq.s32.totalorder %s27, 1
      %p66 = scmp.ne.s32.totalorder %s61, %s63
      %p67 = scmp.eq.s32.totalorder %s27, 0
      %p68 = por %p66, %p67
      %p69 = scmp.ne.s32.totalorder %s61, %s63
      %p70 = scmp.eq.s32.totalorder %s32, 1
      %p71 = por %p69, %p70
      %p72 = scmp.ne.s32.totalorder %s63, %s64
      %p73 = scmp.eq.s32.totalorder %s32, 0
      %p74 = por %p72, %p73
      %p75 = scmp.ne.s32.totalorder %s63, %s64
      %p76 = scmp.eq.s32.totalorder %s33, 1
      %p77 = por %p75, %p76
      %p79 = scmp.ne.s32.totalorder %s64, %s78
      %p80 = scmp.eq.s32.totalorder %s33, 0
      %p81 = por %p79, %p80
      %s83 = sadd.s32 %s82, 1
      %p86 = scmp.eq.s32.totalorder %s27, 1
      %p87 = scmp.ne.s32.totalorder %s82, %s84
      %p88 = scmp.eq.s32.totalorder %s27, 0
      %p89 = por %p87, %p88
      %p90 = scmp.ne.s32.totalorder %s82, %s84
      %p91 = scmp.eq.s32.totalorder %s32, 1
      %p92 = por %p90, %p91
      %p93 = scmp.ne.s32.totalorder %s84, %s85
      %p94 = scmp.eq.s32.totalorder %s32, 0
      %p95 = por %p93, %p94
      %p96 = scmp.ne.s32.totalorder %s84, %s85
      %p97 = scmp.eq.s32.totalorder %s33, 1
      %p98 = por %p96, %p97
      %p100 = scmp.ne.s32.totalorder %s85, %s99
      %p101 = scmp.eq.s32.totalorder %s33, 0
      %p102 = por %p100, %p101
      %s104 = sadd.s32 %s103, 1
      %p107 = scmp.eq.s32.totalorder %s27, 1
      %p108 = scmp.ne.s32.totalorder %s103, %s105
      %p109 = scmp.eq.s32.totalorder %s27, 0
      %p110 = por %p108, %p109
      %p111 = scmp.ne.s32.totalorder %s103, %s105
      %p112 = scmp.eq.s32.totalorder %s32, 1
      %p113 = por %p111, %p112
      %p114 = scmp.ne.s32.totalorder %s105, %s106
      %p115 = scmp.eq.s32.totalorder %s32, 0
      %p116 = por %p114, %p115
      %p117 = scmp.ne.s32.totalorder %s105, %s106
      %p118 = scmp.eq.s32.totalorder %s33, 1
      %p119 = por %p117, %p118
      %p121 = scmp.ne.s32.totalorder %s106, %s120
      %p122 = scmp.eq.s32.totalorder %s33, 0
      %p123 = por %p121, %p122
      %s125 = sadd.s32 %s124, 1
      %p128 = scmp.eq.s32.totalorder %s27, 1
      %p129 = scmp.ne.s32.totalorder %s124, %s126
      %p130 = scmp.eq.s32.totalorder %s27, 0
      %p131 = por %p129, %p130
      %p132 = scmp.ne.s32.totalorder %s124, %s126
      %p133 = scmp.eq.s32.totalorder %s32, 1
      %p134 = por %p132, %p133
      %p135 = scmp.ne.s32.totalorder %s126, %s127
      %p136 = scmp.eq.s32.totalorder %s32, 0
      %p137 = por %p135, %p136
      %p138 = scmp.ne.s32.totalorder %s126, %s127
      %p139 = scmp.eq.s32.totalorder %s33, 1
      %p140 = por %p138, %p139
      %p142 = scmp.ne.s32.totalorder %s127, %s141
      %p143 = scmp.eq.s32.totalorder %s33, 0
      %p144 = por %p142, %p143
      %s146 = sadd.s32 %s145, 1
      %p149 = scmp.eq.s32.totalorder %s27, 1
      %p150 = scmp.ne.s32.totalorder %s145, %s147
      %p151 = scmp.eq.s32.totalorder %s27, 0
      %p152 = por %p150, %p151
      %p153 = scmp.ne.s32.totalorder %s145, %s147
      %p154 = scmp.eq.s32.totalorder %s32, 1
      %p155 = por %p153, %p154
      %p156 = scmp.ne.s32.totalorder %s147, %s148
      %p157 = scmp.eq.s32.totalorder %s32, 0
      %p158 = por %p156, %p157
      %p159 = scmp.ne.s32.totalorder %s147, %s148
      %p160 = scmp.eq.s32.totalorder %s33, 1
      %p161 = por %p159, %p160
      %p163 = scmp.ne.s32.totalorder %s148, %s162
      %p164 = scmp.eq.s32.totalorder %s33, 0
      %p165 = por %p163, %p164
      %s167 = sadd.s32 %s166, 1
      %p170 = scmp.eq.s32.totalorder %s27, 1
      %p171 = scmp.ne.s32.totalorder %s166, %s168
      %p172 = scmp.eq.s32.totalorder %s27, 0
      %p173 = por %p171, %p172
      %p174 = scmp.ne.s32.totalorder %s166, %s168
      %p175 = scmp.eq.s32.totalorder %s32, 1
      %p176 = por %p174, %p175
      %p177 = scmp.ne.s32.totalorder %s168, %s169
      %p178 = scmp.eq.s32.totalorder %s32, 0
      %p179 = por %p177, %p178
      %p180 = scmp.ne.s32.totalorder %s168, %s169
      %p181 = scmp.eq.s32.totalorder %s33, 1
      %p182 = por %p180, %p181
      %p184 = scmp.ne.s32.totalorder %s169, %s183
      %p185 = scmp.eq.s32.totalorder %s33, 0
      %p186 = por %p184, %p185
      %s188 = sadd.s32 %s187, 1
      %p191 = scmp.eq.s32.totalorder %s27, 1
      %p192 = scmp.ne.s32.totalorder %s187, %s189
      %p193 = scmp.eq.s32.totalorder %s27, 0
      %p194 = por %p192, %p193
      %p195 = scmp.ne.s32.totalorder %s187, %s189
      %p196 = scmp.eq.s32.totalorder %s32, 1
      %p197 = por %p195, %p196
      %p198 = scmp.ne.s32.totalorder %s189, %s190
      %p199 = scmp.eq.s32.totalorder %s32, 0
      %p200 = por %p198, %p199
      %p201 = scmp.ne.s32.totalorder %s189, %s190
      %p202 = scmp.eq.s32.totalorder %s33, 1
      %p203 = por %p201, %p202
      %p205 = scmp.ne.s32.totalorder %s190, %s204
      %p206 = scmp.eq.s32.totalorder %s33, 0
      %p207 = por %p205, %p206
      %s209 = sadd.s32 %s208, 1
      %p212 = scmp.eq.s32.totalorder %s27, 1
      %p213 = scmp.ne.s32.totalorder %s208, %s210
      %p214 = scmp.eq.s32.totalorder %s27, 0
      %p215 = por %p213, %p214
      %p216 = scmp.ne.s32.totalorder %s208, %s210
      %p217 = scmp.eq.s32.totalorder %s32, 1
      %p218 = por %p216, %p217
      %p219 = scmp.ne.s32.totalorder %s210, %s211
      %p220 = scmp.eq.s32.totalorder %s32, 0
      %p221 = por %p219, %p220
      %p222 = scmp.ne.s32.totalorder %s210, %s211
      %p223 = scmp.eq.s32.totalorder %s33, 1
      %p224 = por %p222, %p223
      %p226 = scmp.ne.s32.totalorder %s211, %s225
      %p227 = scmp.eq.s32.totalorder %s33, 0
      %p228 = por %p226, %p227
      %s230 = sadd.s32 %s229, 1
      %p233 = scmp.eq.s32.totalorder %s27, 1
      %p234 = scmp.ne.s32.totalorder %s229, %s231
      %p235 = scmp.eq.s32.totalorder %s27, 0
      %p236 = por %p234, %p235
      %p237 = scmp.ne.s32.totalorder %s229, %s231
      %p238 = scmp.eq.s32.totalorder %s32, 1
      %p239 = por %p237, %p238
      %p240 = scmp.ne.s32.totalorder %s231, %s232
      %p241 = scmp.eq.s32.totalorder %s32, 0
      %p242 = por %p240, %p241
      %p243 = scmp.ne.s32.totalorder %s231, %s232
      %p244 = scmp.eq.s32.totalorder %s33, 1
      %p245 = por %p243, %p244
      %p247 = scmp.ne.s32.totalorder %s232, %s246
      %p248 = scmp.eq.s32.totalorder %s33, 0
      %p249 = por %p247, %p248
      %s251 = sadd.s32 %s250, 1
      %p254 = scmp.eq.s32.totalorder %s27, 1
      %p255 = scmp.ne.s32.totalorder %s250, %s252
      %p256 = scmp.eq.s32.totalorder %s27, 0
      %p257 = por %p255, %p256
      %p258 = scmp.ne.s32.totalorder %s250, %s252
      %p259 = scmp.eq.s32.totalorder %s32, 1
      %p260 = por %p258, %p259
      %p261 = scmp.ne.s32.totalorder %s252, %s253
      %p262 = scmp.eq.s32.totalorder %s32, 0
      %p263 = por %p261, %p262
      %p264 = scmp.ne.s32.totalorder %s252, %s253
      %p265 = scmp.eq.s32.totalorder %s33, 1
      %p266 = por %p264, %p265
      %p268 = scmp.ne.s32.totalorder %s253, %s267
      %p269 = scmp.eq.s32.totalorder %s33, 0
      %p270 = por %p268, %p269
      %s272 = sadd.s32 %s271, 1
      %p275 = scmp.eq.s32.totalorder %s27, 1
      %p276 = scmp.ne.s32.totalorder %s271, %s273
      %p277 = scmp.eq.s32.totalorder %s27, 0
      %p278 = por %p276, %p277
      %p279 = scmp.ne.s32.totalorder %s271, %s273
      %p280 = scmp.eq.s32.totalorder %s32, 1
      %p281 = por %p279, %p280
      %p282 = scmp.ne.s32.totalorder %s273, %s274
      %p283 = scmp.eq.s32.totalorder %s32, 0
      %p284 = por %p282, %p283
      %p285 = scmp.ne.s32.totalorder %s273, %s274
      %p286 = scmp.eq.s32.totalorder %s33, 1
      %p287 = por %p285, %p286
      %p289 = scmp.ne.s32.totalorder %s274, %s288
      %p290 = scmp.eq.s32.totalorder %s33, 0
      %p291 = por %p289, %p290
      %s293 = sadd.s32 %s292, 1
      %p296 = scmp.eq.s32.totalorder %s27, 1
      %p297 = scmp.ne.s32.totalorder %s292, %s294
      %p298 = scmp.eq.s32.totalorder %s27, 0
      %p299 = por %p297, %p298
      %p300 = scmp.ne.s32.totalorder %s292, %s294
      %p301 = scmp.eq.s32.totalorder %s32, 1
      %p302 = por %p300, %p301
      %p303 = scmp.ne.s32.totalorder %s294, %s295
      %p304 = scmp.eq.s32.totalorder %s32, 0
      %p305 = por %p303, %p304
      %p306 = scmp.ne.s32.totalorder %s294, %s295
      %p307 = scmp.eq.s32.totalorder %s33, 1
      %p308 = por %p306, %p307
      %p310 = scmp.ne.s32.totalorder %s295, %s309
      %p311 = scmp.eq.s32.totalorder %s33, 0
      %p312 = por %p310, %p311
      %s314 = sadd.s32 %s313, 1
      %p317 = scmp.eq.s32.totalorder %s27, 1
      %p318 = scmp.ne.s32.totalorder %s313, %s315
      %p319 = scmp.eq.s32.totalorder %s27, 0
      %p320 = por %p318, %p319
      %p321 = scmp.ne.s32.totalorder %s313, %s315
      %p322 = scmp.eq.s32.totalorder %s32, 1
      %p323 = por %p321, %p322
      %p324 = scmp.ne.s32.totalorder %s315, %s316
      %p325 = scmp.eq.s32.totalorder %s32, 0
      %p326 = por %p324, %p325
      %p327 = scmp.ne.s32.totalorder %s315, %s316
      %p328 = scmp.eq.s32.totalorder %s33, 1
      %p329 = por %p327, %p328
      %p331 = scmp.ne.s32.totalorder %s316, %s330
      %p332 = scmp.eq.s32.totalorder %s33, 0
      %p333 = por %p331, %p332
      %s335 = sadd.s32 %s334, 1
      %p338 = scmp.eq.s32.totalorder %s27, 1
      %p339 = scmp.ne.s32.totalorder %s334, %s336
      %p340 = scmp.eq.s32.totalorder %s27, 0
      %p341 = por %p339, %p340
      %p342 = scmp.ne.s32.totalorder %s334, %s336
      %p343 = scmp.eq.s32.totalorder %s32, 1
      %p344 = por %p342, %p343
      %p345 = scmp.ne.s32.totalorder %s336, %s337
      %p346 = scmp.eq.s32.totalorder %s32, 0
      %p347 = por %p345, %p346
      %p348 = scmp.ne.s32.totalorder %s336, %s337
      %p349 = scmp.eq.s32.totalorder %s33, 1
      %p350 = por %p348, %p349
      %p352 = scmp.ne.s32.totalorder %s337, %s351
      %p353 = scmp.eq.s32.totalorder %s33, 0
      %p354 = por %p352, %p353
      %s356 = sadd.s32 %s355, 1
      %p359 = scmp.eq.s32.totalorder %s27, 1
      %p360 = scmp.ne.s32.totalorder %s355, %s357
      %p361 = scmp.eq.s32.totalorder %s27, 0
      %p362 = por %p360, %p361
      %p363 = scmp.ne.s32.totalorder %s355, %s357
      %p364 = scmp.eq.s32.totalorder %s32, 1
      %p365 = por %p363, %p364
      %p366 = scmp.ne.s32.totalorder %s357, %s358
      %p367 = scmp.eq.s32.totalorder %s32, 0
      %p368 = por %p366, %p367
      %p369 = scmp.ne.s32.totalorder %s357, %s358
      %p370 = scmp.eq.s32.totalorder %s33, 1
      %p371 = por %p369, %p370
      %p373 = scmp.ne.s32.totalorder %s358, %s372
      %p374 = scmp.eq.s32.totalorder %s33, 0
      %p375 = por %p373, %p374
      %s377 = sadd.s32 %s376, 1
      %p380 = scmp.eq.s32.totalorder %s27, 1
      %p381 = scmp.ne.s32.totalorder %s376, %s378
      %p382 = scmp.eq.s32.totalorder %s27, 0
      %p383 = por %p381, %p382
      %p384 = scmp.ne.s32.totalorder %s376, %s378
      %p385 = scmp.eq.s32.totalorder %s32, 1
      %p386 = por %p384, %p385
      %p387 = scmp.ne.s32.totalorder %s378, %s379
      %p388 = scmp.eq.s32.totalorder %s32, 0
      %p389 = por %p387, %p388
      %p390 = scmp.ne.s32.totalorder %s378, %s379
      %p391 = scmp.eq.s32.totalorder %s33, 1
      %p392 = por %p390, %p391
      %p394 = scmp.ne.s32.totalorder %s379, %s393
      %p395 = scmp.eq.s32.totalorder %s33, 0
      %p396 = por %p394, %p395
      %s398 = sadd.s32 %s397, 1
      %p401 = scmp.eq.s32.totalorder %s27, 1
      %p402 = scmp.ne.s32.totalorder %s397, %s399
      %p403 = scmp.eq.s32.totalorder %s27, 0
      %p404 = por %p402, %p403
      %p405 = scmp.ne.s32.totalorder %s397, %s399
      %p406 = scmp.eq.s32.totalorder %s32, 1
      %p407 = por %p405, %p406
      %p408 = scmp.ne.s32.totalorder %s399, %s400
      %p409 = scmp.eq.s32.totalorder %s32, 0
      %p410 = por %p408, %p409
      %p411 = scmp.ne.s32.totalorder %s399, %s400
      %p412 = scmp.eq.s32.totalorder %s33, 1
      %p413 = por %p411, %p412
      %p415 = scmp.ne.s32.totalorder %s400, %s414
      %p416 = scmp.eq.s32.totalorder %s33, 0
      %p417 = por %p415, %p416
      %s418 = ssub.s32 %s27, %s34
      %p419 = scmp.eq.s32.totalorder %s418, 0
      %s421 = sadd.s32 %s420, 1
      %s422 = scalar_select %p419, %s420, %s421
      %p425 = pneg %p419
      %p426 = scmp.eq.s32.totalorder %s27, 1
      %p427 = por %p425, %p426
      %p428 = scmp.ne.s32.totalorder %s420, %s423
      %p429 = scmp.eq.s32.totalorder %s27, 0
      %p430 = por %p428, %p429
      %p431 = scmp.ne.s32.totalorder %s420, %s423
      %p432 = scmp.eq.s32.totalorder %s32, 1
      %p433 = por %p431, %p432
      %p434 = scmp.ne.s32.totalorder %s423, %s424
      %p435 = scmp.eq.s32.totalorder %s32, 0
      %p436 = por %p434, %p435
      %p437 = scmp.ne.s32.totalorder %s423, %s424
      %p438 = scmp.eq.s32.totalorder %s33, 1
      %p439 = por %p437, %p438
      %p441 = scmp.ne.s32.totalorder %s424, %s440
      %p442 = scmp.eq.s32.totalorder %s33, 0
      %p443 = por %p441, %p442
      %p444 = scmp.le.s32.totalorder 1, %s27
      %p445 = scmp.lt.s32.totalorder %s27, 3
      %p446 = pnand %p444, %p445
      %p447 = pneg %p446
      // Predicated region
      $region9: #{basic_tt_forward.1} parent=5 // pred_check
        _
      $region10: #{basic_tt_forward.1} parent=5 // pred_check_branch
        %449 = sbr.rel (%p446) target = $region12
      $region11: #{basic_tt_forward.1} parent=5 // pred_region
        %s450 = ssub.s32 %s27, 1
        // Predicated region
        $region13: #{basic_tt_forward.1} parent=11 // pred_check
          %p451 = pneg %p74
        $region14: #{basic_tt_forward.1} parent=11 // pred_check_branch
          %453 = sbr.rel (%p451) target = $region16
        $region15: #{basic_tt_forward.1} parent=11 // pred_region
          _
        $region16: #{basic_tt_forward.1} parent=11 // pred_fallthru
          _
        // Predicated region
        $region17: #{basic_tt_forward.1} parent=11 // pred_check
          %p454 = pneg %p95
        $region18: #{basic_tt_forward.1} parent=11 // pred_check_branch
          %456 = sbr.rel (%p454) target = $region20
        $region19: #{basic_tt_forward.1} parent=11 // pred_region
          _
        $region20: #{basic_tt_forward.1} parent=11 // pred_fallthru
          _
        // Predicated region
        $region21: #{basic_tt_forward.1} parent=11 // pred_check
          %p457 = pneg %p116
        $region22: #{basic_tt_forward.1} parent=11 // pred_check_branch
          %459 = sbr.rel (%p457) target = $region24
        $region23: #{basic_tt_forward.1} parent=11 // pred_region
          _
        $region24: #{basic_tt_forward.1} parent=11 // pred_fallthru
          _
        // Predicated region
        $region25: #{basic_tt_forward.1} parent=11 // pred_check
          %p460 = pneg %p137
        $region26: #{basic_tt_forward.1} parent=11 // pred_check_branch
          %462 = sbr.rel (%p460) target = $region28
        $region27: #{basic_tt_forward.1} parent=11 // pred_region
          _
        $region28: #{basic_tt_forward.1} parent=11 // pred_fallthru
          _
        // Predicated region
        $region29: #{basic_tt_forward.1} parent=11 // pred_check
          %p463 = pneg %p158
        $region30: #{basic_tt_forward.1} parent=11 // pred_check_branch
          %465 = sbr.rel (%p463) target = $region32
        $region31: #{basic_tt_forward.1} parent=11 // pred_region
          _
        $region32: #{basic_tt_forward.1} parent=11 // pred_fallthru
          _
        // Predicated region
        $region33: #{basic_tt_forward.1} parent=11 // pred_check
          %p466 = pneg %p179
        $region34: #{basic_tt_forward.1} parent=11 // pred_check_branch
          %468 = sbr.rel (%p466) target = $region36
        $region35: #{basic_tt_forward.1} parent=11 // pred_region
          _
        $region36: #{basic_tt_forward.1} parent=11 // pred_fallthru
          _
        // Predicated region
        $region37: #{basic_tt_forward.1} parent=11 // pred_check
          %p469 = pneg %p200
        $region38: #{basic_tt_forward.1} parent=11 // pred_check_branch
          %471 = sbr.rel (%p469) target = $region40
        $region39: #{basic_tt_forward.1} parent=11 // pred_region
          _
        $region40: #{basic_tt_forward.1} parent=11 // pred_fallthru
          _
        // Predicated region
        $region41: #{basic_tt_forward.1} parent=11 // pred_check
          %p472 = pneg %p221
        $region42: #{basic_tt_forward.1} parent=11 // pred_check_branch
          %474 = sbr.rel (%p472) target = $region44
        $region43: #{basic_tt_forward.1} parent=11 // pred_region
          _
        $region44: #{basic_tt_forward.1} parent=11 // pred_fallthru
          _
        // Predicated region
        $region45: #{basic_tt_forward.1} parent=11 // pred_check
          %p475 = pneg %p242
        $region46: #{basic_tt_forward.1} parent=11 // pred_check_branch
          %477 = sbr.rel (%p475) target = $region48
        $region47: #{basic_tt_forward.1} parent=11 // pred_region
          _
        $region48: #{basic_tt_forward.1} parent=11 // pred_fallthru
          _
        // Predicated region
        $region49: #{basic_tt_forward.1} parent=11 // pred_check
          %p478 = pneg %p263
        $region50: #{basic_tt_forward.1} parent=11 // pred_check_branch
          %480 = sbr.rel (%p478) target = $region52
        $region51: #{basic_tt_forward.1} parent=11 // pred_region
          _
        $region52: #{basic_tt_forward.1} parent=11 // pred_fallthru
          _
        // Predicated region
        $region53: #{basic_tt_forward.1} parent=11 // pred_check
          %p481 = pneg %p284
        $region54: #{basic_tt_forward.1} parent=11 // pred_check_branch
          %483 = sbr.rel (%p481) target = $region56
        $region55: #{basic_tt_forward.1} parent=11 // pred_region
          _
        $region56: #{basic_tt_forward.1} parent=11 // pred_fallthru
          _
        // Predicated region
        $region57: #{basic_tt_forward.1} parent=11 // pred_check
          %p484 = pneg %p305
        $region58: #{basic_tt_forward.1} parent=11 // pred_check_branch
          %486 = sbr.rel (%p484) target = $region60
        $region59: #{basic_tt_forward.1} parent=11 // pred_region
          _
        $region60: #{basic_tt_forward.1} parent=11 // pred_fallthru
          _
        // Predicated region
        $region61: #{basic_tt_forward.1} parent=11 // pred_check
          %p487 = pneg %p326
        $region62: #{basic_tt_forward.1} parent=11 // pred_check_branch
          %489 = sbr.rel (%p487) target = $region64
        $region63: #{basic_tt_forward.1} parent=11 // pred_region
          _
        $region64: #{basic_tt_forward.1} parent=11 // pred_fallthru
          _
        // Predicated region
        $region65: #{basic_tt_forward.1} parent=11 // pred_check
          %p490 = pneg %p347
        $region66: #{basic_tt_forward.1} parent=11 // pred_check_branch
          %492 = sbr.rel (%p490) target = $region68
        $region67: #{basic_tt_forward.1} parent=11 // pred_region
          _
        $region68: #{basic_tt_forward.1} parent=11 // pred_fallthru
          _
        // Predicated region
        $region69: #{basic_tt_forward.1} parent=11 // pred_check
          %p493 = pneg %p368
        $region70: #{basic_tt_forward.1} parent=11 // pred_check_branch
          %495 = sbr.rel (%p493) target = $region72
        $region71: #{basic_tt_forward.1} parent=11 // pred_region
          _
        $region72: #{basic_tt_forward.1} parent=11 // pred_fallthru
          _
        // Predicated region
        $region73: #{basic_tt_forward.1} parent=11 // pred_check
          %p496 = pneg %p389
        $region74: #{basic_tt_forward.1} parent=11 // pred_check_branch
          %498 = sbr.rel (%p496) target = $region76
        $region75: #{basic_tt_forward.1} parent=11 // pred_region
          _
        $region76: #{basic_tt_forward.1} parent=11 // pred_fallthru
          _
        // Predicated region
        $region77: #{basic_tt_forward.1} parent=11 // pred_check
          %p499 = pneg %p410
        $region78: #{basic_tt_forward.1} parent=11 // pred_check_branch
          %501 = sbr.rel (%p499) target = $region80
        $region79: #{basic_tt_forward.1} parent=11 // pred_region
          _
        $region80: #{basic_tt_forward.1} parent=11 // pred_fallthru
          _
      $region12: #{basic_tt_forward.1} parent=5 // pred_fallthru
        _
      %p502 = scmp.lt.s32.totalorder %s27, 2
      // Predicated region
      $region81: #{basic_tt_forward.1} parent=5 // pred_check
        %p503 = pneg %p502
      $region82: #{basic_tt_forward.1} parent=5 // pred_check_branch
        %505 = sbr.rel (%p503) target = $region84
      $region83: #{basic_tt_forward.1} parent=5 // pred_region
        // Predicated region
        $region85: #{basic_tt_forward.1} parent=83 // pred_check
          %p506 = pneg %p47
        $region86: #{basic_tt_forward.1} parent=83 // pred_check_branch
          %508 = sbr.rel (%p506) target = $region88
        $region87: #{basic_tt_forward.1} parent=83 // pred_region
          %p509 = scmp.lt.s32.totalorder %s27, 1
          %s510 = scalar_select %p509, %s27, 1
          %s511 = smul.addr %s510, 24
          %s512 = smul.addr %s511, 8
          %s513 = scalar_lea.vmem %s0, %s512
        $region88: #{basic_tt_forward.1} parent=83 // pred_fallthru
          _
      $region84: #{basic_tt_forward.1} parent=5 // pred_fallthru
        _
      %p514 = scmp.le.s32.totalorder 1, %s27
      %p515 = scmp.lt.s32.totalorder %s27, 3
      %p516 = pnand %p514, %p515
      %p517 = pneg %p516
      // Predicated region
      $region89: #{basic_tt_forward.1} parent=5 // pred_check
        _
      $region90: #{basic_tt_forward.1} parent=5 // pred_check_branch
        %519 = sbr.rel (%p516) target = $region92
      $region91: #{basic_tt_forward.1} parent=5 // pred_region
        %s520 = ssub.s32 %s27, 1
        %p521 = scmp.lt.s32.totalorder %s32, 1
        %s522 = scalar_select %p521, %s32, 1
        %s523 = smul.addr %s522, 24
        %s524 = smul.addr %s523, 8
        %s525 = scalar_lea.vmem %s0, %s524
        %p526 = pneg %p53
        %p527 = pneg %p50
        %p528 = pneg %p74
        %p529 = pneg %p71
        %p530 = pneg %p95
        %p531 = pneg %p92
        %p532 = pneg %p116
        %p533 = pneg %p113
        %p534 = pneg %p137
        %p535 = pneg %p134
        %p536 = pneg %p158
        %p537 = pneg %p155
        %p538 = pneg %p179
        %p539 = pneg %p176
        %p540 = pneg %p200
        %p541 = pneg %p197
        %p542 = pneg %p221
        %p543 = pneg %p218
        %p544 = pneg %p242
        %p545 = pneg %p239
        %p546 = pneg %p263
        %p547 = pneg %p260
        %p548 = pneg %p284
        %p549 = pneg %p281
        %p550 = pneg %p305
        %p551 = pneg %p302
        %p552 = pneg %p326
        %p553 = pneg %p323
        %p554 = pneg %p347
        %p555 = pneg %p344
        %p556 = pneg %p368
        %p557 = pneg %p365
        %p558 = pneg %p389
        %p559 = pneg %p386
        %p560 = pneg %p410
        %p561 = pneg %p407
        %p562 = pneg %p436
        %p563 = pneg %p433
        %s564 = sand.u32 %s423, 1
        %s565 = scalar_lea.sflag [#allocation3], %s564
        %s566 = sand.u32 %s423, 1
        %s567 = scalar_lea.vmem [#allocation2], %s566
        %p568 = scmp.lt.s32.totalorder %s32, 1
        %s569 = scalar_select %p568, %s32, 1
        %s570 = smul.addr %s569, 24
        %s571 = smul.addr %s570, 8
        %s572 = scalar_lea.vmem %s0, %s571
        %v573 = vld [vmem:[%s572] sm:$0xff]
        %v574 = vld [vmem:[%s572 + $0x8] sm:$0xff]
        %v575 = vld [vmem:[%s572 + $0x10] sm:$0xff]
        %v576 = vld [vmem:[%s572 + $0x18] sm:$0xff]
        %v577 = vld [vmem:[%s572 + $0x20] sm:$0xff]
        %v578 = vld [vmem:[%s572 + $0x28] sm:$0xff]
        %v579 = vld [vmem:[%s572 + $0x30] sm:$0xff]
        %v580 = vld [vmem:[%s572 + $0x38] sm:$0xff]
        %v581 = vld [vmem:[%s572 + $0x40] sm:$0xff]
        %v582 = vld [vmem:[%s572 + $0x48] sm:$0xff]
        %v583 = vld [vmem:[%s572 + $0x50] sm:$0xff]
        %v584 = vld [vmem:[%s572 + $0x58] sm:$0xff]
        %v585 = vld [vmem:[%s572 + $0x60] sm:$0xff]
        %v586 = vld [vmem:[%s572 + $0x68] sm:$0xff]
        %v587 = vld [vmem:[%s572 + $0x70] sm:$0xff]
        %v588 = vld [vmem:[%s572 + $0x78] sm:$0xff]
        %v589 = vld [vmem:[%s572 + $0x80] sm:$0xff]
        %v590 = vld [vmem:[%s572 + $0x88] sm:$0xff]
        %v591 = vld [vmem:[%s572 + $0x90] sm:$0xff]
        %v592 = vld [vmem:[%s572 + $0x98] sm:$0xff]
        %v593 = vld [vmem:[%s572 + $0xa0] sm:$0xff]
        %v594 = vld [vmem:[%s572 + $0xa8] sm:$0xff]
        %v595 = vld [vmem:[%s572 + $0xb0] sm:$0xff]
        %v596 = vld [vmem:[%s572 + $0xb8] sm:$0xff]
        %v597 = vld [vmem:[%s2] sm:$0xff]
        %v598 = vld [vmem:[%s2 + $0x8] sm:$0xff]
        %v599 = vld [vmem:[%s2 + $0x10] sm:$0xff]
        %v600 = vld [vmem:[%s2 + $0x18] sm:$0xff]
        %v601 = vld [vmem:[%s2 + $0x20] sm:$0xff]
        %v602 = vld [vmem:[%s2 + $0x28] sm:$0xff]
        %v603 = vld [vmem:[%s2 + $0x30] sm:$0xff]
        %v604 = vld [vmem:[%s2 + $0x38] sm:$0xff]
        %v605 = vld [vmem:[%s2 + $0x40] sm:$0xff]
        %v606 = vld [vmem:[%s2 + $0x48] sm:$0xff]
        %v607 = vld [vmem:[%s2 + $0x50] sm:$0xff]
        %v608 = vld [vmem:[%s2 + $0x58] sm:$0xff]
        %v609 = vld [vmem:[%s2 + $0x60] sm:$0xf]
        %v610 = vld [vmem:[%s1] sm:$0xff]
        %v611 = vld [vmem:[%s1 + $0x8] sm:$0xff]
        %v612 = vld [vmem:[%s1 + $0x10] sm:$0xff]
        %v613 = vld [vmem:[%s1 + $0x18] sm:$0xff]
        %v614 = vld [vmem:[%s1 + $0x20] sm:$0xff]
        %v615 = vld [vmem:[%s1 + $0x28] sm:$0xff]
        %v616 = vld [vmem:[%s1 + $0x30] sm:$0xff]
        %v617 = vld [vmem:[%s1 + $0x38] sm:$0xff]
        %v618 = vld [vmem:[%s1 + $0x40] sm:$0xff]
        %v619 = vld [vmem:[%s1 + $0x48] sm:$0xff]
        %v620 = vld [vmem:[%s1 + $0x50] sm:$0xff]
        %v621 = vld [vmem:[%s1 + $0x58] sm:$0xff]
        %v622 = vld [vmem:[%s1 + $0x60] sm:$0xff]
        %v623 = vld [vmem:[%s1 + $0x68] sm:$0xff]
        %v624 = vld [vmem:[%s1 + $0x70] sm:$0xff]
        %v625 = vld [vmem:[%s1 + $0x78] sm:$0xff]
        %v626 = vld [vmem:[%s1 + $0x80] sm:$0xff]
        %v627 = vld [vmem:[%s1 + $0x88] sm:$0xff]
        %v628 = vld [vmem:[%s1 + $0x90] sm:$0xff]
        %v629 = vld [vmem:[%s1 + $0x98] sm:$0xff]
        %v630 = vld [vmem:[%s1 + $0xa0] sm:$0xff]
        %v631 = vld [vmem:[%s1 + $0xa8] sm:$0xff]
        %v632 = vld [vmem:[%s1 + $0xb0] sm:$0xff]
        %v633 = vld [vmem:[%s1 + $0xb8] sm:$0xff]
        %v634 = vld [vmem:[%s1 + $0xc0] sm:$0xff]
        %v635 = vld [vmem:[%s1 + $0xc8] sm:$0xff]
        %v636 = vld [vmem:[%s1 + $0xd0] sm:$0xff]
        %v637 = vld [vmem:[%s1 + $0xd8] sm:$0xff]
        %v638 = vld [vmem:[%s1 + $0xe0] sm:$0xff]
        %v639 = vld [vmem:[%s1 + $0xe8] sm:$0xff]
        %v640 = vld [vmem:[%s1 + $0xf0] sm:$0xff]
        %v641 = vld [vmem:[%s1 + $0xf8] sm:$0xff]
        %v642 = vld [vmem:[%s1 + $0x100] sm:$0xff]
        %v643 = vld [vmem:[%s1 + $0x108] sm:$0xff]
        %v644 = vld [vmem:[%s1 + $0x110] sm:$0xff]
        %v645 = vld [vmem:[%s1 + $0x118] sm:$0xff]
        %v646 = vld [vmem:[%s1 + $0x120] sm:$0xff]
        %v647 = vld [vmem:[%s1 + $0x128] sm:$0xff]
        %v648 = vld [vmem:[%s1 + $0x130] sm:$0xff]
        %v649 = vld [vmem:[%s1 + $0x138] sm:$0xff]
        %v650 = vld [vmem:[%s1 + $0x140] sm:$0xff]
        %v651 = vld [vmem:[%s1 + $0x148] sm:$0xff]
        %v652 = vld [vmem:[%s1 + $0x150] sm:$0xff]
        %v653 = vld [vmem:[%s1 + $0x158] sm:$0xff]
        %v654 = vld [vmem:[%s1 + $0x160] sm:$0xff]
        %v655 = vld [vmem:[%s1 + $0x168] sm:$0xff]
        %v656 = vld [vmem:[%s1 + $0x170] sm:$0xff]
        %v657 = vld [vmem:[%s1 + $0x178] sm:$0xff]
        %v658 = vld [vmem:[%s1 + $0x180] sm:$0xff]
        %v659 = vld [vmem:[%s1 + $0x188] sm:$0xff]
        %v660 = vld [vmem:[%s1 + $0x190] sm:$0xff]
        %v661 = vld [vmem:[%s1 + $0x198] sm:$0xff]
        %v662 = vld [vmem:[%s1 + $0x1a0] sm:$0xff]
        %v663 = vld [vmem:[%s1 + $0x1a8] sm:$0xff]
        %v664 = vld [vmem:[%s1 + $0x1b0] sm:$0xff]
        %v665 = vld [vmem:[%s1 + $0x1b8] sm:$0xff]
        %v666 = vld [vmem:[%s1 + $0x1c0] sm:$0xff]
        %v667 = vld [vmem:[%s1 + $0x1c8] sm:$0xff]
        %v668 = vld [vmem:[%s1 + $0x1d0] sm:$0xff]
        %v669 = vld [vmem:[%s1 + $0x1d8] sm:$0xff]
        %v670 = vld [vmem:[%s1 + $0x1e0] sm:$0xff]
        %v671 = vld [vmem:[%s1 + $0x1e8] sm:$0xff]
        %v672 = vld [vmem:[%s1 + $0x1f0] sm:$0xff]
        %v673 = vld [vmem:[%s1 + $0x1f8] sm:$0xff]
        %v674 = vld [vmem:[%s1 + $0x200] sm:$0xff]
        %v675 = vld [vmem:[%s1 + $0x208] sm:$0xff]
        %v676 = vld [vmem:[%s1 + $0x210] sm:$0xff]
        %v677 = vld [vmem:[%s1 + $0x218] sm:$0xff]
        %v678 = vld [vmem:[%s1 + $0x220] sm:$0xff]
        %v679 = vld [vmem:[%s1 + $0x228] sm:$0xff]
        %v680 = vld [vmem:[%s1 + $0x230] sm:$0xff]
        %v681 = vld [vmem:[%s1 + $0x238] sm:$0xff]
        %v682 = vld [vmem:[%s1 + $0x240] sm:$0xff]
        %v683 = vld [vmem:[%s1 + $0x248] sm:$0xff]
        %v684 = vld [vmem:[%s1 + $0x250] sm:$0xff]
        %v685 = vld [vmem:[%s1 + $0x258] sm:$0xff]
        %v686 = vld [vmem:[%s1 + $0x260] sm:$0xff]
        %v687 = vld [vmem:[%s1 + $0x268] sm:$0xff]
        %v688 = vld [vmem:[%s1 + $0x270] sm:$0xff]
        %v689 = vld [vmem:[%s1 + $0x278] sm:$0xff]
        %v690 = vld [vmem:[%s1 + $0x280] sm:$0xff]
        %v691 = vld [vmem:[%s1 + $0x288] sm:$0xff]
        %v692 = vld [vmem:[%s1 + $0x290] sm:$0xff]
        %v693 = vld [vmem:[%s1 + $0x298] sm:$0xff]
        %v694 = vld [vmem:[%s1 + $0x2a0] sm:$0xff]
        %v695 = vld [vmem:[%s1 + $0x2a8] sm:$0xff]
        %v696 = vld [vmem:[%s1 + $0x2b0] sm:$0xff]
        %v697 = vld [vmem:[%s1 + $0x2b8] sm:$0xff]
        %v698 = vld [vmem:[%s1 + $0x2c0] sm:$0xff]
        %v699 = vld [vmem:[%s1 + $0x2c8] sm:$0xff]
        %v700 = vld [vmem:[%s1 + $0x2d0] sm:$0xff]
        %v701 = vld [vmem:[%s1 + $0x2d8] sm:$0xff]
        %v702 = vld [vmem:[%s1 + $0x2e0] sm:$0xff]
        %v703 = vld [vmem:[%s1 + $0x2e8] sm:$0xff]
        %v704 = vld [vmem:[%s1 + $0x2f0] sm:$0xff]
        %v705 = vld [vmem:[%s1 + $0x2f8] sm:$0xff]
        %v706 = vld [vmem:[%s1 + $0x300] sm:$0xff]
        %v707 = vld [vmem:[%s1 + $0x308] sm:$0xff]
        %v708 = vld [vmem:[%s1 + $0x310] sm:$0xff]
        %v709 = vld [vmem:[%s1 + $0x318] sm:$0xff]
        %v710 = vld [vmem:[%s1 + $0x320] sm:$0xff]
        %v711 = vld [vmem:[%s1 + $0x328] sm:$0xff]
        %v712 = vld [vmem:[%s1 + $0x330] sm:$0xff]
        %v713 = vld [vmem:[%s1 + $0x338] sm:$0xff]
        %v714 = vld [vmem:[%s1 + $0x340] sm:$0xff]
        %v715 = vld [vmem:[%s1 + $0x348] sm:$0xff]
        %v716 = vld [vmem:[%s1 + $0x350] sm:$0xff]
        %v717 = vld [vmem:[%s1 + $0x358] sm:$0xff]
        %v718 = vld [vmem:[%s1 + $0x360] sm:$0xff]
        %v719 = vld [vmem:[%s1 + $0x368] sm:$0xff]
        %v720 = vld [vmem:[%s1 + $0x370] sm:$0xff]
        %v721 = vld [vmem:[%s1 + $0x378] sm:$0xff]
        %v722 = vld [vmem:[%s1 + $0x380] sm:$0xff]
        %v723 = vld [vmem:[%s1 + $0x388] sm:$0xff]
        %v724 = vld [vmem:[%s1 + $0x390] sm:$0xff]
        %v725 = vld [vmem:[%s1 + $0x398] sm:$0xff]
        %v726 = vld [vmem:[%s1 + $0x3a0] sm:$0xff]
        %v727 = vld [vmem:[%s1 + $0x3a8] sm:$0xff]
        %v728 = vld [vmem:[%s1 + $0x3b0] sm:$0xff]
        %v729 = vld [vmem:[%s1 + $0x3b8] sm:$0xff]
        %v730 = vld [vmem:[%s1 + $0x3c0] sm:$0xff]
        %v731 = vld [vmem:[%s1 + $0x3c8] sm:$0xff]
        %v732 = vld [vmem:[%s1 + $0x3d0] sm:$0xff]
        %v733 = vld [vmem:[%s1 + $0x3d8] sm:$0xff]
        %v734 = vld [vmem:[%s1 + $0x3e0] sm:$0xff]
        %v735 = vld [vmem:[%s1 + $0x3e8] sm:$0xff]
        %v736 = vld [vmem:[%s1 + $0x3f0] sm:$0xff]
        %v737 = vld [vmem:[%s1 + $0x3f8] sm:$0xff]
        %v738 = vld [vmem:[%s1 + $0x400] sm:$0xff]
        %v739 = vld [vmem:[%s1 + $0x408] sm:$0xff]
        %v740 = vld [vmem:[%s1 + $0x410] sm:$0xff]
        %v741 = vld [vmem:[%s1 + $0x418] sm:$0xff]
        %v742 = vld [vmem:[%s1 + $0x420] sm:$0xff]
        %v743 = vld [vmem:[%s1 + $0x428] sm:$0xff]
        %v744 = vld [vmem:[%s1 + $0x430] sm:$0xff]
        %v745 = vld [vmem:[%s1 + $0x438] sm:$0xff]
        %v746 = vld [vmem:[%s1 + $0x440] sm:$0xff]
        %v747 = vld [vmem:[%s1 + $0x448] sm:$0xff]
        %v748 = vld [vmem:[%s1 + $0x450] sm:$0xff]
        %v749 = vld [vmem:[%s1 + $0x458] sm:$0xff]
        %v750 = vld [vmem:[%s1 + $0x460] sm:$0xff]
        %v751 = vld [vmem:[%s1 + $0x468] sm:$0xff]
        %v752 = vld [vmem:[%s1 + $0x470] sm:$0xff]
        %v753 = vld [vmem:[%s1 + $0x478] sm:$0xff]
        %v754 = vld [vmem:[%s1 + $0x480] sm:$0xff]
        %v755 = vld [vmem:[%s1 + $0x488] sm:$0xff]
        %v756 = vld [vmem:[%s1 + $0x490] sm:$0xff]
        %v757 = vld [vmem:[%s1 + $0x498] sm:$0xff]
        %v758 = vld [vmem:[%s1 + $0x4a0] sm:$0xff]
        %v759 = vld [vmem:[%s1 + $0x4a8] sm:$0xff]
        %v760 = vld [vmem:[%s1 + $0x4b0] sm:$0xff]
        %v761 = vld [vmem:[%s1 + $0x4b8] sm:$0xff]
        %v762 = vld [vmem:[%s1 + $0x4c0] sm:$0xff]
        %v763 = vld [vmem:[%s1 + $0x4c8] sm:$0xff]
        %v764 = vld [vmem:[%s1 + $0x4d0] sm:$0xff]
        %v765 = vld [vmem:[%s1 + $0x4d8] sm:$0xff]
        %v766 = vld [vmem:[%s1 + $0x4e0] sm:$0xff]
        %v767 = vld [vmem:[%s1 + $0x4e8] sm:$0xff]
        %v768 = vld [vmem:[%s1 + $0x4f0] sm:$0xff]
        %v769 = vld [vmem:[%s1 + $0x4f8] sm:$0xff]
        %v770 = vld [vmem:[%s1 + $0x500] sm:$0xff]
        %v771 = vld [vmem:[%s1 + $0x508] sm:$0xff]
        %v772 = vld [vmem:[%s1 + $0x510] sm:$0xff]
        %v773 = vld [vmem:[%s1 + $0x518] sm:$0xff]
        %v774 = vld [vmem:[%s1 + $0x520] sm:$0xff]
        %v775 = vld [vmem:[%s1 + $0x528] sm:$0xff]
        %v776 = vld [vmem:[%s1 + $0x530] sm:$0xff]
        %v777 = vld [vmem:[%s1 + $0x538] sm:$0xff]
        %v778 = vld [vmem:[%s1 + $0x540] sm:$0xff]
        %v779 = vld [vmem:[%s1 + $0x548] sm:$0xff]
        %v780 = vld [vmem:[%s1 + $0x550] sm:$0xff]
        %v781 = vld [vmem:[%s1 + $0x558] sm:$0xff]
        %v782 = vld [vmem:[%s1 + $0x560] sm:$0xff]
        %v783 = vld [vmem:[%s1 + $0x568] sm:$0xff]
        %v784 = vld [vmem:[%s1 + $0x570] sm:$0xff]
        %v785 = vld [vmem:[%s1 + $0x578] sm:$0xff]
        %v786 = vld [vmem:[%s1 + $0x580] sm:$0xff]
        %v787 = vld [vmem:[%s1 + $0x588] sm:$0xff]
        %v788 = vld [vmem:[%s1 + $0x590] sm:$0xff]
        %v789 = vld [vmem:[%s1 + $0x598] sm:$0xff]
        %v790 = vld [vmem:[%s1 + $0x5a0] sm:$0xff]
        %v791 = vld [vmem:[%s1 + $0x5a8] sm:$0xff]
        %v792 = vld [vmem:[%s1 + $0x5b0] sm:$0xff]
        %v793 = vld [vmem:[%s1 + $0x5b8] sm:$0xff]
        %v794 = vld [vmem:[%s1 + $0x5c0] sm:$0xff]
        %v795 = vld [vmem:[%s1 + $0x5c8] sm:$0xff]
        %v796 = vld [vmem:[%s1 + $0x5d0] sm:$0xff]
        %v797 = vld [vmem:[%s1 + $0x5d8] sm:$0xff]
        %v798 = vld [vmem:[%s1 + $0x5e0] sm:$0xff]
        %v799 = vld [vmem:[%s1 + $0x5e8] sm:$0xff]
        %v800 = vld [vmem:[%s1 + $0x5f0] sm:$0xff]
        %v801 = vld [vmem:[%s1 + $0x5f8] sm:$0xff]
        %v802 = vld [vmem:[%s1 + $0x600] sm:$0xff]
        %v803 = vld [vmem:[%s1 + $0x608] sm:$0xff]
        %v804 = vld [vmem:[%s1 + $0x610] sm:$0xff]
        %v805 = vld [vmem:[%s1 + $0x618] sm:$0xff]
        %v806 = vld [vmem:[%s1 + $0x620] sm:$0xff]
        %v807 = vld [vmem:[%s1 + $0x628] sm:$0xff]
        %v808 = vld [vmem:[%s1 + $0x630] sm:$0xff]
        %v809 = vld [vmem:[%s1 + $0x638] sm:$0xff]
        %vm810 = vcmask 523264
        %v812 = vsel %vm810, %v597, 0
        %v815 = vsel %vm810, %v598, 0
        %v818 = vsel %vm810, %v599, 0
        %v821 = vsel %vm810, %v600, 0
        %v824 = vsel %vm810, %v601, 0
        %v827 = vsel %vm810, %v602, 0
        %v830 = vsel %vm810, %v603, 0
        %v833 = vsel %vm810, %v604, 0
        %v836 = vsel %vm810, %v605, 0
        %v839 = vsel %vm810, %v606, 0
        %v842 = vsel %vm810, %v607, 0
        %v845 = vsel %vm810, %v608, 0
        %v848 = vsel %vm810, %v609, 0
        %v851 = vsel %vm810, %v573, 0
        %v854 = vsel %vm810, %v574, 0
        %v857 = vsel %vm810, %v575, 0
        %v860 = vsel %vm810, %v576, 0
        %v863 = vsel %vm810, %v577, 0
        %v866 = vsel %vm810, %v578, 0
        %v869 = vsel %vm810, %v579, 0
        %v872 = vsel %vm810, %v580, 0
        %v875 = vsel %vm810, %v581, 0
        %v878 = vsel %vm810, %v582, 0
        %v881 = vsel %vm810, %v583, 0
        %v884 = vsel %vm810, %v584, 0
        %v887 = vsel %vm810, %v585, 0
        %v890 = vsel %vm810, %v586, 0
        %v893 = vsel %vm810, %v587, 0
        %v896 = vsel %vm810, %v588, 0
        %v899 = vsel %vm810, %v589, 0
        %v902 = vsel %vm810, %v590, 0
        %v905 = vsel %vm810, %v591, 0
        %v908 = vsel %vm810, %v592, 0
        %v911 = vsel %vm810, %v593, 0
        %v914 = vsel %vm810, %v594, 0
        %v917 = vsel %vm810, %v595, 0
        %v920 = vsel %vm810, %v596, 0
        %922 = vmatprep.subr.mxu0 0.0
        %923 = vmatpush1.xpose.msra.mxu0 %v896
        %924 = vmatprep.subr.mxu0 0.0
        %925 = vmatpush1.xpose.msra.mxu0 %v893
        %926 = vmatprep.subr.mxu0 0.0
        %927 = vmatpush1.xpose.msra.mxu0 %v890
        %928 = vmatprep.subr.mxu0 0.0
        %929 = vmatpush1.xpose.msra.mxu0 %v887
        %930 = vmatprep.subr.mxu0 0.0
        %931 = vmatpush1.xpose.msra.mxu0 %v884
        %932 = vmatprep.subr.mxu0 0.0
        %933 = vmatpush1.xpose.msra.mxu0 %v881
        %934 = vmatprep.subr.mxu0 0.0
        %935 = vmatpush1.xpose.msra.mxu0 %v878
        %936 = vmatprep.subr.mxu0 0.0
        %937 = vmatpush1.xpose.msra.mxu0 %v875
        %938 = vmatprep.subr.mxu0 0.0
        %939 = vmatpush1.xpose.msra.mxu0 %v872
        %940 = vmatprep.subr.mxu0 0.0
        %941 = vmatpush1.xpose.msra.mxu0 %v869
        %942 = vmatprep.subr.mxu0 0.0
        %943 = vmatpush1.xpose.msra.mxu0 %v866
        %944 = vmatprep.subr.mxu0 0.0
        %945 = vmatpush1.xpose.msra.mxu0 %v863
        %946 = vmatprep.subr.mxu0 0.0
        %947 = vmatpush1.xpose.msra.mxu0 %v860
        %948 = vmatprep.subr.mxu0 0.0
        %949 = vmatpush1.xpose.msra.mxu0 %v857
        %950 = vmatprep.subr.mxu0 0.0
        %951 = vmatpush1.xpose.msra.mxu0 %v854
        %952 = vmatprep.subr.mxu0 0.0
        %953 = vmatpush1.xpose.msra.mxu0 %v851
        %954 = vmatprep.subr.mxu0 0.0
        %955 = vmatpush2.xpose.msra.mxu0 0.0
        %956 = vmatprep.subr.mxu0 0.0
        %957 = vmatpush2.xpose.msra.mxu0 0.0
        %958 = vmatprep.subr.mxu0 0.0
        %959 = vmatpush2.xpose.msra.mxu0 0.0
        %960 = vmatprep.subr.mxu0 0.0
        %961 = vmatpush2.xpose.msra.mxu0 0.0
        %962 = vmatprep.subr.mxu0 0.0
        %963 = vmatpush2.xpose.msra.mxu0 0.0
        %964 = vmatprep.subr.mxu0 0.0
        %965 = vmatpush2.xpose.msra.mxu0 0.0
        %966 = vmatprep.subr.mxu0 0.0
        %967 = vmatpush2.xpose.msra.mxu0 0.0
        %968 = vmatprep.subr.mxu0 0.0
        %969 = vmatpush2.xpose.msra.mxu0 0.0
        %970 = vmatprep.subr.mxu0 0.0
        %971 = vmatpush2.xpose.msra.mxu0 %v920
        %972 = vmatprep.subr.mxu0 0.0
        %973 = vmatpush2.xpose.msra.mxu0 %v917
        %974 = vmatprep.subr.mxu0 0.0
        %975 = vmatpush2.xpose.msra.mxu0 %v914
        %976 = vmatprep.subr.mxu0 0.0
        %977 = vmatpush2.xpose.msra.mxu0 %v911
        %978 = vmatprep.subr.mxu0 0.0
        %979 = vmatpush2.xpose.msra.mxu0 %v908
        %980 = vmatprep.subr.mxu0 0.0
        %981 = vmatpush2.xpose.msra.mxu0 %v905
        %982 = vmatprep.subr.mxu0 0.0
        %983 = vmatpush2.xpose.msra.mxu0 %v902
        %984 = vmatprep.subr.mxu0 0.0
        %985 = vmatpush2.xpose.msra.mxu0 %v899
        %986 = vmatprep.mubr.f32.mxu0 0.0
        %987 = vmatmul.mubr.f32.gmra.mxu0 %v812
        %v988 = vpop.f32.mrf.mxu0
        %v989 = vadd.f32 0.0, %v988
        %v990 = vpop.f32.mrf.mxu0
        %v991 = vadd.f32 0.0, %v990
        %992 = vmatprep.mubr.f32.mxu0 0.0
        %993 = vmatmul.mubr.f32.gmra.mxu0 %v815
        %v994 = vpop.f32.mrf.mxu0
        %v995 = vadd.f32 0.0, %v994
        %v996 = vpop.f32.mrf.mxu0
        %v997 = vadd.f32 0.0, %v996
        %998 = vmatprep.mubr.f32.mxu0 0.0
        %999 = vmatmul.mubr.f32.gmra.mxu0 %v818
        %v1000 = vpop.f32.mrf.mxu0
        %v1001 = vadd.f32 0.0, %v1000
        %v1002 = vpop.f32.mrf.mxu0
        %v1003 = vadd.f32 0.0, %v1002
        %1004 = vmatprep.mubr.f32.mxu0 0.0
        %1005 = vmatmul.mubr.f32.gmra.mxu0 %v821
        %v1006 = vpop.f32.mrf.mxu0
        %v1007 = vadd.f32 0.0, %v1006
        %v1008 = vpop.f32.mrf.mxu0
        %v1009 = vadd.f32 0.0, %v1008
        %1010 = vmatprep.mubr.f32.mxu0 0.0
        %1011 = vmatmul.mubr.f32.gmra.mxu0 %v824
        %v1012 = vpop.f32.mrf.mxu0
        %v1013 = vadd.f32 0.0, %v1012
        %v1014 = vpop.f32.mrf.mxu0
        %v1015 = vadd.f32 0.0, %v1014
        %1016 = vmatprep.mubr.f32.mxu0 0.0
        %1017 = vmatmul.mubr.f32.gmra.mxu0 %v827
        %v1018 = vpop.f32.mrf.mxu0
        %v1019 = vadd.f32 0.0, %v1018
        %v1020 = vpop.f32.mrf.mxu0
        %v1021 = vadd.f32 0.0, %v1020
        %1022 = vmatprep.mubr.f32.mxu0 0.0
        %1023 = vmatmul.mubr.f32.gmra.mxu0 %v830
        %v1024 = vpop.f32.mrf.mxu0
        %v1025 = vadd.f32 0.0, %v1024
        %v1026 = vpop.f32.mrf.mxu0
        %v1027 = vadd.f32 0.0, %v1026
        %1028 = vmatprep.mubr.f32.mxu0 0.0
        %1029 = vmatmul.mubr.f32.gmra.mxu0 %v833
        %v1030 = vpop.f32.mrf.mxu0
        %v1031 = vadd.f32 0.0, %v1030
        %v1032 = vpop.f32.mrf.mxu0
        %v1033 = vadd.f32 0.0, %v1032
        %1034 = vmatprep.mubr.f32.mxu0 0.0
        %1035 = vmatmul.mubr.f32.gmra.mxu0 %v836
        %v1036 = vpop.f32.mrf.mxu0
        %v1037 = vadd.f32 0.0, %v1036
        %v1038 = vpop.f32.mrf.mxu0
        %v1039 = vadd.f32 0.0, %v1038
        %1040 = vmatprep.mubr.f32.mxu0 0.0
        %1041 = vmatmul.mubr.f32.gmra.mxu0 %v839
        %v1042 = vpop.f32.mrf.mxu0
        %v1043 = vadd.f32 0.0, %v1042
        %v1044 = vpop.f32.mrf.mxu0
        %v1045 = vadd.f32 0.0, %v1044
        %1046 = vmatprep.mubr.f32.mxu0 0.0
        %1047 = vmatmul.mubr.f32.gmra.mxu0 %v842
        %v1048 = vpop.f32.mrf.mxu0
        %v1049 = vadd.f32 0.0, %v1048
        %v1050 = vpop.f32.mrf.mxu0
        %v1051 = vadd.f32 0.0, %v1050
        %1052 = vmatprep.mubr.f32.mxu0 0.0
        %1053 = vmatmul.mubr.f32.gmra.mxu0 %v845
        %v1054 = vpop.f32.mrf.mxu0
        %v1055 = vadd.f32 0.0, %v1054
        %v1056 = vpop.f32.mrf.mxu0
        %v1057 = vadd.f32 0.0, %v1056
        %1058 = vmatprep.mubr.f32.mxu0 0.0
        %1059 = vmatmul.mubr.f32.gmra.mxu0 %v848
        %v1060 = vpop.f32.mrf.mxu0
        %v1061 = vadd.f32 0.0, %v1060
        %v1062 = vpop.f32.mrf.mxu0
        %v1063 = vadd.f32 0.0, %v1062
        %1064 = vdwg.mxu0
        %s1065 = scalar_lea.vmem %s2, 104
        %v1066 = vld [vmem:[%s1065] sm:$0xff]
        %v1067 = vld [vmem:[%s1065 + $0x8] sm:$0xff]
        %v1068 = vld [vmem:[%s1065 + $0x10] sm:$0xff]
        %v1069 = vld [vmem:[%s1065 + $0x18] sm:$0xff]
        %v1070 = vld [vmem:[%s1065 + $0x20] sm:$0xff]
        %v1071 = vld [vmem:[%s1065 + $0x28] sm:$0xff]
        %v1072 = vld [vmem:[%s1065 + $0x30] sm:$0xff]
        %v1073 = vld [vmem:[%s1065 + $0x38] sm:$0xff]
        %v1074 = vld [vmem:[%s1065 + $0x40] sm:$0xff]
        %v1075 = vld [vmem:[%s1065 + $0x48] sm:$0xff]
        %v1076 = vld [vmem:[%s1065 + $0x50] sm:$0xff]
        %v1077 = vld [vmem:[%s1065 + $0x58] sm:$0xff]
        %v1078 = vld [vmem:[%s1065 + $0x60] sm:$0xf]
        %s1079 = scalar_lea.vmem %s1, 1600
        %v1080 = vld [vmem:[%s1079] sm:$0xff]
        %v1081 = vld [vmem:[%s1079 + $0x8] sm:$0xff]
        %v1082 = vld [vmem:[%s1079 + $0x10] sm:$0xff]
        %v1083 = vld [vmem:[%s1079 + $0x18] sm:$0xff]
        %v1084 = vld [vmem:[%s1079 + $0x20] sm:$0xff]
        %v1085 = vld [vmem:[%s1079 + $0x28] sm:$0xff]
        %v1086 = vld [vmem:[%s1079 + $0x30] sm:$0xff]
        %v1087 = vld [vmem:[%s1079 + $0x38] sm:$0xff]
        %v1088 = vld [vmem:[%s1079 + $0x40] sm:$0xff]
        %v1089 = vld [vmem:[%s1079 + $0x48] sm:$0xff]
        %v1090 = vld [vmem:[%s1079 + $0x50] sm:$0xff]
        %v1091 = vld [vmem:[%s1079 + $0x58] sm:$0xff]
        %v1092 = vld [vmem:[%s1079 + $0x60] sm:$0xff]
        %v1093 = vld [vmem:[%s1079 + $0x68] sm:$0xff]
        %v1094 = vld [vmem:[%s1079 + $0x70] sm:$0xff]
        %v1095 = vld [vmem:[%s1079 + $0x78] sm:$0xff]
        %v1096 = vld [vmem:[%s1079 + $0x80] sm:$0xff]
        %v1097 = vld [vmem:[%s1079 + $0x88] sm:$0xff]
        %v1098 = vld [vmem:[%s1079 + $0x90] sm:$0xff]
        %v1099 = vld [vmem:[%s1079 + $0x98] sm:$0xff]
        %v1100 = vld [vmem:[%s1079 + $0xa0] sm:$0xff]
        %v1101 = vld [vmem:[%s1079 + $0xa8] sm:$0xff]
        %v1102 = vld [vmem:[%s1079 + $0xb0] sm:$0xff]
        %v1103 = vld [vmem:[%s1079 + $0xb8] sm:$0xff]
        %v1104 = vld [vmem:[%s1079 + $0xc0] sm:$0xff]
        %v1105 = vld [vmem:[%s1079 + $0xc8] sm:$0xff]
        %v1106 = vld [vmem:[%s1079 + $0xd0] sm:$0xff]
        %v1107 = vld [vmem:[%s1079 + $0xd8] sm:$0xff]
        %v1108 = vld [vmem:[%s1079 + $0xe0] sm:$0xff]
        %v1109 = vld [vmem:[%s1079 + $0xe8] sm:$0xff]
        %v1110 = vld [vmem:[%s1079 + $0xf0] sm:$0xff]
        %v1111 = vld [vmem:[%s1079 + $0xf8] sm:$0xff]
        %v1112 = vld [vmem:[%s1079 + $0x100] sm:$0xff]
        %v1113 = vld [vmem:[%s1079 + $0x108] sm:$0xff]
        %v1114 = vld [vmem:[%s1079 + $0x110] sm:$0xff]
        %v1115 = vld [vmem:[%s1079 + $0x118] sm:$0xff]
        %v1116 = vld [vmem:[%s1079 + $0x120] sm:$0xff]
        %v1117 = vld [vmem:[%s1079 + $0x128] sm:$0xff]
        %v1118 = vld [vmem:[%s1079 + $0x130] sm:$0xff]
        %v1119 = vld [vmem:[%s1079 + $0x138] sm:$0xff]
        %v1120 = vld [vmem:[%s1079 + $0x140] sm:$0xff]
        %v1121 = vld [vmem:[%s1079 + $0x148] sm:$0xff]
        %v1122 = vld [vmem:[%s1079 + $0x150] sm:$0xff]
        %v1123 = vld [vmem:[%s1079 + $0x158] sm:$0xff]
        %v1124 = vld [vmem:[%s1079 + $0x160] sm:$0xff]
        %v1125 = vld [vmem:[%s1079 + $0x168] sm:$0xff]
        %v1126 = vld [vmem:[%s1079 + $0x170] sm:$0xff]
        %v1127 = vld [vmem:[%s1079 + $0x178] sm:$0xff]
        %v1128 = vld [vmem:[%s1079 + $0x180] sm:$0xff]
        %v1129 = vld [vmem:[%s1079 + $0x188] sm:$0xff]
        %v1130 = vld [vmem:[%s1079 + $0x190] sm:$0xff]
        %v1131 = vld [vmem:[%s1079 + $0x198] sm:$0xff]
        %v1132 = vld [vmem:[%s1079 + $0x1a0] sm:$0xff]
        %v1133 = vld [vmem:[%s1079 + $0x1a8] sm:$0xff]
        %v1134 = vld [vmem:[%s1079 + $0x1b0] sm:$0xff]
        %v1135 = vld [vmem:[%s1079 + $0x1b8] sm:$0xff]
        %v1136 = vld [vmem:[%s1079 + $0x1c0] sm:$0xff]
        %v1137 = vld [vmem:[%s1079 + $0x1c8] sm:$0xff]
        %v1138 = vld [vmem:[%s1079 + $0x1d0] sm:$0xff]
        %v1139 = vld [vmem:[%s1079 + $0x1d8] sm:$0xff]
        %v1140 = vld [vmem:[%s1079 + $0x1e0] sm:$0xff]
        %v1141 = vld [vmem:[%s1079 + $0x1e8] sm:$0xff]
        %v1142 = vld [vmem:[%s1079 + $0x1f0] sm:$0xff]
        %v1143 = vld [vmem:[%s1079 + $0x1f8] sm:$0xff]
        %v1144 = vld [vmem:[%s1079 + $0x200] sm:$0xff]
        %v1145 = vld [vmem:[%s1079 + $0x208] sm:$0xff]
        %v1146 = vld [vmem:[%s1079 + $0x210] sm:$0xff]
        %v1147 = vld [vmem:[%s1079 + $0x218] sm:$0xff]
        %v1148 = vld [vmem:[%s1079 + $0x220] sm:$0xff]
        %v1149 = vld [vmem:[%s1079 + $0x228] sm:$0xff]
        %v1150 = vld [vmem:[%s1079 + $0x230] sm:$0xff]
        %v1151 = vld [vmem:[%s1079 + $0x238] sm:$0xff]
        %v1152 = vld [vmem:[%s1079 + $0x240] sm:$0xff]
        %v1153 = vld [vmem:[%s1079 + $0x248] sm:$0xff]
        %v1154 = vld [vmem:[%s1079 + $0x250] sm:$0xff]
        %v1155 = vld [vmem:[%s1079 + $0x258] sm:$0xff]
        %v1156 = vld [vmem:[%s1079 + $0x260] sm:$0xff]
        %v1157 = vld [vmem:[%s1079 + $0x268] sm:$0xff]
        %v1158 = vld [vmem:[%s1079 + $0x270] sm:$0xff]
        %v1159 = vld [vmem:[%s1079 + $0x278] sm:$0xff]
        %v1160 = vld [vmem:[%s1079 + $0x280] sm:$0xff]
        %v1161 = vld [vmem:[%s1079 + $0x288] sm:$0xff]
        %v1162 = vld [vmem:[%s1079 + $0x290] sm:$0xff]
        %v1163 = vld [vmem:[%s1079 + $0x298] sm:$0xff]
        %v1164 = vld [vmem:[%s1079 + $0x2a0] sm:$0xff]
        %v1165 = vld [vmem:[%s1079 + $0x2a8] sm:$0xff]
        %v1166 = vld [vmem:[%s1079 + $0x2b0] sm:$0xff]
        %v1167 = vld [vmem:[%s1079 + $0x2b8] sm:$0xff]
        %v1168 = vld [vmem:[%s1079 + $0x2c0] sm:$0xff]
        %v1169 = vld [vmem:[%s1079 + $0x2c8] sm:$0xff]
        %v1170 = vld [vmem:[%s1079 + $0x2d0] sm:$0xff]
        %v1171 = vld [vmem:[%s1079 + $0x2d8] sm:$0xff]
        %v1172 = vld [vmem:[%s1079 + $0x2e0] sm:$0xff]
        %v1173 = vld [vmem:[%s1079 + $0x2e8] sm:$0xff]
        %v1174 = vld [vmem:[%s1079 + $0x2f0] sm:$0xff]
        %v1175 = vld [vmem:[%s1079 + $0x2f8] sm:$0xff]
        %v1176 = vld [vmem:[%s1079 + $0x300] sm:$0xff]
        %v1177 = vld [vmem:[%s1079 + $0x308] sm:$0xff]
        %v1178 = vld [vmem:[%s1079 + $0x310] sm:$0xff]
        %v1179 = vld [vmem:[%s1079 + $0x318] sm:$0xff]
        %v1180 = vld [vmem:[%s1079 + $0x320] sm:$0xff]
        %v1181 = vld [vmem:[%s1079 + $0x328] sm:$0xff]
        %v1182 = vld [vmem:[%s1079 + $0x330] sm:$0xff]
        %v1183 = vld [vmem:[%s1079 + $0x338] sm:$0xff]
        %v1184 = vld [vmem:[%s1079 + $0x340] sm:$0xff]
        %v1185 = vld [vmem:[%s1079 + $0x348] sm:$0xff]
        %v1186 = vld [vmem:[%s1079 + $0x350] sm:$0xff]
        %v1187 = vld [vmem:[%s1079 + $0x358] sm:$0xff]
        %v1188 = vld [vmem:[%s1079 + $0x360] sm:$0xff]
        %v1189 = vld [vmem:[%s1079 + $0x368] sm:$0xff]
        %v1190 = vld [vmem:[%s1079 + $0x370] sm:$0xff]
        %v1191 = vld [vmem:[%s1079 + $0x378] sm:$0xff]
        %v1192 = vld [vmem:[%s1079 + $0x380] sm:$0xff]
        %v1193 = vld [vmem:[%s1079 + $0x388] sm:$0xff]
        %v1194 = vld [vmem:[%s1079 + $0x390] sm:$0xff]
        %v1195 = vld [vmem:[%s1079 + $0x398] sm:$0xff]
        %v1196 = vld [vmem:[%s1079 + $0x3a0] sm:$0xff]
        %v1197 = vld [vmem:[%s1079 + $0x3a8] sm:$0xff]
        %v1198 = vld [vmem:[%s1079 + $0x3b0] sm:$0xff]
        %v1199 = vld [vmem:[%s1079 + $0x3b8] sm:$0xff]
        %v1200 = vld [vmem:[%s1079 + $0x3c0] sm:$0xff]
        %v1201 = vld [vmem:[%s1079 + $0x3c8] sm:$0xff]
        %v1202 = vld [vmem:[%s1079 + $0x3d0] sm:$0xff]
        %v1203 = vld [vmem:[%s1079 + $0x3d8] sm:$0xff]
        %v1204 = vld [vmem:[%s1079 + $0x3e0] sm:$0xff]
        %v1205 = vld [vmem:[%s1079 + $0x3e8] sm:$0xff]
        %v1206 = vld [vmem:[%s1079 + $0x3f0] sm:$0xff]
        %v1207 = vld [vmem:[%s1079 + $0x3f8] sm:$0xff]
        %v1208 = vld [vmem:[%s1079 + $0x400] sm:$0xff]
        %v1209 = vld [vmem:[%s1079 + $0x408] sm:$0xff]
        %v1210 = vld [vmem:[%s1079 + $0x410] sm:$0xff]
        %v1211 = vld [vmem:[%s1079 + $0x418] sm:$0xff]
        %v1212 = vld [vmem:[%s1079 + $0x420] sm:$0xff]
        %v1213 = vld [vmem:[%s1079 + $0x428] sm:$0xff]
        %v1214 = vld [vmem:[%s1079 + $0x430] sm:$0xff]
        %v1215 = vld [vmem:[%s1079 + $0x438] sm:$0xff]
        %v1216 = vld [vmem:[%s1079 + $0x440] sm:$0xff]
        %v1217 = vld [vmem:[%s1079 + $0x448] sm:$0xff]
        %v1218 = vld [vmem:[%s1079 + $0x450] sm:$0xff]
        %v1219 = vld [vmem:[%s1079 + $0x458] sm:$0xff]
        %v1220 = vld [vmem:[%s1079 + $0x460] sm:$0xff]
        %v1221 = vld [vmem:[%s1079 + $0x468] sm:$0xff]
        %v1222 = vld [vmem:[%s1079 + $0x470] sm:$0xff]
        %v1223 = vld [vmem:[%s1079 + $0x478] sm:$0xff]
        %v1224 = vld [vmem:[%s1079 + $0x480] sm:$0xff]
        %v1225 = vld [vmem:[%s1079 + $0x488] sm:$0xff]
        %v1226 = vld [vmem:[%s1079 + $0x490] sm:$0xff]
        %v1227 = vld [vmem:[%s1079 + $0x498] sm:$0xff]
        %v1228 = vld [vmem:[%s1079 + $0x4a0] sm:$0xff]
        %v1229 = vld [vmem:[%s1079 + $0x4a8] sm:$0xff]
        %v1230 = vld [vmem:[%s1079 + $0x4b0] sm:$0xff]
        %v1231 = vld [vmem:[%s1079 + $0x4b8] sm:$0xff]
        %v1232 = vld [vmem:[%s1079 + $0x4c0] sm:$0xff]
        %v1233 = vld [vmem:[%s1079 + $0x4c8] sm:$0xff]
        %v1234 = vld [vmem:[%s1079 + $0x4d0] sm:$0xff]
        %v1235 = vld [vmem:[%s1079 + $0x4d8] sm:$0xff]
        %v1236 = vld [vmem:[%s1079 + $0x4e0] sm:$0xff]
        %v1237 = vld [vmem:[%s1079 + $0x4e8] sm:$0xff]
        %v1238 = vld [vmem:[%s1079 + $0x4f0] sm:$0xff]
        %v1239 = vld [vmem:[%s1079 + $0x4f8] sm:$0xff]
        %v1240 = vld [vmem:[%s1079 + $0x500] sm:$0xff]
        %v1241 = vld [vmem:[%s1079 + $0x508] sm:$0xff]
        %v1242 = vld [vmem:[%s1079 + $0x510] sm:$0xff]
        %v1243 = vld [vmem:[%s1079 + $0x518] sm:$0xff]
        %v1244 = vld [vmem:[%s1079 + $0x520] sm:$0xff]
        %v1245 = vld [vmem:[%s1079 + $0x528] sm:$0xff]
        %v1246 = vld [vmem:[%s1079 + $0x530] sm:$0xff]
        %v1247 = vld [vmem:[%s1079 + $0x538] sm:$0xff]
        %v1248 = vld [vmem:[%s1079 + $0x540] sm:$0xff]
        %v1249 = vld [vmem:[%s1079 + $0x548] sm:$0xff]
        %v1250 = vld [vmem:[%s1079 + $0x550] sm:$0xff]
        %v1251 = vld [vmem:[%s1079 + $0x558] sm:$0xff]
        %v1252 = vld [vmem:[%s1079 + $0x560] sm:$0xff]
        %v1253 = vld [vmem:[%s1079 + $0x568] sm:$0xff]
        %v1254 = vld [vmem:[%s1079 + $0x570] sm:$0xff]
        %v1255 = vld [vmem:[%s1079 + $0x578] sm:$0xff]
        %v1256 = vld [vmem:[%s1079 + $0x580] sm:$0xff]
        %v1257 = vld [vmem:[%s1079 + $0x588] sm:$0xff]
        %v1258 = vld [vmem:[%s1079 + $0x590] sm:$0xff]
        %v1259 = vld [vmem:[%s1079 + $0x598] sm:$0xff]
        %v1260 = vld [vmem:[%s1079 + $0x5a0] sm:$0xff]
        %v1261 = vld [vmem:[%s1079 + $0x5a8] sm:$0xff]
        %v1262 = vld [vmem:[%s1079 + $0x5b0] sm:$0xff]
        %v1263 = vld [vmem:[%s1079 + $0x5b8] sm:$0xff]
        %v1264 = vld [vmem:[%s1079 + $0x5c0] sm:$0xff]
        %v1265 = vld [vmem:[%s1079 + $0x5c8] sm:$0xff]
        %v1266 = vld [vmem:[%s1079 + $0x5d0] sm:$0xff]
        %v1267 = vld [vmem:[%s1079 + $0x5d8] sm:$0xff]
        %v1268 = vld [vmem:[%s1079 + $0x5e0] sm:$0xff]
        %v1269 = vld [vmem:[%s1079 + $0x5e8] sm:$0xff]
        %v1270 = vld [vmem:[%s1079 + $0x5f0] sm:$0xff]
        %v1271 = vld [vmem:[%s1079 + $0x5f8] sm:$0xff]
        %v1272 = vld [vmem:[%s1079 + $0x600] sm:$0xff]
        %v1273 = vld [vmem:[%s1079 + $0x608] sm:$0xff]
        %v1274 = vld [vmem:[%s1079 + $0x610] sm:$0xff]
        %v1275 = vld [vmem:[%s1079 + $0x618] sm:$0xff]
        %v1276 = vld [vmem:[%s1079 + $0x620] sm:$0xff]
        %v1277 = vld [vmem:[%s1079 + $0x628] sm:$0xff]
        %v1278 = vld [vmem:[%s1079 + $0x630] sm:$0xff]
        %v1279 = vld [vmem:[%s1079 + $0x638] sm:$0xff]
        %v1281 = vsel %vm810, %v1066, 0
        %v1284 = vsel %vm810, %v1067, 0
        %v1287 = vsel %vm810, %v1068, 0
        %v1290 = vsel %vm810, %v1069, 0
        %v1293 = vsel %vm810, %v1070, 0
        %v1296 = vsel %vm810, %v1071, 0
        %v1299 = vsel %vm810, %v1072, 0
        %v1302 = vsel %vm810, %v1073, 0
        %v1305 = vsel %vm810, %v1074, 0
        %v1308 = vsel %vm810, %v1075, 0
        %v1311 = vsel %vm810, %v1076, 0
        %v1314 = vsel %vm810, %v1077, 0
        %v1317 = vsel %vm810, %v1078, 0
        %1319 = vmatprep.subr.mxu0 0.0
        %1320 = vmatpush1.xpose.msra.mxu0 %v896
        %1321 = vmatprep.subr.mxu0 0.0
        %1322 = vmatpush1.xpose.msra.mxu0 %v893
        %1323 = vmatprep.subr.mxu0 0.0
        %1324 = vmatpush1.xpose.msra.mxu0 %v890
        %1325 = vmatprep.subr.mxu0 0.0
        %1326 = vmatpush1.xpose.msra.mxu0 %v887
        %1327 = vmatprep.subr.mxu0 0.0
        %1328 = vmatpush1.xpose.msra.mxu0 %v884
        %1329 = vmatprep.subr.mxu0 0.0
        %1330 = vmatpush1.xpose.msra.mxu0 %v881
        %1331 = vmatprep.subr.mxu0 0.0
        %1332 = vmatpush1.xpose.msra.mxu0 %v878
        %1333 = vmatprep.subr.mxu0 0.0
        %1334 = vmatpush1.xpose.msra.mxu0 %v875
        %1335 = vmatprep.subr.mxu0 0.0
        %1336 = vmatpush1.xpose.msra.mxu0 %v872
        %1337 = vmatprep.subr.mxu0 0.0
        %1338 = vmatpush1.xpose.msra.mxu0 %v869
        %1339 = vmatprep.subr.mxu0 0.0
        %1340 = vmatpush1.xpose.msra.mxu0 %v866
        %1341 = vmatprep.subr.mxu0 0.0
        %1342 = vmatpush1.xpose.msra.mxu0 %v863
        %1343 = vmatprep.subr.mxu0 0.0
        %1344 = vmatpush1.xpose.msra.mxu0 %v860
        %1345 = vmatprep.subr.mxu0 0.0
        %1346 = vmatpush1.xpose.msra.mxu0 %v857
        %1347 = vmatprep.subr.mxu0 0.0
        %1348 = vmatpush1.xpose.msra.mxu0 %v854
        %1349 = vmatprep.subr.mxu0 0.0
        %1350 = vmatpush1.xpose.msra.mxu0 %v851
        %1351 = vmatprep.subr.mxu0 0.0
        %1352 = vmatpush2.xpose.msra.mxu0 0.0
        %1353 = vmatprep.subr.mxu0 0.0
        %1354 = vmatpush2.xpose.msra.mxu0 0.0
        %1355 = vmatprep.subr.mxu0 0.0
        %1356 = vmatpush2.xpose.msra.mxu0 0.0
        %1357 = vmatprep.subr.mxu0 0.0
        %1358 = vmatpush2.xpose.msra.mxu0 0.0
        %1359 = vmatprep.subr.mxu0 0.0
        %1360 = vmatpush2.xpose.msra.mxu0 0.0
        %1361 = vmatprep.subr.mxu0 0.0
        %1362 = vmatpush2.xpose.msra.mxu0 0.0
        %1363 = vmatprep.subr.mxu0 0.0
        %1364 = vmatpush2.xpose.msra.mxu0 0.0
        %1365 = vmatprep.subr.mxu0 0.0
        %1366 = vmatpush2.xpose.msra.mxu0 0.0
        %1367 = vmatprep.subr.mxu0 0.0
        %1368 = vmatpush2.xpose.msra.mxu0 %v920
        %1369 = vmatprep.subr.mxu0 0.0
        %1370 = vmatpush2.xpose.msra.mxu0 %v917
        %1371 = vmatprep.subr.mxu0 0.0
        %1372 = vmatpush2.xpose.msra.mxu0 %v914
        %1373 = vmatprep.subr.mxu0 0.0
        %1374 = vmatpush2.xpose.msra.mxu0 %v911
        %1375 = vmatprep.subr.mxu0 0.0
        %1376 = vmatpush2.xpose.msra.mxu0 %v908
        %1377 = vmatprep.subr.mxu0 0.0
        %1378 = vmatpush2.xpose.msra.mxu0 %v905
        %1379 = vmatprep.subr.mxu0 0.0
        %1380 = vmatpush2.xpose.msra.mxu0 %v902
        %1381 = vmatprep.subr.mxu0 0.0
        %1382 = vmatpush2.xpose.msra.mxu0 %v899
        %1383 = vmatprep.mubr.f32.mxu0 0.0
        %1384 = vmatmul.mubr.f32.gmra.mxu0 %v1281
        %v1385 = vpop.f32.mrf.mxu0
        %v1386 = vadd.f32 0.0, %v1385
        %v1387 = vpop.f32.mrf.mxu0
        %v1388 = vadd.f32 0.0, %v1387
        %1389 = vmatprep.mubr.f32.mxu0 0.0
        %1390 = vmatmul.mubr.f32.gmra.mxu0 %v1284
        %v1391 = vpop.f32.mrf.mxu0
        %v1392 = vadd.f32 0.0, %v1391
        %v1393 = vpop.f32.mrf.mxu0
        %v1394 = vadd.f32 0.0, %v1393
        %1395 = vmatprep.mubr.f32.mxu0 0.0
        %1396 = vmatmul.mubr.f32.gmra.mxu0 %v1287
        %v1397 = vpop.f32.mrf.mxu0
        %v1398 = vadd.f32 0.0, %v1397
        %v1399 = vpop.f32.mrf.mxu0
        %v1400 = vadd.f32 0.0, %v1399
        %1401 = vmatprep.mubr.f32.mxu0 0.0
        %1402 = vmatmul.mubr.f32.gmra.mxu0 %v1290
        %v1403 = vpop.f32.mrf.mxu0
        %v1404 = vadd.f32 0.0, %v1403
        %v1405 = vpop.f32.mrf.mxu0
        %v1406 = vadd.f32 0.0, %v1405
        %1407 = vmatprep.mubr.f32.mxu0 0.0
        %1408 = vmatmul.mubr.f32.gmra.mxu0 %v1293
        %v1409 = vpop.f32.mrf.mxu0
        %v1410 = vadd.f32 0.0, %v1409
        %v1411 = vpop.f32.mrf.mxu0
        %v1412 = vadd.f32 0.0, %v1411
        %1413 = vmatprep.mubr.f32.mxu0 0.0
        %1414 = vmatmul.mubr.f32.gmra.mxu0 %v1296
        %v1415 = vpop.f32.mrf.mxu0
        %v1416 = vadd.f32 0.0, %v1415
        %v1417 = vpop.f32.mrf.mxu0
        %v1418 = vadd.f32 0.0, %v1417
        %1419 = vmatprep.mubr.f32.mxu0 0.0
        %1420 = vmatmul.mubr.f32.gmra.mxu0 %v1299
        %v1421 = vpop.f32.mrf.mxu0
        %v1422 = vadd.f32 0.0, %v1421
        %v1423 = vpop.f32.mrf.mxu0
        %v1424 = vadd.f32 0.0, %v1423
        %1425 = vmatprep.mubr.f32.mxu0 0.0
        %1426 = vmatmul.mubr.f32.gmra.mxu0 %v1302
        %v1427 = vpop.f32.mrf.mxu0
        %v1428 = vadd.f32 0.0, %v1427
        %v1429 = vpop.f32.mrf.mxu0
        %v1430 = vadd.f32 0.0, %v1429
        %1431 = vmatprep.mubr.f32.mxu0 0.0
        %1432 = vmatmul.mubr.f32.gmra.mxu0 %v1305
        %v1433 = vpop.f32.mrf.mxu0
        %v1434 = vadd.f32 0.0, %v1433
        %v1435 = vpop.f32.mrf.mxu0
        %v1436 = vadd.f32 0.0, %v1435
        %1437 = vmatprep.mubr.f32.mxu0 0.0
        %1438 = vmatmul.mubr.f32.gmra.mxu0 %v1308
        %v1439 = vpop.f32.mrf.mxu0
        %v1440 = vadd.f32 0.0, %v1439
        %v1441 = vpop.f32.mrf.mxu0
        %v1442 = vadd.f32 0.0, %v1441
        %1443 = vmatprep.mubr.f32.mxu0 0.0
        %1444 = vmatmul.mubr.f32.gmra.mxu0 %v1311
        %v1445 = vpop.f32.mrf.mxu0
        %v1446 = vadd.f32 0.0, %v1445
        %v1447 = vpop.f32.mrf.mxu0
        %v1448 = vadd.f32 0.0, %v1447
        %1449 = vmatprep.mubr.f32.mxu0 0.0
        %1450 = vmatmul.mubr.f32.gmra.mxu0 %v1314
        %v1451 = vpop.f32.mrf.mxu0
        %v1452 = vadd.f32 0.0, %v1451
        %v1453 = vpop.f32.mrf.mxu0
        %v1454 = vadd.f32 0.0, %v1453
        %1455 = vmatprep.mubr.f32.mxu0 0.0
        %1456 = vmatmul.mubr.f32.gmra.mxu0 %v1317
        %v1457 = vpop.f32.mrf.mxu0
        %v1458 = vadd.f32 0.0, %v1457
        %v1459 = vpop.f32.mrf.mxu0
        %v1460 = vadd.f32 0.0, %v1459
        %1461 = vdwg.mxu0
        %v1463 = vsel %vm810, %v1081, 0
        %v1466 = vsel %vm810, %v1083, 0
        %v1469 = vsel %vm810, %v1085, 0
        %v1472 = vsel %vm810, %v1087, 0
        %v1475 = vsel %vm810, %v1089, 0
        %v1478 = vsel %vm810, %v1091, 0
        %v1481 = vsel %vm810, %v1093, 0
        %v1484 = vsel %vm810, %v1095, 0
        %v1487 = vsel %vm810, %v1097, 0
        %v1490 = vsel %vm810, %v1099, 0
        %v1493 = vsel %vm810, %v1101, 0
        %v1496 = vsel %vm810, %v1103, 0
        %v1499 = vsel %vm810, %v1105, 0
        %v1502 = vsel %vm810, %v1107, 0
        %v1505 = vsel %vm810, %v1109, 0
        %v1508 = vsel %vm810, %v1111, 0
        %v1511 = vsel %vm810, %v1113, 0
        %v1514 = vsel %vm810, %v1115, 0
        %v1517 = vsel %vm810, %v1117, 0
        %v1520 = vsel %vm810, %v1119, 0
        %v1523 = vsel %vm810, %v1121, 0
        %v1526 = vsel %vm810, %v1123, 0
        %v1529 = vsel %vm810, %v1125, 0
        %v1532 = vsel %vm810, %v1127, 0
        %v1535 = vsel %vm810, %v1129, 0
        %v1538 = vsel %vm810, %v1131, 0
        %v1541 = vsel %vm810, %v1133, 0
        %v1544 = vsel %vm810, %v1135, 0
        %v1547 = vsel %vm810, %v1137, 0
        %v1550 = vsel %vm810, %v1139, 0
        %v1553 = vsel %vm810, %v1141, 0
        %v1556 = vsel %vm810, %v1143, 0
        %v1559 = vsel %vm810, %v1145, 0
        %v1562 = vsel %vm810, %v1147, 0
        %v1565 = vsel %vm810, %v1149, 0
        %v1568 = vsel %vm810, %v1151, 0
        %v1571 = vsel %vm810, %v1153, 0
        %v1574 = vsel %vm810, %v1155, 0
        %v1577 = vsel %vm810, %v1157, 0
        %v1580 = vsel %vm810, %v1159, 0
        %v1583 = vsel %vm810, %v1161, 0
        %v1586 = vsel %vm810, %v1163, 0
        %v1589 = vsel %vm810, %v1165, 0
        %v1592 = vsel %vm810, %v1167, 0
        %v1595 = vsel %vm810, %v1169, 0
        %v1598 = vsel %vm810, %v1171, 0
        %v1601 = vsel %vm810, %v1173, 0
        %v1604 = vsel %vm810, %v1175, 0
        %v1607 = vsel %vm810, %v1177, 0
        %v1610 = vsel %vm810, %v1179, 0
        %v1613 = vsel %vm810, %v1181, 0
        %v1616 = vsel %vm810, %v1183, 0
        %v1619 = vsel %vm810, %v1185, 0
        %v1622 = vsel %vm810, %v1187, 0
        %v1625 = vsel %vm810, %v1189, 0
        %v1628 = vsel %vm810, %v1191, 0
        %v1631 = vsel %vm810, %v1193, 0
        %v1634 = vsel %vm810, %v1195, 0
        %v1637 = vsel %vm810, %v1197, 0
        %v1640 = vsel %vm810, %v1199, 0
        %v1643 = vsel %vm810, %v1201, 0
        %v1646 = vsel %vm810, %v1203, 0
        %v1649 = vsel %vm810, %v1205, 0
        %v1652 = vsel %vm810, %v1207, 0
        %v1655 = vsel %vm810, %v1209, 0
        %v1658 = vsel %vm810, %v1211, 0
        %v1661 = vsel %vm810, %v1213, 0
        %v1664 = vsel %vm810, %v1215, 0
        %v1667 = vsel %vm810, %v1217, 0
        %v1670 = vsel %vm810, %v1219, 0
        %v1673 = vsel %vm810, %v1221, 0
        %v1676 = vsel %vm810, %v1223, 0
        %v1679 = vsel %vm810, %v1225, 0
        %v1682 = vsel %vm810, %v1227, 0
        %v1685 = vsel %vm810, %v1229, 0
        %v1688 = vsel %vm810, %v1231, 0
        %v1691 = vsel %vm810, %v1233, 0
        %v1694 = vsel %vm810, %v1235, 0
        %v1697 = vsel %vm810, %v1237, 0
        %v1700 = vsel %vm810, %v1239, 0
        %v1703 = vsel %vm810, %v1241, 0
        %v1706 = vsel %vm810, %v1243, 0
        %v1709 = vsel %vm810, %v1245, 0
        %v1712 = vsel %vm810, %v1247, 0
        %v1715 = vsel %vm810, %v1249, 0
        %v1718 = vsel %vm810, %v1251, 0
        %v1721 = vsel %vm810, %v1253, 0
        %v1724 = vsel %vm810, %v1255, 0
        %v1727 = vsel %vm810, %v1257, 0
        %v1730 = vsel %vm810, %v1259, 0
        %v1733 = vsel %vm810, %v1261, 0
        %v1736 = vsel %vm810, %v1263, 0
        %v1739 = vsel %vm810, %v1265, 0
        %v1742 = vsel %vm810, %v1267, 0
        %v1745 = vsel %vm810, %v1269, 0
        %v1748 = vsel %vm810, %v1271, 0
        %v1751 = vsel %vm810, %v1273, 0
        %v1754 = vsel %vm810, %v1275, 0
        %v1757 = vsel %vm810, %v1277, 0
        %v1760 = vsel %vm810, %v1279, 0
        %v1763 = vsel %vm810, %v1388, 0
        %v1766 = vsel %vm810, %v1394, 0
        %v1769 = vsel %vm810, %v1400, 0
        %v1772 = vsel %vm810, %v1406, 0
        %v1775 = vsel %vm810, %v1412, 0
        %v1778 = vsel %vm810, %v1418, 0
        %v1781 = vsel %vm810, %v1424, 0
        %v1784 = vsel %vm810, %v1430, 0
        %v1787 = vsel %vm810, %v1436, 0
        %v1790 = vsel %vm810, %v1442, 0
        %v1793 = vsel %vm810, %v1448, 0
        %v1796 = vsel %vm810, %v1454, 0
        %v1799 = vsel %vm810, %v1460, 0
        %1801 = vmatprep.subr.mxu0 0.0
        %1802 = vmatpush1.xpose.msra.mxu0 0.0
        %1803 = vmatprep.subr.mxu0 0.0
        %1804 = vmatpush1.xpose.msra.mxu0 0.0
        %1805 = vmatprep.subr.mxu0 0.0
        %1806 = vmatpush1.xpose.msra.mxu0 0.0
        %1807 = vmatprep.subr.mxu0 %v1799
        %1808 = vmatpush1.xpose.msra.mxu0 %v1458
        %1809 = vmatprep.subr.mxu0 %v1796
        %1810 = vmatpush1.xpose.msra.mxu0 %v1452
        %1811 = vmatprep.subr.mxu0 %v1793
        %1812 = vmatpush1.xpose.msra.mxu0 %v1446
        %1813 = vmatprep.subr.mxu0 %v1790
        %1814 = vmatpush1.xpose.msra.mxu0 %v1440
        %1815 = vmatprep.subr.mxu0 %v1787
        %1816 = vmatpush1.xpose.msra.mxu0 %v1434
        %1817 = vmatprep.subr.mxu0 %v1784
        %1818 = vmatpush1.xpose.msra.mxu0 %v1428
        %1819 = vmatprep.subr.mxu0 %v1781
        %1820 = vmatpush1.xpose.msra.mxu0 %v1422
        %1821 = vmatprep.subr.mxu0 %v1778
        %1822 = vmatpush1.xpose.msra.mxu0 %v1416
        %1823 = vmatprep.subr.mxu0 %v1775
        %1824 = vmatpush1.xpose.msra.mxu0 %v1410
        %1825 = vmatprep.subr.mxu0 %v1772
        %1826 = vmatpush1.xpose.msra.mxu0 %v1404
        %1827 = vmatprep.subr.mxu0 %v1769
        %1828 = vmatpush1.xpose.msra.mxu0 %v1398
        %1829 = vmatprep.subr.mxu0 %v1766
        %1830 = vmatpush1.xpose.msra.mxu0 %v1392
        %1831 = vmatprep.subr.mxu0 %v1763
        %1832 = vmatpush1.xpose.msra.mxu0 %v1386
        %1833 = vmatprep.subr.mxu0 0.0
        %1834 = vmatpush2.xpose.msra.mxu0 0.0
        %1835 = vmatprep.subr.mxu0 0.0
        %1836 = vmatpush2.xpose.msra.mxu0 0.0
        %1837 = vmatprep.subr.mxu0 0.0
        %1838 = vmatpush2.xpose.msra.mxu0 0.0
        %1839 = vmatprep.subr.mxu0 0.0
        %1840 = vmatpush2.xpose.msra.mxu0 0.0
        %1841 = vmatprep.subr.mxu0 0.0
        %1842 = vmatpush2.xpose.msra.mxu0 0.0
        %1843 = vmatprep.subr.mxu0 0.0
        %1844 = vmatpush2.xpose.msra.mxu0 0.0
        %1845 = vmatprep.subr.mxu0 0.0
        %1846 = vmatpush2.xpose.msra.mxu0 0.0
        %1847 = vmatprep.subr.mxu0 0.0
        %1848 = vmatpush2.xpose.msra.mxu0 0.0
        %1849 = vmatprep.subr.mxu0 0.0
        %1850 = vmatpush2.xpose.msra.mxu0 0.0
        %1851 = vmatprep.subr.mxu0 0.0
        %1852 = vmatpush2.xpose.msra.mxu0 0.0
        %1853 = vmatprep.subr.mxu0 0.0
        %1854 = vmatpush2.xpose.msra.mxu0 0.0
        %1855 = vmatprep.subr.mxu0 0.0
        %1856 = vmatpush2.xpose.msra.mxu0 0.0
        %1857 = vmatprep.subr.mxu0 0.0
        %1858 = vmatpush2.xpose.msra.mxu0 0.0
        %1859 = vmatprep.subr.mxu0 0.0
        %1860 = vmatpush2.xpose.msra.mxu0 0.0
        %1861 = vmatprep.subr.mxu0 0.0
        %1862 = vmatpush2.xpose.msra.mxu0 0.0
        %1863 = vmatprep.subr.mxu0 0.0
        %1864 = vmatpush2.xpose.msra.mxu0 0.0
        %1865 = vmatprep.mubr.f32.mxu0 %v1463
        %1866 = vmatmul.mubr.f32.gmra.mxu0 %v1080
        %v1867 = vpop.f32.mrf.mxu0
        %v1868 = vadd.f32 0.0, %v1867
        %v1869 = vpop.f32.mrf.mxu0
        %1870 = vmatprep.mubr.f32.mxu0 %v1466
        %1871 = vmatmul.mubr.f32.gmra.mxu0 %v1082
        %v1872 = vpop.f32.mrf.mxu0
        %v1873 = vadd.f32 0.0, %v1872
        %v1874 = vpop.f32.mrf.mxu0
        %1875 = vmatprep.mubr.f32.mxu0 %v1469
        %1876 = vmatmul.mubr.f32.gmra.mxu0 %v1084
        %v1877 = vpop.f32.mrf.mxu0
        %v1878 = vadd.f32 0.0, %v1877
        %v1879 = vpop.f32.mrf.mxu0
        %1880 = vmatprep.mubr.f32.mxu0 %v1472
        %1881 = vmatmul.mubr.f32.gmra.mxu0 %v1086
        %v1882 = vpop.f32.mrf.mxu0
        %v1883 = vadd.f32 0.0, %v1882
        %v1884 = vpop.f32.mrf.mxu0
        %1885 = vmatprep.mubr.f32.mxu0 %v1475
        %1886 = vmatmul.mubr.f32.gmra.mxu0 %v1088
        %v1887 = vpop.f32.mrf.mxu0
        %v1888 = vadd.f32 0.0, %v1887
        %v1889 = vpop.f32.mrf.mxu0
        %1890 = vmatprep.mubr.f32.mxu0 %v1478
        %1891 = vmatmul.mubr.f32.gmra.mxu0 %v1090
        %v1892 = vpop.f32.mrf.mxu0
        %v1893 = vadd.f32 0.0, %v1892
        %v1894 = vpop.f32.mrf.mxu0
        %1895 = vmatprep.mubr.f32.mxu0 %v1481
        %1896 = vmatmul.mubr.f32.gmra.mxu0 %v1092
        %v1897 = vpop.f32.mrf.mxu0
        %v1898 = vadd.f32 0.0, %v1897
        %v1899 = vpop.f32.mrf.mxu0
        %1900 = vmatprep.mubr.f32.mxu0 %v1484
        %1901 = vmatmul.mubr.f32.gmra.mxu0 %v1094
        %v1902 = vpop.f32.mrf.mxu0
        %v1903 = vadd.f32 0.0, %v1902
        %v1904 = vpop.f32.mrf.mxu0
        %1905 = vmatprep.mubr.f32.mxu0 %v1487
        %1906 = vmatmul.mubr.f32.gmra.mxu0 %v1096
        %v1907 = vpop.f32.mrf.mxu0
        %v1908 = vadd.f32 0.0, %v1907
        %v1909 = vpop.f32.mrf.mxu0
        %1910 = vmatprep.mubr.f32.mxu0 %v1490
        %1911 = vmatmul.mubr.f32.gmra.mxu0 %v1098
        %v1912 = vpop.f32.mrf.mxu0
        %v1913 = vadd.f32 0.0, %v1912
        %v1914 = vpop.f32.mrf.mxu0
        %1915 = vmatprep.mubr.f32.mxu0 %v1493
        %1916 = vmatmul.mubr.f32.gmra.mxu0 %v1100
        %v1917 = vpop.f32.mrf.mxu0
        %v1918 = vadd.f32 0.0, %v1917
        %v1919 = vpop.f32.mrf.mxu0
        %1920 = vmatprep.mubr.f32.mxu0 %v1496
        %1921 = vmatmul.mubr.f32.gmra.mxu0 %v1102
        %v1922 = vpop.f32.mrf.mxu0
        %v1923 = vadd.f32 0.0, %v1922
        %v1924 = vpop.f32.mrf.mxu0
        %1925 = vmatprep.mubr.f32.mxu0 %v1499
        %1926 = vmatmul.mubr.f32.gmra.mxu0 %v1104
        %v1927 = vpop.f32.mrf.mxu0
        %v1928 = vadd.f32 0.0, %v1927
        %v1929 = vpop.f32.mrf.mxu0
        %1930 = vmatprep.mubr.f32.mxu0 %v1502
        %1931 = vmatmul.mubr.f32.gmra.mxu0 %v1106
        %v1932 = vpop.f32.mrf.mxu0
        %v1933 = vadd.f32 0.0, %v1932
        %v1934 = vpop.f32.mrf.mxu0
        %1935 = vmatprep.mubr.f32.mxu0 %v1505
        %1936 = vmatmul.mubr.f32.gmra.mxu0 %v1108
        %v1937 = vpop.f32.mrf.mxu0
        %v1938 = vadd.f32 0.0, %v1937
        %v1939 = vpop.f32.mrf.mxu0
        %1940 = vmatprep.mubr.f32.mxu0 %v1508
        %1941 = vmatmul.mubr.f32.gmra.mxu0 %v1110
        %v1942 = vpop.f32.mrf.mxu0
        %v1943 = vadd.f32 0.0, %v1942
        %v1944 = vpop.f32.mrf.mxu0
        %1945 = vmatprep.mubr.f32.mxu0 %v1511
        %1946 = vmatmul.mubr.f32.gmra.mxu0 %v1112
        %v1947 = vpop.f32.mrf.mxu0
        %v1948 = vadd.f32 0.0, %v1947
        %v1949 = vpop.f32.mrf.mxu0
        %1950 = vmatprep.mubr.f32.mxu0 %v1514
        %1951 = vmatmul.mubr.f32.gmra.mxu0 %v1114
        %v1952 = vpop.f32.mrf.mxu0
        %v1953 = vadd.f32 0.0, %v1952
        %v1954 = vpop.f32.mrf.mxu0
        %1955 = vmatprep.mubr.f32.mxu0 %v1517
        %1956 = vmatmul.mubr.f32.gmra.mxu0 %v1116
        %v1957 = vpop.f32.mrf.mxu0
        %v1958 = vadd.f32 0.0, %v1957
        %v1959 = vpop.f32.mrf.mxu0
        %1960 = vmatprep.mubr.f32.mxu0 %v1520
        %1961 = vmatmul.mubr.f32.gmra.mxu0 %v1118
        %v1962 = vpop.f32.mrf.mxu0
        %v1963 = vadd.f32 0.0, %v1962
        %v1964 = vpop.f32.mrf.mxu0
        %1965 = vmatprep.mubr.f32.mxu0 %v1523
        %1966 = vmatmul.mubr.f32.gmra.mxu0 %v1120
        %v1967 = vpop.f32.mrf.mxu0
        %v1968 = vadd.f32 0.0, %v1967
        %v1969 = vpop.f32.mrf.mxu0
        %1970 = vmatprep.mubr.f32.mxu0 %v1526
        %1971 = vmatmul.mubr.f32.gmra.mxu0 %v1122
        %v1972 = vpop.f32.mrf.mxu0
        %v1973 = vadd.f32 0.0, %v1972
        %v1974 = vpop.f32.mrf.mxu0
        %1975 = vmatprep.mubr.f32.mxu0 %v1529
        %1976 = vmatmul.mubr.f32.gmra.mxu0 %v1124
        %v1977 = vpop.f32.mrf.mxu0
        %v1978 = vadd.f32 0.0, %v1977
        %v1979 = vpop.f32.mrf.mxu0
        %1980 = vmatprep.mubr.f32.mxu0 %v1532
        %1981 = vmatmul.mubr.f32.gmra.mxu0 %v1126
        %v1982 = vpop.f32.mrf.mxu0
        %v1983 = vadd.f32 0.0, %v1982
        %v1984 = vpop.f32.mrf.mxu0
        %1985 = vmatprep.mubr.f32.mxu0 %v1535
        %1986 = vmatmul.mubr.f32.gmra.mxu0 %v1128
        %v1987 = vpop.f32.mrf.mxu0
        %v1988 = vadd.f32 0.0, %v1987
        %v1989 = vpop.f32.mrf.mxu0
        %1990 = vmatprep.mubr.f32.mxu0 %v1538
        %1991 = vmatmul.mubr.f32.gmra.mxu0 %v1130
        %v1992 = vpop.f32.mrf.mxu0
        %v1993 = vadd.f32 0.0, %v1992
        %v1994 = vpop.f32.mrf.mxu0
        %1995 = vmatprep.mubr.f32.mxu0 %v1541
        %1996 = vmatmul.mubr.f32.gmra.mxu0 %v1132
        %v1997 = vpop.f32.mrf.mxu0
        %v1998 = vadd.f32 0.0, %v1997
        %v1999 = vpop.f32.mrf.mxu0
        %2000 = vmatprep.mubr.f32.mxu0 %v1544
        %2001 = vmatmul.mubr.f32.gmra.mxu0 %v1134
        %v2002 = vpop.f32.mrf.mxu0
        %v2003 = vadd.f32 0.0, %v2002
        %v2004 = vpop.f32.mrf.mxu0
        %2005 = vmatprep.mubr.f32.mxu0 %v1547
        %2006 = vmatmul.mubr.f32.gmra.mxu0 %v1136
        %v2007 = vpop.f32.mrf.mxu0
        %v2008 = vadd.f32 0.0, %v2007
        %v2009 = vpop.f32.mrf.mxu0
        %2010 = vmatprep.mubr.f32.mxu0 %v1550
        %2011 = vmatmul.mubr.f32.gmra.mxu0 %v1138
        %v2012 = vpop.f32.mrf.mxu0
        %v2013 = vadd.f32 0.0, %v2012
        %v2014 = vpop.f32.mrf.mxu0
        %2015 = vmatprep.mubr.f32.mxu0 %v1553
        %2016 = vmatmul.mubr.f32.gmra.mxu0 %v1140
        %v2017 = vpop.f32.mrf.mxu0
        %v2018 = vadd.f32 0.0, %v2017
        %v2019 = vpop.f32.mrf.mxu0
        %2020 = vmatprep.mubr.f32.mxu0 %v1556
        %2021 = vmatmul.mubr.f32.gmra.mxu0 %v1142
        %v2022 = vpop.f32.mrf.mxu0
        %v2023 = vadd.f32 0.0, %v2022
        %v2024 = vpop.f32.mrf.mxu0
        %2025 = vmatprep.mubr.f32.mxu0 %v1559
        %2026 = vmatmul.mubr.f32.gmra.mxu0 %v1144
        %v2027 = vpop.f32.mrf.mxu0
        %v2028 = vadd.f32 0.0, %v2027
        %v2029 = vpop.f32.mrf.mxu0
        %2030 = vmatprep.mubr.f32.mxu0 %v1562
        %2031 = vmatmul.mubr.f32.gmra.mxu0 %v1146
        %v2032 = vpop.f32.mrf.mxu0
        %v2033 = vadd.f32 0.0, %v2032
        %v2034 = vpop.f32.mrf.mxu0
        %2035 = vmatprep.mubr.f32.mxu0 %v1565
        %2036 = vmatmul.mubr.f32.gmra.mxu0 %v1148
        %v2037 = vpop.f32.mrf.mxu0
        %v2038 = vadd.f32 0.0, %v2037
        %v2039 = vpop.f32.mrf.mxu0
        %2040 = vmatprep.mubr.f32.mxu0 %v1568
        %2041 = vmatmul.mubr.f32.gmra.mxu0 %v1150
        %v2042 = vpop.f32.mrf.mxu0
        %v2043 = vadd.f32 0.0, %v2042
        %v2044 = vpop.f32.mrf.mxu0
        %2045 = vmatprep.mubr.f32.mxu0 %v1571
        %2046 = vmatmul.mubr.f32.gmra.mxu0 %v1152
        %v2047 = vpop.f32.mrf.mxu0
        %v2048 = vadd.f32 0.0, %v2047
        %v2049 = vpop.f32.mrf.mxu0
        %2050 = vmatprep.mubr.f32.mxu0 %v1574
        %2051 = vmatmul.mubr.f32.gmra.mxu0 %v1154
        %v2052 = vpop.f32.mrf.mxu0
        %v2053 = vadd.f32 0.0, %v2052
        %v2054 = vpop.f32.mrf.mxu0
        %2055 = vmatprep.mubr.f32.mxu0 %v1577
        %2056 = vmatmul.mubr.f32.gmra.mxu0 %v1156
        %v2057 = vpop.f32.mrf.mxu0
        %v2058 = vadd.f32 0.0, %v2057
        %v2059 = vpop.f32.mrf.mxu0
        %2060 = vmatprep.mubr.f32.mxu0 %v1580
        %2061 = vmatmul.mubr.f32.gmra.mxu0 %v1158
        %v2062 = vpop.f32.mrf.mxu0
        %v2063 = vadd.f32 0.0, %v2062
        %v2064 = vpop.f32.mrf.mxu0
        %2065 = vmatprep.mubr.f32.mxu0 %v1583
        %2066 = vmatmul.mubr.f32.gmra.mxu0 %v1160
        %v2067 = vpop.f32.mrf.mxu0
        %v2068 = vadd.f32 0.0, %v2067
        %v2069 = vpop.f32.mrf.mxu0
        %2070 = vmatprep.mubr.f32.mxu0 %v1586
        %2071 = vmatmul.mubr.f32.gmra.mxu0 %v1162
        %v2072 = vpop.f32.mrf.mxu0
        %v2073 = vadd.f32 0.0, %v2072
        %v2074 = vpop.f32.mrf.mxu0
        %2075 = vmatprep.mubr.f32.mxu0 %v1589
        %2076 = vmatmul.mubr.f32.gmra.mxu0 %v1164
        %v2077 = vpop.f32.mrf.mxu0
        %v2078 = vadd.f32 0.0, %v2077
        %v2079 = vpop.f32.mrf.mxu0
        %2080 = vmatprep.mubr.f32.mxu0 %v1592
        %2081 = vmatmul.mubr.f32.gmra.mxu0 %v1166
        %v2082 = vpop.f32.mrf.mxu0
        %v2083 = vadd.f32 0.0, %v2082
        %v2084 = vpop.f32.mrf.mxu0
        %2085 = vmatprep.mubr.f32.mxu0 %v1595
        %2086 = vmatmul.mubr.f32.gmra.mxu0 %v1168
        %v2087 = vpop.f32.mrf.mxu0
        %v2088 = vadd.f32 0.0, %v2087
        %v2089 = vpop.f32.mrf.mxu0
        %2090 = vmatprep.mubr.f32.mxu0 %v1598
        %2091 = vmatmul.mubr.f32.gmra.mxu0 %v1170
        %v2092 = vpop.f32.mrf.mxu0
        %v2093 = vadd.f32 0.0, %v2092
        %v2094 = vpop.f32.mrf.mxu0
        %2095 = vmatprep.mubr.f32.mxu0 %v1601
        %2096 = vmatmul.mubr.f32.gmra.mxu0 %v1172
        %v2097 = vpop.f32.mrf.mxu0
        %v2098 = vadd.f32 0.0, %v2097
        %v2099 = vpop.f32.mrf.mxu0
        %2100 = vmatprep.mubr.f32.mxu0 %v1604
        %2101 = vmatmul.mubr.f32.gmra.mxu0 %v1174
        %v2102 = vpop.f32.mrf.mxu0
        %v2103 = vadd.f32 0.0, %v2102
        %v2104 = vpop.f32.mrf.mxu0
        %2105 = vmatprep.mubr.f32.mxu0 %v1607
        %2106 = vmatmul.mubr.f32.gmra.mxu0 %v1176
        %v2107 = vpop.f32.mrf.mxu0
        %v2108 = vadd.f32 0.0, %v2107
        %v2109 = vpop.f32.mrf.mxu0
        %2110 = vmatprep.mubr.f32.mxu0 %v1610
        %2111 = vmatmul.mubr.f32.gmra.mxu0 %v1178
        %v2112 = vpop.f32.mrf.mxu0
        %v2113 = vadd.f32 0.0, %v2112
        %v2114 = vpop.f32.mrf.mxu0
        %2115 = vmatprep.mubr.f32.mxu0 %v1613
        %2116 = vmatmul.mubr.f32.gmra.mxu0 %v1180
        %v2117 = vpop.f32.mrf.mxu0
        %v2118 = vadd.f32 0.0, %v2117
        %v2119 = vpop.f32.mrf.mxu0
        %2120 = vmatprep.mubr.f32.mxu0 %v1616
        %2121 = vmatmul.mubr.f32.gmra.mxu0 %v1182
        %v2122 = vpop.f32.mrf.mxu0
        %v2123 = vadd.f32 0.0, %v2122
        %v2124 = vpop.f32.mrf.mxu0
        %2125 = vmatprep.mubr.f32.mxu0 %v1619
        %2126 = vmatmul.mubr.f32.gmra.mxu0 %v1184
        %v2127 = vpop.f32.mrf.mxu0
        %v2128 = vadd.f32 0.0, %v2127
        %v2129 = vpop.f32.mrf.mxu0
        %2130 = vmatprep.mubr.f32.mxu0 %v1622
        %2131 = vmatmul.mubr.f32.gmra.mxu0 %v1186
        %v2132 = vpop.f32.mrf.mxu0
        %v2133 = vadd.f32 0.0, %v2132
        %v2134 = vpop.f32.mrf.mxu0
        %2135 = vmatprep.mubr.f32.mxu0 %v1625
        %2136 = vmatmul.mubr.f32.gmra.mxu0 %v1188
        %v2137 = vpop.f32.mrf.mxu0
        %v2138 = vadd.f32 0.0, %v2137
        %v2139 = vpop.f32.mrf.mxu0
        %2140 = vmatprep.mubr.f32.mxu0 %v1628
        %2141 = vmatmul.mubr.f32.gmra.mxu0 %v1190
        %v2142 = vpop.f32.mrf.mxu0
        %v2143 = vadd.f32 0.0, %v2142
        %v2144 = vpop.f32.mrf.mxu0
        %2145 = vmatprep.mubr.f32.mxu0 %v1631
        %2146 = vmatmul.mubr.f32.gmra.mxu0 %v1192
        %v2147 = vpop.f32.mrf.mxu0
        %v2148 = vadd.f32 0.0, %v2147
        %v2149 = vpop.f32.mrf.mxu0
        %2150 = vmatprep.mubr.f32.mxu0 %v1634
        %2151 = vmatmul.mubr.f32.gmra.mxu0 %v1194
        %v2152 = vpop.f32.mrf.mxu0
        %v2153 = vadd.f32 0.0, %v2152
        %v2154 = vpop.f32.mrf.mxu0
        %2155 = vmatprep.mubr.f32.mxu0 %v1637
        %2156 = vmatmul.mubr.f32.gmra.mxu0 %v1196
        %v2157 = vpop.f32.mrf.mxu0
        %v2158 = vadd.f32 0.0, %v2157
        %v2159 = vpop.f32.mrf.mxu0
        %2160 = vmatprep.mubr.f32.mxu0 %v1640
        %2161 = vmatmul.mubr.f32.gmra.mxu0 %v1198
        %v2162 = vpop.f32.mrf.mxu0
        %v2163 = vadd.f32 0.0, %v2162
        %v2164 = vpop.f32.mrf.mxu0
        %2165 = vmatprep.mubr.f32.mxu0 %v1643
        %2166 = vmatmul.mubr.f32.gmra.mxu0 %v1200
        %v2167 = vpop.f32.mrf.mxu0
        %v2168 = vadd.f32 0.0, %v2167
        %v2169 = vpop.f32.mrf.mxu0
        %2170 = vmatprep.mubr.f32.mxu0 %v1646
        %2171 = vmatmul.mubr.f32.gmra.mxu0 %v1202
        %v2172 = vpop.f32.mrf.mxu0
        %v2173 = vadd.f32 0.0, %v2172
        %v2174 = vpop.f32.mrf.mxu0
        %2175 = vmatprep.mubr.f32.mxu0 %v1649
        %2176 = vmatmul.mubr.f32.gmra.mxu0 %v1204
        %v2177 = vpop.f32.mrf.mxu0
        %v2178 = vadd.f32 0.0, %v2177
        %v2179 = vpop.f32.mrf.mxu0
        %2180 = vmatprep.mubr.f32.mxu0 %v1652
        %2181 = vmatmul.mubr.f32.gmra.mxu0 %v1206
        %v2182 = vpop.f32.mrf.mxu0
        %v2183 = vadd.f32 0.0, %v2182
        %v2184 = vpop.f32.mrf.mxu0
        %2185 = vmatprep.mubr.f32.mxu0 %v1655
        %2186 = vmatmul.mubr.f32.gmra.mxu0 %v1208
        %v2187 = vpop.f32.mrf.mxu0
        %v2188 = vadd.f32 0.0, %v2187
        %v2189 = vpop.f32.mrf.mxu0
        %2190 = vmatprep.mubr.f32.mxu0 %v1658
        %2191 = vmatmul.mubr.f32.gmra.mxu0 %v1210
        %v2192 = vpop.f32.mrf.mxu0
        %v2193 = vadd.f32 0.0, %v2192
        %v2194 = vpop.f32.mrf.mxu0
        %2195 = vmatprep.mubr.f32.mxu0 %v1661
        %2196 = vmatmul.mubr.f32.gmra.mxu0 %v1212
        %v2197 = vpop.f32.mrf.mxu0
        %v2198 = vadd.f32 0.0, %v2197
        %v2199 = vpop.f32.mrf.mxu0
        %2200 = vmatprep.mubr.f32.mxu0 %v1664
        %2201 = vmatmul.mubr.f32.gmra.mxu0 %v1214
        %v2202 = vpop.f32.mrf.mxu0
        %v2203 = vadd.f32 0.0, %v2202
        %v2204 = vpop.f32.mrf.mxu0
        %2205 = vmatprep.mubr.f32.mxu0 %v1667
        %2206 = vmatmul.mubr.f32.gmra.mxu0 %v1216
        %v2207 = vpop.f32.mrf.mxu0
        %v2208 = vadd.f32 0.0, %v2207
        %v2209 = vpop.f32.mrf.mxu0
        %2210 = vmatprep.mubr.f32.mxu0 %v1670
        %2211 = vmatmul.mubr.f32.gmra.mxu0 %v1218
        %v2212 = vpop.f32.mrf.mxu0
        %v2213 = vadd.f32 0.0, %v2212
        %v2214 = vpop.f32.mrf.mxu0
        %2215 = vmatprep.mubr.f32.mxu0 %v1673
        %2216 = vmatmul.mubr.f32.gmra.mxu0 %v1220
        %v2217 = vpop.f32.mrf.mxu0
        %v2218 = vadd.f32 0.0, %v2217
        %v2219 = vpop.f32.mrf.mxu0
        %2220 = vmatprep.mubr.f32.mxu0 %v1676
        %2221 = vmatmul.mubr.f32.gmra.mxu0 %v1222
        %v2222 = vpop.f32.mrf.mxu0
        %v2223 = vadd.f32 0.0, %v2222
        %v2224 = vpop.f32.mrf.mxu0
        %2225 = vmatprep.mubr.f32.mxu0 %v1679
        %2226 = vmatmul.mubr.f32.gmra.mxu0 %v1224
        %v2227 = vpop.f32.mrf.mxu0
        %v2228 = vadd.f32 0.0, %v2227
        %v2229 = vpop.f32.mrf.mxu0
        %2230 = vmatprep.mubr.f32.mxu0 %v1682
        %2231 = vmatmul.mubr.f32.gmra.mxu0 %v1226
        %v2232 = vpop.f32.mrf.mxu0
        %v2233 = vadd.f32 0.0, %v2232
        %v2234 = vpop.f32.mrf.mxu0
        %2235 = vmatprep.mubr.f32.mxu0 %v1685
        %2236 = vmatmul.mubr.f32.gmra.mxu0 %v1228
        %v2237 = vpop.f32.mrf.mxu0
        %v2238 = vadd.f32 0.0, %v2237
        %v2239 = vpop.f32.mrf.mxu0
        %2240 = vmatprep.mubr.f32.mxu0 %v1688
        %2241 = vmatmul.mubr.f32.gmra.mxu0 %v1230
        %v2242 = vpop.f32.mrf.mxu0
        %v2243 = vadd.f32 0.0, %v2242
        %v2244 = vpop.f32.mrf.mxu0
        %2245 = vmatprep.mubr.f32.mxu0 %v1691
        %2246 = vmatmul.mubr.f32.gmra.mxu0 %v1232
        %v2247 = vpop.f32.mrf.mxu0
        %v2248 = vadd.f32 0.0, %v2247
        %v2249 = vpop.f32.mrf.mxu0
        %2250 = vmatprep.mubr.f32.mxu0 %v1694
        %2251 = vmatmul.mubr.f32.gmra.mxu0 %v1234
        %v2252 = vpop.f32.mrf.mxu0
        %v2253 = vadd.f32 0.0, %v2252
        %v2254 = vpop.f32.mrf.mxu0
        %2255 = vmatprep.mubr.f32.mxu0 %v1697
        %2256 = vmatmul.mubr.f32.gmra.mxu0 %v1236
        %v2257 = vpop.f32.mrf.mxu0
        %v2258 = vadd.f32 0.0, %v2257
        %v2259 = vpop.f32.mrf.mxu0
        %2260 = vmatprep.mubr.f32.mxu0 %v1700
        %2261 = vmatmul.mubr.f32.gmra.mxu0 %v1238
        %v2262 = vpop.f32.mrf.mxu0
        %v2263 = vadd.f32 0.0, %v2262
        %v2264 = vpop.f32.mrf.mxu0
        %2265 = vmatprep.mubr.f32.mxu0 %v1703
        %2266 = vmatmul.mubr.f32.gmra.mxu0 %v1240
        %v2267 = vpop.f32.mrf.mxu0
        %v2268 = vadd.f32 0.0, %v2267
        %v2269 = vpop.f32.mrf.mxu0
        %2270 = vmatprep.mubr.f32.mxu0 %v1706
        %2271 = vmatmul.mubr.f32.gmra.mxu0 %v1242
        %v2272 = vpop.f32.mrf.mxu0
        %v2273 = vadd.f32 0.0, %v2272
        %v2274 = vpop.f32.mrf.mxu0
        %2275 = vmatprep.mubr.f32.mxu0 %v1709
        %2276 = vmatmul.mubr.f32.gmra.mxu0 %v1244
        %v2277 = vpop.f32.mrf.mxu0
        %v2278 = vadd.f32 0.0, %v2277
        %v2279 = vpop.f32.mrf.mxu0
        %2280 = vmatprep.mubr.f32.mxu0 %v1712
        %2281 = vmatmul.mubr.f32.gmra.mxu0 %v1246
        %v2282 = vpop.f32.mrf.mxu0
        %v2283 = vadd.f32 0.0, %v2282
        %v2284 = vpop.f32.mrf.mxu0
        %2285 = vmatprep.mubr.f32.mxu0 %v1715
        %2286 = vmatmul.mubr.f32.gmra.mxu0 %v1248
        %v2287 = vpop.f32.mrf.mxu0
        %v2288 = vadd.f32 0.0, %v2287
        %v2289 = vpop.f32.mrf.mxu0
        %2290 = vmatprep.mubr.f32.mxu0 %v1718
        %2291 = vmatmul.mubr.f32.gmra.mxu0 %v1250
        %v2292 = vpop.f32.mrf.mxu0
        %v2293 = vadd.f32 0.0, %v2292
        %v2294 = vpop.f32.mrf.mxu0
        %2295 = vmatprep.mubr.f32.mxu0 %v1721
        %2296 = vmatmul.mubr.f32.gmra.mxu0 %v1252
        %v2297 = vpop.f32.mrf.mxu0
        %v2298 = vadd.f32 0.0, %v2297
        %v2299 = vpop.f32.mrf.mxu0
        %2300 = vmatprep.mubr.f32.mxu0 %v1724
        %2301 = vmatmul.mubr.f32.gmra.mxu0 %v1254
        %v2302 = vpop.f32.mrf.mxu0
        %v2303 = vadd.f32 0.0, %v2302
        %v2304 = vpop.f32.mrf.mxu0
        %2305 = vmatprep.mubr.f32.mxu0 %v1727
        %2306 = vmatmul.mubr.f32.gmra.mxu0 %v1256
        %v2307 = vpop.f32.mrf.mxu0
        %v2308 = vadd.f32 0.0, %v2307
        %v2309 = vpop.f32.mrf.mxu0
        %2310 = vmatprep.mubr.f32.mxu0 %v1730
        %2311 = vmatmul.mubr.f32.gmra.mxu0 %v1258
        %v2312 = vpop.f32.mrf.mxu0
        %v2313 = vadd.f32 0.0, %v2312
        %v2314 = vpop.f32.mrf.mxu0
        %2315 = vmatprep.mubr.f32.mxu0 %v1733
        %2316 = vmatmul.mubr.f32.gmra.mxu0 %v1260
        %v2317 = vpop.f32.mrf.mxu0
        %v2318 = vadd.f32 0.0, %v2317
        %v2319 = vpop.f32.mrf.mxu0
        %2320 = vmatprep.mubr.f32.mxu0 %v1736
        %2321 = vmatmul.mubr.f32.gmra.mxu0 %v1262
        %v2322 = vpop.f32.mrf.mxu0
        %v2323 = vadd.f32 0.0, %v2322
        %v2324 = vpop.f32.mrf.mxu0
        %2325 = vmatprep.mubr.f32.mxu0 %v1739
        %2326 = vmatmul.mubr.f32.gmra.mxu0 %v1264
        %v2327 = vpop.f32.mrf.mxu0
        %v2328 = vadd.f32 0.0, %v2327
        %v2329 = vpop.f32.mrf.mxu0
        %2330 = vmatprep.mubr.f32.mxu0 %v1742
        %2331 = vmatmul.mubr.f32.gmra.mxu0 %v1266
        %v2332 = vpop.f32.mrf.mxu0
        %v2333 = vadd.f32 0.0, %v2332
        %v2334 = vpop.f32.mrf.mxu0
        %2335 = vmatprep.mubr.f32.mxu0 %v1745
        %2336 = vmatmul.mubr.f32.gmra.mxu0 %v1268
        %v2337 = vpop.f32.mrf.mxu0
        %v2338 = vadd.f32 0.0, %v2337
        %v2339 = vpop.f32.mrf.mxu0
        %2340 = vmatprep.mubr.f32.mxu0 %v1748
        %2341 = vmatmul.mubr.f32.gmra.mxu0 %v1270
        %v2342 = vpop.f32.mrf.mxu0
        %v2343 = vadd.f32 0.0, %v2342
        %v2344 = vpop.f32.mrf.mxu0
        %2345 = vmatprep.mubr.f32.mxu0 %v1751
        %2346 = vmatmul.mubr.f32.gmra.mxu0 %v1272
        %v2347 = vpop.f32.mrf.mxu0
        %v2348 = vadd.f32 0.0, %v2347
        %v2349 = vpop.f32.mrf.mxu0
        %2350 = vmatprep.mubr.f32.mxu0 %v1754
        %2351 = vmatmul.mubr.f32.gmra.mxu0 %v1274
        %v2352 = vpop.f32.mrf.mxu0
        %v2353 = vadd.f32 0.0, %v2352
        %v2354 = vpop.f32.mrf.mxu0
        %2355 = vmatprep.mubr.f32.mxu0 %v1757
        %2356 = vmatmul.mubr.f32.gmra.mxu0 %v1276
        %v2357 = vpop.f32.mrf.mxu0
        %v2358 = vadd.f32 0.0, %v2357
        %v2359 = vpop.f32.mrf.mxu0
        %2360 = vmatprep.mubr.f32.mxu0 %v1760
        %2361 = vmatmul.mubr.f32.gmra.mxu0 %v1278
        %v2362 = vpop.f32.mrf.mxu0
        %v2363 = vadd.f32 0.0, %v2362
        %v2364 = vpop.f32.mrf.mxu0
        %2365 = vdwg.mxu0
        %v2367 = vsel %vm810, %v611, 0
        %v2370 = vsel %vm810, %v613, 0
        %v2373 = vsel %vm810, %v615, 0
        %v2376 = vsel %vm810, %v617, 0
        %v2379 = vsel %vm810, %v619, 0
        %v2382 = vsel %vm810, %v621, 0
        %v2385 = vsel %vm810, %v623, 0
        %v2388 = vsel %vm810, %v625, 0
        %v2391 = vsel %vm810, %v627, 0
        %v2394 = vsel %vm810, %v629, 0
        %v2397 = vsel %vm810, %v631, 0
        %v2400 = vsel %vm810, %v633, 0
        %v2403 = vsel %vm810, %v635, 0
        %v2406 = vsel %vm810, %v637, 0
        %v2409 = vsel %vm810, %v639, 0
        %v2412 = vsel %vm810, %v641, 0
        %v2415 = vsel %vm810, %v643, 0
        %v2418 = vsel %vm810, %v645, 0
        %v2421 = vsel %vm810, %v647, 0
        %v2424 = vsel %vm810, %v649, 0
        %v2427 = vsel %vm810, %v651, 0
        %v2430 = vsel %vm810, %v653, 0
        %v2433 = vsel %vm810, %v655, 0
        %v2436 = vsel %vm810, %v657, 0
        %v2439 = vsel %vm810, %v659, 0
        %v2442 = vsel %vm810, %v661, 0
        %v2445 = vsel %vm810, %v663, 0
        %v2448 = vsel %vm810, %v665, 0
        %v2451 = vsel %vm810, %v667, 0
        %v2454 = vsel %vm810, %v669, 0
        %v2457 = vsel %vm810, %v671, 0
        %v2460 = vsel %vm810, %v673, 0
        %v2463 = vsel %vm810, %v675, 0
        %v2466 = vsel %vm810, %v677, 0
        %v2469 = vsel %vm810, %v679, 0
        %v2472 = vsel %vm810, %v681, 0
        %v2475 = vsel %vm810, %v683, 0
        %v2478 = vsel %vm810, %v685, 0
        %v2481 = vsel %vm810, %v687, 0
        %v2484 = vsel %vm810, %v689, 0
        %v2487 = vsel %vm810, %v691, 0
        %v2490 = vsel %vm810, %v693, 0
        %v2493 = vsel %vm810, %v695, 0
        %v2496 = vsel %vm810, %v697, 0
        %v2499 = vsel %vm810, %v699, 0
        %v2502 = vsel %vm810, %v701, 0
        %v2505 = vsel %vm810, %v703, 0
        %v2508 = vsel %vm810, %v705, 0
        %v2511 = vsel %vm810, %v707, 0
        %v2514 = vsel %vm810, %v709, 0
        %v2517 = vsel %vm810, %v711, 0
        %v2520 = vsel %vm810, %v713, 0
        %v2523 = vsel %vm810, %v715, 0
        %v2526 = vsel %vm810, %v717, 0
        %v2529 = vsel %vm810, %v719, 0
        %v2532 = vsel %vm810, %v721, 0
        %v2535 = vsel %vm810, %v723, 0
        %v2538 = vsel %vm810, %v725, 0
        %v2541 = vsel %vm810, %v727, 0
        %v2544 = vsel %vm810, %v729, 0
        %v2547 = vsel %vm810, %v731, 0
        %v2550 = vsel %vm810, %v733, 0
        %v2553 = vsel %vm810, %v735, 0
        %v2556 = vsel %vm810, %v737, 0
        %v2559 = vsel %vm810, %v739, 0
        %v2562 = vsel %vm810, %v741, 0
        %v2565 = vsel %vm810, %v743, 0
        %v2568 = vsel %vm810, %v745, 0
        %v2571 = vsel %vm810, %v747, 0
        %v2574 = vsel %vm810, %v749, 0
        %v2577 = vsel %vm810, %v751, 0
        %v2580 = vsel %vm810, %v753, 0
        %v2583 = vsel %vm810, %v755, 0
        %v2586 = vsel %vm810, %v757, 0
        %v2589 = vsel %vm810, %v759, 0
        %v2592 = vsel %vm810, %v761, 0
        %v2595 = vsel %vm810, %v763, 0
        %v2598 = vsel %vm810, %v765, 0
        %v2601 = vsel %vm810, %v767, 0
        %v2604 = vsel %vm810, %v769, 0
        %v2607 = vsel %vm810, %v771, 0
        %v2610 = vsel %vm810, %v773, 0
        %v2613 = vsel %vm810, %v775, 0
        %v2616 = vsel %vm810, %v777, 0
        %v2619 = vsel %vm810, %v779, 0
        %v2622 = vsel %vm810, %v781, 0
        %v2625 = vsel %vm810, %v783, 0
        %v2628 = vsel %vm810, %v785, 0
        %v2631 = vsel %vm810, %v787, 0
        %v2634 = vsel %vm810, %v789, 0
        %v2637 = vsel %vm810, %v791, 0
        %v2640 = vsel %vm810, %v793, 0
        %v2643 = vsel %vm810, %v795, 0
        %v2646 = vsel %vm810, %v797, 0
        %v2649 = vsel %vm810, %v799, 0
        %v2652 = vsel %vm810, %v801, 0
        %v2655 = vsel %vm810, %v803, 0
        %v2658 = vsel %vm810, %v805, 0
        %v2661 = vsel %vm810, %v807, 0
        %v2664 = vsel %vm810, %v809, 0
        %v2667 = vsel %vm810, %v991, 0
        %v2670 = vsel %vm810, %v997, 0
        %v2673 = vsel %vm810, %v1003, 0
        %v2676 = vsel %vm810, %v1009, 0
        %v2679 = vsel %vm810, %v1015, 0
        %v2682 = vsel %vm810, %v1021, 0
        %v2685 = vsel %vm810, %v1027, 0
        %v2688 = vsel %vm810, %v1033, 0
        %v2691 = vsel %vm810, %v1039, 0
        %v2694 = vsel %vm810, %v1045, 0
        %v2697 = vsel %vm810, %v1051, 0
        %v2700 = vsel %vm810, %v1057, 0
        %v2703 = vsel %vm810, %v1063, 0
        %2705 = vmatprep.subr.mxu0 0.0
        %2706 = vmatpush1.xpose.msra.mxu0 0.0
        %2707 = vmatprep.subr.mxu0 0.0
        %2708 = vmatpush1.xpose.msra.mxu0 0.0
        %2709 = vmatprep.subr.mxu0 0.0
        %2710 = vmatpush1.xpose.msra.mxu0 0.0
        %2711 = vmatprep.subr.mxu0 %v2703
        %2712 = vmatpush1.xpose.msra.mxu0 %v1061
        %2713 = vmatprep.subr.mxu0 %v2700
        %2714 = vmatpush1.xpose.msra.mxu0 %v1055
        %2715 = vmatprep.subr.mxu0 %v2697
        %2716 = vmatpush1.xpose.msra.mxu0 %v1049
        %2717 = vmatprep.subr.mxu0 %v2694
        %2718 = vmatpush1.xpose.msra.mxu0 %v1043
        %2719 = vmatprep.subr.mxu0 %v2691
        %2720 = vmatpush1.xpose.msra.mxu0 %v1037
        %2721 = vmatprep.subr.mxu0 %v2688
        %2722 = vmatpush1.xpose.msra.mxu0 %v1031
        %2723 = vmatprep.subr.mxu0 %v2685
        %2724 = vmatpush1.xpose.msra.mxu0 %v1025
        %2725 = vmatprep.subr.mxu0 %v2682
        %2726 = vmatpush1.xpose.msra.mxu0 %v1019
        %2727 = vmatprep.subr.mxu0 %v2679
        %2728 = vmatpush1.xpose.msra.mxu0 %v1013
        %2729 = vmatprep.subr.mxu0 %v2676
        %2730 = vmatpush1.xpose.msra.mxu0 %v1007
        %2731 = vmatprep.subr.mxu0 %v2673
        %2732 = vmatpush1.xpose.msra.mxu0 %v1001
        %2733 = vmatprep.subr.mxu0 %v2670
        %2734 = vmatpush1.xpose.msra.mxu0 %v995
        %2735 = vmatprep.subr.mxu0 %v2667
        %2736 = vmatpush1.xpose.msra.mxu0 %v989
        %2737 = vmatprep.subr.mxu0 0.0
        %2738 = vmatpush2.xpose.msra.mxu0 0.0
        %2739 = vmatprep.subr.mxu0 0.0
        %2740 = vmatpush2.xpose.msra.mxu0 0.0
        %2741 = vmatprep.subr.mxu0 0.0
        %2742 = vmatpush2.xpose.msra.mxu0 0.0
        %2743 = vmatprep.subr.mxu0 0.0
        %2744 = vmatpush2.xpose.msra.mxu0 0.0
        %2745 = vmatprep.subr.mxu0 0.0
        %2746 = vmatpush2.xpose.msra.mxu0 0.0
        %2747 = vmatprep.subr.mxu0 0.0
        %2748 = vmatpush2.xpose.msra.mxu0 0.0
        %2749 = vmatprep.subr.mxu0 0.0
        %2750 = vmatpush2.xpose.msra.mxu0 0.0
        %2751 = vmatprep.subr.mxu0 0.0
        %2752 = vmatpush2.xpose.msra.mxu0 0.0
        %2753 = vmatprep.subr.mxu0 0.0
        %2754 = vmatpush2.xpose.msra.mxu0 0.0
        %2755 = vmatprep.subr.mxu0 0.0
        %2756 = vmatpush2.xpose.msra.mxu0 0.0
        %2757 = vmatprep.subr.mxu0 0.0
        %2758 = vmatpush2.xpose.msra.mxu0 0.0
        %2759 = vmatprep.subr.mxu0 0.0
        %2760 = vmatpush2.xpose.msra.mxu0 0.0
        %2761 = vmatprep.subr.mxu0 0.0
        %2762 = vmatpush2.xpose.msra.mxu0 0.0
        %2763 = vmatprep.subr.mxu0 0.0
        %2764 = vmatpush2.xpose.msra.mxu0 0.0
        %2765 = vmatprep.subr.mxu0 0.0
        %2766 = vmatpush2.xpose.msra.mxu0 0.0
        %2767 = vmatprep.subr.mxu0 0.0
        %2768 = vmatpush2.xpose.msra.mxu0 0.0
        %2769 = vmatprep.mubr.f32.mxu0 %v2367
        %2770 = vmatmul.mubr.f32.gmra.mxu0 %v610
        %v2771 = vpop.f32.mrf.mxu0
        %v2772 = vadd.f32 %v1868, %v2771
        %v2773 = vpop.f32.mrf.mxu0
        %2774 = vmatprep.mubr.f32.mxu0 %v2370
        %2775 = vmatmul.mubr.f32.gmra.mxu0 %v612
        %v2776 = vpop.f32.mrf.mxu0
        %v2777 = vadd.f32 %v1873, %v2776
        %v2778 = vpop.f32.mrf.mxu0
        %2779 = vmatprep.mubr.f32.mxu0 %v2373
        %2780 = vmatmul.mubr.f32.gmra.mxu0 %v614
        %v2781 = vpop.f32.mrf.mxu0
        %v2782 = vadd.f32 %v1878, %v2781
        %v2783 = vpop.f32.mrf.mxu0
        %2784 = vmatprep.mubr.f32.mxu0 %v2376
        %2785 = vmatmul.mubr.f32.gmra.mxu0 %v616
        %v2786 = vpop.f32.mrf.mxu0
        %v2787 = vadd.f32 %v1883, %v2786
        %v2788 = vpop.f32.mrf.mxu0
        %2789 = vmatprep.mubr.f32.mxu0 %v2379
        %2790 = vmatmul.mubr.f32.gmra.mxu0 %v618
        %v2791 = vpop.f32.mrf.mxu0
        %v2792 = vadd.f32 %v1888, %v2791
        %v2793 = vpop.f32.mrf.mxu0
        %2794 = vmatprep.mubr.f32.mxu0 %v2382
        %2795 = vmatmul.mubr.f32.gmra.mxu0 %v620
        %v2796 = vpop.f32.mrf.mxu0
        %v2797 = vadd.f32 %v1893, %v2796
        %v2798 = vpop.f32.mrf.mxu0
        %2799 = vmatprep.mubr.f32.mxu0 %v2385
        %2800 = vmatmul.mubr.f32.gmra.mxu0 %v622
        %v2801 = vpop.f32.mrf.mxu0
        %v2802 = vadd.f32 %v1898, %v2801
        %v2803 = vpop.f32.mrf.mxu0
        %2804 = vmatprep.mubr.f32.mxu0 %v2388
        %2805 = vmatmul.mubr.f32.gmra.mxu0 %v624
        %v2806 = vpop.f32.mrf.mxu0
        %v2807 = vadd.f32 %v1903, %v2806
        %v2808 = vpop.f32.mrf.mxu0
        %2809 = vmatprep.mubr.f32.mxu0 %v2391
        %2810 = vmatmul.mubr.f32.gmra.mxu0 %v626
        %v2811 = vpop.f32.mrf.mxu0
        %v2812 = vadd.f32 %v1908, %v2811
        %v2813 = vpop.f32.mrf.mxu0
        %2814 = vmatprep.mubr.f32.mxu0 %v2394
        %2815 = vmatmul.mubr.f32.gmra.mxu0 %v628
        %v2816 = vpop.f32.mrf.mxu0
        %v2817 = vadd.f32 %v1913, %v2816
        %v2818 = vpop.f32.mrf.mxu0
        %2819 = vmatprep.mubr.f32.mxu0 %v2397
        %2820 = vmatmul.mubr.f32.gmra.mxu0 %v630
        %v2821 = vpop.f32.mrf.mxu0
        %v2822 = vadd.f32 %v1918, %v2821
        %v2823 = vpop.f32.mrf.mxu0
        %2824 = vmatprep.mubr.f32.mxu0 %v2400
        %2825 = vmatmul.mubr.f32.gmra.mxu0 %v632
        %v2826 = vpop.f32.mrf.mxu0
        %v2827 = vadd.f32 %v1923, %v2826
        %v2828 = vpop.f32.mrf.mxu0
        %2829 = vmatprep.mubr.f32.mxu0 %v2403
        %2830 = vmatmul.mubr.f32.gmra.mxu0 %v634
        %v2831 = vpop.f32.mrf.mxu0
        %v2832 = vadd.f32 %v1928, %v2831
        %v2833 = vpop.f32.mrf.mxu0
        %2834 = vmatprep.mubr.f32.mxu0 %v2406
        %2835 = vmatmul.mubr.f32.gmra.mxu0 %v636
        %v2836 = vpop.f32.mrf.mxu0
        %v2837 = vadd.f32 %v1933, %v2836
        %v2838 = vpop.f32.mrf.mxu0
        %2839 = vmatprep.mubr.f32.mxu0 %v2409
        %2840 = vmatmul.mubr.f32.gmra.mxu0 %v638
        %v2841 = vpop.f32.mrf.mxu0
        %v2842 = vadd.f32 %v1938, %v2841
        %v2843 = vpop.f32.mrf.mxu0
        %2844 = vmatprep.mubr.f32.mxu0 %v2412
        %2845 = vmatmul.mubr.f32.gmra.mxu0 %v640
        %v2846 = vpop.f32.mrf.mxu0
        %v2847 = vadd.f32 %v1943, %v2846
        %v2848 = vpop.f32.mrf.mxu0
        %2849 = vmatprep.mubr.f32.mxu0 %v2415
        %2850 = vmatmul.mubr.f32.gmra.mxu0 %v642
        %v2851 = vpop.f32.mrf.mxu0
        %v2852 = vadd.f32 %v1948, %v2851
        %v2853 = vpop.f32.mrf.mxu0
        %2854 = vmatprep.mubr.f32.mxu0 %v2418
        %2855 = vmatmul.mubr.f32.gmra.mxu0 %v644
        %v2856 = vpop.f32.mrf.mxu0
        %v2857 = vadd.f32 %v1953, %v2856
        %v2858 = vpop.f32.mrf.mxu0
        %2859 = vmatprep.mubr.f32.mxu0 %v2421
        %2860 = vmatmul.mubr.f32.gmra.mxu0 %v646
        %v2861 = vpop.f32.mrf.mxu0
        %v2862 = vadd.f32 %v1958, %v2861
        %v2863 = vpop.f32.mrf.mxu0
        %2864 = vmatprep.mubr.f32.mxu0 %v2424
        %2865 = vmatmul.mubr.f32.gmra.mxu0 %v648
        %v2866 = vpop.f32.mrf.mxu0
        %v2867 = vadd.f32 %v1963, %v2866
        %v2868 = vpop.f32.mrf.mxu0
        %2869 = vmatprep.mubr.f32.mxu0 %v2427
        %2870 = vmatmul.mubr.f32.gmra.mxu0 %v650
        %v2871 = vpop.f32.mrf.mxu0
        %v2872 = vadd.f32 %v1968, %v2871
        %v2873 = vpop.f32.mrf.mxu0
        %2874 = vmatprep.mubr.f32.mxu0 %v2430
        %2875 = vmatmul.mubr.f32.gmra.mxu0 %v652
        %v2876 = vpop.f32.mrf.mxu0
        %v2877 = vadd.f32 %v1973, %v2876
        %v2878 = vpop.f32.mrf.mxu0
        %2879 = vmatprep.mubr.f32.mxu0 %v2433
        %2880 = vmatmul.mubr.f32.gmra.mxu0 %v654
        %v2881 = vpop.f32.mrf.mxu0
        %v2882 = vadd.f32 %v1978, %v2881
        %v2883 = vpop.f32.mrf.mxu0
        %2884 = vmatprep.mubr.f32.mxu0 %v2436
        %2885 = vmatmul.mubr.f32.gmra.mxu0 %v656
        %v2886 = vpop.f32.mrf.mxu0
        %v2887 = vadd.f32 %v1983, %v2886
        %v2888 = vpop.f32.mrf.mxu0
        %2889 = vmatprep.mubr.f32.mxu0 %v2439
        %2890 = vmatmul.mubr.f32.gmra.mxu0 %v658
        %v2891 = vpop.f32.mrf.mxu0
        %v2892 = vadd.f32 %v1988, %v2891
        %v2893 = vpop.f32.mrf.mxu0
        %2894 = vmatprep.mubr.f32.mxu0 %v2442
        %2895 = vmatmul.mubr.f32.gmra.mxu0 %v660
        %v2896 = vpop.f32.mrf.mxu0
        %v2897 = vadd.f32 %v1993, %v2896
        %v2898 = vpop.f32.mrf.mxu0
        %2899 = vmatprep.mubr.f32.mxu0 %v2445
        %2900 = vmatmul.mubr.f32.gmra.mxu0 %v662
        %v2901 = vpop.f32.mrf.mxu0
        %v2902 = vadd.f32 %v1998, %v2901
        %v2903 = vpop.f32.mrf.mxu0
        %2904 = vmatprep.mubr.f32.mxu0 %v2448
        %2905 = vmatmul.mubr.f32.gmra.mxu0 %v664
        %v2906 = vpop.f32.mrf.mxu0
        %v2907 = vadd.f32 %v2003, %v2906
        %v2908 = vpop.f32.mrf.mxu0
        %2909 = vmatprep.mubr.f32.mxu0 %v2451
        %2910 = vmatmul.mubr.f32.gmra.mxu0 %v666
        %v2911 = vpop.f32.mrf.mxu0
        %v2912 = vadd.f32 %v2008, %v2911
        %v2913 = vpop.f32.mrf.mxu0
        %2914 = vmatprep.mubr.f32.mxu0 %v2454
        %2915 = vmatmul.mubr.f32.gmra.mxu0 %v668
        %v2916 = vpop.f32.mrf.mxu0
        %v2917 = vadd.f32 %v2013, %v2916
        %v2918 = vpop.f32.mrf.mxu0
        %2919 = vmatprep.mubr.f32.mxu0 %v2457
        %2920 = vmatmul.mubr.f32.gmra.mxu0 %v670
        %v2921 = vpop.f32.mrf.mxu0
        %v2922 = vadd.f32 %v2018, %v2921
        %v2923 = vpop.f32.mrf.mxu0
        %2924 = vmatprep.mubr.f32.mxu0 %v2460
        %2925 = vmatmul.mubr.f32.gmra.mxu0 %v672
        %v2926 = vpop.f32.mrf.mxu0
        %v2927 = vadd.f32 %v2023, %v2926
        %v2928 = vpop.f32.mrf.mxu0
        %2929 = vmatprep.mubr.f32.mxu0 %v2463
        %2930 = vmatmul.mubr.f32.gmra.mxu0 %v674
        %v2931 = vpop.f32.mrf.mxu0
        %v2932 = vadd.f32 %v2028, %v2931
        %v2933 = vpop.f32.mrf.mxu0
        %2934 = vmatprep.mubr.f32.mxu0 %v2466
        %2935 = vmatmul.mubr.f32.gmra.mxu0 %v676
        %v2936 = vpop.f32.mrf.mxu0
        %v2937 = vadd.f32 %v2033, %v2936
        %v2938 = vpop.f32.mrf.mxu0
        %2939 = vmatprep.mubr.f32.mxu0 %v2469
        %2940 = vmatmul.mubr.f32.gmra.mxu0 %v678
        %v2941 = vpop.f32.mrf.mxu0
        %v2942 = vadd.f32 %v2038, %v2941
        %v2943 = vpop.f32.mrf.mxu0
        %2944 = vmatprep.mubr.f32.mxu0 %v2472
        %2945 = vmatmul.mubr.f32.gmra.mxu0 %v680
        %v2946 = vpop.f32.mrf.mxu0
        %v2947 = vadd.f32 %v2043, %v2946
        %v2948 = vpop.f32.mrf.mxu0
        %2949 = vmatprep.mubr.f32.mxu0 %v2475
        %2950 = vmatmul.mubr.f32.gmra.mxu0 %v682
        %v2951 = vpop.f32.mrf.mxu0
        %v2952 = vadd.f32 %v2048, %v2951
        %v2953 = vpop.f32.mrf.mxu0
        %2954 = vmatprep.mubr.f32.mxu0 %v2478
        %2955 = vmatmul.mubr.f32.gmra.mxu0 %v684
        %v2956 = vpop.f32.mrf.mxu0
        %v2957 = vadd.f32 %v2053, %v2956
        %v2958 = vpop.f32.mrf.mxu0
        %2959 = vmatprep.mubr.f32.mxu0 %v2481
        %2960 = vmatmul.mubr.f32.gmra.mxu0 %v686
        %v2961 = vpop.f32.mrf.mxu0
        %v2962 = vadd.f32 %v2058, %v2961
        %v2963 = vpop.f32.mrf.mxu0
        %2964 = vmatprep.mubr.f32.mxu0 %v2484
        %2965 = vmatmul.mubr.f32.gmra.mxu0 %v688
        %v2966 = vpop.f32.mrf.mxu0
        %v2967 = vadd.f32 %v2063, %v2966
        %v2968 = vpop.f32.mrf.mxu0
        %2969 = vmatprep.mubr.f32.mxu0 %v2487
        %2970 = vmatmul.mubr.f32.gmra.mxu0 %v690
        %v2971 = vpop.f32.mrf.mxu0
        %v2972 = vadd.f32 %v2068, %v2971
        %v2973 = vpop.f32.mrf.mxu0
        %2974 = vmatprep.mubr.f32.mxu0 %v2490
        %2975 = vmatmul.mubr.f32.gmra.mxu0 %v692
        %v2976 = vpop.f32.mrf.mxu0
        %v2977 = vadd.f32 %v2073, %v2976
        %v2978 = vpop.f32.mrf.mxu0
        %2979 = vmatprep.mubr.f32.mxu0 %v2493
        %2980 = vmatmul.mubr.f32.gmra.mxu0 %v694
        %v2981 = vpop.f32.mrf.mxu0
        %v2982 = vadd.f32 %v2078, %v2981
        %v2983 = vpop.f32.mrf.mxu0
        %2984 = vmatprep.mubr.f32.mxu0 %v2496
        %2985 = vmatmul.mubr.f32.gmra.mxu0 %v696
        %v2986 = vpop.f32.mrf.mxu0
        %v2987 = vadd.f32 %v2083, %v2986
        %v2988 = vpop.f32.mrf.mxu0
        %2989 = vmatprep.mubr.f32.mxu0 %v2499
        %2990 = vmatmul.mubr.f32.gmra.mxu0 %v698
        %v2991 = vpop.f32.mrf.mxu0
        %v2992 = vadd.f32 %v2088, %v2991
        %v2993 = vpop.f32.mrf.mxu0
        %2994 = vmatprep.mubr.f32.mxu0 %v2502
        %2995 = vmatmul.mubr.f32.gmra.mxu0 %v700
        %v2996 = vpop.f32.mrf.mxu0
        %v2997 = vadd.f32 %v2093, %v2996
        %v2998 = vpop.f32.mrf.mxu0
        %2999 = vmatprep.mubr.f32.mxu0 %v2505
        %3000 = vmatmul.mubr.f32.gmra.mxu0 %v702
        %v3001 = vpop.f32.mrf.mxu0
        %v3002 = vadd.f32 %v2098, %v3001
        %v3003 = vpop.f32.mrf.mxu0
        %3004 = vmatprep.mubr.f32.mxu0 %v2508
        %3005 = vmatmul.mubr.f32.gmra.mxu0 %v704
        %v3006 = vpop.f32.mrf.mxu0
        %v3007 = vadd.f32 %v2103, %v3006
        %v3008 = vpop.f32.mrf.mxu0
        %3009 = vmatprep.mubr.f32.mxu0 %v2511
        %3010 = vmatmul.mubr.f32.gmra.mxu0 %v706
        %v3011 = vpop.f32.mrf.mxu0
        %v3012 = vadd.f32 %v2108, %v3011
        %v3013 = vpop.f32.mrf.mxu0
        %3014 = vmatprep.mubr.f32.mxu0 %v2514
        %3015 = vmatmul.mubr.f32.gmra.mxu0 %v708
        %v3016 = vpop.f32.mrf.mxu0
        %v3017 = vadd.f32 %v2113, %v3016
        %v3018 = vpop.f32.mrf.mxu0
        %3019 = vmatprep.mubr.f32.mxu0 %v2517
        %3020 = vmatmul.mubr.f32.gmra.mxu0 %v710
        %v3021 = vpop.f32.mrf.mxu0
        %v3022 = vadd.f32 %v2118, %v3021
        %v3023 = vpop.f32.mrf.mxu0
        %3024 = vmatprep.mubr.f32.mxu0 %v2520
        %3025 = vmatmul.mubr.f32.gmra.mxu0 %v712
        %v3026 = vpop.f32.mrf.mxu0
        %v3027 = vadd.f32 %v2123, %v3026
        %v3028 = vpop.f32.mrf.mxu0
        %3029 = vmatprep.mubr.f32.mxu0 %v2523
        %3030 = vmatmul.mubr.f32.gmra.mxu0 %v714
        %v3031 = vpop.f32.mrf.mxu0
        %v3032 = vadd.f32 %v2128, %v3031
        %v3033 = vpop.f32.mrf.mxu0
        %3034 = vmatprep.mubr.f32.mxu0 %v2526
        %3035 = vmatmul.mubr.f32.gmra.mxu0 %v716
        %v3036 = vpop.f32.mrf.mxu0
        %v3037 = vadd.f32 %v2133, %v3036
        %v3038 = vpop.f32.mrf.mxu0
        %3039 = vmatprep.mubr.f32.mxu0 %v2529
        %3040 = vmatmul.mubr.f32.gmra.mxu0 %v718
        %v3041 = vpop.f32.mrf.mxu0
        %v3042 = vadd.f32 %v2138, %v3041
        %v3043 = vpop.f32.mrf.mxu0
        %3044 = vmatprep.mubr.f32.mxu0 %v2532
        %3045 = vmatmul.mubr.f32.gmra.mxu0 %v720
        %v3046 = vpop.f32.mrf.mxu0
        %v3047 = vadd.f32 %v2143, %v3046
        %v3048 = vpop.f32.mrf.mxu0
        %3049 = vmatprep.mubr.f32.mxu0 %v2535
        %3050 = vmatmul.mubr.f32.gmra.mxu0 %v722
        %v3051 = vpop.f32.mrf.mxu0
        %v3052 = vadd.f32 %v2148, %v3051
        %v3053 = vpop.f32.mrf.mxu0
        %3054 = vmatprep.mubr.f32.mxu0 %v2538
        %3055 = vmatmul.mubr.f32.gmra.mxu0 %v724
        %v3056 = vpop.f32.mrf.mxu0
        %v3057 = vadd.f32 %v2153, %v3056
        %v3058 = vpop.f32.mrf.mxu0
        %3059 = vmatprep.mubr.f32.mxu0 %v2541
        %3060 = vmatmul.mubr.f32.gmra.mxu0 %v726
        %v3061 = vpop.f32.mrf.mxu0
        %v3062 = vadd.f32 %v2158, %v3061
        %v3063 = vpop.f32.mrf.mxu0
        %3064 = vmatprep.mubr.f32.mxu0 %v2544
        %3065 = vmatmul.mubr.f32.gmra.mxu0 %v728
        %v3066 = vpop.f32.mrf.mxu0
        %v3067 = vadd.f32 %v2163, %v3066
        %v3068 = vpop.f32.mrf.mxu0
        %3069 = vmatprep.mubr.f32.mxu0 %v2547
        %3070 = vmatmul.mubr.f32.gmra.mxu0 %v730
        %v3071 = vpop.f32.mrf.mxu0
        %v3072 = vadd.f32 %v2168, %v3071
        %v3073 = vpop.f32.mrf.mxu0
        %3074 = vmatprep.mubr.f32.mxu0 %v2550
        %3075 = vmatmul.mubr.f32.gmra.mxu0 %v732
        %v3076 = vpop.f32.mrf.mxu0
        %v3077 = vadd.f32 %v2173, %v3076
        %v3078 = vpop.f32.mrf.mxu0
        %3079 = vmatprep.mubr.f32.mxu0 %v2553
        %3080 = vmatmul.mubr.f32.gmra.mxu0 %v734
        %v3081 = vpop.f32.mrf.mxu0
        %v3082 = vadd.f32 %v2178, %v3081
        %v3083 = vpop.f32.mrf.mxu0
        %3084 = vmatprep.mubr.f32.mxu0 %v2556
        %3085 = vmatmul.mubr.f32.gmra.mxu0 %v736
        %v3086 = vpop.f32.mrf.mxu0
        %v3087 = vadd.f32 %v2183, %v3086
        %v3088 = vpop.f32.mrf.mxu0
        %3089 = vmatprep.mubr.f32.mxu0 %v2559
        %3090 = vmatmul.mubr.f32.gmra.mxu0 %v738
        %v3091 = vpop.f32.mrf.mxu0
        %v3092 = vadd.f32 %v2188, %v3091
        %v3093 = vpop.f32.mrf.mxu0
        %3094 = vmatprep.mubr.f32.mxu0 %v2562
        %3095 = vmatmul.mubr.f32.gmra.mxu0 %v740
        %v3096 = vpop.f32.mrf.mxu0
        %v3097 = vadd.f32 %v2193, %v3096
        %v3098 = vpop.f32.mrf.mxu0
        %3099 = vmatprep.mubr.f32.mxu0 %v2565
        %3100 = vmatmul.mubr.f32.gmra.mxu0 %v742
        %v3101 = vpop.f32.mrf.mxu0
        %v3102 = vadd.f32 %v2198, %v3101
        %v3103 = vpop.f32.mrf.mxu0
        %3104 = vmatprep.mubr.f32.mxu0 %v2568
        %3105 = vmatmul.mubr.f32.gmra.mxu0 %v744
        %v3106 = vpop.f32.mrf.mxu0
        %v3107 = vadd.f32 %v2203, %v3106
        %v3108 = vpop.f32.mrf.mxu0
        %3109 = vmatprep.mubr.f32.mxu0 %v2571
        %3110 = vmatmul.mubr.f32.gmra.mxu0 %v746
        %v3111 = vpop.f32.mrf.mxu0
        %v3112 = vadd.f32 %v2208, %v3111
        %v3113 = vpop.f32.mrf.mxu0
        %3114 = vmatprep.mubr.f32.mxu0 %v2574
        %3115 = vmatmul.mubr.f32.gmra.mxu0 %v748
        %v3116 = vpop.f32.mrf.mxu0
        %v3117 = vadd.f32 %v2213, %v3116
        %v3118 = vpop.f32.mrf.mxu0
        %3119 = vmatprep.mubr.f32.mxu0 %v2577
        %3120 = vmatmul.mubr.f32.gmra.mxu0 %v750
        %v3121 = vpop.f32.mrf.mxu0
        %v3122 = vadd.f32 %v2218, %v3121
        %v3123 = vpop.f32.mrf.mxu0
        %3124 = vmatprep.mubr.f32.mxu0 %v2580
        %3125 = vmatmul.mubr.f32.gmra.mxu0 %v752
        %v3126 = vpop.f32.mrf.mxu0
        %v3127 = vadd.f32 %v2223, %v3126
        %v3128 = vpop.f32.mrf.mxu0
        %3129 = vmatprep.mubr.f32.mxu0 %v2583
        %3130 = vmatmul.mubr.f32.gmra.mxu0 %v754
        %v3131 = vpop.f32.mrf.mxu0
        %v3132 = vadd.f32 %v2228, %v3131
        %v3133 = vpop.f32.mrf.mxu0
        %3134 = vmatprep.mubr.f32.mxu0 %v2586
        %3135 = vmatmul.mubr.f32.gmra.mxu0 %v756
        %v3136 = vpop.f32.mrf.mxu0
        %v3137 = vadd.f32 %v2233, %v3136
        %v3138 = vpop.f32.mrf.mxu0
        %3139 = vmatprep.mubr.f32.mxu0 %v2589
        %3140 = vmatmul.mubr.f32.gmra.mxu0 %v758
        %v3141 = vpop.f32.mrf.mxu0
        %v3142 = vadd.f32 %v2238, %v3141
        %v3143 = vpop.f32.mrf.mxu0
        %3144 = vmatprep.mubr.f32.mxu0 %v2592
        %3145 = vmatmul.mubr.f32.gmra.mxu0 %v760
        %v3146 = vpop.f32.mrf.mxu0
        %v3147 = vadd.f32 %v2243, %v3146
        %v3148 = vpop.f32.mrf.mxu0
        %3149 = vmatprep.mubr.f32.mxu0 %v2595
        %3150 = vmatmul.mubr.f32.gmra.mxu0 %v762
        %v3151 = vpop.f32.mrf.mxu0
        %v3152 = vadd.f32 %v2248, %v3151
        %v3153 = vpop.f32.mrf.mxu0
        %3154 = vmatprep.mubr.f32.mxu0 %v2598
        %3155 = vmatmul.mubr.f32.gmra.mxu0 %v764
        %v3156 = vpop.f32.mrf.mxu0
        %v3157 = vadd.f32 %v2253, %v3156
        %v3158 = vpop.f32.mrf.mxu0
        %3159 = vmatprep.mubr.f32.mxu0 %v2601
        %3160 = vmatmul.mubr.f32.gmra.mxu0 %v766
        %v3161 = vpop.f32.mrf.mxu0
        %v3162 = vadd.f32 %v2258, %v3161
        %v3163 = vpop.f32.mrf.mxu0
        %3164 = vmatprep.mubr.f32.mxu0 %v2604
        %3165 = vmatmul.mubr.f32.gmra.mxu0 %v768
        %v3166 = vpop.f32.mrf.mxu0
        %v3167 = vadd.f32 %v2263, %v3166
        %v3168 = vpop.f32.mrf.mxu0
        %3169 = vmatprep.mubr.f32.mxu0 %v2607
        %3170 = vmatmul.mubr.f32.gmra.mxu0 %v770
        %v3171 = vpop.f32.mrf.mxu0
        %v3172 = vadd.f32 %v2268, %v3171
        %v3173 = vpop.f32.mrf.mxu0
        %3174 = vmatprep.mubr.f32.mxu0 %v2610
        %3175 = vmatmul.mubr.f32.gmra.mxu0 %v772
        %v3176 = vpop.f32.mrf.mxu0
        %v3177 = vadd.f32 %v2273, %v3176
        %v3178 = vpop.f32.mrf.mxu0
        %3179 = vmatprep.mubr.f32.mxu0 %v2613
        %3180 = vmatmul.mubr.f32.gmra.mxu0 %v774
        %v3181 = vpop.f32.mrf.mxu0
        %v3182 = vadd.f32 %v2278, %v3181
        %v3183 = vpop.f32.mrf.mxu0
        %3184 = vmatprep.mubr.f32.mxu0 %v2616
        %3185 = vmatmul.mubr.f32.gmra.mxu0 %v776
        %v3186 = vpop.f32.mrf.mxu0
        %v3187 = vadd.f32 %v2283, %v3186
        %v3188 = vpop.f32.mrf.mxu0
        %3189 = vmatprep.mubr.f32.mxu0 %v2619
        %3190 = vmatmul.mubr.f32.gmra.mxu0 %v778
        %v3191 = vpop.f32.mrf.mxu0
        %v3192 = vadd.f32 %v2288, %v3191
        %v3193 = vpop.f32.mrf.mxu0
        %3194 = vmatprep.mubr.f32.mxu0 %v2622
        %3195 = vmatmul.mubr.f32.gmra.mxu0 %v780
        %v3196 = vpop.f32.mrf.mxu0
        %v3197 = vadd.f32 %v2293, %v3196
        %v3198 = vpop.f32.mrf.mxu0
        %3199 = vmatprep.mubr.f32.mxu0 %v2625
        %3200 = vmatmul.mubr.f32.gmra.mxu0 %v782
        %v3201 = vpop.f32.mrf.mxu0
        %v3202 = vadd.f32 %v2298, %v3201
        %v3203 = vpop.f32.mrf.mxu0
        %3204 = vmatprep.mubr.f32.mxu0 %v2628
        %3205 = vmatmul.mubr.f32.gmra.mxu0 %v784
        %v3206 = vpop.f32.mrf.mxu0
        %v3207 = vadd.f32 %v2303, %v3206
        %v3208 = vpop.f32.mrf.mxu0
        %3209 = vmatprep.mubr.f32.mxu0 %v2631
        %3210 = vmatmul.mubr.f32.gmra.mxu0 %v786
        %v3211 = vpop.f32.mrf.mxu0
        %v3212 = vadd.f32 %v2308, %v3211
        %v3213 = vpop.f32.mrf.mxu0
        %3214 = vmatprep.mubr.f32.mxu0 %v2634
        %3215 = vmatmul.mubr.f32.gmra.mxu0 %v788
        %v3216 = vpop.f32.mrf.mxu0
        %v3217 = vadd.f32 %v2313, %v3216
        %v3218 = vpop.f32.mrf.mxu0
        %3219 = vmatprep.mubr.f32.mxu0 %v2637
        %3220 = vmatmul.mubr.f32.gmra.mxu0 %v790
        %v3221 = vpop.f32.mrf.mxu0
        %v3222 = vadd.f32 %v2318, %v3221
        %v3223 = vpop.f32.mrf.mxu0
        %3224 = vmatprep.mubr.f32.mxu0 %v2640
        %3225 = vmatmul.mubr.f32.gmra.mxu0 %v792
        %v3226 = vpop.f32.mrf.mxu0
        %v3227 = vadd.f32 %v2323, %v3226
        %v3228 = vpop.f32.mrf.mxu0
        %3229 = vmatprep.mubr.f32.mxu0 %v2643
        %3230 = vmatmul.mubr.f32.gmra.mxu0 %v794
        %v3231 = vpop.f32.mrf.mxu0
        %v3232 = vadd.f32 %v2328, %v3231
        %v3233 = vpop.f32.mrf.mxu0
        %3234 = vmatprep.mubr.f32.mxu0 %v2646
        %3235 = vmatmul.mubr.f32.gmra.mxu0 %v796
        %v3236 = vpop.f32.mrf.mxu0
        %v3237 = vadd.f32 %v2333, %v3236
        %v3238 = vpop.f32.mrf.mxu0
        %3239 = vmatprep.mubr.f32.mxu0 %v2649
        %3240 = vmatmul.mubr.f32.gmra.mxu0 %v798
        %v3241 = vpop.f32.mrf.mxu0
        %v3242 = vadd.f32 %v2338, %v3241
        %v3243 = vpop.f32.mrf.mxu0
        %3244 = vmatprep.mubr.f32.mxu0 %v2652
        %3245 = vmatmul.mubr.f32.gmra.mxu0 %v800
        %v3246 = vpop.f32.mrf.mxu0
        %v3247 = vadd.f32 %v2343, %v3246
        %v3248 = vpop.f32.mrf.mxu0
        %3249 = vmatprep.mubr.f32.mxu0 %v2655
        %3250 = vmatmul.mubr.f32.gmra.mxu0 %v802
        %v3251 = vpop.f32.mrf.mxu0
        %v3252 = vadd.f32 %v2348, %v3251
        %v3253 = vpop.f32.mrf.mxu0
        %3254 = vmatprep.mubr.f32.mxu0 %v2658
        %3255 = vmatmul.mubr.f32.gmra.mxu0 %v804
        %v3256 = vpop.f32.mrf.mxu0
        %v3257 = vadd.f32 %v2353, %v3256
        %v3258 = vpop.f32.mrf.mxu0
        %3259 = vmatprep.mubr.f32.mxu0 %v2661
        %3260 = vmatmul.mubr.f32.gmra.mxu0 %v806
        %v3261 = vpop.f32.mrf.mxu0
        %v3262 = vadd.f32 %v2358, %v3261
        %v3263 = vpop.f32.mrf.mxu0
        %3264 = vmatprep.mubr.f32.mxu0 %v2664
        %3265 = vmatmul.mubr.f32.gmra.mxu0 %v808
        %v3266 = vpop.f32.mrf.mxu0
        %v3267 = vadd.f32 %v2363, %v3266
        %v3268 = vpop.f32.mrf.mxu0
        %3269 = vdwg.mxu0
        %v3270 = vld [vmem:[%s3] sm:$0xff]
        %v3271 = vld [vmem:[%s3 + $0x8] sm:$0xff]
        %v3272 = vld [vmem:[%s3 + $0x10] sm:$0xff]
        %v3273 = vld [vmem:[%s3 + $0x18] sm:$0xff]
        %v3274 = vld [vmem:[%s3 + $0x20] sm:$0xff]
        %v3275 = vld [vmem:[%s3 + $0x28] sm:$0xff]
        %v3276 = vld [vmem:[%s3 + $0x30] sm:$0xff]
        %v3277 = vld [vmem:[%s3 + $0x38] sm:$0xff]
        %v3278 = vld [vmem:[%s3 + $0x40] sm:$0xff]
        %v3279 = vld [vmem:[%s3 + $0x48] sm:$0xff]
        %v3280 = vld [vmem:[%s3 + $0x50] sm:$0xff]
        %v3281 = vld [vmem:[%s3 + $0x58] sm:$0xff]
        %v3282 = vld [vmem:[%s3 + $0x60] sm:$0xff]
        %v3283 = vld [vmem:[%s3 + $0x68] sm:$0xff]
        %v3284 = vld [vmem:[%s3 + $0x70] sm:$0xff]
        %v3285 = vld [vmem:[%s3 + $0x78] sm:$0xff]
        %v3286 = vld [vmem:[%s3 + $0x80] sm:$0xff]
        %v3287 = vld [vmem:[%s3 + $0x88] sm:$0xff]
        %v3288 = vld [vmem:[%s3 + $0x90] sm:$0xff]
        %v3289 = vld [vmem:[%s3 + $0x98] sm:$0xff]
        %v3290 = vld [vmem:[%s3 + $0xa0] sm:$0xff]
        %v3291 = vld [vmem:[%s3 + $0xa8] sm:$0xff]
        %v3292 = vld [vmem:[%s3 + $0xb0] sm:$0xff]
        %v3293 = vld [vmem:[%s3 + $0xb8] sm:$0xff]
        %v3294 = vld [vmem:[%s3 + $0xc0] sm:$0xff]
        %v3295 = vld [vmem:[%s3 + $0xc8] sm:$0xff]
        %v3296 = vld [vmem:[%s3 + $0xd0] sm:$0xff]
        %v3297 = vld [vmem:[%s3 + $0xd8] sm:$0xff]
        %v3298 = vld [vmem:[%s3 + $0xe0] sm:$0xff]
        %v3299 = vld [vmem:[%s3 + $0xe8] sm:$0xff]
        %v3300 = vld [vmem:[%s3 + $0xf0] sm:$0xff]
        %v3301 = vld [vmem:[%s3 + $0xf8] sm:$0xff]
        %v3302 = vld [vmem:[%s3 + $0x100] sm:$0xff]
        %v3303 = vld [vmem:[%s3 + $0x108] sm:$0xff]
        %v3304 = vld [vmem:[%s3 + $0x110] sm:$0xff]
        %v3305 = vld [vmem:[%s3 + $0x118] sm:$0xff]
        %v3306 = vld [vmem:[%s3 + $0x120] sm:$0xff]
        %v3307 = vld [vmem:[%s3 + $0x128] sm:$0xff]
        %v3308 = vld [vmem:[%s3 + $0x130] sm:$0xff]
        %v3309 = vld [vmem:[%s3 + $0x138] sm:$0xff]
        %v3310 = vld [vmem:[%s3 + $0x140] sm:$0xff]
        %v3311 = vld [vmem:[%s3 + $0x148] sm:$0xff]
        %v3312 = vld [vmem:[%s3 + $0x150] sm:$0xff]
        %v3313 = vld [vmem:[%s3 + $0x158] sm:$0xff]
        %v3314 = vld [vmem:[%s3 + $0x160] sm:$0xff]
        %v3315 = vld [vmem:[%s3 + $0x168] sm:$0xff]
        %v3316 = vld [vmem:[%s3 + $0x170] sm:$0xff]
        %v3317 = vld [vmem:[%s3 + $0x178] sm:$0xff]
        %v3318 = vld [vmem:[%s3 + $0x180] sm:$0xff]
        %v3319 = vld [vmem:[%s3 + $0x188] sm:$0xff]
        %v3320 = vld [vmem:[%s3 + $0x190] sm:$0xff]
        %v3321 = vld [vmem:[%s3 + $0x198] sm:$0xff]
        %v3322 = vld [vmem:[%s3 + $0x1a0] sm:$0xff]
        %v3323 = vld [vmem:[%s3 + $0x1a8] sm:$0xff]
        %v3324 = vld [vmem:[%s3 + $0x1b0] sm:$0xff]
        %v3325 = vld [vmem:[%s3 + $0x1b8] sm:$0xff]
        %v3326 = vld [vmem:[%s3 + $0x1c0] sm:$0xff]
        %v3327 = vld [vmem:[%s3 + $0x1c8] sm:$0xff]
        %v3328 = vld [vmem:[%s3 + $0x1d0] sm:$0xff]
        %v3329 = vld [vmem:[%s3 + $0x1d8] sm:$0xff]
        %v3330 = vld [vmem:[%s3 + $0x1e0] sm:$0xff]
        %v3331 = vld [vmem:[%s3 + $0x1e8] sm:$0xff]
        %v3332 = vld [vmem:[%s3 + $0x1f0] sm:$0xff]
        %v3333 = vld [vmem:[%s3 + $0x1f8] sm:$0xff]
        %v3334 = vld [vmem:[%s3 + $0x200] sm:$0xff]
        %v3335 = vld [vmem:[%s3 + $0x208] sm:$0xff]
        %v3336 = vld [vmem:[%s3 + $0x210] sm:$0xff]
        %v3337 = vld [vmem:[%s3 + $0x218] sm:$0xff]
        %v3338 = vld [vmem:[%s3 + $0x220] sm:$0xff]
        %v3339 = vld [vmem:[%s3 + $0x228] sm:$0xff]
        %v3340 = vld [vmem:[%s3 + $0x230] sm:$0xff]
        %v3341 = vld [vmem:[%s3 + $0x238] sm:$0xff]
        %v3342 = vld [vmem:[%s3 + $0x240] sm:$0xff]
        %v3343 = vld [vmem:[%s3 + $0x248] sm:$0xff]
        %v3344 = vld [vmem:[%s3 + $0x250] sm:$0xff]
        %v3345 = vld [vmem:[%s3 + $0x258] sm:$0xff]
        %v3346 = vld [vmem:[%s3 + $0x260] sm:$0xff]
        %v3347 = vld [vmem:[%s3 + $0x268] sm:$0xff]
        %v3348 = vld [vmem:[%s3 + $0x270] sm:$0xff]
        %v3349 = vld [vmem:[%s3 + $0x278] sm:$0xff]
        %v3350 = vld [vmem:[%s3 + $0x280] sm:$0xff]
        %v3351 = vld [vmem:[%s3 + $0x288] sm:$0xff]
        %v3352 = vld [vmem:[%s3 + $0x290] sm:$0xff]
        %v3353 = vld [vmem:[%s3 + $0x298] sm:$0xff]
        %v3354 = vld [vmem:[%s3 + $0x2a0] sm:$0xff]
        %v3355 = vld [vmem:[%s3 + $0x2a8] sm:$0xff]
        %v3356 = vld [vmem:[%s3 + $0x2b0] sm:$0xff]
        %v3357 = vld [vmem:[%s3 + $0x2b8] sm:$0xff]
        %v3358 = vld [vmem:[%s3 + $0x2c0] sm:$0xff]
        %v3359 = vld [vmem:[%s3 + $0x2c8] sm:$0xff]
        %v3360 = vld [vmem:[%s3 + $0x2d0] sm:$0xff]
        %v3361 = vld [vmem:[%s3 + $0x2d8] sm:$0xff]
        %v3362 = vld [vmem:[%s3 + $0x2e0] sm:$0xff]
        %v3363 = vld [vmem:[%s3 + $0x2e8] sm:$0xff]
        %v3364 = vld [vmem:[%s3 + $0x2f0] sm:$0xff]
        %v3365 = vld [vmem:[%s3 + $0x2f8] sm:$0xff]
        %v3366 = vld [vmem:[%s3 + $0x300] sm:$0xff]
        %v3367 = vld [vmem:[%s3 + $0x308] sm:$0xff]
        %v3368 = vld [vmem:[%s3 + $0x310] sm:$0xff]
        %v3369 = vld [vmem:[%s3 + $0x318] sm:$0xff]
        %v3370 = vadd.f32 %v2772, %v3270
        %v3371 = vadd.f32 %v2777, %v3271
        %v3372 = vadd.f32 %v2782, %v3272
        %v3373 = vadd.f32 %v2787, %v3273
        %v3374 = vadd.f32 %v2792, %v3274
        %v3375 = vadd.f32 %v2797, %v3275
        %v3376 = vadd.f32 %v2802, %v3276
        %v3377 = vadd.f32 %v2807, %v3277
        %v3378 = vadd.f32 %v2812, %v3278
        %v3379 = vadd.f32 %v2817, %v3279
        %v3380 = vadd.f32 %v2822, %v3280
        %v3381 = vadd.f32 %v2827, %v3281
        %v3382 = vadd.f32 %v2832, %v3282
        %v3383 = vadd.f32 %v2837, %v3283
        %v3384 = vadd.f32 %v2842, %v3284
        %v3385 = vadd.f32 %v2847, %v3285
        %v3386 = vadd.f32 %v2852, %v3286
        %v3387 = vadd.f32 %v2857, %v3287
        %v3388 = vadd.f32 %v2862, %v3288
        %v3389 = vadd.f32 %v2867, %v3289
        %v3390 = vadd.f32 %v2872, %v3290
        %v3391 = vadd.f32 %v2877, %v3291
        %v3392 = vadd.f32 %v2882, %v3292
        %v3393 = vadd.f32 %v2887, %v3293
        %v3394 = vadd.f32 %v2892, %v3294
        %v3395 = vadd.f32 %v2897, %v3295
        %v3396 = vadd.f32 %v2902, %v3296
        %v3397 = vadd.f32 %v2907, %v3297
        %v3398 = vadd.f32 %v2912, %v3298
        %v3399 = vadd.f32 %v2917, %v3299
        %v3400 = vadd.f32 %v2922, %v3300
        %v3401 = vadd.f32 %v2927, %v3301
        %v3402 = vadd.f32 %v2932, %v3302
        %v3403 = vadd.f32 %v2937, %v3303
        %v3404 = vadd.f32 %v2942, %v3304
        %v3405 = vadd.f32 %v2947, %v3305
        %v3406 = vadd.f32 %v2952, %v3306
        %v3407 = vadd.f32 %v2957, %v3307
        %v3408 = vadd.f32 %v2962, %v3308
        %v3409 = vadd.f32 %v2967, %v3309
        %v3410 = vadd.f32 %v2972, %v3310
        %v3411 = vadd.f32 %v2977, %v3311
        %v3412 = vadd.f32 %v2982, %v3312
        %v3413 = vadd.f32 %v2987, %v3313
        %v3414 = vadd.f32 %v2992, %v3314
        %v3415 = vadd.f32 %v2997, %v3315
        %v3416 = vadd.f32 %v3002, %v3316
        %v3417 = vadd.f32 %v3007, %v3317
        %v3418 = vadd.f32 %v3012, %v3318
        %v3419 = vadd.f32 %v3017, %v3319
        %v3420 = vadd.f32 %v3022, %v3320
        %v3421 = vadd.f32 %v3027, %v3321
        %v3422 = vadd.f32 %v3032, %v3322
        %v3423 = vadd.f32 %v3037, %v3323
        %v3424 = vadd.f32 %v3042, %v3324
        %v3425 = vadd.f32 %v3047, %v3325
        %v3426 = vadd.f32 %v3052, %v3326
        %v3427 = vadd.f32 %v3057, %v3327
        %v3428 = vadd.f32 %v3062, %v3328
        %v3429 = vadd.f32 %v3067, %v3329
        %v3430 = vadd.f32 %v3072, %v3330
        %v3431 = vadd.f32 %v3077, %v3331
        %v3432 = vadd.f32 %v3082, %v3332
        %v3433 = vadd.f32 %v3087, %v3333
        %v3434 = vadd.f32 %v3092, %v3334
        %v3435 = vadd.f32 %v3097, %v3335
        %v3436 = vadd.f32 %v3102, %v3336
        %v3437 = vadd.f32 %v3107, %v3337
        %v3438 = vadd.f32 %v3112, %v3338
        %v3439 = vadd.f32 %v3117, %v3339
        %v3440 = vadd.f32 %v3122, %v3340
        %v3441 = vadd.f32 %v3127, %v3341
        %v3442 = vadd.f32 %v3132, %v3342
        %v3443 = vadd.f32 %v3137, %v3343
        %v3444 = vadd.f32 %v3142, %v3344
        %v3445 = vadd.f32 %v3147, %v3345
        %v3446 = vadd.f32 %v3152, %v3346
        %v3447 = vadd.f32 %v3157, %v3347
        %v3448 = vadd.f32 %v3162, %v3348
        %v3449 = vadd.f32 %v3167, %v3349
        %v3450 = vadd.f32 %v3172, %v3350
        %v3451 = vadd.f32 %v3177, %v3351
        %v3452 = vadd.f32 %v3182, %v3352
        %v3453 = vadd.f32 %v3187, %v3353
        %v3454 = vadd.f32 %v3192, %v3354
        %v3455 = vadd.f32 %v3197, %v3355
        %v3456 = vadd.f32 %v3202, %v3356
        %v3457 = vadd.f32 %v3207, %v3357
        %v3458 = vadd.f32 %v3212, %v3358
        %v3459 = vadd.f32 %v3217, %v3359
        %v3460 = vadd.f32 %v3222, %v3360
        %v3461 = vadd.f32 %v3227, %v3361
        %v3462 = vadd.f32 %v3232, %v3362
        %v3463 = vadd.f32 %v3237, %v3363
        %v3464 = vadd.f32 %v3242, %v3364
        %v3465 = vadd.f32 %v3247, %v3365
        %v3466 = vadd.f32 %v3252, %v3366
        %v3467 = vadd.f32 %v3257, %v3367
        %v3468 = vadd.f32 %v3262, %v3368
        %v3469 = vadd.f32 %v3267, %v3369
        %v3470 = vmax.f32 %v3370, 0.0
        %v3471 = vmax.f32 %v3371, 0.0
        %v3472 = vmax.f32 %v3372, 0.0
        %v3473 = vmax.f32 %v3373, 0.0
        %v3474 = vmax.f32 %v3374, 0.0
        %v3475 = vmax.f32 %v3375, 0.0
        %v3476 = vmax.f32 %v3376, 0.0
        %v3477 = vmax.f32 %v3377, 0.0
        %v3478 = vmax.f32 %v3378, 0.0
        %v3479 = vmax.f32 %v3379, 0.0
        %v3480 = vmax.f32 %v3380, 0.0
        %v3481 = vmax.f32 %v3381, 0.0
        %v3482 = vmax.f32 %v3382, 0.0
        %v3483 = vmax.f32 %v3383, 0.0
        %v3484 = vmax.f32 %v3384, 0.0
        %v3485 = vmax.f32 %v3385, 0.0
        %v3486 = vmax.f32 %v3386, 0.0
        %v3487 = vmax.f32 %v3387, 0.0
        %v3488 = vmax.f32 %v3388, 0.0
        %v3489 = vmax.f32 %v3389, 0.0
        %v3490 = vmax.f32 %v3390, 0.0
        %v3491 = vmax.f32 %v3391, 0.0
        %v3492 = vmax.f32 %v3392, 0.0
        %v3493 = vmax.f32 %v3393, 0.0
        %v3494 = vmax.f32 %v3394, 0.0
        %v3495 = vmax.f32 %v3395, 0.0
        %v3496 = vmax.f32 %v3396, 0.0
        %v3497 = vmax.f32 %v3397, 0.0
        %v3498 = vmax.f32 %v3398, 0.0
        %v3499 = vmax.f32 %v3399, 0.0
        %v3500 = vmax.f32 %v3400, 0.0
        %v3501 = vmax.f32 %v3401, 0.0
        %v3502 = vmax.f32 %v3402, 0.0
        %v3503 = vmax.f32 %v3403, 0.0
        %v3504 = vmax.f32 %v3404, 0.0
        %v3505 = vmax.f32 %v3405, 0.0
        %v3506 = vmax.f32 %v3406, 0.0
        %v3507 = vmax.f32 %v3407, 0.0
        %v3508 = vmax.f32 %v3408, 0.0
        %v3509 = vmax.f32 %v3409, 0.0
        %v3510 = vmax.f32 %v3410, 0.0
        %v3511 = vmax.f32 %v3411, 0.0
        %v3512 = vmax.f32 %v3412, 0.0
        %v3513 = vmax.f32 %v3413, 0.0
        %v3514 = vmax.f32 %v3414, 0.0
        %v3515 = vmax.f32 %v3415, 0.0
        %v3516 = vmax.f32 %v3416, 0.0
        %v3517 = vmax.f32 %v3417, 0.0
        %v3518 = vmax.f32 %v3418, 0.0
        %v3519 = vmax.f32 %v3419, 0.0
        %v3520 = vmax.f32 %v3420, 0.0
        %v3521 = vmax.f32 %v3421, 0.0
        %v3522 = vmax.f32 %v3422, 0.0
        %v3523 = vmax.f32 %v3423, 0.0
        %v3524 = vmax.f32 %v3424, 0.0
        %v3525 = vmax.f32 %v3425, 0.0
        %v3526 = vmax.f32 %v3426, 0.0
        %v3527 = vmax.f32 %v3427, 0.0
        %v3528 = vmax.f32 %v3428, 0.0
        %v3529 = vmax.f32 %v3429, 0.0
        %v3530 = vmax.f32 %v3430, 0.0
        %v3531 = vmax.f32 %v3431, 0.0
        %v3532 = vmax.f32 %v3432, 0.0
        %v3533 = vmax.f32 %v3433, 0.0
        %v3534 = vmax.f32 %v3434, 0.0
        %v3535 = vmax.f32 %v3435, 0.0
        %v3536 = vmax.f32 %v3436, 0.0
        %v3537 = vmax.f32 %v3437, 0.0
        %v3538 = vmax.f32 %v3438, 0.0
        %v3539 = vmax.f32 %v3439, 0.0
        %v3540 = vmax.f32 %v3440, 0.0
        %v3541 = vmax.f32 %v3441, 0.0
        %v3542 = vmax.f32 %v3442, 0.0
        %v3543 = vmax.f32 %v3443, 0.0
        %v3544 = vmax.f32 %v3444, 0.0
        %v3545 = vmax.f32 %v3445, 0.0
        %v3546 = vmax.f32 %v3446, 0.0
        %v3547 = vmax.f32 %v3447, 0.0
        %v3548 = vmax.f32 %v3448, 0.0
        %v3549 = vmax.f32 %v3449, 0.0
        %v3550 = vmax.f32 %v3450, 0.0
        %v3551 = vmax.f32 %v3451, 0.0
        %v3552 = vmax.f32 %v3452, 0.0
        %v3553 = vmax.f32 %v3453, 0.0
        %v3554 = vmax.f32 %v3454, 0.0
        %v3555 = vmax.f32 %v3455, 0.0
        %v3556 = vmax.f32 %v3456, 0.0
        %v3557 = vmax.f32 %v3457, 0.0
        %v3558 = vmax.f32 %v3458, 0.0
        %v3559 = vmax.f32 %v3459, 0.0
        %v3560 = vmax.f32 %v3460, 0.0
        %v3561 = vmax.f32 %v3461, 0.0
        %v3562 = vmax.f32 %v3462, 0.0
        %v3563 = vmax.f32 %v3463, 0.0
        %v3564 = vmax.f32 %v3464, 0.0
        %v3565 = vmax.f32 %v3465, 0.0
        %v3566 = vmax.f32 %v3466, 0.0
        %v3567 = vmax.f32 %v3467, 0.0
        %v3568 = vmax.f32 %v3468, 0.0
        %v3569 = vmax.f32 %v3469, 0.0
        %v3570 = vld [vmem:[%s5] sm:$0xff]
        %v3571 = vld [vmem:[%s5 + $0x8] sm:$0xff]
        %v3572 = vld [vmem:[%s4] sm:$0xff]
        %v3573 = vld [vmem:[%s4 + $0x8] sm:$0xff]
        %v3574 = vld [vmem:[%s4 + $0x10] sm:$0xff]
        %v3575 = vld [vmem:[%s4 + $0x18] sm:$0xff]
        %v3576 = vld [vmem:[%s4 + $0x20] sm:$0xff]
        %v3577 = vld [vmem:[%s4 + $0x28] sm:$0xff]
        %v3578 = vld [vmem:[%s4 + $0x30] sm:$0xff]
        %v3579 = vld [vmem:[%s4 + $0x38] sm:$0xff]
        %v3580 = vld [vmem:[%s4 + $0x40] sm:$0xff]
        %v3581 = vld [vmem:[%s4 + $0x48] sm:$0xff]
        %v3582 = vld [vmem:[%s4 + $0x50] sm:$0xff]
        %v3583 = vld [vmem:[%s4 + $0x58] sm:$0xff]
        %v3584 = vld [vmem:[%s4 + $0x60] sm:$0xff]
        %v3585 = vld [vmem:[%s4 + $0x68] sm:$0xff]
        %v3586 = vld [vmem:[%s4 + $0x70] sm:$0xff]
        %v3587 = vld [vmem:[%s4 + $0x78] sm:$0xff]
        %v3588 = vld [vmem:[%s4 + $0x80] sm:$0xff]
        %v3589 = vld [vmem:[%s4 + $0x88] sm:$0xff]
        %v3590 = vld [vmem:[%s4 + $0x90] sm:$0xff]
        %v3591 = vld [vmem:[%s4 + $0x98] sm:$0xff]
        %v3592 = vld [vmem:[%s4 + $0xa0] sm:$0xff]
        %v3593 = vld [vmem:[%s4 + $0xa8] sm:$0xff]
        %v3594 = vld [vmem:[%s4 + $0xb0] sm:$0xff]
        %v3595 = vld [vmem:[%s4 + $0xb8] sm:$0xff]
        %v3596 = vld [vmem:[%s4 + $0xc0] sm:$0xff]
        %v3597 = vld [vmem:[%s4 + $0xc8] sm:$0xff]
        %v3598 = vld [vmem:[%s4 + $0xd0] sm:$0xff]
        %v3599 = vld [vmem:[%s4 + $0xd8] sm:$0xff]
        %v3600 = vld [vmem:[%s4 + $0xe0] sm:$0xff]
        %v3601 = vld [vmem:[%s4 + $0xe8] sm:$0xff]
        %v3602 = vld [vmem:[%s4 + $0xf0] sm:$0xff]
        %v3603 = vld [vmem:[%s4 + $0xf8] sm:$0xff]
        %v3604 = vld [vmem:[%s4 + $0x100] sm:$0xff]
        %v3605 = vld [vmem:[%s4 + $0x108] sm:$0xff]
        %v3606 = vld [vmem:[%s4 + $0x110] sm:$0xff]
        %v3607 = vld [vmem:[%s4 + $0x118] sm:$0xff]
        %v3608 = vld [vmem:[%s4 + $0x120] sm:$0xff]
        %v3609 = vld [vmem:[%s4 + $0x128] sm:$0xff]
        %v3610 = vld [vmem:[%s4 + $0x130] sm:$0xff]
        %v3611 = vld [vmem:[%s4 + $0x138] sm:$0xff]
        %v3612 = vld [vmem:[%s4 + $0x140] sm:$0xff]
        %v3613 = vld [vmem:[%s4 + $0x148] sm:$0xff]
        %v3614 = vld [vmem:[%s4 + $0x150] sm:$0xff]
        %v3615 = vld [vmem:[%s4 + $0x158] sm:$0xff]
        %v3616 = vld [vmem:[%s4 + $0x160] sm:$0xff]
        %v3617 = vld [vmem:[%s4 + $0x168] sm:$0xff]
        %v3618 = vld [vmem:[%s4 + $0x170] sm:$0xff]
        %v3619 = vld [vmem:[%s4 + $0x178] sm:$0xff]
        %v3620 = vld [vmem:[%s4 + $0x180] sm:$0xff]
        %v3621 = vld [vmem:[%s4 + $0x188] sm:$0xff]
        %v3622 = vld [vmem:[%s4 + $0x190] sm:$0xff]
        %v3623 = vld [vmem:[%s4 + $0x198] sm:$0xff]
        %v3624 = vld [vmem:[%s4 + $0x1a0] sm:$0xff]
        %v3625 = vld [vmem:[%s4 + $0x1a8] sm:$0xff]
        %v3626 = vld [vmem:[%s4 + $0x1b0] sm:$0xff]
        %v3627 = vld [vmem:[%s4 + $0x1b8] sm:$0xff]
        %v3628 = vld [vmem:[%s4 + $0x1c0] sm:$0xff]
        %v3629 = vld [vmem:[%s4 + $0x1c8] sm:$0xff]
        %v3630 = vld [vmem:[%s4 + $0x1d0] sm:$0xff]
        %v3631 = vld [vmem:[%s4 + $0x1d8] sm:$0xff]
        %v3632 = vld [vmem:[%s4 + $0x1e0] sm:$0xff]
        %v3633 = vld [vmem:[%s4 + $0x1e8] sm:$0xff]
        %v3634 = vld [vmem:[%s4 + $0x1f0] sm:$0xff]
        %v3635 = vld [vmem:[%s4 + $0x1f8] sm:$0xff]
        %v3636 = vld [vmem:[%s4 + $0x200] sm:$0xff]
        %v3637 = vld [vmem:[%s4 + $0x208] sm:$0xff]
        %v3638 = vld [vmem:[%s4 + $0x210] sm:$0xff]
        %v3639 = vld [vmem:[%s4 + $0x218] sm:$0xff]
        %v3640 = vld [vmem:[%s4 + $0x220] sm:$0xff]
        %v3641 = vld [vmem:[%s4 + $0x228] sm:$0xff]
        %v3642 = vld [vmem:[%s4 + $0x230] sm:$0xff]
        %v3643 = vld [vmem:[%s4 + $0x238] sm:$0xff]
        %v3644 = vld [vmem:[%s4 + $0x240] sm:$0xff]
        %v3645 = vld [vmem:[%s4 + $0x248] sm:$0xff]
        %v3646 = vld [vmem:[%s4 + $0x250] sm:$0xff]
        %v3647 = vld [vmem:[%s4 + $0x258] sm:$0xff]
        %v3648 = vld [vmem:[%s4 + $0x260] sm:$0xff]
        %v3649 = vld [vmem:[%s4 + $0x268] sm:$0xff]
        %v3650 = vld [vmem:[%s4 + $0x270] sm:$0xff]
        %v3651 = vld [vmem:[%s4 + $0x278] sm:$0xff]
        %v3652 = vld [vmem:[%s4 + $0x280] sm:$0xff]
        %v3653 = vld [vmem:[%s4 + $0x288] sm:$0xff]
        %v3654 = vld [vmem:[%s4 + $0x290] sm:$0xff]
        %v3655 = vld [vmem:[%s4 + $0x298] sm:$0xff]
        %v3656 = vld [vmem:[%s4 + $0x2a0] sm:$0xff]
        %v3657 = vld [vmem:[%s4 + $0x2a8] sm:$0xff]
        %v3658 = vld [vmem:[%s4 + $0x2b0] sm:$0xff]
        %v3659 = vld [vmem:[%s4 + $0x2b8] sm:$0xff]
        %v3660 = vld [vmem:[%s4 + $0x2c0] sm:$0xff]
        %v3661 = vld [vmem:[%s4 + $0x2c8] sm:$0xff]
        %v3662 = vld [vmem:[%s4 + $0x2d0] sm:$0xff]
        %v3663 = vld [vmem:[%s4 + $0x2d8] sm:$0xff]
        %v3664 = vld [vmem:[%s4 + $0x2e0] sm:$0xff]
        %v3665 = vld [vmem:[%s4 + $0x2e8] sm:$0xff]
        %v3666 = vld [vmem:[%s4 + $0x2f0] sm:$0xff]
        %v3667 = vld [vmem:[%s4 + $0x2f8] sm:$0xff]
        %v3668 = vld [vmem:[%s4 + $0x300] sm:$0xff]
        %v3669 = vld [vmem:[%s4 + $0x308] sm:$0xff]
        %v3670 = vld [vmem:[%s4 + $0x310] sm:$0xff]
        %v3671 = vld [vmem:[%s4 + $0x318] sm:$0xff]
        %v3672 = vld [vmem:[%s4 + $0x320] sm:$0xff]
        %v3673 = vld [vmem:[%s4 + $0x328] sm:$0xff]
        %v3674 = vld [vmem:[%s4 + $0x330] sm:$0xff]
        %v3675 = vld [vmem:[%s4 + $0x338] sm:$0xff]
        %v3676 = vld [vmem:[%s4 + $0x340] sm:$0xff]
        %v3677 = vld [vmem:[%s4 + $0x348] sm:$0xff]
        %v3678 = vld [vmem:[%s4 + $0x350] sm:$0xff]
        %v3679 = vld [vmem:[%s4 + $0x358] sm:$0xff]
        %v3680 = vld [vmem:[%s4 + $0x360] sm:$0xff]
        %v3681 = vld [vmem:[%s4 + $0x368] sm:$0xff]
        %v3682 = vld [vmem:[%s4 + $0x370] sm:$0xff]
        %v3683 = vld [vmem:[%s4 + $0x378] sm:$0xff]
        %vm3684 = vcmask 818176
        %v3686 = vsel %vm3684, %v3570, 0
        %v3689 = vsel %vm3684, %v3571, 0
        %v3692 = vsel %vm3684, %v3470, 0
        %v3695 = vsel %vm3684, %v3471, 0
        %v3698 = vsel %vm3684, %v3472, 0
        %v3701 = vsel %vm3684, %v3473, 0
        %v3704 = vsel %vm3684, %v3474, 0
        %v3707 = vsel %vm3684, %v3475, 0
        %v3710 = vsel %vm3684, %v3476, 0
        %v3713 = vsel %vm3684, %v3477, 0
        %v3716 = vsel %vm3684, %v3478, 0
        %v3719 = vsel %vm3684, %v3479, 0
        %v3722 = vsel %vm3684, %v3480, 0
        %v3725 = vsel %vm3684, %v3481, 0
        %v3728 = vsel %vm3684, %v3482, 0
        %v3731 = vsel %vm3684, %v3483, 0
        %v3734 = vsel %vm3684, %v3484, 0
        %v3737 = vsel %vm3684, %v3485, 0
        %v3740 = vsel %vm3684, %v3486, 0
        %v3743 = vsel %vm3684, %v3487, 0
        %v3746 = vsel %vm3684, %v3488, 0
        %v3749 = vsel %vm3684, %v3489, 0
        %v3752 = vsel %vm3684, %v3490, 0
        %v3755 = vsel %vm3684, %v3491, 0
        %v3758 = vsel %vm3684, %v3492, 0
        %v3761 = vsel %vm3684, %v3493, 0
        %v3764 = vsel %vm3684, %v3494, 0
        %v3767 = vsel %vm3684, %v3495, 0
        %v3770 = vsel %vm3684, %v3496, 0
        %v3773 = vsel %vm3684, %v3497, 0
        %v3776 = vsel %vm3684, %v3498, 0
        %v3779 = vsel %vm3684, %v3499, 0
        %v3782 = vsel %vm3684, %v3500, 0
        %v3785 = vsel %vm3684, %v3501, 0
        %v3788 = vsel %vm3684, %v3502, 0
        %v3791 = vsel %vm3684, %v3503, 0
        %v3794 = vsel %vm3684, %v3504, 0
        %v3797 = vsel %vm3684, %v3505, 0
        %v3800 = vsel %vm3684, %v3506, 0
        %v3803 = vsel %vm3684, %v3507, 0
        %v3806 = vsel %vm3684, %v3508, 0
        %v3809 = vsel %vm3684, %v3509, 0
        %v3812 = vsel %vm3684, %v3510, 0
        %v3815 = vsel %vm3684, %v3511, 0
        %v3818 = vsel %vm3684, %v3512, 0
        %v3821 = vsel %vm3684, %v3513, 0
        %v3824 = vsel %vm3684, %v3514, 0
        %v3827 = vsel %vm3684, %v3515, 0
        %v3830 = vsel %vm3684, %v3516, 0
        %v3833 = vsel %vm3684, %v3517, 0
        %v3836 = vsel %vm3684, %v3518, 0
        %v3839 = vsel %vm3684, %v3519, 0
        %v3842 = vsel %vm3684, %v3520, 0
        %v3845 = vsel %vm3684, %v3521, 0
        %v3848 = vsel %vm3684, %v3522, 0
        %v3851 = vsel %vm3684, %v3523, 0
        %v3854 = vsel %vm3684, %v3524, 0
        %v3857 = vsel %vm3684, %v3525, 0
        %v3860 = vsel %vm3684, %v3526, 0
        %v3863 = vsel %vm3684, %v3527, 0
        %v3866 = vsel %vm3684, %v3528, 0
        %v3869 = vsel %vm3684, %v3529, 0
        %v3872 = vsel %vm3684, %v3530, 0
        %v3875 = vsel %vm3684, %v3531, 0
        %v3878 = vsel %vm3684, %v3532, 0
        %v3881 = vsel %vm3684, %v3533, 0
        %v3884 = vsel %vm3684, %v3534, 0
        %v3887 = vsel %vm3684, %v3535, 0
        %v3890 = vsel %vm3684, %v3536, 0
        %v3893 = vsel %vm3684, %v3537, 0
        %v3896 = vsel %vm3684, %v3538, 0
        %v3899 = vsel %vm3684, %v3539, 0
        %v3902 = vsel %vm3684, %v3540, 0
        %v3905 = vsel %vm3684, %v3541, 0
        %v3908 = vsel %vm3684, %v3542, 0
        %v3911 = vsel %vm3684, %v3543, 0
        %v3914 = vsel %vm3684, %v3544, 0
        %v3917 = vsel %vm3684, %v3545, 0
        %v3920 = vsel %vm3684, %v3546, 0
        %v3923 = vsel %vm3684, %v3547, 0
        %v3926 = vsel %vm3684, %v3548, 0
        %v3929 = vsel %vm3684, %v3549, 0
        %v3932 = vsel %vm3684, %v3550, 0
        %v3935 = vsel %vm3684, %v3551, 0
        %v3938 = vsel %vm3684, %v3552, 0
        %v3941 = vsel %vm3684, %v3553, 0
        %v3944 = vsel %vm3684, %v3554, 0
        %v3947 = vsel %vm3684, %v3555, 0
        %v3950 = vsel %vm3684, %v3556, 0
        %v3953 = vsel %vm3684, %v3557, 0
        %v3956 = vsel %vm3684, %v3558, 0
        %v3959 = vsel %vm3684, %v3559, 0
        %v3962 = vsel %vm3684, %v3560, 0
        %v3965 = vsel %vm3684, %v3561, 0
        %v3968 = vsel %vm3684, %v3562, 0
        %v3971 = vsel %vm3684, %v3563, 0
        %v3974 = vsel %vm3684, %v3564, 0
        %v3977 = vsel %vm3684, %v3565, 0
        %v3980 = vsel %vm3684, %v3566, 0
        %v3983 = vsel %vm3684, %v3567, 0
        %v3986 = vsel %vm3684, %v3568, 0
        %v3989 = vsel %vm3684, %v3569, 0
        %3991 = vmatprep.subr.mxu0 0.0
        %3992 = vmatpush1.xpose.msra.mxu0 %v3737
        %3993 = vmatprep.subr.mxu0 0.0
        %3994 = vmatpush1.xpose.msra.mxu0 %v3734
        %3995 = vmatprep.subr.mxu0 0.0
        %3996 = vmatpush1.xpose.msra.mxu0 %v3731
        %3997 = vmatprep.subr.mxu0 0.0
        %3998 = vmatpush1.xpose.msra.mxu0 %v3728
        %3999 = vmatprep.subr.mxu0 0.0
        %4000 = vmatpush1.xpose.msra.mxu0 %v3725
        %4001 = vmatprep.subr.mxu0 0.0
        %4002 = vmatpush1.xpose.msra.mxu0 %v3722
        %4003 = vmatprep.subr.mxu0 0.0
        %4004 = vmatpush1.xpose.msra.mxu0 %v3719
        %4005 = vmatprep.subr.mxu0 0.0
        %4006 = vmatpush1.xpose.msra.mxu0 %v3716
        %4007 = vmatprep.subr.mxu0 0.0
        %4008 = vmatpush1.xpose.msra.mxu0 %v3713
        %4009 = vmatprep.subr.mxu0 0.0
        %4010 = vmatpush1.xpose.msra.mxu0 %v3710
        %4011 = vmatprep.subr.mxu0 0.0
        %4012 = vmatpush1.xpose.msra.mxu0 %v3707
        %4013 = vmatprep.subr.mxu0 0.0
        %4014 = vmatpush1.xpose.msra.mxu0 %v3704
        %4015 = vmatprep.subr.mxu0 0.0
        %4016 = vmatpush1.xpose.msra.mxu0 %v3701
        %4017 = vmatprep.subr.mxu0 0.0
        %4018 = vmatpush1.xpose.msra.mxu0 %v3698
        %4019 = vmatprep.subr.mxu0 0.0
        %4020 = vmatpush1.xpose.msra.mxu0 %v3695
        %4021 = vmatprep.subr.mxu0 0.0
        %4022 = vmatpush1.xpose.msra.mxu0 %v3692
        %4023 = vmatprep.subr.mxu0 0.0
        %4024 = vmatpush2.xpose.msra.mxu0 %v3785
        %4025 = vmatprep.subr.mxu0 0.0
        %4026 = vmatpush2.xpose.msra.mxu0 %v3782
        %4027 = vmatprep.subr.mxu0 0.0
        %4028 = vmatpush2.xpose.msra.mxu0 %v3779
        %4029 = vmatprep.subr.mxu0 0.0
        %4030 = vmatpush2.xpose.msra.mxu0 %v3776
        %4031 = vmatprep.subr.mxu0 0.0
        %4032 = vmatpush2.xpose.msra.mxu0 %v3773
        %4033 = vmatprep.subr.mxu0 0.0
        %4034 = vmatpush2.xpose.msra.mxu0 %v3770
        %4035 = vmatprep.subr.mxu0 0.0
        %4036 = vmatpush2.xpose.msra.mxu0 %v3767
        %4037 = vmatprep.subr.mxu0 0.0
        %4038 = vmatpush2.xpose.msra.mxu0 %v3764
        %4039 = vmatprep.subr.mxu0 0.0
        %4040 = vmatpush2.xpose.msra.mxu0 %v3761
        %4041 = vmatprep.subr.mxu0 0.0
        %4042 = vmatpush2.xpose.msra.mxu0 %v3758
        %4043 = vmatprep.subr.mxu0 0.0
        %4044 = vmatpush2.xpose.msra.mxu0 %v3755
        %4045 = vmatprep.subr.mxu0 0.0
        %4046 = vmatpush2.xpose.msra.mxu0 %v3752
        %4047 = vmatprep.subr.mxu0 0.0
        %4048 = vmatpush2.xpose.msra.mxu0 %v3749
        %4049 = vmatprep.subr.mxu0 0.0
        %4050 = vmatpush2.xpose.msra.mxu0 %v3746
        %4051 = vmatprep.subr.mxu0 0.0
        %4052 = vmatpush2.xpose.msra.mxu0 %v3743
        %4053 = vmatprep.subr.mxu0 0.0
        %4054 = vmatpush2.xpose.msra.mxu0 %v3740
        %4055 = vmatprep.mubr.f32.mxu0 0.0
        %4056 = vmatmul.mubr.f32.gmra.mxu0 %v3686
        %v4057 = vpop.f32.mrf.mxu0
        %v4058 = vadd.f32 0.0, %v4057
        %v4059 = vpop.f32.mrf.mxu0
        %v4060 = vadd.f32 0.0, %v4059
        %4061 = vmatprep.mubr.f32.mxu0 0.0
        %4062 = vmatmul.mubr.f32.gmra.mxu0 %v3689
        %v4063 = vpop.f32.mrf.mxu0
        %v4064 = vadd.f32 0.0, %v4063
        %v4065 = vpop.f32.mrf.mxu0
        %v4066 = vadd.f32 0.0, %v4065
        %4067 = vdwg.mxu0
        %4068 = vmatprep.subr.mxu0 0.0
        %4069 = vmatpush1.xpose.msra.mxu0 %v3833
        %4070 = vmatprep.subr.mxu0 0.0
        %4071 = vmatpush1.xpose.msra.mxu0 %v3830
        %4072 = vmatprep.subr.mxu0 0.0
        %4073 = vmatpush1.xpose.msra.mxu0 %v3827
        %4074 = vmatprep.subr.mxu0 0.0
        %4075 = vmatpush1.xpose.msra.mxu0 %v3824
        %4076 = vmatprep.subr.mxu0 0.0
        %4077 = vmatpush1.xpose.msra.mxu0 %v3821
        %4078 = vmatprep.subr.mxu0 0.0
        %4079 = vmatpush1.xpose.msra.mxu0 %v3818
        %4080 = vmatprep.subr.mxu0 0.0
        %4081 = vmatpush1.xpose.msra.mxu0 %v3815
        %4082 = vmatprep.subr.mxu0 0.0
        %4083 = vmatpush1.xpose.msra.mxu0 %v3812
        %4084 = vmatprep.subr.mxu0 0.0
        %4085 = vmatpush1.xpose.msra.mxu0 %v3809
        %4086 = vmatprep.subr.mxu0 0.0
        %4087 = vmatpush1.xpose.msra.mxu0 %v3806
        %4088 = vmatprep.subr.mxu0 0.0
        %4089 = vmatpush1.xpose.msra.mxu0 %v3803
        %4090 = vmatprep.subr.mxu0 0.0
        %4091 = vmatpush1.xpose.msra.mxu0 %v3800
        %4092 = vmatprep.subr.mxu0 0.0
        %4093 = vmatpush1.xpose.msra.mxu0 %v3797
        %4094 = vmatprep.subr.mxu0 0.0
        %4095 = vmatpush1.xpose.msra.mxu0 %v3794
        %4096 = vmatprep.subr.mxu0 0.0
        %4097 = vmatpush1.xpose.msra.mxu0 %v3791
        %4098 = vmatprep.subr.mxu0 0.0
        %4099 = vmatpush1.xpose.msra.mxu0 %v3788
        %4100 = vmatprep.subr.mxu0 0.0
        %4101 = vmatpush2.xpose.msra.mxu0 %v3881
        %4102 = vmatprep.subr.mxu0 0.0
        %4103 = vmatpush2.xpose.msra.mxu0 %v3878
        %4104 = vmatprep.subr.mxu0 0.0
        %4105 = vmatpush2.xpose.msra.mxu0 %v3875
        %4106 = vmatprep.subr.mxu0 0.0
        %4107 = vmatpush2.xpose.msra.mxu0 %v3872
        %4108 = vmatprep.subr.mxu0 0.0
        %4109 = vmatpush2.xpose.msra.mxu0 %v3869
        %4110 = vmatprep.subr.mxu0 0.0
        %4111 = vmatpush2.xpose.msra.mxu0 %v3866
        %4112 = vmatprep.subr.mxu0 0.0
        %4113 = vmatpush2.xpose.msra.mxu0 %v3863
        %4114 = vmatprep.subr.mxu0 0.0
        %4115 = vmatpush2.xpose.msra.mxu0 %v3860
        %4116 = vmatprep.subr.mxu0 0.0
        %4117 = vmatpush2.xpose.msra.mxu0 %v3857
        %4118 = vmatprep.subr.mxu0 0.0
        %4119 = vmatpush2.xpose.msra.mxu0 %v3854
        %4120 = vmatprep.subr.mxu0 0.0
        %4121 = vmatpush2.xpose.msra.mxu0 %v3851
        %4122 = vmatprep.subr.mxu0 0.0
        %4123 = vmatpush2.xpose.msra.mxu0 %v3848
        %4124 = vmatprep.subr.mxu0 0.0
        %4125 = vmatpush2.xpose.msra.mxu0 %v3845
        %4126 = vmatprep.subr.mxu0 0.0
        %4127 = vmatpush2.xpose.msra.mxu0 %v3842
        %4128 = vmatprep.subr.mxu0 0.0
        %4129 = vmatpush2.xpose.msra.mxu0 %v3839
        %4130 = vmatprep.subr.mxu0 0.0
        %4131 = vmatpush2.xpose.msra.mxu0 %v3836
        %4132 = vmatprep.mubr.f32.mxu0 0.0
        %4133 = vmatmul.mubr.f32.gmra.mxu0 %v3686
        %v4134 = vpop.f32.mrf.mxu0
        %v4135 = vadd.f32 0.0, %v4134
        %v4136 = vpop.f32.mrf.mxu0
        %v4137 = vadd.f32 0.0, %v4136
        %4138 = vmatprep.mubr.f32.mxu0 0.0
        %4139 = vmatmul.mubr.f32.gmra.mxu0 %v3689
        %v4140 = vpop.f32.mrf.mxu0
        %v4141 = vadd.f32 0.0, %v4140
        %v4142 = vpop.f32.mrf.mxu0
        %v4143 = vadd.f32 0.0, %v4142
        %4144 = vdwg.mxu0
        %4145 = vmatprep.subr.mxu0 0.0
        %4146 = vmatpush1.xpose.msra.mxu0 %v3929
        %4147 = vmatprep.subr.mxu0 0.0
        %4148 = vmatpush1.xpose.msra.mxu0 %v3926
        %4149 = vmatprep.subr.mxu0 0.0
        %4150 = vmatpush1.xpose.msra.mxu0 %v3923
        %4151 = vmatprep.subr.mxu0 0.0
        %4152 = vmatpush1.xpose.msra.mxu0 %v3920
        %4153 = vmatprep.subr.mxu0 0.0
        %4154 = vmatpush1.xpose.msra.mxu0 %v3917
        %4155 = vmatprep.subr.mxu0 0.0
        %4156 = vmatpush1.xpose.msra.mxu0 %v3914
        %4157 = vmatprep.subr.mxu0 0.0
        %4158 = vmatpush1.xpose.msra.mxu0 %v3911
        %4159 = vmatprep.subr.mxu0 0.0
        %4160 = vmatpush1.xpose.msra.mxu0 %v3908
        %4161 = vmatprep.subr.mxu0 0.0
        %4162 = vmatpush1.xpose.msra.mxu0 %v3905
        %4163 = vmatprep.subr.mxu0 0.0
        %4164 = vmatpush1.xpose.msra.mxu0 %v3902
        %4165 = vmatprep.subr.mxu0 0.0
        %4166 = vmatpush1.xpose.msra.mxu0 %v3899
        %4167 = vmatprep.subr.mxu0 0.0
        %4168 = vmatpush1.xpose.msra.mxu0 %v3896
        %4169 = vmatprep.subr.mxu0 0.0
        %4170 = vmatpush1.xpose.msra.mxu0 %v3893
        %4171 = vmatprep.subr.mxu0 0.0
        %4172 = vmatpush1.xpose.msra.mxu0 %v3890
        %4173 = vmatprep.subr.mxu0 0.0
        %4174 = vmatpush1.xpose.msra.mxu0 %v3887
        %4175 = vmatprep.subr.mxu0 0.0
        %4176 = vmatpush1.xpose.msra.mxu0 %v3884
        %4177 = vmatprep.subr.mxu0 0.0
        %4178 = vmatpush2.xpose.msra.mxu0 %v3977
        %4179 = vmatprep.subr.mxu0 0.0
        %4180 = vmatpush2.xpose.msra.mxu0 %v3974
        %4181 = vmatprep.subr.mxu0 0.0
        %4182 = vmatpush2.xpose.msra.mxu0 %v3971
        %4183 = vmatprep.subr.mxu0 0.0
        %4184 = vmatpush2.xpose.msra.mxu0 %v3968
        %4185 = vmatprep.subr.mxu0 0.0
        %4186 = vmatpush2.xpose.msra.mxu0 %v3965
        %4187 = vmatprep.subr.mxu0 0.0
        %4188 = vmatpush2.xpose.msra.mxu0 %v3962
        %4189 = vmatprep.subr.mxu0 0.0
        %4190 = vmatpush2.xpose.msra.mxu0 %v3959
        %4191 = vmatprep.subr.mxu0 0.0
        %4192 = vmatpush2.xpose.msra.mxu0 %v3956
        %4193 = vmatprep.subr.mxu0 0.0
        %4194 = vmatpush2.xpose.msra.mxu0 %v3953
        %4195 = vmatprep.subr.mxu0 0.0
        %4196 = vmatpush2.xpose.msra.mxu0 %v3950
        %4197 = vmatprep.subr.mxu0 0.0
        %4198 = vmatpush2.xpose.msra.mxu0 %v3947
        %4199 = vmatprep.subr.mxu0 0.0
        %4200 = vmatpush2.xpose.msra.mxu0 %v3944
        %4201 = vmatprep.subr.mxu0 0.0
        %4202 = vmatpush2.xpose.msra.mxu0 %v3941
        %4203 = vmatprep.subr.mxu0 0.0
        %4204 = vmatpush2.xpose.msra.mxu0 %v3938
        %4205 = vmatprep.subr.mxu0 0.0
        %4206 = vmatpush2.xpose.msra.mxu0 %v3935
        %4207 = vmatprep.subr.mxu0 0.0
        %4208 = vmatpush2.xpose.msra.mxu0 %v3932
        %4209 = vmatprep.mubr.f32.mxu0 0.0
        %4210 = vmatmul.mubr.f32.gmra.mxu0 %v3686
        %v4211 = vpop.f32.mrf.mxu0
        %v4212 = vadd.f32 0.0, %v4211
        %v4213 = vpop.f32.mrf.mxu0
        %v4214 = vadd.f32 0.0, %v4213
        %4215 = vmatprep.mubr.f32.mxu0 0.0
        %4216 = vmatmul.mubr.f32.gmra.mxu0 %v3689
        %v4217 = vpop.f32.mrf.mxu0
        %v4218 = vadd.f32 0.0, %v4217
        %v4219 = vpop.f32.mrf.mxu0
        %v4220 = vadd.f32 0.0, %v4219
        %4221 = vdwg.mxu0
        %4222 = vmatprep.subr.mxu0 0.0
        %4223 = vmatpush1.xpose.msra.mxu0 0.0
        %4224 = vmatprep.subr.mxu0 0.0
        %4225 = vmatpush1.xpose.msra.mxu0 0.0
        %4226 = vmatprep.subr.mxu0 0.0
        %4227 = vmatpush1.xpose.msra.mxu0 0.0
        %4228 = vmatprep.subr.mxu0 0.0
        %4229 = vmatpush1.xpose.msra.mxu0 0.0
        %4230 = vmatprep.subr.mxu0 0.0
        %4231 = vmatpush1.xpose.msra.mxu0 0.0
        %4232 = vmatprep.subr.mxu0 0.0
        %4233 = vmatpush1.xpose.msra.mxu0 0.0
        %4234 = vmatprep.subr.mxu0 0.0
        %4235 = vmatpush1.xpose.msra.mxu0 0.0
        %4236 = vmatprep.subr.mxu0 0.0
        %4237 = vmatpush1.xpose.msra.mxu0 0.0
        %4238 = vmatprep.subr.mxu0 0.0
        %4239 = vmatpush1.xpose.msra.mxu0 0.0
        %4240 = vmatprep.subr.mxu0 0.0
        %4241 = vmatpush1.xpose.msra.mxu0 0.0
        %4242 = vmatprep.subr.mxu0 0.0
        %4243 = vmatpush1.xpose.msra.mxu0 0.0
        %4244 = vmatprep.subr.mxu0 0.0
        %4245 = vmatpush1.xpose.msra.mxu0 0.0
        %4246 = vmatprep.subr.mxu0 0.0
        %4247 = vmatpush1.xpose.msra.mxu0 %v3989
        %4248 = vmatprep.subr.mxu0 0.0
        %4249 = vmatpush1.xpose.msra.mxu0 %v3986
        %4250 = vmatprep.subr.mxu0 0.0
        %4251 = vmatpush1.xpose.msra.mxu0 %v3983
        %4252 = vmatprep.subr.mxu0 0.0
        %4253 = vmatpush1.xpose.msra.mxu0 %v3980
        %4254 = vmatprep.subr.mxu0 0.0
        %4255 = vmatpush2.xpose.msra.mxu0 0.0
        %4256 = vmatprep.subr.mxu0 0.0
        %4257 = vmatpush2.xpose.msra.mxu0 0.0
        %4258 = vmatprep.subr.mxu0 0.0
        %4259 = vmatpush2.xpose.msra.mxu0 0.0
        %4260 = vmatprep.subr.mxu0 0.0
        %4261 = vmatpush2.xpose.msra.mxu0 0.0
        %4262 = vmatprep.subr.mxu0 0.0
        %4263 = vmatpush2.xpose.msra.mxu0 0.0
        %4264 = vmatprep.subr.mxu0 0.0
        %4265 = vmatpush2.xpose.msra.mxu0 0.0
        %4266 = vmatprep.subr.mxu0 0.0
        %4267 = vmatpush2.xpose.msra.mxu0 0.0
        %4268 = vmatprep.subr.mxu0 0.0
        %4269 = vmatpush2.xpose.msra.mxu0 0.0
        %4270 = vmatprep.subr.mxu0 0.0
        %4271 = vmatpush2.xpose.msra.mxu0 0.0
        %4272 = vmatprep.subr.mxu0 0.0
        %4273 = vmatpush2.xpose.msra.mxu0 0.0
        %4274 = vmatprep.subr.mxu0 0.0
        %4275 = vmatpush2.xpose.msra.mxu0 0.0
        %4276 = vmatprep.subr.mxu0 0.0
        %4277 = vmatpush2.xpose.msra.mxu0 0.0
        %4278 = vmatprep.subr.mxu0 0.0
        %4279 = vmatpush2.xpose.msra.mxu0 0.0
        %4280 = vmatprep.subr.mxu0 0.0
        %4281 = vmatpush2.xpose.msra.mxu0 0.0
        %4282 = vmatprep.subr.mxu0 0.0
        %4283 = vmatpush2.xpose.msra.mxu0 0.0
        %4284 = vmatprep.subr.mxu0 0.0
        %4285 = vmatpush2.xpose.msra.mxu0 0.0
        %4286 = vmatprep.mubr.f32.mxu0 0.0
        %4287 = vmatmul.mubr.f32.gmra.mxu0 %v3686
        %v4288 = vpop.f32.mrf.mxu0
        %v4289 = vadd.f32 0.0, %v4288
        %v4290 = vpop.f32.mrf.mxu0
        %4291 = vmatprep.mubr.f32.mxu0 0.0
        %4292 = vmatmul.mubr.f32.gmra.mxu0 %v3689
        %v4293 = vpop.f32.mrf.mxu0
        %v4294 = vadd.f32 0.0, %v4293
        %v4295 = vpop.f32.mrf.mxu0
        %4296 = vdwg.mxu0
        %s4297 = scalar_lea.vmem %s5, 16
        %v4298 = vld [vmem:[%s4297] sm:$0xff]
        %v4299 = vld [vmem:[%s4297 + $0x8] sm:$0xff]
        %s4300 = scalar_lea.vmem %s4, 896
        %v4301 = vld [vmem:[%s4300] sm:$0xff]
        %v4302 = vld [vmem:[%s4300 + $0x8] sm:$0xff]
        %v4303 = vld [vmem:[%s4300 + $0x10] sm:$0xff]
        %v4304 = vld [vmem:[%s4300 + $0x18] sm:$0xff]
        %v4305 = vld [vmem:[%s4300 + $0x20] sm:$0xff]
        %v4306 = vld [vmem:[%s4300 + $0x28] sm:$0xff]
        %v4307 = vld [vmem:[%s4300 + $0x30] sm:$0xff]
        %v4308 = vld [vmem:[%s4300 + $0x38] sm:$0xff]
        %v4309 = vld [vmem:[%s4300 + $0x40] sm:$0xff]
        %v4310 = vld [vmem:[%s4300 + $0x48] sm:$0xff]
        %v4311 = vld [vmem:[%s4300 + $0x50] sm:$0xff]
        %v4312 = vld [vmem:[%s4300 + $0x58] sm:$0xff]
        %v4313 = vld [vmem:[%s4300 + $0x60] sm:$0xff]
        %v4314 = vld [vmem:[%s4300 + $0x68] sm:$0xff]
        %v4315 = vld [vmem:[%s4300 + $0x70] sm:$0xff]
        %v4316 = vld [vmem:[%s4300 + $0x78] sm:$0xff]
        %v4317 = vld [vmem:[%s4300 + $0x80] sm:$0xff]
        %v4318 = vld [vmem:[%s4300 + $0x88] sm:$0xff]
        %v4319 = vld [vmem:[%s4300 + $0x90] sm:$0xff]
        %v4320 = vld [vmem:[%s4300 + $0x98] sm:$0xff]
        %v4321 = vld [vmem:[%s4300 + $0xa0] sm:$0xff]
        %v4322 = vld [vmem:[%s4300 + $0xa8] sm:$0xff]
        %v4323 = vld [vmem:[%s4300 + $0xb0] sm:$0xff]
        %v4324 = vld [vmem:[%s4300 + $0xb8] sm:$0xff]
        %v4325 = vld [vmem:[%s4300 + $0xc0] sm:$0xff]
        %v4326 = vld [vmem:[%s4300 + $0xc8] sm:$0xff]
        %v4327 = vld [vmem:[%s4300 + $0xd0] sm:$0xff]
        %v4328 = vld [vmem:[%s4300 + $0xd8] sm:$0xff]
        %v4329 = vld [vmem:[%s4300 + $0xe0] sm:$0xff]
        %v4330 = vld [vmem:[%s4300 + $0xe8] sm:$0xff]
        %v4331 = vld [vmem:[%s4300 + $0xf0] sm:$0xff]
        %v4332 = vld [vmem:[%s4300 + $0xf8] sm:$0xff]
        %v4333 = vld [vmem:[%s4300 + $0x100] sm:$0xff]
        %v4334 = vld [vmem:[%s4300 + $0x108] sm:$0xff]
        %v4335 = vld [vmem:[%s4300 + $0x110] sm:$0xff]
        %v4336 = vld [vmem:[%s4300 + $0x118] sm:$0xff]
        %v4337 = vld [vmem:[%s4300 + $0x120] sm:$0xff]
        %v4338 = vld [vmem:[%s4300 + $0x128] sm:$0xff]
        %v4339 = vld [vmem:[%s4300 + $0x130] sm:$0xff]
        %v4340 = vld [vmem:[%s4300 + $0x138] sm:$0xff]
        %v4341 = vld [vmem:[%s4300 + $0x140] sm:$0xff]
        %v4342 = vld [vmem:[%s4300 + $0x148] sm:$0xff]
        %v4343 = vld [vmem:[%s4300 + $0x150] sm:$0xff]
        %v4344 = vld [vmem:[%s4300 + $0x158] sm:$0xff]
        %v4345 = vld [vmem:[%s4300 + $0x160] sm:$0xff]
        %v4346 = vld [vmem:[%s4300 + $0x168] sm:$0xff]
        %v4347 = vld [vmem:[%s4300 + $0x170] sm:$0xff]
        %v4348 = vld [vmem:[%s4300 + $0x178] sm:$0xff]
        %v4349 = vld [vmem:[%s4300 + $0x180] sm:$0xff]
        %v4350 = vld [vmem:[%s4300 + $0x188] sm:$0xff]
        %v4351 = vld [vmem:[%s4300 + $0x190] sm:$0xff]
        %v4352 = vld [vmem:[%s4300 + $0x198] sm:$0xff]
        %v4353 = vld [vmem:[%s4300 + $0x1a0] sm:$0xff]
        %v4354 = vld [vmem:[%s4300 + $0x1a8] sm:$0xff]
        %v4355 = vld [vmem:[%s4300 + $0x1b0] sm:$0xff]
        %v4356 = vld [vmem:[%s4300 + $0x1b8] sm:$0xff]
        %v4357 = vld [vmem:[%s4300 + $0x1c0] sm:$0xff]
        %v4358 = vld [vmem:[%s4300 + $0x1c8] sm:$0xff]
        %v4359 = vld [vmem:[%s4300 + $0x1d0] sm:$0xff]
        %v4360 = vld [vmem:[%s4300 + $0x1d8] sm:$0xff]
        %v4361 = vld [vmem:[%s4300 + $0x1e0] sm:$0xff]
        %v4362 = vld [vmem:[%s4300 + $0x1e8] sm:$0xff]
        %v4363 = vld [vmem:[%s4300 + $0x1f0] sm:$0xff]
        %v4364 = vld [vmem:[%s4300 + $0x1f8] sm:$0xff]
        %v4365 = vld [vmem:[%s4300 + $0x200] sm:$0xff]
        %v4366 = vld [vmem:[%s4300 + $0x208] sm:$0xff]
        %v4367 = vld [vmem:[%s4300 + $0x210] sm:$0xff]
        %v4368 = vld [vmem:[%s4300 + $0x218] sm:$0xff]
        %v4369 = vld [vmem:[%s4300 + $0x220] sm:$0xff]
        %v4370 = vld [vmem:[%s4300 + $0x228] sm:$0xff]
        %v4371 = vld [vmem:[%s4300 + $0x230] sm:$0xff]
        %v4372 = vld [vmem:[%s4300 + $0x238] sm:$0xff]
        %v4373 = vld [vmem:[%s4300 + $0x240] sm:$0xff]
        %v4374 = vld [vmem:[%s4300 + $0x248] sm:$0xff]
        %v4375 = vld [vmem:[%s4300 + $0x250] sm:$0xff]
        %v4376 = vld [vmem:[%s4300 + $0x258] sm:$0xff]
        %v4377 = vld [vmem:[%s4300 + $0x260] sm:$0xff]
        %v4378 = vld [vmem:[%s4300 + $0x268] sm:$0xff]
        %v4379 = vld [vmem:[%s4300 + $0x270] sm:$0xff]
        %v4380 = vld [vmem:[%s4300 + $0x278] sm:$0xff]
        %v4381 = vld [vmem:[%s4300 + $0x280] sm:$0xff]
        %v4382 = vld [vmem:[%s4300 + $0x288] sm:$0xff]
        %v4383 = vld [vmem:[%s4300 + $0x290] sm:$0xff]
        %v4384 = vld [vmem:[%s4300 + $0x298] sm:$0xff]
        %v4385 = vld [vmem:[%s4300 + $0x2a0] sm:$0xff]
        %v4386 = vld [vmem:[%s4300 + $0x2a8] sm:$0xff]
        %v4387 = vld [vmem:[%s4300 + $0x2b0] sm:$0xff]
        %v4388 = vld [vmem:[%s4300 + $0x2b8] sm:$0xff]
        %v4389 = vld [vmem:[%s4300 + $0x2c0] sm:$0xff]
        %v4390 = vld [vmem:[%s4300 + $0x2c8] sm:$0xff]
        %v4391 = vld [vmem:[%s4300 + $0x2d0] sm:$0xff]
        %v4392 = vld [vmem:[%s4300 + $0x2d8] sm:$0xff]
        %v4393 = vld [vmem:[%s4300 + $0x2e0] sm:$0xff]
        %v4394 = vld [vmem:[%s4300 + $0x2e8] sm:$0xff]
        %v4395 = vld [vmem:[%s4300 + $0x2f0] sm:$0xff]
        %v4396 = vld [vmem:[%s4300 + $0x2f8] sm:$0xff]
        %v4397 = vld [vmem:[%s4300 + $0x300] sm:$0xff]
        %v4398 = vld [vmem:[%s4300 + $0x308] sm:$0xff]
        %v4399 = vld [vmem:[%s4300 + $0x310] sm:$0xff]
        %v4400 = vld [vmem:[%s4300 + $0x318] sm:$0xff]
        %v4401 = vld [vmem:[%s4300 + $0x320] sm:$0xff]
        %v4402 = vld [vmem:[%s4300 + $0x328] sm:$0xff]
        %v4403 = vld [vmem:[%s4300 + $0x330] sm:$0xff]
        %v4404 = vld [vmem:[%s4300 + $0x338] sm:$0xff]
        %v4405 = vld [vmem:[%s4300 + $0x340] sm:$0xff]
        %v4406 = vld [vmem:[%s4300 + $0x348] sm:$0xff]
        %v4407 = vld [vmem:[%s4300 + $0x350] sm:$0xff]
        %v4408 = vld [vmem:[%s4300 + $0x358] sm:$0xff]
        %v4409 = vld [vmem:[%s4300 + $0x360] sm:$0xff]
        %v4410 = vld [vmem:[%s4300 + $0x368] sm:$0xff]
        %v4411 = vld [vmem:[%s4300 + $0x370] sm:$0xff]
        %v4412 = vld [vmem:[%s4300 + $0x378] sm:$0xff]
        %v4414 = vsel %vm3684, %v4298, 0
        %v4417 = vsel %vm3684, %v4299, 0
        %4419 = vmatprep.subr.mxu0 0.0
        %4420 = vmatpush1.xpose.msra.mxu0 %v3737
        %4421 = vmatprep.subr.mxu0 0.0
        %4422 = vmatpush1.xpose.msra.mxu0 %v3734
        %4423 = vmatprep.subr.mxu0 0.0
        %4424 = vmatpush1.xpose.msra.mxu0 %v3731
        %4425 = vmatprep.subr.mxu0 0.0
        %4426 = vmatpush1.xpose.msra.mxu0 %v3728
        %4427 = vmatprep.subr.mxu0 0.0
        %4428 = vmatpush1.xpose.msra.mxu0 %v3725
        %4429 = vmatprep.subr.mxu0 0.0
        %4430 = vmatpush1.xpose.msra.mxu0 %v3722
        %4431 = vmatprep.subr.mxu0 0.0
        %4432 = vmatpush1.xpose.msra.mxu0 %v3719
        %4433 = vmatprep.subr.mxu0 0.0
        %4434 = vmatpush1.xpose.msra.mxu0 %v3716
        %4435 = vmatprep.subr.mxu0 0.0
        %4436 = vmatpush1.xpose.msra.mxu0 %v3713
        %4437 = vmatprep.subr.mxu0 0.0
        %4438 = vmatpush1.xpose.msra.mxu0 %v3710
        %4439 = vmatprep.subr.mxu0 0.0
        %4440 = vmatpush1.xpose.msra.mxu0 %v3707
        %4441 = vmatprep.subr.mxu0 0.0
        %4442 = vmatpush1.xpose.msra.mxu0 %v3704
        %4443 = vmatprep.subr.mxu0 0.0
        %4444 = vmatpush1.xpose.msra.mxu0 %v3701
        %4445 = vmatprep.subr.mxu0 0.0
        %4446 = vmatpush1.xpose.msra.mxu0 %v3698
        %4447 = vmatprep.subr.mxu0 0.0
        %4448 = vmatpush1.xpose.msra.mxu0 %v3695
        %4449 = vmatprep.subr.mxu0 0.0
        %4450 = vmatpush1.xpose.msra.mxu0 %v3692
        %4451 = vmatprep.subr.mxu0 0.0
        %4452 = vmatpush2.xpose.msra.mxu0 %v3785
        %4453 = vmatprep.subr.mxu0 0.0
        %4454 = vmatpush2.xpose.msra.mxu0 %v3782
        %4455 = vmatprep.subr.mxu0 0.0
        %4456 = vmatpush2.xpose.msra.mxu0 %v3779
        %4457 = vmatprep.subr.mxu0 0.0
        %4458 = vmatpush2.xpose.msra.mxu0 %v3776
        %4459 = vmatprep.subr.mxu0 0.0
        %4460 = vmatpush2.xpose.msra.mxu0 %v3773
        %4461 = vmatprep.subr.mxu0 0.0
        %4462 = vmatpush2.xpose.msra.mxu0 %v3770
        %4463 = vmatprep.subr.mxu0 0.0
        %4464 = vmatpush2.xpose.msra.mxu0 %v3767
        %4465 = vmatprep.subr.mxu0 0.0
        %4466 = vmatpush2.xpose.msra.mxu0 %v3764
        %4467 = vmatprep.subr.mxu0 0.0
        %4468 = vmatpush2.xpose.msra.mxu0 %v3761
        %4469 = vmatprep.subr.mxu0 0.0
        %4470 = vmatpush2.xpose.msra.mxu0 %v3758
        %4471 = vmatprep.subr.mxu0 0.0
        %4472 = vmatpush2.xpose.msra.mxu0 %v3755
        %4473 = vmatprep.subr.mxu0 0.0
        %4474 = vmatpush2.xpose.msra.mxu0 %v3752
        %4475 = vmatprep.subr.mxu0 0.0
        %4476 = vmatpush2.xpose.msra.mxu0 %v3749
        %4477 = vmatprep.subr.mxu0 0.0
        %4478 = vmatpush2.xpose.msra.mxu0 %v3746
        %4479 = vmatprep.subr.mxu0 0.0
        %4480 = vmatpush2.xpose.msra.mxu0 %v3743
        %4481 = vmatprep.subr.mxu0 0.0
        %4482 = vmatpush2.xpose.msra.mxu0 %v3740
        %4483 = vmatprep.mubr.f32.mxu0 0.0
        %4484 = vmatmul.mubr.f32.gmra.mxu0 %v4414
        %v4485 = vpop.f32.mrf.mxu0
        %v4486 = vadd.f32 0.0, %v4485
        %v4487 = vpop.f32.mrf.mxu0
        %v4488 = vadd.f32 0.0, %v4487
        %4489 = vmatprep.mubr.f32.mxu0 0.0
        %4490 = vmatmul.mubr.f32.gmra.mxu0 %v4417
        %v4491 = vpop.f32.mrf.mxu0
        %v4492 = vadd.f32 0.0, %v4491
        %v4493 = vpop.f32.mrf.mxu0
        %v4494 = vadd.f32 0.0, %v4493
        %4495 = vdwg.mxu0
        %4496 = vmatprep.subr.mxu0 0.0
        %4497 = vmatpush1.xpose.msra.mxu0 %v3833
        %4498 = vmatprep.subr.mxu0 0.0
        %4499 = vmatpush1.xpose.msra.mxu0 %v3830
        %4500 = vmatprep.subr.mxu0 0.0
        %4501 = vmatpush1.xpose.msra.mxu0 %v3827
        %4502 = vmatprep.subr.mxu0 0.0
        %4503 = vmatpush1.xpose.msra.mxu0 %v3824
        %4504 = vmatprep.subr.mxu0 0.0
        %4505 = vmatpush1.xpose.msra.mxu0 %v3821
        %4506 = vmatprep.subr.mxu0 0.0
        %4507 = vmatpush1.xpose.msra.mxu0 %v3818
        %4508 = vmatprep.subr.mxu0 0.0
        %4509 = vmatpush1.xpose.msra.mxu0 %v3815
        %4510 = vmatprep.subr.mxu0 0.0
        %4511 = vmatpush1.xpose.msra.mxu0 %v3812
        %4512 = vmatprep.subr.mxu0 0.0
        %4513 = vmatpush1.xpose.msra.mxu0 %v3809
        %4514 = vmatprep.subr.mxu0 0.0
        %4515 = vmatpush1.xpose.msra.mxu0 %v3806
        %4516 = vmatprep.subr.mxu0 0.0
        %4517 = vmatpush1.xpose.msra.mxu0 %v3803
        %4518 = vmatprep.subr.mxu0 0.0
        %4519 = vmatpush1.xpose.msra.mxu0 %v3800
        %4520 = vmatprep.subr.mxu0 0.0
        %4521 = vmatpush1.xpose.msra.mxu0 %v3797
        %4522 = vmatprep.subr.mxu0 0.0
        %4523 = vmatpush1.xpose.msra.mxu0 %v3794
        %4524 = vmatprep.subr.mxu0 0.0
        %4525 = vmatpush1.xpose.msra.mxu0 %v3791
        %4526 = vmatprep.subr.mxu0 0.0
        %4527 = vmatpush1.xpose.msra.mxu0 %v3788
        %4528 = vmatprep.subr.mxu0 0.0
        %4529 = vmatpush2.xpose.msra.mxu0 %v3881
        %4530 = vmatprep.subr.mxu0 0.0
        %4531 = vmatpush2.xpose.msra.mxu0 %v3878
        %4532 = vmatprep.subr.mxu0 0.0
        %4533 = vmatpush2.xpose.msra.mxu0 %v3875
        %4534 = vmatprep.subr.mxu0 0.0
        %4535 = vmatpush2.xpose.msra.mxu0 %v3872
        %4536 = vmatprep.subr.mxu0 0.0
        %4537 = vmatpush2.xpose.msra.mxu0 %v3869
        %4538 = vmatprep.subr.mxu0 0.0
        %4539 = vmatpush2.xpose.msra.mxu0 %v3866
        %4540 = vmatprep.subr.mxu0 0.0
        %4541 = vmatpush2.xpose.msra.mxu0 %v3863
        %4542 = vmatprep.subr.mxu0 0.0
        %4543 = vmatpush2.xpose.msra.mxu0 %v3860
        %4544 = vmatprep.subr.mxu0 0.0
        %4545 = vmatpush2.xpose.msra.mxu0 %v3857
        %4546 = vmatprep.subr.mxu0 0.0
        %4547 = vmatpush2.xpose.msra.mxu0 %v3854
        %4548 = vmatprep.subr.mxu0 0.0
        %4549 = vmatpush2.xpose.msra.mxu0 %v3851
        %4550 = vmatprep.subr.mxu0 0.0
        %4551 = vmatpush2.xpose.msra.mxu0 %v3848
        %4552 = vmatprep.subr.mxu0 0.0
        %4553 = vmatpush2.xpose.msra.mxu0 %v3845
        %4554 = vmatprep.subr.mxu0 0.0
        %4555 = vmatpush2.xpose.msra.mxu0 %v3842
        %4556 = vmatprep.subr.mxu0 0.0
        %4557 = vmatpush2.xpose.msra.mxu0 %v3839
        %4558 = vmatprep.subr.mxu0 0.0
        %4559 = vmatpush2.xpose.msra.mxu0 %v3836
        %4560 = vmatprep.mubr.f32.mxu0 0.0
        %4561 = vmatmul.mubr.f32.gmra.mxu0 %v4414
        %v4562 = vpop.f32.mrf.mxu0
        %v4563 = vadd.f32 0.0, %v4562
        %v4564 = vpop.f32.mrf.mxu0
        %v4565 = vadd.f32 0.0, %v4564
        %4566 = vmatprep.mubr.f32.mxu0 0.0
        %4567 = vmatmul.mubr.f32.gmra.mxu0 %v4417
        %v4568 = vpop.f32.mrf.mxu0
        %v4569 = vadd.f32 0.0, %v4568
        %v4570 = vpop.f32.mrf.mxu0
        %v4571 = vadd.f32 0.0, %v4570
        %4572 = vdwg.mxu0
        %4573 = vmatprep.subr.mxu0 0.0
        %4574 = vmatpush1.xpose.msra.mxu0 %v3929
        %4575 = vmatprep.subr.mxu0 0.0
        %4576 = vmatpush1.xpose.msra.mxu0 %v3926
        %4577 = vmatprep.subr.mxu0 0.0
        %4578 = vmatpush1.xpose.msra.mxu0 %v3923
        %4579 = vmatprep.subr.mxu0 0.0
        %4580 = vmatpush1.xpose.msra.mxu0 %v3920
        %4581 = vmatprep.subr.mxu0 0.0
        %4582 = vmatpush1.xpose.msra.mxu0 %v3917
        %4583 = vmatprep.subr.mxu0 0.0
        %4584 = vmatpush1.xpose.msra.mxu0 %v3914
        %4585 = vmatprep.subr.mxu0 0.0
        %4586 = vmatpush1.xpose.msra.mxu0 %v3911
        %4587 = vmatprep.subr.mxu0 0.0
        %4588 = vmatpush1.xpose.msra.mxu0 %v3908
        %4589 = vmatprep.subr.mxu0 0.0
        %4590 = vmatpush1.xpose.msra.mxu0 %v3905
        %4591 = vmatprep.subr.mxu0 0.0
        %4592 = vmatpush1.xpose.msra.mxu0 %v3902
        %4593 = vmatprep.subr.mxu0 0.0
        %4594 = vmatpush1.xpose.msra.mxu0 %v3899
        %4595 = vmatprep.subr.mxu0 0.0
        %4596 = vmatpush1.xpose.msra.mxu0 %v3896
        %4597 = vmatprep.subr.mxu0 0.0
        %4598 = vmatpush1.xpose.msra.mxu0 %v3893
        %4599 = vmatprep.subr.mxu0 0.0
        %4600 = vmatpush1.xpose.msra.mxu0 %v3890
        %4601 = vmatprep.subr.mxu0 0.0
        %4602 = vmatpush1.xpose.msra.mxu0 %v3887
        %4603 = vmatprep.subr.mxu0 0.0
        %4604 = vmatpush1.xpose.msra.mxu0 %v3884
        %4605 = vmatprep.subr.mxu0 0.0
        %4606 = vmatpush2.xpose.msra.mxu0 %v3977
        %4607 = vmatprep.subr.mxu0 0.0
        %4608 = vmatpush2.xpose.msra.mxu0 %v3974
        %4609 = vmatprep.subr.mxu0 0.0
        %4610 = vmatpush2.xpose.msra.mxu0 %v3971
        %4611 = vmatprep.subr.mxu0 0.0
        %4612 = vmatpush2.xpose.msra.mxu0 %v3968
        %4613 = vmatprep.subr.mxu0 0.0
        %4614 = vmatpush2.xpose.msra.mxu0 %v3965
        %4615 = vmatprep.subr.mxu0 0.0
        %4616 = vmatpush2.xpose.msra.mxu0 %v3962
        %4617 = vmatprep.subr.mxu0 0.0
        %4618 = vmatpush2.xpose.msra.mxu0 %v3959
        %4619 = vmatprep.subr.mxu0 0.0
        %4620 = vmatpush2.xpose.msra.mxu0 %v3956
        %4621 = vmatprep.subr.mxu0 0.0
        %4622 = vmatpush2.xpose.msra.mxu0 %v3953
        %4623 = vmatprep.subr.mxu0 0.0
        %4624 = vmatpush2.xpose.msra.mxu0 %v3950
        %4625 = vmatprep.subr.mxu0 0.0
        %4626 = vmatpush2.xpose.msra.mxu0 %v3947
        %4627 = vmatprep.subr.mxu0 0.0
        %4628 = vmatpush2.xpose.msra.mxu0 %v3944
        %4629 = vmatprep.subr.mxu0 0.0
        %4630 = vmatpush2.xpose.msra.mxu0 %v3941
        %4631 = vmatprep.subr.mxu0 0.0
        %4632 = vmatpush2.xpose.msra.mxu0 %v3938
        %4633 = vmatprep.subr.mxu0 0.0
        %4634 = vmatpush2.xpose.msra.mxu0 %v3935
        %4635 = vmatprep.subr.mxu0 0.0
        %4636 = vmatpush2.xpose.msra.mxu0 %v3932
        %4637 = vmatprep.mubr.f32.mxu0 0.0
        %4638 = vmatmul.mubr.f32.gmra.mxu0 %v4414
        %v4639 = vpop.f32.mrf.mxu0
        %v4640 = vadd.f32 0.0, %v4639
        %v4641 = vpop.f32.mrf.mxu0
        %v4642 = vadd.f32 0.0, %v4641
        %4643 = vmatprep.mubr.f32.mxu0 0.0
        %4644 = vmatmul.mubr.f32.gmra.mxu0 %v4417
        %v4645 = vpop.f32.mrf.mxu0
        %v4646 = vadd.f32 0.0, %v4645
        %v4647 = vpop.f32.mrf.mxu0
        %v4648 = vadd.f32 0.0, %v4647
        %4649 = vdwg.mxu0
        %4650 = vmatprep.subr.mxu0 0.0
        %4651 = vmatpush1.xpose.msra.mxu0 0.0
        %4652 = vmatprep.subr.mxu0 0.0
        %4653 = vmatpush1.xpose.msra.mxu0 0.0
        %4654 = vmatprep.subr.mxu0 0.0
        %4655 = vmatpush1.xpose.msra.mxu0 0.0
        %4656 = vmatprep.subr.mxu0 0.0
        %4657 = vmatpush1.xpose.msra.mxu0 0.0
        %4658 = vmatprep.subr.mxu0 0.0
        %4659 = vmatpush1.xpose.msra.mxu0 0.0
        %4660 = vmatprep.subr.mxu0 0.0
        %4661 = vmatpush1.xpose.msra.mxu0 0.0
        %4662 = vmatprep.subr.mxu0 0.0
        %4663 = vmatpush1.xpose.msra.mxu0 0.0
        %4664 = vmatprep.subr.mxu0 0.0
        %4665 = vmatpush1.xpose.msra.mxu0 0.0
        %4666 = vmatprep.subr.mxu0 0.0
        %4667 = vmatpush1.xpose.msra.mxu0 0.0
        %4668 = vmatprep.subr.mxu0 0.0
        %4669 = vmatpush1.xpose.msra.mxu0 0.0
        %4670 = vmatprep.subr.mxu0 0.0
        %4671 = vmatpush1.xpose.msra.mxu0 0.0
        %4672 = vmatprep.subr.mxu0 0.0
        %4673 = vmatpush1.xpose.msra.mxu0 0.0
        %4674 = vmatprep.subr.mxu0 0.0
        %4675 = vmatpush1.xpose.msra.mxu0 %v3989
        %4676 = vmatprep.subr.mxu0 0.0
        %4677 = vmatpush1.xpose.msra.mxu0 %v3986
        %4678 = vmatprep.subr.mxu0 0.0
        %4679 = vmatpush1.xpose.msra.mxu0 %v3983
        %4680 = vmatprep.subr.mxu0 0.0
        %4681 = vmatpush1.xpose.msra.mxu0 %v3980
        %4682 = vmatprep.subr.mxu0 0.0
        %4683 = vmatpush2.xpose.msra.mxu0 0.0
        %4684 = vmatprep.subr.mxu0 0.0
        %4685 = vmatpush2.xpose.msra.mxu0 0.0
        %4686 = vmatprep.subr.mxu0 0.0
        %4687 = vmatpush2.xpose.msra.mxu0 0.0
        %4688 = vmatprep.subr.mxu0 0.0
        %4689 = vmatpush2.xpose.msra.mxu0 0.0
        %4690 = vmatprep.subr.mxu0 0.0
        %4691 = vmatpush2.xpose.msra.mxu0 0.0
        %4692 = vmatprep.subr.mxu0 0.0
        %4693 = vmatpush2.xpose.msra.mxu0 0.0
        %4694 = vmatprep.subr.mxu0 0.0
        %4695 = vmatpush2.xpose.msra.mxu0 0.0
        %4696 = vmatprep.subr.mxu0 0.0
        %4697 = vmatpush2.xpose.msra.mxu0 0.0
        %4698 = vmatprep.subr.mxu0 0.0
        %4699 = vmatpush2.xpose.msra.mxu0 0.0
        %4700 = vmatprep.subr.mxu0 0.0
        %4701 = vmatpush2.xpose.msra.mxu0 0.0
        %4702 = vmatprep.subr.mxu0 0.0
        %4703 = vmatpush2.xpose.msra.mxu0 0.0
        %4704 = vmatprep.subr.mxu0 0.0
        %4705 = vmatpush2.xpose.msra.mxu0 0.0
        %4706 = vmatprep.subr.mxu0 0.0
        %4707 = vmatpush2.xpose.msra.mxu0 0.0
        %4708 = vmatprep.subr.mxu0 0.0
        %4709 = vmatpush2.xpose.msra.mxu0 0.0
        %4710 = vmatprep.subr.mxu0 0.0
        %4711 = vmatpush2.xpose.msra.mxu0 0.0
        %4712 = vmatprep.subr.mxu0 0.0
        %4713 = vmatpush2.xpose.msra.mxu0 0.0
        %4714 = vmatprep.mubr.f32.mxu0 0.0
        %4715 = vmatmul.mubr.f32.gmra.mxu0 %v4414
        %v4716 = vpop.f32.mrf.mxu0
        %v4717 = vadd.f32 0.0, %v4716
        %v4718 = vpop.f32.mrf.mxu0
        %4719 = vmatprep.mubr.f32.mxu0 0.0
        %4720 = vmatmul.mubr.f32.gmra.mxu0 %v4417
        %v4721 = vpop.f32.mrf.mxu0
        %v4722 = vadd.f32 0.0, %v4721
        %v4723 = vpop.f32.mrf.mxu0
        %4724 = vdwg.mxu0
        %vm4725 = vcmask 261120
        %v4727 = vsel %vm4725, %v4307, 0
        %v4730 = vsel %vm4725, %v4314, 0
        %v4733 = vsel %vm4725, %v4321, 0
        %v4736 = vsel %vm4725, %v4328, 0
        %v4739 = vsel %vm4725, %v4335, 0
        %v4742 = vsel %vm4725, %v4342, 0
        %v4745 = vsel %vm4725, %v4349, 0
        %v4748 = vsel %vm4725, %v4356, 0
        %v4751 = vsel %vm4725, %v4363, 0
        %v4754 = vsel %vm4725, %v4370, 0
        %v4757 = vsel %vm4725, %v4377, 0
        %v4760 = vsel %vm4725, %v4384, 0
        %v4763 = vsel %vm4725, %v4391, 0
        %v4766 = vsel %vm4725, %v4398, 0
        %v4769 = vsel %vm4725, %v4405, 0
        %v4772 = vsel %vm4725, %v4412, 0
        %v4775 = vsel %vm4725, %v4717, 0
        %v4778 = vsel %vm4725, %v4722, 0
        %4780 = vmatprep.subr.mxu0 0.0
        %4781 = vmatpush1.xpose.msra.mxu0 0.0
        %4782 = vmatprep.subr.mxu0 0.0
        %4783 = vmatpush1.xpose.msra.mxu0 0.0
        %4784 = vmatprep.subr.mxu0 0.0
        %4785 = vmatpush1.xpose.msra.mxu0 0.0
        %4786 = vmatprep.subr.mxu0 0.0
        %4787 = vmatpush1.xpose.msra.mxu0 0.0
        %4788 = vmatprep.subr.mxu0 0.0
        %4789 = vmatpush1.xpose.msra.mxu0 0.0
        %4790 = vmatprep.subr.mxu0 0.0
        %4791 = vmatpush1.xpose.msra.mxu0 0.0
        %4792 = vmatprep.subr.mxu0 0.0
        %4793 = vmatpush1.xpose.msra.mxu0 0.0
        %4794 = vmatprep.subr.mxu0 0.0
        %4795 = vmatpush1.xpose.msra.mxu0 0.0
        %4796 = vmatprep.subr.mxu0 0.0
        %4797 = vmatpush1.xpose.msra.mxu0 0.0
        %4798 = vmatprep.subr.mxu0 0.0
        %4799 = vmatpush1.xpose.msra.mxu0 0.0
        %4800 = vmatprep.subr.mxu0 0.0
        %4801 = vmatpush1.xpose.msra.mxu0 0.0
        %4802 = vmatprep.subr.mxu0 0.0
        %4803 = vmatpush1.xpose.msra.mxu0 0.0
        %4804 = vmatprep.subr.mxu0 0.0
        %4805 = vmatpush1.xpose.msra.mxu0 0.0
        %4806 = vmatprep.subr.mxu0 0.0
        %4807 = vmatpush1.xpose.msra.mxu0 0.0
        %4808 = vmatprep.subr.mxu0 %v4494
        %4809 = vmatpush1.xpose.msra.mxu0 %v4492
        %4810 = vmatprep.subr.mxu0 %v4488
        %4811 = vmatpush1.xpose.msra.mxu0 %v4486
        %4812 = vmatprep.subr.mxu0 0.0
        %4813 = vmatpush2.xpose.msra.mxu0 0.0
        %4814 = vmatprep.subr.mxu0 0.0
        %4815 = vmatpush2.xpose.msra.mxu0 0.0
        %4816 = vmatprep.subr.mxu0 0.0
        %4817 = vmatpush2.xpose.msra.mxu0 0.0
        %4818 = vmatprep.subr.mxu0 0.0
        %4819 = vmatpush2.xpose.msra.mxu0 0.0
        %4820 = vmatprep.subr.mxu0 0.0
        %4821 = vmatpush2.xpose.msra.mxu0 0.0
        %4822 = vmatprep.subr.mxu0 0.0
        %4823 = vmatpush2.xpose.msra.mxu0 0.0
        %4824 = vmatprep.subr.mxu0 0.0
        %4825 = vmatpush2.xpose.msra.mxu0 0.0
        %4826 = vmatprep.subr.mxu0 0.0
        %4827 = vmatpush2.xpose.msra.mxu0 0.0
        %4828 = vmatprep.subr.mxu0 0.0
        %4829 = vmatpush2.xpose.msra.mxu0 0.0
        %4830 = vmatprep.subr.mxu0 0.0
        %4831 = vmatpush2.xpose.msra.mxu0 0.0
        %4832 = vmatprep.subr.mxu0 0.0
        %4833 = vmatpush2.xpose.msra.mxu0 0.0
        %4834 = vmatprep.subr.mxu0 0.0
        %4835 = vmatpush2.xpose.msra.mxu0 0.0
        %4836 = vmatprep.subr.mxu0 0.0
        %4837 = vmatpush2.xpose.msra.mxu0 0.0
        %4838 = vmatprep.subr.mxu0 0.0
        %4839 = vmatpush2.xpose.msra.mxu0 0.0
        %4840 = vmatprep.subr.mxu0 0.0
        %4841 = vmatpush2.xpose.msra.mxu0 0.0
        %4842 = vmatprep.subr.mxu0 0.0
        %4843 = vmatpush2.xpose.msra.mxu0 0.0
        %4844 = vmatprep.mubr.f32.mxu0 %v4302
        %4845 = vmatmul.mubr.f32.gmra.mxu0 %v4301
        %v4846 = vpop.f32.mrf.mxu0
        %v4847 = vadd.f32 0.0, %v4846
        %v4848 = vpop.f32.mrf.mxu0
        %4849 = vmatprep.mubr.f32.mxu0 %v4309
        %4850 = vmatmul.mubr.f32.gmra.mxu0 %v4308
        %v4851 = vpop.f32.mrf.mxu0
        %v4852 = vadd.f32 0.0, %v4851
        %v4853 = vpop.f32.mrf.mxu0
        %4854 = vmatprep.mubr.f32.mxu0 %v4316
        %4855 = vmatmul.mubr.f32.gmra.mxu0 %v4315
        %v4856 = vpop.f32.mrf.mxu0
        %v4857 = vadd.f32 0.0, %v4856
        %v4858 = vpop.f32.mrf.mxu0
        %4859 = vmatprep.mubr.f32.mxu0 %v4323
        %4860 = vmatmul.mubr.f32.gmra.mxu0 %v4322
        %v4861 = vpop.f32.mrf.mxu0
        %v4862 = vadd.f32 0.0, %v4861
        %v4863 = vpop.f32.mrf.mxu0
        %4864 = vmatprep.mubr.f32.mxu0 %v4330
        %4865 = vmatmul.mubr.f32.gmra.mxu0 %v4329
        %v4866 = vpop.f32.mrf.mxu0
        %v4867 = vadd.f32 0.0, %v4866
        %v4868 = vpop.f32.mrf.mxu0
        %4869 = vmatprep.mubr.f32.mxu0 %v4337
        %4870 = vmatmul.mubr.f32.gmra.mxu0 %v4336
        %v4871 = vpop.f32.mrf.mxu0
        %v4872 = vadd.f32 0.0, %v4871
        %v4873 = vpop.f32.mrf.mxu0
        %4874 = vmatprep.mubr.f32.mxu0 %v4344
        %4875 = vmatmul.mubr.f32.gmra.mxu0 %v4343
        %v4876 = vpop.f32.mrf.mxu0
        %v4877 = vadd.f32 0.0, %v4876
        %v4878 = vpop.f32.mrf.mxu0
        %4879 = vmatprep.mubr.f32.mxu0 %v4351
        %4880 = vmatmul.mubr.f32.gmra.mxu0 %v4350
        %v4881 = vpop.f32.mrf.mxu0
        %v4882 = vadd.f32 0.0, %v4881
        %v4883 = vpop.f32.mrf.mxu0
        %4884 = vmatprep.mubr.f32.mxu0 %v4358
        %4885 = vmatmul.mubr.f32.gmra.mxu0 %v4357
        %v4886 = vpop.f32.mrf.mxu0
        %v4887 = vadd.f32 0.0, %v4886
        %v4888 = vpop.f32.mrf.mxu0
        %4889 = vmatprep.mubr.f32.mxu0 %v4365
        %4890 = vmatmul.mubr.f32.gmra.mxu0 %v4364
        %v4891 = vpop.f32.mrf.mxu0
        %v4892 = vadd.f32 0.0, %v4891
        %v4893 = vpop.f32.mrf.mxu0
        %4894 = vmatprep.mubr.f32.mxu0 %v4372
        %4895 = vmatmul.mubr.f32.gmra.mxu0 %v4371
        %v4896 = vpop.f32.mrf.mxu0
        %v4897 = vadd.f32 0.0, %v4896
        %v4898 = vpop.f32.mrf.mxu0
        %4899 = vmatprep.mubr.f32.mxu0 %v4379
        %4900 = vmatmul.mubr.f32.gmra.mxu0 %v4378
        %v4901 = vpop.f32.mrf.mxu0
        %v4902 = vadd.f32 0.0, %v4901
        %v4903 = vpop.f32.mrf.mxu0
        %4904 = vmatprep.mubr.f32.mxu0 %v4386
        %4905 = vmatmul.mubr.f32.gmra.mxu0 %v4385
        %v4906 = vpop.f32.mrf.mxu0
        %v4907 = vadd.f32 0.0, %v4906
        %v4908 = vpop.f32.mrf.mxu0
        %4909 = vmatprep.mubr.f32.mxu0 %v4393
        %4910 = vmatmul.mubr.f32.gmra.mxu0 %v4392
        %v4911 = vpop.f32.mrf.mxu0
        %v4912 = vadd.f32 0.0, %v4911
        %v4913 = vpop.f32.mrf.mxu0
        %4914 = vmatprep.mubr.f32.mxu0 %v4400
        %4915 = vmatmul.mubr.f32.gmra.mxu0 %v4399
        %v4916 = vpop.f32.mrf.mxu0
        %v4917 = vadd.f32 0.0, %v4916
        %v4918 = vpop.f32.mrf.mxu0
        %4919 = vmatprep.mubr.f32.mxu0 %v4407
        %4920 = vmatmul.mubr.f32.gmra.mxu0 %v4406
        %v4921 = vpop.f32.mrf.mxu0
        %v4922 = vadd.f32 0.0, %v4921
        %v4923 = vpop.f32.mrf.mxu0
        %4924 = vdwg.mxu0
        %4925 = vmatprep.subr.mxu0 0.0
        %4926 = vmatpush1.xpose.msra.mxu0 0.0
        %4927 = vmatprep.subr.mxu0 0.0
        %4928 = vmatpush1.xpose.msra.mxu0 0.0
        %4929 = vmatprep.subr.mxu0 0.0
        %4930 = vmatpush1.xpose.msra.mxu0 0.0
        %4931 = vmatprep.subr.mxu0 0.0
        %4932 = vmatpush1.xpose.msra.mxu0 0.0
        %4933 = vmatprep.subr.mxu0 0.0
        %4934 = vmatpush1.xpose.msra.mxu0 0.0
        %4935 = vmatprep.subr.mxu0 0.0
        %4936 = vmatpush1.xpose.msra.mxu0 0.0
        %4937 = vmatprep.subr.mxu0 0.0
        %4938 = vmatpush1.xpose.msra.mxu0 0.0
        %4939 = vmatprep.subr.mxu0 0.0
        %4940 = vmatpush1.xpose.msra.mxu0 0.0
        %4941 = vmatprep.subr.mxu0 0.0
        %4942 = vmatpush1.xpose.msra.mxu0 0.0
        %4943 = vmatprep.subr.mxu0 0.0
        %4944 = vmatpush1.xpose.msra.mxu0 0.0
        %4945 = vmatprep.subr.mxu0 0.0
        %4946 = vmatpush1.xpose.msra.mxu0 0.0
        %4947 = vmatprep.subr.mxu0 0.0
        %4948 = vmatpush1.xpose.msra.mxu0 0.0
        %4949 = vmatprep.subr.mxu0 0.0
        %4950 = vmatpush1.xpose.msra.mxu0 0.0
        %4951 = vmatprep.subr.mxu0 0.0
        %4952 = vmatpush1.xpose.msra.mxu0 0.0
        %4953 = vmatprep.subr.mxu0 %v4571
        %4954 = vmatpush1.xpose.msra.mxu0 %v4569
        %4955 = vmatprep.subr.mxu0 %v4565
        %4956 = vmatpush1.xpose.msra.mxu0 %v4563
        %4957 = vmatprep.subr.mxu0 0.0
        %4958 = vmatpush2.xpose.msra.mxu0 0.0
        %4959 = vmatprep.subr.mxu0 0.0
        %4960 = vmatpush2.xpose.msra.mxu0 0.0
        %4961 = vmatprep.subr.mxu0 0.0
        %4962 = vmatpush2.xpose.msra.mxu0 0.0
        %4963 = vmatprep.subr.mxu0 0.0
        %4964 = vmatpush2.xpose.msra.mxu0 0.0
        %4965 = vmatprep.subr.mxu0 0.0
        %4966 = vmatpush2.xpose.msra.mxu0 0.0
        %4967 = vmatprep.subr.mxu0 0.0
        %4968 = vmatpush2.xpose.msra.mxu0 0.0
        %4969 = vmatprep.subr.mxu0 0.0
        %4970 = vmatpush2.xpose.msra.mxu0 0.0
        %4971 = vmatprep.subr.mxu0 0.0
        %4972 = vmatpush2.xpose.msra.mxu0 0.0
        %4973 = vmatprep.subr.mxu0 0.0
        %4974 = vmatpush2.xpose.msra.mxu0 0.0
        %4975 = vmatprep.subr.mxu0 0.0
        %4976 = vmatpush2.xpose.msra.mxu0 0.0
        %4977 = vmatprep.subr.mxu0 0.0
        %4978 = vmatpush2.xpose.msra.mxu0 0.0
        %4979 = vmatprep.subr.mxu0 0.0
        %4980 = vmatpush2.xpose.msra.mxu0 0.0
        %4981 = vmatprep.subr.mxu0 0.0
        %4982 = vmatpush2.xpose.msra.mxu0 0.0
        %4983 = vmatprep.subr.mxu0 0.0
        %4984 = vmatpush2.xpose.msra.mxu0 0.0
        %4985 = vmatprep.subr.mxu0 0.0
        %4986 = vmatpush2.xpose.msra.mxu0 0.0
        %4987 = vmatprep.subr.mxu0 0.0
        %4988 = vmatpush2.xpose.msra.mxu0 0.0
        %4989 = vmatprep.mubr.f32.mxu0 %v4304
        %4990 = vmatmul.mubr.f32.gmra.mxu0 %v4303
        %v4991 = vpop.f32.mrf.mxu0
        %v4992 = vadd.f32 %v4847, %v4991
        %v4993 = vpop.f32.mrf.mxu0
        %4994 = vmatprep.mubr.f32.mxu0 %v4311
        %4995 = vmatmul.mubr.f32.gmra.mxu0 %v4310
        %v4996 = vpop.f32.mrf.mxu0
        %v4997 = vadd.f32 %v4852, %v4996
        %v4998 = vpop.f32.mrf.mxu0
        %4999 = vmatprep.mubr.f32.mxu0 %v4318
        %5000 = vmatmul.mubr.f32.gmra.mxu0 %v4317
        %v5001 = vpop.f32.mrf.mxu0
        %v5002 = vadd.f32 %v4857, %v5001
        %v5003 = vpop.f32.mrf.mxu0
        %5004 = vmatprep.mubr.f32.mxu0 %v4325
        %5005 = vmatmul.mubr.f32.gmra.mxu0 %v4324
        %v5006 = vpop.f32.mrf.mxu0
        %v5007 = vadd.f32 %v4862, %v5006
        %v5008 = vpop.f32.mrf.mxu0
        %5009 = vmatprep.mubr.f32.mxu0 %v4332
        %5010 = vmatmul.mubr.f32.gmra.mxu0 %v4331
        %v5011 = vpop.f32.mrf.mxu0
        %v5012 = vadd.f32 %v4867, %v5011
        %v5013 = vpop.f32.mrf.mxu0
        %5014 = vmatprep.mubr.f32.mxu0 %v4339
        %5015 = vmatmul.mubr.f32.gmra.mxu0 %v4338
        %v5016 = vpop.f32.mrf.mxu0
        %v5017 = vadd.f32 %v4872, %v5016
        %v5018 = vpop.f32.mrf.mxu0
        %5019 = vmatprep.mubr.f32.mxu0 %v4346
        %5020 = vmatmul.mubr.f32.gmra.mxu0 %v4345
        %v5021 = vpop.f32.mrf.mxu0
        %v5022 = vadd.f32 %v4877, %v5021
        %v5023 = vpop.f32.mrf.mxu0
        %5024 = vmatprep.mubr.f32.mxu0 %v4353
        %5025 = vmatmul.mubr.f32.gmra.mxu0 %v4352
        %v5026 = vpop.f32.mrf.mxu0
        %v5027 = vadd.f32 %v4882, %v5026
        %v5028 = vpop.f32.mrf.mxu0
        %5029 = vmatprep.mubr.f32.mxu0 %v4360
        %5030 = vmatmul.mubr.f32.gmra.mxu0 %v4359
        %v5031 = vpop.f32.mrf.mxu0
        %v5032 = vadd.f32 %v4887, %v5031
        %v5033 = vpop.f32.mrf.mxu0
        %5034 = vmatprep.mubr.f32.mxu0 %v4367
        %5035 = vmatmul.mubr.f32.gmra.mxu0 %v4366
        %v5036 = vpop.f32.mrf.mxu0
        %v5037 = vadd.f32 %v4892, %v5036
        %v5038 = vpop.f32.mrf.mxu0
        %5039 = vmatprep.mubr.f32.mxu0 %v4374
        %5040 = vmatmul.mubr.f32.gmra.mxu0 %v4373
        %v5041 = vpop.f32.mrf.mxu0
        %v5042 = vadd.f32 %v4897, %v5041
        %v5043 = vpop.f32.mrf.mxu0
        %5044 = vmatprep.mubr.f32.mxu0 %v4381
        %5045 = vmatmul.mubr.f32.gmra.mxu0 %v4380
        %v5046 = vpop.f32.mrf.mxu0
        %v5047 = vadd.f32 %v4902, %v5046
        %v5048 = vpop.f32.mrf.mxu0
        %5049 = vmatprep.mubr.f32.mxu0 %v4388
        %5050 = vmatmul.mubr.f32.gmra.mxu0 %v4387
        %v5051 = vpop.f32.mrf.mxu0
        %v5052 = vadd.f32 %v4907, %v5051
        %v5053 = vpop.f32.mrf.mxu0
        %5054 = vmatprep.mubr.f32.mxu0 %v4395
        %5055 = vmatmul.mubr.f32.gmra.mxu0 %v4394
        %v5056 = vpop.f32.mrf.mxu0
        %v5057 = vadd.f32 %v4912, %v5056
        %v5058 = vpop.f32.mrf.mxu0
        %5059 = vmatprep.mubr.f32.mxu0 %v4402
        %5060 = vmatmul.mubr.f32.gmra.mxu0 %v4401
        %v5061 = vpop.f32.mrf.mxu0
        %v5062 = vadd.f32 %v4917, %v5061
        %v5063 = vpop.f32.mrf.mxu0
        %5064 = vmatprep.mubr.f32.mxu0 %v4409
        %5065 = vmatmul.mubr.f32.gmra.mxu0 %v4408
        %v5066 = vpop.f32.mrf.mxu0
        %v5067 = vadd.f32 %v4922, %v5066
        %v5068 = vpop.f32.mrf.mxu0
        %5069 = vdwg.mxu0
        %5070 = vmatprep.subr.mxu0 0.0
        %5071 = vmatpush1.xpose.msra.mxu0 0.0
        %5072 = vmatprep.subr.mxu0 0.0
        %5073 = vmatpush1.xpose.msra.mxu0 0.0
        %5074 = vmatprep.subr.mxu0 0.0
        %5075 = vmatpush1.xpose.msra.mxu0 0.0
        %5076 = vmatprep.subr.mxu0 0.0
        %5077 = vmatpush1.xpose.msra.mxu0 0.0
        %5078 = vmatprep.subr.mxu0 0.0
        %5079 = vmatpush1.xpose.msra.mxu0 0.0
        %5080 = vmatprep.subr.mxu0 0.0
        %5081 = vmatpush1.xpose.msra.mxu0 0.0
        %5082 = vmatprep.subr.mxu0 0.0
        %5083 = vmatpush1.xpose.msra.mxu0 0.0
        %5084 = vmatprep.subr.mxu0 0.0
        %5085 = vmatpush1.xpose.msra.mxu0 0.0
        %5086 = vmatprep.subr.mxu0 0.0
        %5087 = vmatpush1.xpose.msra.mxu0 0.0
        %5088 = vmatprep.subr.mxu0 0.0
        %5089 = vmatpush1.xpose.msra.mxu0 0.0
        %5090 = vmatprep.subr.mxu0 0.0
        %5091 = vmatpush1.xpose.msra.mxu0 0.0
        %5092 = vmatprep.subr.mxu0 0.0
        %5093 = vmatpush1.xpose.msra.mxu0 0.0
        %5094 = vmatprep.subr.mxu0 0.0
        %5095 = vmatpush1.xpose.msra.mxu0 0.0
        %5096 = vmatprep.subr.mxu0 0.0
        %5097 = vmatpush1.xpose.msra.mxu0 0.0
        %5098 = vmatprep.subr.mxu0 %v4648
        %5099 = vmatpush1.xpose.msra.mxu0 %v4646
        %5100 = vmatprep.subr.mxu0 %v4642
        %5101 = vmatpush1.xpose.msra.mxu0 %v4640
        %5102 = vmatprep.subr.mxu0 0.0
        %5103 = vmatpush2.xpose.msra.mxu0 0.0
        %5104 = vmatprep.subr.mxu0 0.0
        %5105 = vmatpush2.xpose.msra.mxu0 0.0
        %5106 = vmatprep.subr.mxu0 0.0
        %5107 = vmatpush2.xpose.msra.mxu0 0.0
        %5108 = vmatprep.subr.mxu0 0.0
        %5109 = vmatpush2.xpose.msra.mxu0 0.0
        %5110 = vmatprep.subr.mxu0 0.0
        %5111 = vmatpush2.xpose.msra.mxu0 0.0
        %5112 = vmatprep.subr.mxu0 0.0
        %5113 = vmatpush2.xpose.msra.mxu0 0.0
        %5114 = vmatprep.subr.mxu0 0.0
        %5115 = vmatpush2.xpose.msra.mxu0 0.0
        %5116 = vmatprep.subr.mxu0 0.0
        %5117 = vmatpush2.xpose.msra.mxu0 0.0
        %5118 = vmatprep.subr.mxu0 0.0
        %5119 = vmatpush2.xpose.msra.mxu0 0.0
        %5120 = vmatprep.subr.mxu0 0.0
        %5121 = vmatpush2.xpose.msra.mxu0 0.0
        %5122 = vmatprep.subr.mxu0 0.0
        %5123 = vmatpush2.xpose.msra.mxu0 0.0
        %5124 = vmatprep.subr.mxu0 0.0
        %5125 = vmatpush2.xpose.msra.mxu0 0.0
        %5126 = vmatprep.subr.mxu0 0.0
        %5127 = vmatpush2.xpose.msra.mxu0 0.0
        %5128 = vmatprep.subr.mxu0 0.0
        %5129 = vmatpush2.xpose.msra.mxu0 0.0
        %5130 = vmatprep.subr.mxu0 0.0
        %5131 = vmatpush2.xpose.msra.mxu0 0.0
        %5132 = vmatprep.subr.mxu0 0.0
        %5133 = vmatpush2.xpose.msra.mxu0 0.0
        %5134 = vmatprep.mubr.f32.mxu0 %v4306
        %5135 = vmatmul.mubr.f32.gmra.mxu0 %v4305
        %v5136 = vpop.f32.mrf.mxu0
        %v5137 = vadd.f32 %v4992, %v5136
        %v5138 = vpop.f32.mrf.mxu0
        %5139 = vmatprep.mubr.f32.mxu0 %v4313
        %5140 = vmatmul.mubr.f32.gmra.mxu0 %v4312
        %v5141 = vpop.f32.mrf.mxu0
        %v5142 = vadd.f32 %v4997, %v5141
        %v5143 = vpop.f32.mrf.mxu0
        %5144 = vmatprep.mubr.f32.mxu0 %v4320
        %5145 = vmatmul.mubr.f32.gmra.mxu0 %v4319
        %v5146 = vpop.f32.mrf.mxu0
        %v5147 = vadd.f32 %v5002, %v5146
        %v5148 = vpop.f32.mrf.mxu0
        %5149 = vmatprep.mubr.f32.mxu0 %v4327
        %5150 = vmatmul.mubr.f32.gmra.mxu0 %v4326
        %v5151 = vpop.f32.mrf.mxu0
        %v5152 = vadd.f32 %v5007, %v5151
        %v5153 = vpop.f32.mrf.mxu0
        %5154 = vmatprep.mubr.f32.mxu0 %v4334
        %5155 = vmatmul.mubr.f32.gmra.mxu0 %v4333
        %v5156 = vpop.f32.mrf.mxu0
        %v5157 = vadd.f32 %v5012, %v5156
        %v5158 = vpop.f32.mrf.mxu0
        %5159 = vmatprep.mubr.f32.mxu0 %v4341
        %5160 = vmatmul.mubr.f32.gmra.mxu0 %v4340
        %v5161 = vpop.f32.mrf.mxu0
        %v5162 = vadd.f32 %v5017, %v5161
        %v5163 = vpop.f32.mrf.mxu0
        %5164 = vmatprep.mubr.f32.mxu0 %v4348
        %5165 = vmatmul.mubr.f32.gmra.mxu0 %v4347
        %v5166 = vpop.f32.mrf.mxu0
        %v5167 = vadd.f32 %v5022, %v5166
        %v5168 = vpop.f32.mrf.mxu0
        %5169 = vmatprep.mubr.f32.mxu0 %v4355
        %5170 = vmatmul.mubr.f32.gmra.mxu0 %v4354
        %v5171 = vpop.f32.mrf.mxu0
        %v5172 = vadd.f32 %v5027, %v5171
        %v5173 = vpop.f32.mrf.mxu0
        %5174 = vmatprep.mubr.f32.mxu0 %v4362
        %5175 = vmatmul.mubr.f32.gmra.mxu0 %v4361
        %v5176 = vpop.f32.mrf.mxu0
        %v5177 = vadd.f32 %v5032, %v5176
        %v5178 = vpop.f32.mrf.mxu0
        %5179 = vmatprep.mubr.f32.mxu0 %v4369
        %5180 = vmatmul.mubr.f32.gmra.mxu0 %v4368
        %v5181 = vpop.f32.mrf.mxu0
        %v5182 = vadd.f32 %v5037, %v5181
        %v5183 = vpop.f32.mrf.mxu0
        %5184 = vmatprep.mubr.f32.mxu0 %v4376
        %5185 = vmatmul.mubr.f32.gmra.mxu0 %v4375
        %v5186 = vpop.f32.mrf.mxu0
        %v5187 = vadd.f32 %v5042, %v5186
        %v5188 = vpop.f32.mrf.mxu0
        %5189 = vmatprep.mubr.f32.mxu0 %v4383
        %5190 = vmatmul.mubr.f32.gmra.mxu0 %v4382
        %v5191 = vpop.f32.mrf.mxu0
        %v5192 = vadd.f32 %v5047, %v5191
        %v5193 = vpop.f32.mrf.mxu0
        %5194 = vmatprep.mubr.f32.mxu0 %v4390
        %5195 = vmatmul.mubr.f32.gmra.mxu0 %v4389
        %v5196 = vpop.f32.mrf.mxu0
        %v5197 = vadd.f32 %v5052, %v5196
        %v5198 = vpop.f32.mrf.mxu0
        %5199 = vmatprep.mubr.f32.mxu0 %v4397
        %5200 = vmatmul.mubr.f32.gmra.mxu0 %v4396
        %v5201 = vpop.f32.mrf.mxu0
        %v5202 = vadd.f32 %v5057, %v5201
        %v5203 = vpop.f32.mrf.mxu0
        %5204 = vmatprep.mubr.f32.mxu0 %v4404
        %5205 = vmatmul.mubr.f32.gmra.mxu0 %v4403
        %v5206 = vpop.f32.mrf.mxu0
        %v5207 = vadd.f32 %v5062, %v5206
        %v5208 = vpop.f32.mrf.mxu0
        %5209 = vmatprep.mubr.f32.mxu0 %v4411
        %5210 = vmatmul.mubr.f32.gmra.mxu0 %v4410
        %v5211 = vpop.f32.mrf.mxu0
        %v5212 = vadd.f32 %v5067, %v5211
        %v5213 = vpop.f32.mrf.mxu0
        %5214 = vdwg.mxu0
        %5215 = vmatprep.subr.mxu0 0.0
        %5216 = vmatpush1.xpose.msra.mxu0 0.0
        %5217 = vmatprep.subr.mxu0 0.0
        %5218 = vmatpush1.xpose.msra.mxu0 0.0
        %5219 = vmatprep.subr.mxu0 0.0
        %5220 = vmatpush1.xpose.msra.mxu0 0.0
        %5221 = vmatprep.subr.mxu0 0.0
        %5222 = vmatpush1.xpose.msra.mxu0 0.0
        %5223 = vmatprep.subr.mxu0 0.0
        %5224 = vmatpush1.xpose.msra.mxu0 0.0
        %5225 = vmatprep.subr.mxu0 0.0
        %5226 = vmatpush1.xpose.msra.mxu0 0.0
        %5227 = vmatprep.subr.mxu0 0.0
        %5228 = vmatpush1.xpose.msra.mxu0 0.0
        %5229 = vmatprep.subr.mxu0 0.0
        %5230 = vmatpush1.xpose.msra.mxu0 0.0
        %5231 = vmatprep.subr.mxu0 0.0
        %5232 = vmatpush1.xpose.msra.mxu0 0.0
        %5233 = vmatprep.subr.mxu0 0.0
        %5234 = vmatpush1.xpose.msra.mxu0 0.0
        %5235 = vmatprep.subr.mxu0 0.0
        %5236 = vmatpush1.xpose.msra.mxu0 0.0
        %5237 = vmatprep.subr.mxu0 0.0
        %5238 = vmatpush1.xpose.msra.mxu0 0.0
        %5239 = vmatprep.subr.mxu0 0.0
        %5240 = vmatpush1.xpose.msra.mxu0 0.0
        %5241 = vmatprep.subr.mxu0 0.0
        %5242 = vmatpush1.xpose.msra.mxu0 0.0
        %5243 = vmatprep.subr.mxu0 0.0
        %5244 = vmatpush1.xpose.msra.mxu0 %v4778
        %5245 = vmatprep.subr.mxu0 0.0
        %5246 = vmatpush1.xpose.msra.mxu0 %v4775
        %5247 = vmatprep.subr.mxu0 0.0
        %5248 = vmatpush2.xpose.msra.mxu0 0.0
        %5249 = vmatprep.subr.mxu0 0.0
        %5250 = vmatpush2.xpose.msra.mxu0 0.0
        %5251 = vmatprep.subr.mxu0 0.0
        %5252 = vmatpush2.xpose.msra.mxu0 0.0
        %5253 = vmatprep.subr.mxu0 0.0
        %5254 = vmatpush2.xpose.msra.mxu0 0.0
        %5255 = vmatprep.subr.mxu0 0.0
        %5256 = vmatpush2.xpose.msra.mxu0 0.0
        %5257 = vmatprep.subr.mxu0 0.0
        %5258 = vmatpush2.xpose.msra.mxu0 0.0
        %5259 = vmatprep.subr.mxu0 0.0
        %5260 = vmatpush2.xpose.msra.mxu0 0.0
        %5261 = vmatprep.subr.mxu0 0.0
        %5262 = vmatpush2.xpose.msra.mxu0 0.0
        %5263 = vmatprep.subr.mxu0 0.0
        %5264 = vmatpush2.xpose.msra.mxu0 0.0
        %5265 = vmatprep.subr.mxu0 0.0
        %5266 = vmatpush2.xpose.msra.mxu0 0.0
        %5267 = vmatprep.subr.mxu0 0.0
        %5268 = vmatpush2.xpose.msra.mxu0 0.0
        %5269 = vmatprep.subr.mxu0 0.0
        %5270 = vmatpush2.xpose.msra.mxu0 0.0
        %5271 = vmatprep.subr.mxu0 0.0
        %5272 = vmatpush2.xpose.msra.mxu0 0.0
        %5273 = vmatprep.subr.mxu0 0.0
        %5274 = vmatpush2.xpose.msra.mxu0 0.0
        %5275 = vmatprep.subr.mxu0 0.0
        %5276 = vmatpush2.xpose.msra.mxu0 0.0
        %5277 = vmatprep.subr.mxu0 0.0
        %5278 = vmatpush2.xpose.msra.mxu0 0.0
        %5279 = vmatprep.mubr.f32.mxu0 0.0
        %5280 = vmatmul.mubr.f32.gmra.mxu0 %v4727
        %v5281 = vpop.f32.mrf.mxu0
        %v5282 = vadd.f32 %v5137, %v5281
        %v5283 = vpop.f32.mrf.mxu0
        %5284 = vmatprep.mubr.f32.mxu0 0.0
        %5285 = vmatmul.mubr.f32.gmra.mxu0 %v4730
        %v5286 = vpop.f32.mrf.mxu0
        %v5287 = vadd.f32 %v5142, %v5286
        %v5288 = vpop.f32.mrf.mxu0
        %5289 = vmatprep.mubr.f32.mxu0 0.0
        %5290 = vmatmul.mubr.f32.gmra.mxu0 %v4733
        %v5291 = vpop.f32.mrf.mxu0
        %v5292 = vadd.f32 %v5147, %v5291
        %v5293 = vpop.f32.mrf.mxu0
        %5294 = vmatprep.mubr.f32.mxu0 0.0
        %5295 = vmatmul.mubr.f32.gmra.mxu0 %v4736
        %v5296 = vpop.f32.mrf.mxu0
        %v5297 = vadd.f32 %v5152, %v5296
        %v5298 = vpop.f32.mrf.mxu0
        %5299 = vmatprep.mubr.f32.mxu0 0.0
        %5300 = vmatmul.mubr.f32.gmra.mxu0 %v4739
        %v5301 = vpop.f32.mrf.mxu0
        %v5302 = vadd.f32 %v5157, %v5301
        %v5303 = vpop.f32.mrf.mxu0
        %5304 = vmatprep.mubr.f32.mxu0 0.0
        %5305 = vmatmul.mubr.f32.gmra.mxu0 %v4742
        %v5306 = vpop.f32.mrf.mxu0
        %v5307 = vadd.f32 %v5162, %v5306
        %v5308 = vpop.f32.mrf.mxu0
        %5309 = vmatprep.mubr.f32.mxu0 0.0
        %5310 = vmatmul.mubr.f32.gmra.mxu0 %v4745
        %v5311 = vpop.f32.mrf.mxu0
        %v5312 = vadd.f32 %v5167, %v5311
        %v5313 = vpop.f32.mrf.mxu0
        %5314 = vmatprep.mubr.f32.mxu0 0.0
        %5315 = vmatmul.mubr.f32.gmra.mxu0 %v4748
        %v5316 = vpop.f32.mrf.mxu0
        %v5317 = vadd.f32 %v5172, %v5316
        %v5318 = vpop.f32.mrf.mxu0
        %5319 = vmatprep.mubr.f32.mxu0 0.0
        %5320 = vmatmul.mubr.f32.gmra.mxu0 %v4751
        %v5321 = vpop.f32.mrf.mxu0
        %v5322 = vadd.f32 %v5177, %v5321
        %v5323 = vpop.f32.mrf.mxu0
        %5324 = vmatprep.mubr.f32.mxu0 0.0
        %5325 = vmatmul.mubr.f32.gmra.mxu0 %v4754
        %v5326 = vpop.f32.mrf.mxu0
        %v5327 = vadd.f32 %v5182, %v5326
        %v5328 = vpop.f32.mrf.mxu0
        %5329 = vmatprep.mubr.f32.mxu0 0.0
        %5330 = vmatmul.mubr.f32.gmra.mxu0 %v4757
        %v5331 = vpop.f32.mrf.mxu0
        %v5332 = vadd.f32 %v5187, %v5331
        %v5333 = vpop.f32.mrf.mxu0
        %5334 = vmatprep.mubr.f32.mxu0 0.0
        %5335 = vmatmul.mubr.f32.gmra.mxu0 %v4760
        %v5336 = vpop.f32.mrf.mxu0
        %v5337 = vadd.f32 %v5192, %v5336
        %v5338 = vpop.f32.mrf.mxu0
        %5339 = vmatprep.mubr.f32.mxu0 0.0
        %5340 = vmatmul.mubr.f32.gmra.mxu0 %v4763
        %v5341 = vpop.f32.mrf.mxu0
        %v5342 = vadd.f32 %v5197, %v5341
        %v5343 = vpop.f32.mrf.mxu0
        %5344 = vmatprep.mubr.f32.mxu0 0.0
        %5345 = vmatmul.mubr.f32.gmra.mxu0 %v4766
        %v5346 = vpop.f32.mrf.mxu0
        %v5347 = vadd.f32 %v5202, %v5346
        %v5348 = vpop.f32.mrf.mxu0
        %5349 = vmatprep.mubr.f32.mxu0 0.0
        %5350 = vmatmul.mubr.f32.gmra.mxu0 %v4769
        %v5351 = vpop.f32.mrf.mxu0
        %v5352 = vadd.f32 %v5207, %v5351
        %v5353 = vpop.f32.mrf.mxu0
        %5354 = vmatprep.mubr.f32.mxu0 0.0
        %5355 = vmatmul.mubr.f32.gmra.mxu0 %v4772
        %v5356 = vpop.f32.mrf.mxu0
        %v5357 = vadd.f32 %v5212, %v5356
        %v5358 = vpop.f32.mrf.mxu0
        %5359 = vdwg.mxu0
        %v5361 = vsel %vm4725, %v3578, 0
        %v5364 = vsel %vm4725, %v3585, 0
        %v5367 = vsel %vm4725, %v3592, 0
        %v5370 = vsel %vm4725, %v3599, 0
        %v5373 = vsel %vm4725, %v3606, 0
        %v5376 = vsel %vm4725, %v3613, 0
        %v5379 = vsel %vm4725, %v3620, 0
        %v5382 = vsel %vm4725, %v3627, 0
        %v5385 = vsel %vm4725, %v3634, 0
        %v5388 = vsel %vm4725, %v3641, 0
        %v5391 = vsel %vm4725, %v3648, 0
        %v5394 = vsel %vm4725, %v3655, 0
        %v5397 = vsel %vm4725, %v3662, 0
        %v5400 = vsel %vm4725, %v3669, 0
        %v5403 = vsel %vm4725, %v3676, 0
        %v5406 = vsel %vm4725, %v3683, 0
        %v5409 = vsel %vm4725, %v4289, 0
        %v5412 = vsel %vm4725, %v4294, 0
        %5414 = vmatprep.subr.mxu0 0.0
        %5415 = vmatpush1.xpose.msra.mxu0 0.0
        %5416 = vmatprep.subr.mxu0 0.0
        %5417 = vmatpush1.xpose.msra.mxu0 0.0
        %5418 = vmatprep.subr.mxu0 0.0
        %5419 = vmatpush1.xpose.msra.mxu0 0.0
        %5420 = vmatprep.subr.mxu0 0.0
        %5421 = vmatpush1.xpose.msra.mxu0 0.0
        %5422 = vmatprep.subr.mxu0 0.0
        %5423 = vmatpush1.xpose.msra.mxu0 0.0
        %5424 = vmatprep.subr.mxu0 0.0
        %5425 = vmatpush1.xpose.msra.mxu0 0.0
        %5426 = vmatprep.subr.mxu0 0.0
        %5427 = vmatpush1.xpose.msra.mxu0 0.0
        %5428 = vmatprep.subr.mxu0 0.0
        %5429 = vmatpush1.xpose.msra.mxu0 0.0
        %5430 = vmatprep.subr.mxu0 0.0
        %5431 = vmatpush1.xpose.msra.mxu0 0.0
        %5432 = vmatprep.subr.mxu0 0.0
        %5433 = vmatpush1.xpose.msra.mxu0 0.0
        %5434 = vmatprep.subr.mxu0 0.0
        %5435 = vmatpush1.xpose.msra.mxu0 0.0
        %5436 = vmatprep.subr.mxu0 0.0
        %5437 = vmatpush1.xpose.msra.mxu0 0.0
        %5438 = vmatprep.subr.mxu0 0.0
        %5439 = vmatpush1.xpose.msra.mxu0 0.0
        %5440 = vmatprep.subr.mxu0 0.0
        %5441 = vmatpush1.xpose.msra.mxu0 0.0
        %5442 = vmatprep.subr.mxu0 %v4066
        %5443 = vmatpush1.xpose.msra.mxu0 %v4064
        %5444 = vmatprep.subr.mxu0 %v4060
        %5445 = vmatpush1.xpose.msra.mxu0 %v4058
        %5446 = vmatprep.subr.mxu0 0.0
        %5447 = vmatpush2.xpose.msra.mxu0 0.0
        %5448 = vmatprep.subr.mxu0 0.0
        %5449 = vmatpush2.xpose.msra.mxu0 0.0
        %5450 = vmatprep.subr.mxu0 0.0
        %5451 = vmatpush2.xpose.msra.mxu0 0.0
        %5452 = vmatprep.subr.mxu0 0.0
        %5453 = vmatpush2.xpose.msra.mxu0 0.0
        %5454 = vmatprep.subr.mxu0 0.0
        %5455 = vmatpush2.xpose.msra.mxu0 0.0
        %5456 = vmatprep.subr.mxu0 0.0
        %5457 = vmatpush2.xpose.msra.mxu0 0.0
        %5458 = vmatprep.subr.mxu0 0.0
        %5459 = vmatpush2.xpose.msra.mxu0 0.0
        %5460 = vmatprep.subr.mxu0 0.0
        %5461 = vmatpush2.xpose.msra.mxu0 0.0
        %5462 = vmatprep.subr.mxu0 0.0
        %5463 = vmatpush2.xpose.msra.mxu0 0.0
        %5464 = vmatprep.subr.mxu0 0.0
        %5465 = vmatpush2.xpose.msra.mxu0 0.0
        %5466 = vmatprep.subr.mxu0 0.0
        %5467 = vmatpush2.xpose.msra.mxu0 0.0
        %5468 = vmatprep.subr.mxu0 0.0
        %5469 = vmatpush2.xpose.msra.mxu0 0.0
        %5470 = vmatprep.subr.mxu0 0.0
        %5471 = vmatpush2.xpose.msra.mxu0 0.0
        %5472 = vmatprep.subr.mxu0 0.0
        %5473 = vmatpush2.xpose.msra.mxu0 0.0
        %5474 = vmatprep.subr.mxu0 0.0
        %5475 = vmatpush2.xpose.msra.mxu0 0.0
        %5476 = vmatprep.subr.mxu0 0.0
        %5477 = vmatpush2.xpose.msra.mxu0 0.0
        %5478 = vmatprep.mubr.f32.mxu0 %v3573
        %5479 = vmatmul.mubr.f32.gmra.mxu0 %v3572
        %v5480 = vpop.f32.mrf.mxu0
        %v5481 = vadd.f32 %v5282, %v5480
        %v5482 = vpop.f32.mrf.mxu0
        %5483 = vmatprep.mubr.f32.mxu0 %v3580
        %5484 = vmatmul.mubr.f32.gmra.mxu0 %v3579
        %v5485 = vpop.f32.mrf.mxu0
        %v5486 = vadd.f32 %v5287, %v5485
        %v5487 = vpop.f32.mrf.mxu0
        %5488 = vmatprep.mubr.f32.mxu0 %v3587
        %5489 = vmatmul.mubr.f32.gmra.mxu0 %v3586
        %v5490 = vpop.f32.mrf.mxu0
        %v5491 = vadd.f32 %v5292, %v5490
        %v5492 = vpop.f32.mrf.mxu0
        %5493 = vmatprep.mubr.f32.mxu0 %v3594
        %5494 = vmatmul.mubr.f32.gmra.mxu0 %v3593
        %v5495 = vpop.f32.mrf.mxu0
        %v5496 = vadd.f32 %v5297, %v5495
        %v5497 = vpop.f32.mrf.mxu0
        %5498 = vmatprep.mubr.f32.mxu0 %v3601
        %5499 = vmatmul.mubr.f32.gmra.mxu0 %v3600
        %v5500 = vpop.f32.mrf.mxu0
        %v5501 = vadd.f32 %v5302, %v5500
        %v5502 = vpop.f32.mrf.mxu0
        %5503 = vmatprep.mubr.f32.mxu0 %v3608
        %5504 = vmatmul.mubr.f32.gmra.mxu0 %v3607
        %v5505 = vpop.f32.mrf.mxu0
        %v5506 = vadd.f32 %v5307, %v5505
        %v5507 = vpop.f32.mrf.mxu0
        %5508 = vmatprep.mubr.f32.mxu0 %v3615
        %5509 = vmatmul.mubr.f32.gmra.mxu0 %v3614
        %v5510 = vpop.f32.mrf.mxu0
        %v5511 = vadd.f32 %v5312, %v5510
        %v5512 = vpop.f32.mrf.mxu0
        %5513 = vmatprep.mubr.f32.mxu0 %v3622
        %5514 = vmatmul.mubr.f32.gmra.mxu0 %v3621
        %v5515 = vpop.f32.mrf.mxu0
        %v5516 = vadd.f32 %v5317, %v5515
        %v5517 = vpop.f32.mrf.mxu0
        %5518 = vmatprep.mubr.f32.mxu0 %v3629
        %5519 = vmatmul.mubr.f32.gmra.mxu0 %v3628
        %v5520 = vpop.f32.mrf.mxu0
        %v5521 = vadd.f32 %v5322, %v5520
        %v5522 = vpop.f32.mrf.mxu0
        %5523 = vmatprep.mubr.f32.mxu0 %v3636
        %5524 = vmatmul.mubr.f32.gmra.mxu0 %v3635
        %v5525 = vpop.f32.mrf.mxu0
        %v5526 = vadd.f32 %v5327, %v5525
        %v5527 = vpop.f32.mrf.mxu0
        %5528 = vmatprep.mubr.f32.mxu0 %v3643
        %5529 = vmatmul.mubr.f32.gmra.mxu0 %v3642
        %v5530 = vpop.f32.mrf.mxu0
        %v5531 = vadd.f32 %v5332, %v5530
        %v5532 = vpop.f32.mrf.mxu0
        %5533 = vmatprep.mubr.f32.mxu0 %v3650
        %5534 = vmatmul.mubr.f32.gmra.mxu0 %v3649
        %v5535 = vpop.f32.mrf.mxu0
        %v5536 = vadd.f32 %v5337, %v5535
        %v5537 = vpop.f32.mrf.mxu0
        %5538 = vmatprep.mubr.f32.mxu0 %v3657
        %5539 = vmatmul.mubr.f32.gmra.mxu0 %v3656
        %v5540 = vpop.f32.mrf.mxu0
        %v5541 = vadd.f32 %v5342, %v5540
        %v5542 = vpop.f32.mrf.mxu0
        %5543 = vmatprep.mubr.f32.mxu0 %v3664
        %5544 = vmatmul.mubr.f32.gmra.mxu0 %v3663
        %v5545 = vpop.f32.mrf.mxu0
        %v5546 = vadd.f32 %v5347, %v5545
        %v5547 = vpop.f32.mrf.mxu0
        %5548 = vmatprep.mubr.f32.mxu0 %v3671
        %5549 = vmatmul.mubr.f32.gmra.mxu0 %v3670
        %v5550 = vpop.f32.mrf.mxu0
        %v5551 = vadd.f32 %v5352, %v5550
        %v5552 = vpop.f32.mrf.mxu0
        %5553 = vmatprep.mubr.f32.mxu0 %v3678
        %5554 = vmatmul.mubr.f32.gmra.mxu0 %v3677
        %v5555 = vpop.f32.mrf.mxu0
        %v5556 = vadd.f32 %v5357, %v5555
        %v5557 = vpop.f32.mrf.mxu0
        %5558 = vdwg.mxu0
        %5559 = vmatprep.subr.mxu0 0.0
        %5560 = vmatpush1.xpose.msra.mxu0 0.0
        %5561 = vmatprep.subr.mxu0 0.0
        %5562 = vmatpush1.xpose.msra.mxu0 0.0
        %5563 = vmatprep.subr.mxu0 0.0
        %5564 = vmatpush1.xpose.msra.mxu0 0.0
        %5565 = vmatprep.subr.mxu0 0.0
        %5566 = vmatpush1.xpose.msra.mxu0 0.0
        %5567 = vmatprep.subr.mxu0 0.0
        %5568 = vmatpush1.xpose.msra.mxu0 0.0
        %5569 = vmatprep.subr.mxu0 0.0
        %5570 = vmatpush1.xpose.msra.mxu0 0.0
        %5571 = vmatprep.subr.mxu0 0.0
        %5572 = vmatpush1.xpose.msra.mxu0 0.0
        %5573 = vmatprep.subr.mxu0 0.0
        %5574 = vmatpush1.xpose.msra.mxu0 0.0
        %5575 = vmatprep.subr.mxu0 0.0
        %5576 = vmatpush1.xpose.msra.mxu0 0.0
        %5577 = vmatprep.subr.mxu0 0.0
        %5578 = vmatpush1.xpose.msra.mxu0 0.0
        %5579 = vmatprep.subr.mxu0 0.0
        %5580 = vmatpush1.xpose.msra.mxu0 0.0
        %5581 = vmatprep.subr.mxu0 0.0
        %5582 = vmatpush1.xpose.msra.mxu0 0.0
        %5583 = vmatprep.subr.mxu0 0.0
        %5584 = vmatpush1.xpose.msra.mxu0 0.0
        %5585 = vmatprep.subr.mxu0 0.0
        %5586 = vmatpush1.xpose.msra.mxu0 0.0
        %5587 = vmatprep.subr.mxu0 %v4143
        %5588 = vmatpush1.xpose.msra.mxu0 %v4141
        %5589 = vmatprep.subr.mxu0 %v4137
        %5590 = vmatpush1.xpose.msra.mxu0 %v4135
        %5591 = vmatprep.subr.mxu0 0.0
        %5592 = vmatpush2.xpose.msra.mxu0 0.0
        %5593 = vmatprep.subr.mxu0 0.0
        %5594 = vmatpush2.xpose.msra.mxu0 0.0
        %5595 = vmatprep.subr.mxu0 0.0
        %5596 = vmatpush2.xpose.msra.mxu0 0.0
        %5597 = vmatprep.subr.mxu0 0.0
        %5598 = vmatpush2.xpose.msra.mxu0 0.0
        %5599 = vmatprep.subr.mxu0 0.0
        %5600 = vmatpush2.xpose.msra.mxu0 0.0
        %5601 = vmatprep.subr.mxu0 0.0
        %5602 = vmatpush2.xpose.msra.mxu0 0.0
        %5603 = vmatprep.subr.mxu0 0.0
        %5604 = vmatpush2.xpose.msra.mxu0 0.0
        %5605 = vmatprep.subr.mxu0 0.0
        %5606 = vmatpush2.xpose.msra.mxu0 0.0
        %5607 = vmatprep.subr.mxu0 0.0
        %5608 = vmatpush2.xpose.msra.mxu0 0.0
        %5609 = vmatprep.subr.mxu0 0.0
        %5610 = vmatpush2.xpose.msra.mxu0 0.0
        %5611 = vmatprep.subr.mxu0 0.0
        %5612 = vmatpush2.xpose.msra.mxu0 0.0
        %5613 = vmatprep.subr.mxu0 0.0
        %5614 = vmatpush2.xpose.msra.mxu0 0.0
        %5615 = vmatprep.subr.mxu0 0.0
        %5616 = vmatpush2.xpose.msra.mxu0 0.0
        %5617 = vmatprep.subr.mxu0 0.0
        %5618 = vmatpush2.xpose.msra.mxu0 0.0
        %5619 = vmatprep.subr.mxu0 0.0
        %5620 = vmatpush2.xpose.msra.mxu0 0.0
        %5621 = vmatprep.subr.mxu0 0.0
        %5622 = vmatpush2.xpose.msra.mxu0 0.0
        %5623 = vmatprep.mubr.f32.mxu0 %v3575
        %5624 = vmatmul.mubr.f32.gmra.mxu0 %v3574
        %v5625 = vpop.f32.mrf.mxu0
        %v5626 = vadd.f32 %v5481, %v5625
        %v5627 = vpop.f32.mrf.mxu0
        %5628 = vmatprep.mubr.f32.mxu0 %v3582
        %5629 = vmatmul.mubr.f32.gmra.mxu0 %v3581
        %v5630 = vpop.f32.mrf.mxu0
        %v5631 = vadd.f32 %v5486, %v5630
        %v5632 = vpop.f32.mrf.mxu0
        %5633 = vmatprep.mubr.f32.mxu0 %v3589
        %5634 = vmatmul.mubr.f32.gmra.mxu0 %v3588
        %v5635 = vpop.f32.mrf.mxu0
        %v5636 = vadd.f32 %v5491, %v5635
        %v5637 = vpop.f32.mrf.mxu0
        %5638 = vmatprep.mubr.f32.mxu0 %v3596
        %5639 = vmatmul.mubr.f32.gmra.mxu0 %v3595
        %v5640 = vpop.f32.mrf.mxu0
        %v5641 = vadd.f32 %v5496, %v5640
        %v5642 = vpop.f32.mrf.mxu0
        %5643 = vmatprep.mubr.f32.mxu0 %v3603
        %5644 = vmatmul.mubr.f32.gmra.mxu0 %v3602
        %v5645 = vpop.f32.mrf.mxu0
        %v5646 = vadd.f32 %v5501, %v5645
        %v5647 = vpop.f32.mrf.mxu0
        %5648 = vmatprep.mubr.f32.mxu0 %v3610
        %5649 = vmatmul.mubr.f32.gmra.mxu0 %v3609
        %v5650 = vpop.f32.mrf.mxu0
        %v5651 = vadd.f32 %v5506, %v5650
        %v5652 = vpop.f32.mrf.mxu0
        %5653 = vmatprep.mubr.f32.mxu0 %v3617
        %5654 = vmatmul.mubr.f32.gmra.mxu0 %v3616
        %v5655 = vpop.f32.mrf.mxu0
        %v5656 = vadd.f32 %v5511, %v5655
        %v5657 = vpop.f32.mrf.mxu0
        %5658 = vmatprep.mubr.f32.mxu0 %v3624
        %5659 = vmatmul.mubr.f32.gmra.mxu0 %v3623
        %v5660 = vpop.f32.mrf.mxu0
        %v5661 = vadd.f32 %v5516, %v5660
        %v5662 = vpop.f32.mrf.mxu0
        %5663 = vmatprep.mubr.f32.mxu0 %v3631
        %5664 = vmatmul.mubr.f32.gmra.mxu0 %v3630
        %v5665 = vpop.f32.mrf.mxu0
        %v5666 = vadd.f32 %v5521, %v5665
        %v5667 = vpop.f32.mrf.mxu0
        %5668 = vmatprep.mubr.f32.mxu0 %v3638
        %5669 = vmatmul.mubr.f32.gmra.mxu0 %v3637
        %v5670 = vpop.f32.mrf.mxu0
        %v5671 = vadd.f32 %v5526, %v5670
        %v5672 = vpop.f32.mrf.mxu0
        %5673 = vmatprep.mubr.f32.mxu0 %v3645
        %5674 = vmatmul.mubr.f32.gmra.mxu0 %v3644
        %v5675 = vpop.f32.mrf.mxu0
        %v5676 = vadd.f32 %v5531, %v5675
        %v5677 = vpop.f32.mrf.mxu0
        %5678 = vmatprep.mubr.f32.mxu0 %v3652
        %5679 = vmatmul.mubr.f32.gmra.mxu0 %v3651
        %v5680 = vpop.f32.mrf.mxu0
        %v5681 = vadd.f32 %v5536, %v5680
        %v5682 = vpop.f32.mrf.mxu0
        %5683 = vmatprep.mubr.f32.mxu0 %v3659
        %5684 = vmatmul.mubr.f32.gmra.mxu0 %v3658
        %v5685 = vpop.f32.mrf.mxu0
        %v5686 = vadd.f32 %v5541, %v5685
        %v5687 = vpop.f32.mrf.mxu0
        %5688 = vmatprep.mubr.f32.mxu0 %v3666
        %5689 = vmatmul.mubr.f32.gmra.mxu0 %v3665
        %v5690 = vpop.f32.mrf.mxu0
        %v5691 = vadd.f32 %v5546, %v5690
        %v5692 = vpop.f32.mrf.mxu0
        %5693 = vmatprep.mubr.f32.mxu0 %v3673
        %5694 = vmatmul.mubr.f32.gmra.mxu0 %v3672
        %v5695 = vpop.f32.mrf.mxu0
        %v5696 = vadd.f32 %v5551, %v5695
        %v5697 = vpop.f32.mrf.mxu0
        %5698 = vmatprep.mubr.f32.mxu0 %v3680
        %5699 = vmatmul.mubr.f32.gmra.mxu0 %v3679
        %v5700 = vpop.f32.mrf.mxu0
        %v5701 = vadd.f32 %v5556, %v5700
        %v5702 = vpop.f32.mrf.mxu0
        %5703 = vdwg.mxu0
        %5704 = vmatprep.subr.mxu0 0.0
        %5705 = vmatpush1.xpose.msra.mxu0 0.0
        %5706 = vmatprep.subr.mxu0 0.0
        %5707 = vmatpush1.xpose.msra.mxu0 0.0
        %5708 = vmatprep.subr.mxu0 0.0
        %5709 = vmatpush1.xpose.msra.mxu0 0.0
        %5710 = vmatprep.subr.mxu0 0.0
        %5711 = vmatpush1.xpose.msra.mxu0 0.0
        %5712 = vmatprep.subr.mxu0 0.0
        %5713 = vmatpush1.xpose.msra.mxu0 0.0
        %5714 = vmatprep.subr.mxu0 0.0
        %5715 = vmatpush1.xpose.msra.mxu0 0.0
        %5716 = vmatprep.subr.mxu0 0.0
        %5717 = vmatpush1.xpose.msra.mxu0 0.0
        %5718 = vmatprep.subr.mxu0 0.0
        %5719 = vmatpush1.xpose.msra.mxu0 0.0
        %5720 = vmatprep.subr.mxu0 0.0
        %5721 = vmatpush1.xpose.msra.mxu0 0.0
        %5722 = vmatprep.subr.mxu0 0.0
        %5723 = vmatpush1.xpose.msra.mxu0 0.0
        %5724 = vmatprep.subr.mxu0 0.0
        %5725 = vmatpush1.xpose.msra.mxu0 0.0
        %5726 = vmatprep.subr.mxu0 0.0
        %5727 = vmatpush1.xpose.msra.mxu0 0.0
        %5728 = vmatprep.subr.mxu0 0.0
        %5729 = vmatpush1.xpose.msra.mxu0 0.0
        %5730 = vmatprep.subr.mxu0 0.0
        %5731 = vmatpush1.xpose.msra.mxu0 0.0
        %5732 = vmatprep.subr.mxu0 %v4220
        %5733 = vmatpush1.xpose.msra.mxu0 %v4218
        %5734 = vmatprep.subr.mxu0 %v4214
        %5735 = vmatpush1.xpose.msra.mxu0 %v4212
        %5736 = vmatprep.subr.mxu0 0.0
        %5737 = vmatpush2.xpose.msra.mxu0 0.0
        %5738 = vmatprep.subr.mxu0 0.0
        %5739 = vmatpush2.xpose.msra.mxu0 0.0
        %5740 = vmatprep.subr.mxu0 0.0
        %5741 = vmatpush2.xpose.msra.mxu0 0.0
        %5742 = vmatprep.subr.mxu0 0.0
        %5743 = vmatpush2.xpose.msra.mxu0 0.0
        %5744 = vmatprep.subr.mxu0 0.0
        %5745 = vmatpush2.xpose.msra.mxu0 0.0
        %5746 = vmatprep.subr.mxu0 0.0
        %5747 = vmatpush2.xpose.msra.mxu0 0.0
        %5748 = vmatprep.subr.mxu0 0.0
        %5749 = vmatpush2.xpose.msra.mxu0 0.0
        %5750 = vmatprep.subr.mxu0 0.0
        %5751 = vmatpush2.xpose.msra.mxu0 0.0
        %5752 = vmatprep.subr.mxu0 0.0
        %5753 = vmatpush2.xpose.msra.mxu0 0.0
        %5754 = vmatprep.subr.mxu0 0.0
        %5755 = vmatpush2.xpose.msra.mxu0 0.0
        %5756 = vmatprep.subr.mxu0 0.0
        %5757 = vmatpush2.xpose.msra.mxu0 0.0
        %5758 = vmatprep.subr.mxu0 0.0
        %5759 = vmatpush2.xpose.msra.mxu0 0.0
        %5760 = vmatprep.subr.mxu0 0.0
        %5761 = vmatpush2.xpose.msra.mxu0 0.0
        %5762 = vmatprep.subr.mxu0 0.0
        %5763 = vmatpush2.xpose.msra.mxu0 0.0
        %5764 = vmatprep.subr.mxu0 0.0
        %5765 = vmatpush2.xpose.msra.mxu0 0.0
        %5766 = vmatprep.subr.mxu0 0.0
        %5767 = vmatpush2.xpose.msra.mxu0 0.0
        %5768 = vmatprep.mubr.f32.mxu0 %v3577
        %5769 = vmatmul.mubr.f32.gmra.mxu0 %v3576
        %v5770 = vpop.f32.mrf.mxu0
        %v5771 = vadd.f32 %v5626, %v5770
        %v5772 = vpop.f32.mrf.mxu0
        %5773 = vmatprep.mubr.f32.mxu0 %v3584
        %5774 = vmatmul.mubr.f32.gmra.mxu0 %v3583
        %v5775 = vpop.f32.mrf.mxu0
        %v5776 = vadd.f32 %v5631, %v5775
        %v5777 = vpop.f32.mrf.mxu0
        %5778 = vmatprep.mubr.f32.mxu0 %v3591
        %5779 = vmatmul.mubr.f32.gmra.mxu0 %v3590
        %v5780 = vpop.f32.mrf.mxu0
        %v5781 = vadd.f32 %v5636, %v5780
        %v5782 = vpop.f32.mrf.mxu0
        %5783 = vmatprep.mubr.f32.mxu0 %v3598
        %5784 = vmatmul.mubr.f32.gmra.mxu0 %v3597
        %v5785 = vpop.f32.mrf.mxu0
        %v5786 = vadd.f32 %v5641, %v5785
        %v5787 = vpop.f32.mrf.mxu0
        %5788 = vmatprep.mubr.f32.mxu0 %v3605
        %5789 = vmatmul.mubr.f32.gmra.mxu0 %v3604
        %v5790 = vpop.f32.mrf.mxu0
        %v5791 = vadd.f32 %v5646, %v5790
        %v5792 = vpop.f32.mrf.mxu0
        %5793 = vmatprep.mubr.f32.mxu0 %v3612
        %5794 = vmatmul.mubr.f32.gmra.mxu0 %v3611
        %v5795 = vpop.f32.mrf.mxu0
        %v5796 = vadd.f32 %v5651, %v5795
        %v5797 = vpop.f32.mrf.mxu0
        %5798 = vmatprep.mubr.f32.mxu0 %v3619
        %5799 = vmatmul.mubr.f32.gmra.mxu0 %v3618
        %v5800 = vpop.f32.mrf.mxu0
        %v5801 = vadd.f32 %v5656, %v5800
        %v5802 = vpop.f32.mrf.mxu0
        %5803 = vmatprep.mubr.f32.mxu0 %v3626
        %5804 = vmatmul.mubr.f32.gmra.mxu0 %v3625
        %v5805 = vpop.f32.mrf.mxu0
        %v5806 = vadd.f32 %v5661, %v5805
        %v5807 = vpop.f32.mrf.mxu0
        %5808 = vmatprep.mubr.f32.mxu0 %v3633
        %5809 = vmatmul.mubr.f32.gmra.mxu0 %v3632
        %v5810 = vpop.f32.mrf.mxu0
        %v5811 = vadd.f32 %v5666, %v5810
        %v5812 = vpop.f32.mrf.mxu0
        %5813 = vmatprep.mubr.f32.mxu0 %v3640
        %5814 = vmatmul.mubr.f32.gmra.mxu0 %v3639
        %v5815 = vpop.f32.mrf.mxu0
        %v5816 = vadd.f32 %v5671, %v5815
        %v5817 = vpop.f32.mrf.mxu0
        %5818 = vmatprep.mubr.f32.mxu0 %v3647
        %5819 = vmatmul.mubr.f32.gmra.mxu0 %v3646
        %v5820 = vpop.f32.mrf.mxu0
        %v5821 = vadd.f32 %v5676, %v5820
        %v5822 = vpop.f32.mrf.mxu0
        %5823 = vmatprep.mubr.f32.mxu0 %v3654
        %5824 = vmatmul.mubr.f32.gmra.mxu0 %v3653
        %v5825 = vpop.f32.mrf.mxu0
        %v5826 = vadd.f32 %v5681, %v5825
        %v5827 = vpop.f32.mrf.mxu0
        %5828 = vmatprep.mubr.f32.mxu0 %v3661
        %5829 = vmatmul.mubr.f32.gmra.mxu0 %v3660
        %v5830 = vpop.f32.mrf.mxu0
        %v5831 = vadd.f32 %v5686, %v5830
        %v5832 = vpop.f32.mrf.mxu0
        %5833 = vmatprep.mubr.f32.mxu0 %v3668
        %5834 = vmatmul.mubr.f32.gmra.mxu0 %v3667
        %v5835 = vpop.f32.mrf.mxu0
        %v5836 = vadd.f32 %v5691, %v5835
        %v5837 = vpop.f32.mrf.mxu0
        %5838 = vmatprep.mubr.f32.mxu0 %v3675
        %5839 = vmatmul.mubr.f32.gmra.mxu0 %v3674
        %v5840 = vpop.f32.mrf.mxu0
        %v5841 = vadd.f32 %v5696, %v5840
        %v5842 = vpop.f32.mrf.mxu0
        %5843 = vmatprep.mubr.f32.mxu0 %v3682
        %5844 = vmatmul.mubr.f32.gmra.mxu0 %v3681
        %v5845 = vpop.f32.mrf.mxu0
        %v5846 = vadd.f32 %v5701, %v5845
        %v5847 = vpop.f32.mrf.mxu0
        %5848 = vdwg.mxu0
        %5849 = vmatprep.subr.mxu0 0.0
        %5850 = vmatpush1.xpose.msra.mxu0 0.0
        %5851 = vmatprep.subr.mxu0 0.0
        %5852 = vmatpush1.xpose.msra.mxu0 0.0
        %5853 = vmatprep.subr.mxu0 0.0
        %5854 = vmatpush1.xpose.msra.mxu0 0.0
        %5855 = vmatprep.subr.mxu0 0.0
        %5856 = vmatpush1.xpose.msra.mxu0 0.0
        %5857 = vmatprep.subr.mxu0 0.0
        %5858 = vmatpush1.xpose.msra.mxu0 0.0
        %5859 = vmatprep.subr.mxu0 0.0
        %5860 = vmatpush1.xpose.msra.mxu0 0.0
        %5861 = vmatprep.subr.mxu0 0.0
        %5862 = vmatpush1.xpose.msra.mxu0 0.0
        %5863 = vmatprep.subr.mxu0 0.0
        %5864 = vmatpush1.xpose.msra.mxu0 0.0
        %5865 = vmatprep.subr.mxu0 0.0
        %5866 = vmatpush1.xpose.msra.mxu0 0.0
        %5867 = vmatprep.subr.mxu0 0.0
        %5868 = vmatpush1.xpose.msra.mxu0 0.0
        %5869 = vmatprep.subr.mxu0 0.0
        %5870 = vmatpush1.xpose.msra.mxu0 0.0
        %5871 = vmatprep.subr.mxu0 0.0
        %5872 = vmatpush1.xpose.msra.mxu0 0.0
        %5873 = vmatprep.subr.mxu0 0.0
        %5874 = vmatpush1.xpose.msra.mxu0 0.0
        %5875 = vmatprep.subr.mxu0 0.0
        %5876 = vmatpush1.xpose.msra.mxu0 0.0
        %5877 = vmatprep.subr.mxu0 0.0
        %5878 = vmatpush1.xpose.msra.mxu0 %v5412
        %5879 = vmatprep.subr.mxu0 0.0
        %5880 = vmatpush1.xpose.msra.mxu0 %v5409
        %5881 = vmatprep.subr.mxu0 0.0
        %5882 = vmatpush2.xpose.msra.mxu0 0.0
        %5883 = vmatprep.subr.mxu0 0.0
        %5884 = vmatpush2.xpose.msra.mxu0 0.0
        %5885 = vmatprep.subr.mxu0 0.0
        %5886 = vmatpush2.xpose.msra.mxu0 0.0
        %5887 = vmatprep.subr.mxu0 0.0
        %5888 = vmatpush2.xpose.msra.mxu0 0.0
        %5889 = vmatprep.subr.mxu0 0.0
        %5890 = vmatpush2.xpose.msra.mxu0 0.0
        %5891 = vmatprep.subr.mxu0 0.0
        %5892 = vmatpush2.xpose.msra.mxu0 0.0
        %5893 = vmatprep.subr.mxu0 0.0
        %5894 = vmatpush2.xpose.msra.mxu0 0.0
        %5895 = vmatprep.subr.mxu0 0.0
        %5896 = vmatpush2.xpose.msra.mxu0 0.0
        %5897 = vmatprep.subr.mxu0 0.0
        %5898 = vmatpush2.xpose.msra.mxu0 0.0
        %5899 = vmatprep.subr.mxu0 0.0
        %5900 = vmatpush2.xpose.msra.mxu0 0.0
        %5901 = vmatprep.subr.mxu0 0.0
        %5902 = vmatpush2.xpose.msra.mxu0 0.0
        %5903 = vmatprep.subr.mxu0 0.0
        %5904 = vmatpush2.xpose.msra.mxu0 0.0
        %5905 = vmatprep.subr.mxu0 0.0
        %5906 = vmatpush2.xpose.msra.mxu0 0.0
        %5907 = vmatprep.subr.mxu0 0.0
        %5908 = vmatpush2.xpose.msra.mxu0 0.0
        %5909 = vmatprep.subr.mxu0 0.0
        %5910 = vmatpush2.xpose.msra.mxu0 0.0
        %5911 = vmatprep.subr.mxu0 0.0
        %5912 = vmatpush2.xpose.msra.mxu0 0.0
        %5913 = vmatprep.mubr.f32.mxu0 0.0
        %5914 = vmatmul.mubr.f32.gmra.mxu0 %v5361
        %v5915 = vpop.f32.mrf.mxu0
        %v5916 = vadd.f32 %v5771, %v5915
        %v5917 = vpop.f32.mrf.mxu0
        %5918 = vmatprep.mubr.f32.mxu0 0.0
        %5919 = vmatmul.mubr.f32.gmra.mxu0 %v5364
        %v5920 = vpop.f32.mrf.mxu0
        %v5921 = vadd.f32 %v5776, %v5920
        %v5922 = vpop.f32.mrf.mxu0
        %5923 = vmatprep.mubr.f32.mxu0 0.0
        %5924 = vmatmul.mubr.f32.gmra.mxu0 %v5367
        %v5925 = vpop.f32.mrf.mxu0
        %v5926 = vadd.f32 %v5781, %v5925
        %v5927 = vpop.f32.mrf.mxu0
        %5928 = vmatprep.mubr.f32.mxu0 0.0
        %5929 = vmatmul.mubr.f32.gmra.mxu0 %v5370
        %v5930 = vpop.f32.mrf.mxu0
        %v5931 = vadd.f32 %v5786, %v5930
        %v5932 = vpop.f32.mrf.mxu0
        %5933 = vmatprep.mubr.f32.mxu0 0.0
        %5934 = vmatmul.mubr.f32.gmra.mxu0 %v5373
        %v5935 = vpop.f32.mrf.mxu0
        %v5936 = vadd.f32 %v5791, %v5935
        %v5937 = vpop.f32.mrf.mxu0
        %5938 = vmatprep.mubr.f32.mxu0 0.0
        %5939 = vmatmul.mubr.f32.gmra.mxu0 %v5376
        %v5940 = vpop.f32.mrf.mxu0
        %v5941 = vadd.f32 %v5796, %v5940
        %v5942 = vpop.f32.mrf.mxu0
        %5943 = vmatprep.mubr.f32.mxu0 0.0
        %5944 = vmatmul.mubr.f32.gmra.mxu0 %v5379
        %v5945 = vpop.f32.mrf.mxu0
        %v5946 = vadd.f32 %v5801, %v5945
        %v5947 = vpop.f32.mrf.mxu0
        %5948 = vmatprep.mubr.f32.mxu0 0.0
        %5949 = vmatmul.mubr.f32.gmra.mxu0 %v5382
        %v5950 = vpop.f32.mrf.mxu0
        %v5951 = vadd.f32 %v5806, %v5950
        %v5952 = vpop.f32.mrf.mxu0
        %5953 = vmatprep.mubr.f32.mxu0 0.0
        %5954 = vmatmul.mubr.f32.gmra.mxu0 %v5385
        %v5955 = vpop.f32.mrf.mxu0
        %v5956 = vadd.f32 %v5811, %v5955
        %v5957 = vpop.f32.mrf.mxu0
        %5958 = vmatprep.mubr.f32.mxu0 0.0
        %5959 = vmatmul.mubr.f32.gmra.mxu0 %v5388
        %v5960 = vpop.f32.mrf.mxu0
        %v5961 = vadd.f32 %v5816, %v5960
        %v5962 = vpop.f32.mrf.mxu0
        %5963 = vmatprep.mubr.f32.mxu0 0.0
        %5964 = vmatmul.mubr.f32.gmra.mxu0 %v5391
        %v5965 = vpop.f32.mrf.mxu0
        %v5966 = vadd.f32 %v5821, %v5965
        %v5967 = vpop.f32.mrf.mxu0
        %5968 = vmatprep.mubr.f32.mxu0 0.0
        %5969 = vmatmul.mubr.f32.gmra.mxu0 %v5394
        %v5970 = vpop.f32.mrf.mxu0
        %v5971 = vadd.f32 %v5826, %v5970
        %v5972 = vpop.f32.mrf.mxu0
        %5973 = vmatprep.mubr.f32.mxu0 0.0
        %5974 = vmatmul.mubr.f32.gmra.mxu0 %v5397
        %v5975 = vpop.f32.mrf.mxu0
        %v5976 = vadd.f32 %v5831, %v5975
        %v5977 = vpop.f32.mrf.mxu0
        %5978 = vmatprep.mubr.f32.mxu0 0.0
        %5979 = vmatmul.mubr.f32.gmra.mxu0 %v5400
        %v5980 = vpop.f32.mrf.mxu0
        %v5981 = vadd.f32 %v5836, %v5980
        %v5982 = vpop.f32.mrf.mxu0
        %5983 = vmatprep.mubr.f32.mxu0 0.0
        %5984 = vmatmul.mubr.f32.gmra.mxu0 %v5403
        %v5985 = vpop.f32.mrf.mxu0
        %v5986 = vadd.f32 %v5841, %v5985
        %v5987 = vpop.f32.mrf.mxu0
        %5988 = vmatprep.mubr.f32.mxu0 0.0
        %5989 = vmatmul.mubr.f32.gmra.mxu0 %v5406
        %v5990 = vpop.f32.mrf.mxu0
        %v5991 = vadd.f32 %v5846, %v5990
        %v5992 = vpop.f32.mrf.mxu0
        %5993 = vdwg.mxu0
        %v5994 = vld [vmem:[%s6] sm:$0xff]
        %v5995 = vld [vmem:[%s6 + $0x8] sm:$0xff]
        %v5996 = vld [vmem:[%s6 + $0x10] sm:$0xff]
        %v5997 = vld [vmem:[%s6 + $0x18] sm:$0xff]
        %v5998 = vld [vmem:[%s6 + $0x20] sm:$0xff]
        %v5999 = vld [vmem:[%s6 + $0x28] sm:$0xff]
        %v6000 = vld [vmem:[%s6 + $0x30] sm:$0xff]
        %v6001 = vld [vmem:[%s6 + $0x38] sm:$0xff]
        %v6002 = vld [vmem:[%s6 + $0x40] sm:$0xff]
        %v6003 = vld [vmem:[%s6 + $0x48] sm:$0xff]
        %v6004 = vld [vmem:[%s6 + $0x50] sm:$0xff]
        %v6005 = vld [vmem:[%s6 + $0x58] sm:$0xff]
        %v6006 = vld [vmem:[%s6 + $0x60] sm:$0xff]
        %v6007 = vld [vmem:[%s6 + $0x68] sm:$0xff]
        %v6008 = vld [vmem:[%s6 + $0x70] sm:$0xff]
        %v6009 = vld [vmem:[%s6 + $0x78] sm:$0xff]
        %v6010 = vadd.f32 %v5916, %v5994
        %v6011 = vadd.f32 %v5921, %v5995
        %v6012 = vadd.f32 %v5926, %v5996
        %v6013 = vadd.f32 %v5931, %v5997
        %v6014 = vadd.f32 %v5936, %v5998
        %v6015 = vadd.f32 %v5941, %v5999
        %v6016 = vadd.f32 %v5946, %v6000
        %v6017 = vadd.f32 %v5951, %v6001
        %v6018 = vadd.f32 %v5956, %v6002
        %v6019 = vadd.f32 %v5961, %v6003
        %v6020 = vadd.f32 %v5966, %v6004
        %v6021 = vadd.f32 %v5971, %v6005
        %v6022 = vadd.f32 %v5976, %v6006
        %v6023 = vadd.f32 %v5981, %v6007
        %v6024 = vadd.f32 %v5986, %v6008
        %v6025 = vadd.f32 %v5991, %v6009
        %v6026 = vmax.f32 %v6010, 0.0
        %v6027 = vmax.f32 %v6011, 0.0
        %v6028 = vmax.f32 %v6012, 0.0
        %v6029 = vmax.f32 %v6013, 0.0
        %v6030 = vmax.f32 %v6014, 0.0
        %v6031 = vmax.f32 %v6015, 0.0
        %v6032 = vmax.f32 %v6016, 0.0
        %v6033 = vmax.f32 %v6017, 0.0
        %v6034 = vmax.f32 %v6018, 0.0
        %v6035 = vmax.f32 %v6019, 0.0
        %v6036 = vmax.f32 %v6020, 0.0
        %v6037 = vmax.f32 %v6021, 0.0
        %v6038 = vmax.f32 %v6022, 0.0
        %v6039 = vmax.f32 %v6023, 0.0
        %v6040 = vmax.f32 %v6024, 0.0
        %v6041 = vmax.f32 %v6025, 0.0
        %v6042 = vld [vmem:[%s8] sm:$0xff]
        %v6043 = vld [vmem:[%s8 + $0x8] sm:$0x1]
        %v6044 = vld [vmem:[%s7] sm:$0xff]
        %v6045 = vld [vmem:[%s7 + $0x8] sm:$0xff]
        %v6046 = vld [vmem:[%s7 + $0x10] sm:$0xff]
        %v6047 = vld [vmem:[%s7 + $0x18] sm:$0x7]
        %vm6048 = vcmask 130048
        %v6050 = vsel %vm6048, %v6042, 0
        %v6053 = vsel %vm6048, %v6043, 0
        %v6056 = vsel %vm6048, %v6026, 0
        %v6059 = vsel %vm6048, %v6027, 0
        %v6062 = vsel %vm6048, %v6028, 0
        %v6065 = vsel %vm6048, %v6029, 0
        %v6068 = vsel %vm6048, %v6030, 0
        %v6071 = vsel %vm6048, %v6031, 0
        %v6074 = vsel %vm6048, %v6032, 0
        %v6077 = vsel %vm6048, %v6033, 0
        %v6080 = vsel %vm6048, %v6034, 0
        %v6083 = vsel %vm6048, %v6035, 0
        %v6086 = vsel %vm6048, %v6036, 0
        %v6089 = vsel %vm6048, %v6037, 0
        %v6092 = vsel %vm6048, %v6038, 0
        %v6095 = vsel %vm6048, %v6039, 0
        %v6098 = vsel %vm6048, %v6040, 0
        %v6101 = vsel %vm6048, %v6041, 0
        %6103 = vmatprep.subr.mxu0 0.0
        %6104 = vmatpush1.xpose.msra.mxu0 %v6101
        %6105 = vmatprep.subr.mxu0 0.0
        %6106 = vmatpush1.xpose.msra.mxu0 %v6098
        %6107 = vmatprep.subr.mxu0 0.0
        %6108 = vmatpush1.xpose.msra.mxu0 %v6095
        %6109 = vmatprep.subr.mxu0 0.0
        %6110 = vmatpush1.xpose.msra.mxu0 %v6092
        %6111 = vmatprep.subr.mxu0 0.0
        %6112 = vmatpush1.xpose.msra.mxu0 %v6089
        %6113 = vmatprep.subr.mxu0 0.0
        %6114 = vmatpush1.xpose.msra.mxu0 %v6086
        %6115 = vmatprep.subr.mxu0 0.0
        %6116 = vmatpush1.xpose.msra.mxu0 %v6083
        %6117 = vmatprep.subr.mxu0 0.0
        %6118 = vmatpush1.xpose.msra.mxu0 %v6080
        %6119 = vmatprep.subr.mxu0 0.0
        %6120 = vmatpush1.xpose.msra.mxu0 %v6077
        %6121 = vmatprep.subr.mxu0 0.0
        %6122 = vmatpush1.xpose.msra.mxu0 %v6074
        %6123 = vmatprep.subr.mxu0 0.0
        %6124 = vmatpush1.xpose.msra.mxu0 %v6071
        %6125 = vmatprep.subr.mxu0 0.0
        %6126 = vmatpush1.xpose.msra.mxu0 %v6068
        %6127 = vmatprep.subr.mxu0 0.0
        %6128 = vmatpush1.xpose.msra.mxu0 %v6065
        %6129 = vmatprep.subr.mxu0 0.0
        %6130 = vmatpush1.xpose.msra.mxu0 %v6062
        %6131 = vmatprep.subr.mxu0 0.0
        %6132 = vmatpush1.xpose.msra.mxu0 %v6059
        %6133 = vmatprep.subr.mxu0 0.0
        %6134 = vmatpush1.xpose.msra.mxu0 %v6056
        %6135 = vmatprep.subr.mxu0 0.0
        %6136 = vmatpush2.xpose.msra.mxu0 0.0
        %6137 = vmatprep.subr.mxu0 0.0
        %6138 = vmatpush2.xpose.msra.mxu0 0.0
        %6139 = vmatprep.subr.mxu0 0.0
        %6140 = vmatpush2.xpose.msra.mxu0 0.0
        %6141 = vmatprep.subr.mxu0 0.0
        %6142 = vmatpush2.xpose.msra.mxu0 0.0
        %6143 = vmatprep.subr.mxu0 0.0
        %6144 = vmatpush2.xpose.msra.mxu0 0.0
        %6145 = vmatprep.subr.mxu0 0.0
        %6146 = vmatpush2.xpose.msra.mxu0 0.0
        %6147 = vmatprep.subr.mxu0 0.0
        %6148 = vmatpush2.xpose.msra.mxu0 0.0
        %6149 = vmatprep.subr.mxu0 0.0
        %6150 = vmatpush2.xpose.msra.mxu0 0.0
        %6151 = vmatprep.subr.mxu0 0.0
        %6152 = vmatpush2.xpose.msra.mxu0 0.0
        %6153 = vmatprep.subr.mxu0 0.0
        %6154 = vmatpush2.xpose.msra.mxu0 0.0
        %6155 = vmatprep.subr.mxu0 0.0
        %6156 = vmatpush2.xpose.msra.mxu0 0.0
        %6157 = vmatprep.subr.mxu0 0.0
        %6158 = vmatpush2.xpose.msra.mxu0 0.0
        %6159 = vmatprep.subr.mxu0 0.0
        %6160 = vmatpush2.xpose.msra.mxu0 0.0
        %6161 = vmatprep.subr.mxu0 0.0
        %6162 = vmatpush2.xpose.msra.mxu0 0.0
        %6163 = vmatprep.subr.mxu0 0.0
        %6164 = vmatpush2.xpose.msra.mxu0 0.0
        %6165 = vmatprep.subr.mxu0 0.0
        %6166 = vmatpush2.xpose.msra.mxu0 0.0
        %6167 = vmatprep.mubr.f32.mxu0 0.0
        %6168 = vmatmul.mubr.f32.gmra.mxu0 %v6050
        %v6169 = vpop.f32.mrf.mxu0
        %v6170 = vadd.f32 0.0, %v6169
        %v6171 = vpop.f32.mrf.mxu0
        %6172 = vmatprep.mubr.f32.mxu0 0.0
        %6173 = vmatmul.mubr.f32.gmra.mxu0 %v6053
        %v6174 = vpop.f32.mrf.mxu0
        %v6175 = vadd.f32 0.0, %v6174
        %v6176 = vpop.f32.mrf.mxu0
        %6177 = vdwg.mxu0
        %s6178 = scalar_lea.vmem %s8, 16
        %v6179 = vld [vmem:[%s6178] sm:$0xff]
        %v6180 = vld [vmem:[%s6178 + $0x8] sm:$0x1]
        %s6181 = scalar_lea.vmem %s7, 32
        %v6182 = vld [vmem:[%s6181] sm:$0xff]
        %v6183 = vld [vmem:[%s6181 + $0x8] sm:$0xff]
        %v6184 = vld [vmem:[%s6181 + $0x10] sm:$0xff]
        %v6185 = vld [vmem:[%s6181 + $0x18] sm:$0x7]
        %v6187 = vsel %vm6048, %v6179, 0
        %v6190 = vsel %vm6048, %v6180, 0
        %6192 = vmatprep.subr.mxu0 0.0
        %6193 = vmatpush1.xpose.msra.mxu0 %v6101
        %6194 = vmatprep.subr.mxu0 0.0
        %6195 = vmatpush1.xpose.msra.mxu0 %v6098
        %6196 = vmatprep.subr.mxu0 0.0
        %6197 = vmatpush1.xpose.msra.mxu0 %v6095
        %6198 = vmatprep.subr.mxu0 0.0
        %6199 = vmatpush1.xpose.msra.mxu0 %v6092
        %6200 = vmatprep.subr.mxu0 0.0
        %6201 = vmatpush1.xpose.msra.mxu0 %v6089
        %6202 = vmatprep.subr.mxu0 0.0
        %6203 = vmatpush1.xpose.msra.mxu0 %v6086
        %6204 = vmatprep.subr.mxu0 0.0
        %6205 = vmatpush1.xpose.msra.mxu0 %v6083
        %6206 = vmatprep.subr.mxu0 0.0
        %6207 = vmatpush1.xpose.msra.mxu0 %v6080
        %6208 = vmatprep.subr.mxu0 0.0
        %6209 = vmatpush1.xpose.msra.mxu0 %v6077
        %6210 = vmatprep.subr.mxu0 0.0
        %6211 = vmatpush1.xpose.msra.mxu0 %v6074
        %6212 = vmatprep.subr.mxu0 0.0
        %6213 = vmatpush1.xpose.msra.mxu0 %v6071
        %6214 = vmatprep.subr.mxu0 0.0
        %6215 = vmatpush1.xpose.msra.mxu0 %v6068
        %6216 = vmatprep.subr.mxu0 0.0
        %6217 = vmatpush1.xpose.msra.mxu0 %v6065
        %6218 = vmatprep.subr.mxu0 0.0
        %6219 = vmatpush1.xpose.msra.mxu0 %v6062
        %6220 = vmatprep.subr.mxu0 0.0
        %6221 = vmatpush1.xpose.msra.mxu0 %v6059
        %6222 = vmatprep.subr.mxu0 0.0
        %6223 = vmatpush1.xpose.msra.mxu0 %v6056
        %6224 = vmatprep.subr.mxu0 0.0
        %6225 = vmatpush2.xpose.msra.mxu0 0.0
        %6226 = vmatprep.subr.mxu0 0.0
        %6227 = vmatpush2.xpose.msra.mxu0 0.0
        %6228 = vmatprep.subr.mxu0 0.0
        %6229 = vmatpush2.xpose.msra.mxu0 0.0
        %6230 = vmatprep.subr.mxu0 0.0
        %6231 = vmatpush2.xpose.msra.mxu0 0.0
        %6232 = vmatprep.subr.mxu0 0.0
        %6233 = vmatpush2.xpose.msra.mxu0 0.0
        %6234 = vmatprep.subr.mxu0 0.0
        %6235 = vmatpush2.xpose.msra.mxu0 0.0
        %6236 = vmatprep.subr.mxu0 0.0
        %6237 = vmatpush2.xpose.msra.mxu0 0.0
        %6238 = vmatprep.subr.mxu0 0.0
        %6239 = vmatpush2.xpose.msra.mxu0 0.0
        %6240 = vmatprep.subr.mxu0 0.0
        %6241 = vmatpush2.xpose.msra.mxu0 0.0
        %6242 = vmatprep.subr.mxu0 0.0
        %6243 = vmatpush2.xpose.msra.mxu0 0.0
        %6244 = vmatprep.subr.mxu0 0.0
        %6245 = vmatpush2.xpose.msra.mxu0 0.0
        %6246 = vmatprep.subr.mxu0 0.0
        %6247 = vmatpush2.xpose.msra.mxu0 0.0
        %6248 = vmatprep.subr.mxu0 0.0
        %6249 = vmatpush2.xpose.msra.mxu0 0.0
        %6250 = vmatprep.subr.mxu0 0.0
        %6251 = vmatpush2.xpose.msra.mxu0 0.0
        %6252 = vmatprep.subr.mxu0 0.0
        %6253 = vmatpush2.xpose.msra.mxu0 0.0
        %6254 = vmatprep.subr.mxu0 0.0
        %6255 = vmatpush2.xpose.msra.mxu0 0.0
        %6256 = vmatprep.mubr.f32.mxu0 0.0
        %6257 = vmatmul.mubr.f32.gmra.mxu0 %v6187
        %v6258 = vpop.f32.mrf.mxu0
        %v6259 = vadd.f32 0.0, %v6258
        %v6260 = vpop.f32.mrf.mxu0
        %6261 = vmatprep.mubr.f32.mxu0 0.0
        %6262 = vmatmul.mubr.f32.gmra.mxu0 %v6190
        %v6263 = vpop.f32.mrf.mxu0
        %v6264 = vadd.f32 0.0, %v6263
        %v6265 = vpop.f32.mrf.mxu0
        %6266 = vdwg.mxu0
        %6267 = vmatprep.subr.mxu0 0.0
        %6268 = vmatpush1.xpose.msra.mxu0 0.0
        %6269 = vmatprep.subr.mxu0 0.0
        %6270 = vmatpush1.xpose.msra.mxu0 0.0
        %6271 = vmatprep.subr.mxu0 0.0
        %6272 = vmatpush1.xpose.msra.mxu0 0.0
        %6273 = vmatprep.subr.mxu0 0.0
        %6274 = vmatpush1.xpose.msra.mxu0 0.0
        %6275 = vmatprep.subr.mxu0 0.0
        %6276 = vmatpush1.xpose.msra.mxu0 0.0
        %6277 = vmatprep.subr.mxu0 0.0
        %6278 = vmatpush1.xpose.msra.mxu0 0.0
        %6279 = vmatprep.subr.mxu0 0.0
        %6280 = vmatpush1.xpose.msra.mxu0 0.0
        %6281 = vmatprep.subr.mxu0 0.0
        %6282 = vmatpush1.xpose.msra.mxu0 0.0
        %6283 = vmatprep.subr.mxu0 0.0
        %6284 = vmatpush1.xpose.msra.mxu0 0.0
        %6285 = vmatprep.subr.mxu0 0.0
        %6286 = vmatpush1.xpose.msra.mxu0 0.0
        %6287 = vmatprep.subr.mxu0 0.0
        %6288 = vmatpush1.xpose.msra.mxu0 0.0
        %6289 = vmatprep.subr.mxu0 0.0
        %6290 = vmatpush1.xpose.msra.mxu0 0.0
        %6291 = vmatprep.subr.mxu0 0.0
        %6292 = vmatpush1.xpose.msra.mxu0 0.0
        %6293 = vmatprep.subr.mxu0 0.0
        %6294 = vmatpush1.xpose.msra.mxu0 0.0
        %6295 = vmatprep.subr.mxu0 0.0
        %6296 = vmatpush1.xpose.msra.mxu0 %v6264
        %6297 = vmatprep.subr.mxu0 0.0
        %6298 = vmatpush1.xpose.msra.mxu0 %v6259
        %6299 = vmatprep.subr.mxu0 0.0
        %6300 = vmatpush2.xpose.msra.mxu0 0.0
        %6301 = vmatprep.subr.mxu0 0.0
        %6302 = vmatpush2.xpose.msra.mxu0 0.0
        %6303 = vmatprep.subr.mxu0 0.0
        %6304 = vmatpush2.xpose.msra.mxu0 0.0
        %6305 = vmatprep.subr.mxu0 0.0
        %6306 = vmatpush2.xpose.msra.mxu0 0.0
        %6307 = vmatprep.subr.mxu0 0.0
        %6308 = vmatpush2.xpose.msra.mxu0 0.0
        %6309 = vmatprep.subr.mxu0 0.0
        %6310 = vmatpush2.xpose.msra.mxu0 0.0
        %6311 = vmatprep.subr.mxu0 0.0
        %6312 = vmatpush2.xpose.msra.mxu0 0.0
        %6313 = vmatprep.subr.mxu0 0.0
        %6314 = vmatpush2.xpose.msra.mxu0 0.0
        %6315 = vmatprep.subr.mxu0 0.0
        %6316 = vmatpush2.xpose.msra.mxu0 0.0
        %6317 = vmatprep.subr.mxu0 0.0
        %6318 = vmatpush2.xpose.msra.mxu0 0.0
        %6319 = vmatprep.subr.mxu0 0.0
        %6320 = vmatpush2.xpose.msra.mxu0 0.0
        %6321 = vmatprep.subr.mxu0 0.0
        %6322 = vmatpush2.xpose.msra.mxu0 0.0
        %6323 = vmatprep.subr.mxu0 0.0
        %6324 = vmatpush2.xpose.msra.mxu0 0.0
        %6325 = vmatprep.subr.mxu0 0.0
        %6326 = vmatpush2.xpose.msra.mxu0 0.0
        %6327 = vmatprep.subr.mxu0 0.0
        %6328 = vmatpush2.xpose.msra.mxu0 0.0
        %6329 = vmatprep.subr.mxu0 0.0
        %6330 = vmatpush2.xpose.msra.mxu0 0.0
        %6331 = vmatprep.mubr.f32.mxu0 0.0
        %6332 = vmatmul.mubr.f32.gmra.mxu0 %v6182
        %v6333 = vpop.f32.mrf.mxu0
        %v6334 = vadd.f32 0.0, %v6333
        %v6335 = vpop.f32.mrf.mxu0
        %6336 = vmatprep.mubr.f32.mxu0 0.0
        %6337 = vmatmul.mubr.f32.gmra.mxu0 %v6183
        %v6338 = vpop.f32.mrf.mxu0
        %v6339 = vadd.f32 0.0, %v6338
        %v6340 = vpop.f32.mrf.mxu0
        %6341 = vmatprep.mubr.f32.mxu0 0.0
        %6342 = vmatmul.mubr.f32.gmra.mxu0 %v6184
        %v6343 = vpop.f32.mrf.mxu0
        %v6344 = vadd.f32 0.0, %v6343
        %v6345 = vpop.f32.mrf.mxu0
        %6346 = vmatprep.mubr.f32.mxu0 0.0
        %6347 = vmatmul.mubr.f32.gmra.mxu0 %v6185
        %v6348 = vpop.f32.mrf.mxu0
        %v6349 = vadd.f32 0.0, %v6348
        %v6350 = vpop.f32.mrf.mxu0
        %6351 = vdwg.mxu0
        %6352 = vmatprep.subr.mxu0 0.0
        %6353 = vmatpush1.xpose.msra.mxu0 0.0
        %6354 = vmatprep.subr.mxu0 0.0
        %6355 = vmatpush1.xpose.msra.mxu0 0.0
        %6356 = vmatprep.subr.mxu0 0.0
        %6357 = vmatpush1.xpose.msra.mxu0 0.0
        %6358 = vmatprep.subr.mxu0 0.0
        %6359 = vmatpush1.xpose.msra.mxu0 0.0
        %6360 = vmatprep.subr.mxu0 0.0
        %6361 = vmatpush1.xpose.msra.mxu0 0.0
        %6362 = vmatprep.subr.mxu0 0.0
        %6363 = vmatpush1.xpose.msra.mxu0 0.0
        %6364 = vmatprep.subr.mxu0 0.0
        %6365 = vmatpush1.xpose.msra.mxu0 0.0
        %6366 = vmatprep.subr.mxu0 0.0
        %6367 = vmatpush1.xpose.msra.mxu0 0.0
        %6368 = vmatprep.subr.mxu0 0.0
        %6369 = vmatpush1.xpose.msra.mxu0 0.0
        %6370 = vmatprep.subr.mxu0 0.0
        %6371 = vmatpush1.xpose.msra.mxu0 0.0
        %6372 = vmatprep.subr.mxu0 0.0
        %6373 = vmatpush1.xpose.msra.mxu0 0.0
        %6374 = vmatprep.subr.mxu0 0.0
        %6375 = vmatpush1.xpose.msra.mxu0 0.0
        %6376 = vmatprep.subr.mxu0 0.0
        %6377 = vmatpush1.xpose.msra.mxu0 0.0
        %6378 = vmatprep.subr.mxu0 0.0
        %6379 = vmatpush1.xpose.msra.mxu0 0.0
        %6380 = vmatprep.subr.mxu0 0.0
        %6381 = vmatpush1.xpose.msra.mxu0 %v6175
        %6382 = vmatprep.subr.mxu0 0.0
        %6383 = vmatpush1.xpose.msra.mxu0 %v6170
        %6384 = vmatprep.subr.mxu0 0.0
        %6385 = vmatpush2.xpose.msra.mxu0 0.0
        %6386 = vmatprep.subr.mxu0 0.0
        %6387 = vmatpush2.xpose.msra.mxu0 0.0
        %6388 = vmatprep.subr.mxu0 0.0
        %6389 = vmatpush2.xpose.msra.mxu0 0.0
        %6390 = vmatprep.subr.mxu0 0.0
        %6391 = vmatpush2.xpose.msra.mxu0 0.0
        %6392 = vmatprep.subr.mxu0 0.0
        %6393 = vmatpush2.xpose.msra.mxu0 0.0
        %6394 = vmatprep.subr.mxu0 0.0
        %6395 = vmatpush2.xpose.msra.mxu0 0.0
        %6396 = vmatprep.subr.mxu0 0.0
        %6397 = vmatpush2.xpose.msra.mxu0 0.0
        %6398 = vmatprep.subr.mxu0 0.0
        %6399 = vmatpush2.xpose.msra.mxu0 0.0
        %6400 = vmatprep.subr.mxu0 0.0
        %6401 = vmatpush2.xpose.msra.mxu0 0.0
        %6402 = vmatprep.subr.mxu0 0.0
        %6403 = vmatpush2.xpose.msra.mxu0 0.0
        %6404 = vmatprep.subr.mxu0 0.0
        %6405 = vmatpush2.xpose.msra.mxu0 0.0
        %6406 = vmatprep.subr.mxu0 0.0
        %6407 = vmatpush2.xpose.msra.mxu0 0.0
        %6408 = vmatprep.subr.mxu0 0.0
        %6409 = vmatpush2.xpose.msra.mxu0 0.0
        %6410 = vmatprep.subr.mxu0 0.0
        %6411 = vmatpush2.xpose.msra.mxu0 0.0
        %6412 = vmatprep.subr.mxu0 0.0
        %6413 = vmatpush2.xpose.msra.mxu0 0.0
        %6414 = vmatprep.subr.mxu0 0.0
        %6415 = vmatpush2.xpose.msra.mxu0 0.0
        %6416 = vmatprep.mubr.f32.mxu0 0.0
        %6417 = vmatmul.mubr.f32.gmra.mxu0 %v6044
        %v6418 = vpop.f32.mrf.mxu0
        %v6419 = vadd.f32 %v6334, %v6418
        %v6420 = vpop.f32.mrf.mxu0
        %6421 = vmatprep.mubr.f32.mxu0 0.0
        %6422 = vmatmul.mubr.f32.gmra.mxu0 %v6045
        %v6423 = vpop.f32.mrf.mxu0
        %v6424 = vadd.f32 %v6339, %v6423
        %v6425 = vpop.f32.mrf.mxu0
        %6426 = vmatprep.mubr.f32.mxu0 0.0
        %6427 = vmatmul.mubr.f32.gmra.mxu0 %v6046
        %v6428 = vpop.f32.mrf.mxu0
        %v6429 = vadd.f32 %v6344, %v6428
        %v6430 = vpop.f32.mrf.mxu0
        %6431 = vmatprep.mubr.f32.mxu0 0.0
        %6432 = vmatmul.mubr.f32.gmra.mxu0 %v6047
        %v6433 = vpop.f32.mrf.mxu0
        %v6434 = vadd.f32 %v6349, %v6433
        %v6435 = vpop.f32.mrf.mxu0
        %6436 = vdwg.mxu0
        %v6437 = vld [vmem:[%s9] sm:$0xff]
        %v6438 = vld [vmem:[%s9 + $0x8] sm:$0xff]
        %v6439 = vld [vmem:[%s9 + $0x10] sm:$0xff]
        %v6440 = vld [vmem:[%s9 + $0x18] sm:$0x7]
        %v6441 = vadd.f32 %v6419, %v6437
        %v6442 = vadd.f32 %v6424, %v6438
        %v6443 = vadd.f32 %v6429, %v6439
        %v6444 = vadd.f32 %v6434, %v6440
        %v6445 = vmax.f32 %v6441, 0.0
        %v6446 = vmax.f32 %v6442, 0.0
        %v6447 = vmax.f32 %v6443, 0.0
        %v6448 = vmax.f32 %v6444, 0.0
        %v6449 = vld [vmem:[%s11] sm:$0xff]
        %v6450 = vld [vmem:[%s11 + $0x8] sm:$0x1]
        %v6451 = vld [vmem:[%s10] sm:$0xff]
        %v6452 = vld [vmem:[%s10 + $0x8] sm:$0xff]
        %v6453 = vld [vmem:[%s10 + $0x10] sm:$0xff]
        %v6454 = vld [vmem:[%s10 + $0x18] sm:$0x7]
        %vm6455 = vcmask 72704
        %v6457 = vsel %vm6455, %v6449, 0
        %v6460 = vsel %vm6455, %v6450, 0
        %v6463 = vsel %vm6455, %v6445, 0
        %v6466 = vsel %vm6455, %v6446, 0
        %v6469 = vsel %vm6455, %v6447, 0
        %v6472 = vsel %vm6455, %v6448, 0
        %6474 = vmatprep.subr.mxu0 0.0
        %6475 = vmatpush1.xpose.msra.mxu0 0.0
        %6476 = vmatprep.subr.mxu0 0.0
        %6477 = vmatpush1.xpose.msra.mxu0 0.0
        %6478 = vmatprep.subr.mxu0 0.0
        %6479 = vmatpush1.xpose.msra.mxu0 0.0
        %6480 = vmatprep.subr.mxu0 0.0
        %6481 = vmatpush1.xpose.msra.mxu0 0.0
        %6482 = vmatprep.subr.mxu0 0.0
        %6483 = vmatpush1.xpose.msra.mxu0 0.0
        %6484 = vmatprep.subr.mxu0 0.0
        %6485 = vmatpush1.xpose.msra.mxu0 0.0
        %6486 = vmatprep.subr.mxu0 0.0
        %6487 = vmatpush1.xpose.msra.mxu0 0.0
        %6488 = vmatprep.subr.mxu0 0.0
        %6489 = vmatpush1.xpose.msra.mxu0 0.0
        %6490 = vmatprep.subr.mxu0 0.0
        %6491 = vmatpush1.xpose.msra.mxu0 0.0
        %6492 = vmatprep.subr.mxu0 0.0
        %6493 = vmatpush1.xpose.msra.mxu0 0.0
        %6494 = vmatprep.subr.mxu0 0.0
        %6495 = vmatpush1.xpose.msra.mxu0 0.0
        %6496 = vmatprep.subr.mxu0 0.0
        %6497 = vmatpush1.xpose.msra.mxu0 0.0
        %6498 = vmatprep.subr.mxu0 0.0
        %6499 = vmatpush1.xpose.msra.mxu0 %v6472
        %6500 = vmatprep.subr.mxu0 0.0
        %6501 = vmatpush1.xpose.msra.mxu0 %v6469
        %6502 = vmatprep.subr.mxu0 0.0
        %6503 = vmatpush1.xpose.msra.mxu0 %v6466
        %6504 = vmatprep.subr.mxu0 0.0
        %6505 = vmatpush1.xpose.msra.mxu0 %v6463
        %6506 = vmatprep.subr.mxu0 0.0
        %6507 = vmatpush2.xpose.msra.mxu0 0.0
        %6508 = vmatprep.subr.mxu0 0.0
        %6509 = vmatpush2.xpose.msra.mxu0 0.0
        %6510 = vmatprep.subr.mxu0 0.0
        %6511 = vmatpush2.xpose.msra.mxu0 0.0
        %6512 = vmatprep.subr.mxu0 0.0
        %6513 = vmatpush2.xpose.msra.mxu0 0.0
        %6514 = vmatprep.subr.mxu0 0.0
        %6515 = vmatpush2.xpose.msra.mxu0 0.0
        %6516 = vmatprep.subr.mxu0 0.0
        %6517 = vmatpush2.xpose.msra.mxu0 0.0
        %6518 = vmatprep.subr.mxu0 0.0
        %6519 = vmatpush2.xpose.msra.mxu0 0.0
        %6520 = vmatprep.subr.mxu0 0.0
        %6521 = vmatpush2.xpose.msra.mxu0 0.0
        %6522 = vmatprep.subr.mxu0 0.0
        %6523 = vmatpush2.xpose.msra.mxu0 0.0
        %6524 = vmatprep.subr.mxu0 0.0
        %6525 = vmatpush2.xpose.msra.mxu0 0.0
        %6526 = vmatprep.subr.mxu0 0.0
        %6527 = vmatpush2.xpose.msra.mxu0 0.0
        %6528 = vmatprep.subr.mxu0 0.0
        %6529 = vmatpush2.xpose.msra.mxu0 0.0
        %6530 = vmatprep.subr.mxu0 0.0
        %6531 = vmatpush2.xpose.msra.mxu0 0.0
        %6532 = vmatprep.subr.mxu0 0.0
        %6533 = vmatpush2.xpose.msra.mxu0 0.0
        %6534 = vmatprep.subr.mxu0 0.0
        %6535 = vmatpush2.xpose.msra.mxu0 0.0
        %6536 = vmatprep.subr.mxu0 0.0
        %6537 = vmatpush2.xpose.msra.mxu0 0.0
        %6538 = vmatprep.mubr.f32.mxu0 0.0
        %6539 = vmatmul.mubr.f32.gmra.mxu0 %v6457
        %v6540 = vpop.f32.mrf.mxu0
        %v6541 = vadd.f32 0.0, %v6540
        %v6542 = vpop.f32.mrf.mxu0
        %6543 = vmatprep.mubr.f32.mxu0 0.0
        %6544 = vmatmul.mubr.f32.gmra.mxu0 %v6460
        %v6545 = vpop.f32.mrf.mxu0
        %v6546 = vadd.f32 0.0, %v6545
        %v6547 = vpop.f32.mrf.mxu0
        %6548 = vdwg.mxu0
        %v6549 = vld [vmem:[%s12] sm:$0xff]
        %v6550 = vld [vmem:[%s12 + $0x8] sm:$0xff]
        %v6551 = vld [vmem:[%s12 + $0x10] sm:$0xff]
        %v6552 = vld [vmem:[%s12 + $0x18] sm:$0x7]
        %vm6553 = vcmask 220160
        %v6555 = vsel %vm6553, %v6451, 0
        %v6558 = vsel %vm6553, %v6452, 0
        %v6561 = vsel %vm6553, %v6453, 0
        %v6564 = vsel %vm6553, %v6454, 0
        %v6567 = vsel %vm6553, %v6541, 0
        %v6570 = vsel %vm6553, %v6546, 0
        %6572 = vmatprep.subr.mxu0 0.0
        %6573 = vmatpush1.xpose.msra.mxu0 0.0
        %6574 = vmatprep.subr.mxu0 0.0
        %6575 = vmatpush1.xpose.msra.mxu0 0.0
        %6576 = vmatprep.subr.mxu0 0.0
        %6577 = vmatpush1.xpose.msra.mxu0 0.0
        %6578 = vmatprep.subr.mxu0 0.0
        %6579 = vmatpush1.xpose.msra.mxu0 0.0
        %6580 = vmatprep.subr.mxu0 0.0
        %6581 = vmatpush1.xpose.msra.mxu0 0.0
        %6582 = vmatprep.subr.mxu0 0.0
        %6583 = vmatpush1.xpose.msra.mxu0 0.0
        %6584 = vmatprep.subr.mxu0 0.0
        %6585 = vmatpush1.xpose.msra.mxu0 0.0
        %6586 = vmatprep.subr.mxu0 0.0
        %6587 = vmatpush1.xpose.msra.mxu0 0.0
        %6588 = vmatprep.subr.mxu0 0.0
        %6589 = vmatpush1.xpose.msra.mxu0 0.0
        %6590 = vmatprep.subr.mxu0 0.0
        %6591 = vmatpush1.xpose.msra.mxu0 0.0
        %6592 = vmatprep.subr.mxu0 0.0
        %6593 = vmatpush1.xpose.msra.mxu0 0.0
        %6594 = vmatprep.subr.mxu0 0.0
        %6595 = vmatpush1.xpose.msra.mxu0 0.0
        %6596 = vmatprep.subr.mxu0 0.0
        %6597 = vmatpush1.xpose.msra.mxu0 0.0
        %6598 = vmatprep.subr.mxu0 0.0
        %6599 = vmatpush1.xpose.msra.mxu0 0.0
        %6600 = vmatprep.subr.mxu0 0.0
        %6601 = vmatpush1.xpose.msra.mxu0 %v6570
        %6602 = vmatprep.subr.mxu0 0.0
        %6603 = vmatpush1.xpose.msra.mxu0 %v6567
        %6604 = vmatprep.subr.mxu0 0.0
        %6605 = vmatpush2.xpose.msra.mxu0 0.0
        %6606 = vmatprep.subr.mxu0 0.0
        %6607 = vmatpush2.xpose.msra.mxu0 0.0
        %6608 = vmatprep.subr.mxu0 0.0
        %6609 = vmatpush2.xpose.msra.mxu0 0.0
        %6610 = vmatprep.subr.mxu0 0.0
        %6611 = vmatpush2.xpose.msra.mxu0 0.0
        %6612 = vmatprep.subr.mxu0 0.0
        %6613 = vmatpush2.xpose.msra.mxu0 0.0
        %6614 = vmatprep.subr.mxu0 0.0
        %6615 = vmatpush2.xpose.msra.mxu0 0.0
        %6616 = vmatprep.subr.mxu0 0.0
        %6617 = vmatpush2.xpose.msra.mxu0 0.0
        %6618 = vmatprep.subr.mxu0 0.0
        %6619 = vmatpush2.xpose.msra.mxu0 0.0
        %6620 = vmatprep.subr.mxu0 0.0
        %6621 = vmatpush2.xpose.msra.mxu0 0.0
        %6622 = vmatprep.subr.mxu0 0.0
        %6623 = vmatpush2.xpose.msra.mxu0 0.0
        %6624 = vmatprep.subr.mxu0 0.0
        %6625 = vmatpush2.xpose.msra.mxu0 0.0
        %6626 = vmatprep.subr.mxu0 0.0
        %6627 = vmatpush2.xpose.msra.mxu0 0.0
        %6628 = vmatprep.subr.mxu0 0.0
        %6629 = vmatpush2.xpose.msra.mxu0 0.0
        %6630 = vmatprep.subr.mxu0 0.0
        %6631 = vmatpush2.xpose.msra.mxu0 0.0
        %6632 = vmatprep.subr.mxu0 0.0
        %6633 = vmatpush2.xpose.msra.mxu0 0.0
        %6634 = vmatprep.subr.mxu0 0.0
        %6635 = vmatpush2.xpose.msra.mxu0 0.0
        %6636 = vmatprep.mubr.f32.mxu0 0.0
        %6637 = vmatmul.mubr.f32.gmra.mxu0 %v6555
        %v6638 = vpop.f32.mrf.mxu0
        %v6639 = vadd.f32 %v6549, %v6638
        %v6640 = vpop.f32.mrf.mxu0
        %6641 = vmatprep.mubr.f32.mxu0 0.0
        %6642 = vmatmul.mubr.f32.gmra.mxu0 %v6558
        %v6643 = vpop.f32.mrf.mxu0
        %v6644 = vadd.f32 %v6550, %v6643
        %v6645 = vpop.f32.mrf.mxu0
        %6646 = vmatprep.mubr.f32.mxu0 0.0
        %6647 = vmatmul.mubr.f32.gmra.mxu0 %v6561
        %v6648 = vpop.f32.mrf.mxu0
        %v6649 = vadd.f32 %v6551, %v6648
        %v6650 = vpop.f32.mrf.mxu0
        %6651 = vmatprep.mubr.f32.mxu0 0.0
        %6652 = vmatmul.mubr.f32.gmra.mxu0 %v6564
        %v6653 = vpop.f32.mrf.mxu0
        %v6654 = vadd.f32 %v6552, %v6653
        %v6655 = vpop.f32.mrf.mxu0
        %6656 = vdwg.mxu0
        %v6657 = vmax.f32 %v6639, 0.0
        %v6658 = vmax.f32 %v6644, 0.0
        %v6659 = vmax.f32 %v6649, 0.0
        %v6660 = vmax.f32 %v6654, 0.0
        %v6661 = vld [vmem:[%s14] sm:$0xff]
        %v6662 = vld [vmem:[%s14 + $0x8] sm:$0x1]
        %v6663 = vld [vmem:[%s13] sm:$0xff]
        %v6664 = vld [vmem:[%s13 + $0x8] sm:$0xff]
        %v6665 = vld [vmem:[%s13 + $0x10] sm:$0xff]
        %v6666 = vld [vmem:[%s13 + $0x18] sm:$0x7]
        %v6668 = vsel %vm6455, %v6661, 0
        %v6671 = vsel %vm6455, %v6662, 0
        %v6674 = vsel %vm6455, %v6657, 0
        %v6677 = vsel %vm6455, %v6658, 0
        %v6680 = vsel %vm6455, %v6659, 0
        %v6683 = vsel %vm6455, %v6660, 0
        %6685 = vmatprep.subr.mxu0 0.0
        %6686 = vmatpush1.xpose.msra.mxu0 0.0
        %6687 = vmatprep.subr.mxu0 0.0
        %6688 = vmatpush1.xpose.msra.mxu0 0.0
        %6689 = vmatprep.subr.mxu0 0.0
        %6690 = vmatpush1.xpose.msra.mxu0 0.0
        %6691 = vmatprep.subr.mxu0 0.0
        %6692 = vmatpush1.xpose.msra.mxu0 0.0
        %6693 = vmatprep.subr.mxu0 0.0
        %6694 = vmatpush1.xpose.msra.mxu0 0.0
        %6695 = vmatprep.subr.mxu0 0.0
        %6696 = vmatpush1.xpose.msra.mxu0 0.0
        %6697 = vmatprep.subr.mxu0 0.0
        %6698 = vmatpush1.xpose.msra.mxu0 0.0
        %6699 = vmatprep.subr.mxu0 0.0
        %6700 = vmatpush1.xpose.msra.mxu0 0.0
        %6701 = vmatprep.subr.mxu0 0.0
        %6702 = vmatpush1.xpose.msra.mxu0 0.0
        %6703 = vmatprep.subr.mxu0 0.0
        %6704 = vmatpush1.xpose.msra.mxu0 0.0
        %6705 = vmatprep.subr.mxu0 0.0
        %6706 = vmatpush1.xpose.msra.mxu0 0.0
        %6707 = vmatprep.subr.mxu0 0.0
        %6708 = vmatpush1.xpose.msra.mxu0 0.0
        %6709 = vmatprep.subr.mxu0 0.0
        %6710 = vmatpush1.xpose.msra.mxu0 %v6683
        %6711 = vmatprep.subr.mxu0 0.0
        %6712 = vmatpush1.xpose.msra.mxu0 %v6680
        %6713 = vmatprep.subr.mxu0 0.0
        %6714 = vmatpush1.xpose.msra.mxu0 %v6677
        %6715 = vmatprep.subr.mxu0 0.0
        %6716 = vmatpush1.xpose.msra.mxu0 %v6674
        %6717 = vmatprep.subr.mxu0 0.0
        %6718 = vmatpush2.xpose.msra.mxu0 0.0
        %6719 = vmatprep.subr.mxu0 0.0
        %6720 = vmatpush2.xpose.msra.mxu0 0.0
        %6721 = vmatprep.subr.mxu0 0.0
        %6722 = vmatpush2.xpose.msra.mxu0 0.0
        %6723 = vmatprep.subr.mxu0 0.0
        %6724 = vmatpush2.xpose.msra.mxu0 0.0
        %6725 = vmatprep.subr.mxu0 0.0
        %6726 = vmatpush2.xpose.msra.mxu0 0.0
        %6727 = vmatprep.subr.mxu0 0.0
        %6728 = vmatpush2.xpose.msra.mxu0 0.0
        %6729 = vmatprep.subr.mxu0 0.0
        %6730 = vmatpush2.xpose.msra.mxu0 0.0
        %6731 = vmatprep.subr.mxu0 0.0
        %6732 = vmatpush2.xpose.msra.mxu0 0.0
        %6733 = vmatprep.subr.mxu0 0.0
        %6734 = vmatpush2.xpose.msra.mxu0 0.0
        %6735 = vmatprep.subr.mxu0 0.0
        %6736 = vmatpush2.xpose.msra.mxu0 0.0
        %6737 = vmatprep.subr.mxu0 0.0
        %6738 = vmatpush2.xpose.msra.mxu0 0.0
        %6739 = vmatprep.subr.mxu0 0.0
        %6740 = vmatpush2.xpose.msra.mxu0 0.0
        %6741 = vmatprep.subr.mxu0 0.0
        %6742 = vmatpush2.xpose.msra.mxu0 0.0
        %6743 = vmatprep.subr.mxu0 0.0
        %6744 = vmatpush2.xpose.msra.mxu0 0.0
        %6745 = vmatprep.subr.mxu0 0.0
        %6746 = vmatpush2.xpose.msra.mxu0 0.0
        %6747 = vmatprep.subr.mxu0 0.0
        %6748 = vmatpush2.xpose.msra.mxu0 0.0
        %6749 = vmatprep.mubr.f32.mxu0 0.0
        %6750 = vmatmul.mubr.f32.gmra.mxu0 %v6668
        %v6751 = vpop.f32.mrf.mxu0
        %v6752 = vadd.f32 0.0, %v6751
        %v6753 = vpop.f32.mrf.mxu0
        %6754 = vmatprep.mubr.f32.mxu0 0.0
        %6755 = vmatmul.mubr.f32.gmra.mxu0 %v6671
        %v6756 = vpop.f32.mrf.mxu0
        %v6757 = vadd.f32 0.0, %v6756
        %v6758 = vpop.f32.mrf.mxu0
        %6759 = vdwg.mxu0
        %v6760 = vld [vmem:[%s15] sm:$0xff]
        %v6761 = vld [vmem:[%s15 + $0x8] sm:$0x1]
        %v6763 = vsel %vm6553, %v6752, 0
        %v6766 = vsel %vm6553, %v6757, 0
        %v6769 = vsel %vm6553, %v6663, 0
        %v6772 = vsel %vm6553, %v6664, 0
        %v6775 = vsel %vm6553, %v6665, 0
        %v6778 = vsel %vm6553, %v6666, 0
        %6780 = vmatprep.subr.mxu0 0.0
        %6781 = vmatpush1.xpose.msra.mxu0 0.0
        %6782 = vmatprep.subr.mxu0 0.0
        %6783 = vmatpush1.xpose.msra.mxu0 0.0
        %6784 = vmatprep.subr.mxu0 0.0
        %6785 = vmatpush1.xpose.msra.mxu0 0.0
        %6786 = vmatprep.subr.mxu0 0.0
        %6787 = vmatpush1.xpose.msra.mxu0 0.0
        %6788 = vmatprep.subr.mxu0 0.0
        %6789 = vmatpush1.xpose.msra.mxu0 0.0
        %6790 = vmatprep.subr.mxu0 0.0
        %6791 = vmatpush1.xpose.msra.mxu0 0.0
        %6792 = vmatprep.subr.mxu0 0.0
        %6793 = vmatpush1.xpose.msra.mxu0 0.0
        %6794 = vmatprep.subr.mxu0 0.0
        %6795 = vmatpush1.xpose.msra.mxu0 0.0
        %6796 = vmatprep.subr.mxu0 0.0
        %6797 = vmatpush1.xpose.msra.mxu0 0.0
        %6798 = vmatprep.subr.mxu0 0.0
        %6799 = vmatpush1.xpose.msra.mxu0 0.0
        %6800 = vmatprep.subr.mxu0 0.0
        %6801 = vmatpush1.xpose.msra.mxu0 0.0
        %6802 = vmatprep.subr.mxu0 0.0
        %6803 = vmatpush1.xpose.msra.mxu0 0.0
        %6804 = vmatprep.subr.mxu0 0.0
        %6805 = vmatpush1.xpose.msra.mxu0 %v6778
        %6806 = vmatprep.subr.mxu0 0.0
        %6807 = vmatpush1.xpose.msra.mxu0 %v6775
        %6808 = vmatprep.subr.mxu0 0.0
        %6809 = vmatpush1.xpose.msra.mxu0 %v6772
        %6810 = vmatprep.subr.mxu0 0.0
        %6811 = vmatpush1.xpose.msra.mxu0 %v6769
        %6812 = vmatprep.subr.mxu0 0.0
        %6813 = vmatpush2.xpose.msra.mxu0 0.0
        %6814 = vmatprep.subr.mxu0 0.0
        %6815 = vmatpush2.xpose.msra.mxu0 0.0
        %6816 = vmatprep.subr.mxu0 0.0
        %6817 = vmatpush2.xpose.msra.mxu0 0.0
        %6818 = vmatprep.subr.mxu0 0.0
        %6819 = vmatpush2.xpose.msra.mxu0 0.0
        %6820 = vmatprep.subr.mxu0 0.0
        %6821 = vmatpush2.xpose.msra.mxu0 0.0
        %6822 = vmatprep.subr.mxu0 0.0
        %6823 = vmatpush2.xpose.msra.mxu0 0.0
        %6824 = vmatprep.subr.mxu0 0.0
        %6825 = vmatpush2.xpose.msra.mxu0 0.0
        %6826 = vmatprep.subr.mxu0 0.0
        %6827 = vmatpush2.xpose.msra.mxu0 0.0
        %6828 = vmatprep.subr.mxu0 0.0
        %6829 = vmatpush2.xpose.msra.mxu0 0.0
        %6830 = vmatprep.subr.mxu0 0.0
        %6831 = vmatpush2.xpose.msra.mxu0 0.0
        %6832 = vmatprep.subr.mxu0 0.0
        %6833 = vmatpush2.xpose.msra.mxu0 0.0
        %6834 = vmatprep.subr.mxu0 0.0
        %6835 = vmatpush2.xpose.msra.mxu0 0.0
        %6836 = vmatprep.subr.mxu0 0.0
        %6837 = vmatpush2.xpose.msra.mxu0 0.0
        %6838 = vmatprep.subr.mxu0 0.0
        %6839 = vmatpush2.xpose.msra.mxu0 0.0
        %6840 = vmatprep.subr.mxu0 0.0
        %6841 = vmatpush2.xpose.msra.mxu0 0.0
        %6842 = vmatprep.subr.mxu0 0.0
        %6843 = vmatpush2.xpose.msra.mxu0 0.0
        %6844 = vmatprep.mubr.f32.mxu0 0.0
        %6845 = vmatmul.mubr.f32.gmra.mxu0 %v6763
        %v6846 = vpop.f32.mrf.mxu0
        %v6847 = vadd.f32 %v6760, %v6846
        %v6848 = vpop.f32.mrf.mxu0
        %6849 = vmatprep.mubr.f32.mxu0 0.0
        %6850 = vmatmul.mubr.f32.gmra.mxu0 %v6766
        %v6851 = vpop.f32.mrf.mxu0
        %v6852 = vadd.f32 %v6761, %v6851
        %v6853 = vpop.f32.mrf.mxu0
        %6854 = vdwg.mxu0
        %v6855 = vmax.f32 %v6847, 0.0
        %v6856 = vmax.f32 %v6852, 0.0
        %v6857 = vld [vmem:[%s17] sm:$0x1]
        %v6858 = vld [vmem:[%s16] sm:$0x3]
        %v6860 = vsel %vm6553, %v6855, 0
        %v6863 = vsel %vm6553, %v6858, 0
        %6865 = vmatprep.subr.mxu0 0.0
        %6866 = vmatpush1.xpose.msra.mxu0 0.0
        %6867 = vmatprep.subr.mxu0 0.0
        %6868 = vmatpush1.xpose.msra.mxu0 0.0
        %6869 = vmatprep.subr.mxu0 0.0
        %6870 = vmatpush1.xpose.msra.mxu0 0.0
        %6871 = vmatprep.subr.mxu0 0.0
        %6872 = vmatpush1.xpose.msra.mxu0 0.0
        %6873 = vmatprep.subr.mxu0 0.0
        %6874 = vmatpush1.xpose.msra.mxu0 0.0
        %6875 = vmatprep.subr.mxu0 0.0
        %6876 = vmatpush1.xpose.msra.mxu0 0.0
        %6877 = vmatprep.subr.mxu0 0.0
        %6878 = vmatpush1.xpose.msra.mxu0 0.0
        %6879 = vmatprep.subr.mxu0 0.0
        %6880 = vmatpush1.xpose.msra.mxu0 0.0
        %6881 = vmatprep.subr.mxu0 0.0
        %6882 = vmatpush1.xpose.msra.mxu0 0.0
        %6883 = vmatprep.subr.mxu0 0.0
        %6884 = vmatpush1.xpose.msra.mxu0 0.0
        %6885 = vmatprep.subr.mxu0 0.0
        %6886 = vmatpush1.xpose.msra.mxu0 0.0
        %6887 = vmatprep.subr.mxu0 0.0
        %6888 = vmatpush1.xpose.msra.mxu0 0.0
        %6889 = vmatprep.subr.mxu0 0.0
        %6890 = vmatpush1.xpose.msra.mxu0 0.0
        %6891 = vmatprep.subr.mxu0 0.0
        %6892 = vmatpush1.xpose.msra.mxu0 0.0
        %6893 = vmatprep.subr.mxu0 0.0
        %6894 = vmatpush1.xpose.msra.mxu0 0.0
        %6895 = vmatprep.subr.mxu0 0.0
        %6896 = vmatpush1.xpose.msra.mxu0 %v6863
        %6897 = vmatprep.subr.mxu0 0.0
        %6898 = vmatpush2.xpose.msra.mxu0 0.0
        %6899 = vmatprep.subr.mxu0 0.0
        %6900 = vmatpush2.xpose.msra.mxu0 0.0
        %6901 = vmatprep.subr.mxu0 0.0
        %6902 = vmatpush2.xpose.msra.mxu0 0.0
        %6903 = vmatprep.subr.mxu0 0.0
        %6904 = vmatpush2.xpose.msra.mxu0 0.0
        %6905 = vmatprep.subr.mxu0 0.0
        %6906 = vmatpush2.xpose.msra.mxu0 0.0
        %6907 = vmatprep.subr.mxu0 0.0
        %6908 = vmatpush2.xpose.msra.mxu0 0.0
        %6909 = vmatprep.subr.mxu0 0.0
        %6910 = vmatpush2.xpose.msra.mxu0 0.0
        %6911 = vmatprep.subr.mxu0 0.0
        %6912 = vmatpush2.xpose.msra.mxu0 0.0
        %6913 = vmatprep.subr.mxu0 0.0
        %6914 = vmatpush2.xpose.msra.mxu0 0.0
        %6915 = vmatprep.subr.mxu0 0.0
        %6916 = vmatpush2.xpose.msra.mxu0 0.0
        %6917 = vmatprep.subr.mxu0 0.0
        %6918 = vmatpush2.xpose.msra.mxu0 0.0
        %6919 = vmatprep.subr.mxu0 0.0
        %6920 = vmatpush2.xpose.msra.mxu0 0.0
        %6921 = vmatprep.subr.mxu0 0.0
        %6922 = vmatpush2.xpose.msra.mxu0 0.0
        %6923 = vmatprep.subr.mxu0 0.0
        %6924 = vmatpush2.xpose.msra.mxu0 0.0
        %6925 = vmatprep.subr.mxu0 0.0
        %6926 = vmatpush2.xpose.msra.mxu0 0.0
        %6927 = vmatprep.subr.mxu0 0.0
        %6928 = vmatpush2.xpose.msra.mxu0 0.0
        %6929 = vmatprep.mubr.f32.mxu0 0.0
        %6930 = vmatmul.mubr.f32.gmra.mxu0 %v6860
        %v6931 = vpop.f32.mrf.mxu0
        %v6932 = vadd.f32 0.0, %v6931
        %v6933 = vpop.f32.mrf.mxu0
        %6934 = vdwg.mxu0
        %v6935 = vadd.f32 %v6857, %v6932
        %s6936 = scalar_lea.vmem %s16, 2
        %v6937 = vld [vmem:[%s6936] sm:$0x3]
        %v6938 = vrot.slane %v6855, 1
        %v6939 = vsel %vm6553, %v6938, 0
        %v6942 = vsel %vm6553, %v6937, 0
        %6944 = vmatprep.subr.mxu0 0.0
        %6945 = vmatpush1.xpose.msra.mxu0 0.0
        %6946 = vmatprep.subr.mxu0 0.0
        %6947 = vmatpush1.xpose.msra.mxu0 0.0
        %6948 = vmatprep.subr.mxu0 0.0
        %6949 = vmatpush1.xpose.msra.mxu0 0.0
        %6950 = vmatprep.subr.mxu0 0.0
        %6951 = vmatpush1.xpose.msra.mxu0 0.0
        %6952 = vmatprep.subr.mxu0 0.0
        %6953 = vmatpush1.xpose.msra.mxu0 0.0
        %6954 = vmatprep.subr.mxu0 0.0
        %6955 = vmatpush1.xpose.msra.mxu0 0.0
        %6956 = vmatprep.subr.mxu0 0.0
        %6957 = vmatpush1.xpose.msra.mxu0 0.0
        %6958 = vmatprep.subr.mxu0 0.0
        %6959 = vmatpush1.xpose.msra.mxu0 0.0
        %6960 = vmatprep.subr.mxu0 0.0
        %6961 = vmatpush1.xpose.msra.mxu0 0.0
        %6962 = vmatprep.subr.mxu0 0.0
        %6963 = vmatpush1.xpose.msra.mxu0 0.0
        %6964 = vmatprep.subr.mxu0 0.0
        %6965 = vmatpush1.xpose.msra.mxu0 0.0
        %6966 = vmatprep.subr.mxu0 0.0
        %6967 = vmatpush1.xpose.msra.mxu0 0.0
        %6968 = vmatprep.subr.mxu0 0.0
        %6969 = vmatpush1.xpose.msra.mxu0 0.0
        %6970 = vmatprep.subr.mxu0 0.0
        %6971 = vmatpush1.xpose.msra.mxu0 0.0
        %6972 = vmatprep.subr.mxu0 0.0
        %6973 = vmatpush1.xpose.msra.mxu0 0.0
        %6974 = vmatprep.subr.mxu0 0.0
        %6975 = vmatpush1.xpose.msra.mxu0 %v6942
        %6976 = vmatprep.subr.mxu0 0.0
        %6977 = vmatpush2.xpose.msra.mxu0 0.0
        %6978 = vmatprep.subr.mxu0 0.0
        %6979 = vmatpush2.xpose.msra.mxu0 0.0
        %6980 = vmatprep.subr.mxu0 0.0
        %6981 = vmatpush2.xpose.msra.mxu0 0.0
        %6982 = vmatprep.subr.mxu0 0.0
        %6983 = vmatpush2.xpose.msra.mxu0 0.0
        %6984 = vmatprep.subr.mxu0 0.0
        %6985 = vmatpush2.xpose.msra.mxu0 0.0
        %6986 = vmatprep.subr.mxu0 0.0
        %6987 = vmatpush2.xpose.msra.mxu0 0.0
        %6988 = vmatprep.subr.mxu0 0.0
        %6989 = vmatpush2.xpose.msra.mxu0 0.0
        %6990 = vmatprep.subr.mxu0 0.0
        %6991 = vmatpush2.xpose.msra.mxu0 0.0
        %6992 = vmatprep.subr.mxu0 0.0
        %6993 = vmatpush2.xpose.msra.mxu0 0.0
        %6994 = vmatprep.subr.mxu0 0.0
        %6995 = vmatpush2.xpose.msra.mxu0 0.0
        %6996 = vmatprep.subr.mxu0 0.0
        %6997 = vmatpush2.xpose.msra.mxu0 0.0
        %6998 = vmatprep.subr.mxu0 0.0
        %6999 = vmatpush2.xpose.msra.mxu0 0.0
        %7000 = vmatprep.subr.mxu0 0.0
        %7001 = vmatpush2.xpose.msra.mxu0 0.0
        %7002 = vmatprep.subr.mxu0 0.0
        %7003 = vmatpush2.xpose.msra.mxu0 0.0
        %7004 = vmatprep.subr.mxu0 0.0
        %7005 = vmatpush2.xpose.msra.mxu0 0.0
        %7006 = vmatprep.subr.mxu0 0.0
        %7007 = vmatpush2.xpose.msra.mxu0 0.0
        %7008 = vmatprep.mubr.f32.mxu0 0.0
        %7009 = vmatmul.mubr.f32.gmra.mxu0 %v6939
        %v7010 = vpop.f32.mrf.mxu0
        %v7011 = vadd.f32 0.0, %v7010
        %v7012 = vpop.f32.mrf.mxu0
        %7013 = vdwg.mxu0
        %v7014 = vadd.f32 %v6935, %v7011
        %s7015 = scalar_lea.vmem %s16, 4
        %v7016 = vld [vmem:[%s7015] sm:$0x3]
        %v7017 = vrot.slane %v6855, 2
        %v7018 = vsel %vm6553, %v7017, 0
        %v7021 = vsel %vm6553, %v7016, 0
        %7023 = vmatprep.subr.mxu0 0.0
        %7024 = vmatpush1.xpose.msra.mxu0 0.0
        %7025 = vmatprep.subr.mxu0 0.0
        %7026 = vmatpush1.xpose.msra.mxu0 0.0
        %7027 = vmatprep.subr.mxu0 0.0
        %7028 = vmatpush1.xpose.msra.mxu0 0.0
        %7029 = vmatprep.subr.mxu0 0.0
        %7030 = vmatpush1.xpose.msra.mxu0 0.0
        %7031 = vmatprep.subr.mxu0 0.0
        %7032 = vmatpush1.xpose.msra.mxu0 0.0
        %7033 = vmatprep.subr.mxu0 0.0
        %7034 = vmatpush1.xpose.msra.mxu0 0.0
        %7035 = vmatprep.subr.mxu0 0.0
        %7036 = vmatpush1.xpose.msra.mxu0 0.0
        %7037 = vmatprep.subr.mxu0 0.0
        %7038 = vmatpush1.xpose.msra.mxu0 0.0
        %7039 = vmatprep.subr.mxu0 0.0
        %7040 = vmatpush1.xpose.msra.mxu0 0.0
        %7041 = vmatprep.subr.mxu0 0.0
        %7042 = vmatpush1.xpose.msra.mxu0 0.0
        %7043 = vmatprep.subr.mxu0 0.0
        %7044 = vmatpush1.xpose.msra.mxu0 0.0
        %7045 = vmatprep.subr.mxu0 0.0
        %7046 = vmatpush1.xpose.msra.mxu0 0.0
        %7047 = vmatprep.subr.mxu0 0.0
        %7048 = vmatpush1.xpose.msra.mxu0 0.0
        %7049 = vmatprep.subr.mxu0 0.0
        %7050 = vmatpush1.xpose.msra.mxu0 0.0
        %7051 = vmatprep.subr.mxu0 0.0
        %7052 = vmatpush1.xpose.msra.mxu0 0.0
        %7053 = vmatprep.subr.mxu0 0.0
        %7054 = vmatpush1.xpose.msra.mxu0 %v7021
        %7055 = vmatprep.subr.mxu0 0.0
        %7056 = vmatpush2.xpose.msra.mxu0 0.0
        %7057 = vmatprep.subr.mxu0 0.0
        %7058 = vmatpush2.xpose.msra.mxu0 0.0
        %7059 = vmatprep.subr.mxu0 0.0
        %7060 = vmatpush2.xpose.msra.mxu0 0.0
        %7061 = vmatprep.subr.mxu0 0.0
        %7062 = vmatpush2.xpose.msra.mxu0 0.0
        %7063 = vmatprep.subr.mxu0 0.0
        %7064 = vmatpush2.xpose.msra.mxu0 0.0
        %7065 = vmatprep.subr.mxu0 0.0
        %7066 = vmatpush2.xpose.msra.mxu0 0.0
        %7067 = vmatprep.subr.mxu0 0.0
        %7068 = vmatpush2.xpose.msra.mxu0 0.0
        %7069 = vmatprep.subr.mxu0 0.0
        %7070 = vmatpush2.xpose.msra.mxu0 0.0
        %7071 = vmatprep.subr.mxu0 0.0
        %7072 = vmatpush2.xpose.msra.mxu0 0.0
        %7073 = vmatprep.subr.mxu0 0.0
        %7074 = vmatpush2.xpose.msra.mxu0 0.0
        %7075 = vmatprep.subr.mxu0 0.0
        %7076 = vmatpush2.xpose.msra.mxu0 0.0
        %7077 = vmatprep.subr.mxu0 0.0
        %7078 = vmatpush2.xpose.msra.mxu0 0.0
        %7079 = vmatprep.subr.mxu0 0.0
        %7080 = vmatpush2.xpose.msra.mxu0 0.0
        %7081 = vmatprep.subr.mxu0 0.0
        %7082 = vmatpush2.xpose.msra.mxu0 0.0
        %7083 = vmatprep.subr.mxu0 0.0
        %7084 = vmatpush2.xpose.msra.mxu0 0.0
        %7085 = vmatprep.subr.mxu0 0.0
        %7086 = vmatpush2.xpose.msra.mxu0 0.0
        %7087 = vmatprep.mubr.f32.mxu0 0.0
        %7088 = vmatmul.mubr.f32.gmra.mxu0 %v7018
        %v7089 = vpop.f32.mrf.mxu0
        %v7090 = vadd.f32 0.0, %v7089
        %v7091 = vpop.f32.mrf.mxu0
        %7092 = vdwg.mxu0
        %v7093 = vadd.f32 %v7014, %v7090
        %s7094 = scalar_lea.vmem %s16, 6
        %v7095 = vld [vmem:[%s7094] sm:$0x3]
        %v7096 = vrot.slane %v6855, 3
        %v7097 = vsel %vm6553, %v7096, 0
        %v7100 = vsel %vm6553, %v7095, 0
        %7102 = vmatprep.subr.mxu0 0.0
        %7103 = vmatpush1.xpose.msra.mxu0 0.0
        %7104 = vmatprep.subr.mxu0 0.0
        %7105 = vmatpush1.xpose.msra.mxu0 0.0
        %7106 = vmatprep.subr.mxu0 0.0
        %7107 = vmatpush1.xpose.msra.mxu0 0.0
        %7108 = vmatprep.subr.mxu0 0.0
        %7109 = vmatpush1.xpose.msra.mxu0 0.0
        %7110 = vmatprep.subr.mxu0 0.0
        %7111 = vmatpush1.xpose.msra.mxu0 0.0
        %7112 = vmatprep.subr.mxu0 0.0
        %7113 = vmatpush1.xpose.msra.mxu0 0.0
        %7114 = vmatprep.subr.mxu0 0.0
        %7115 = vmatpush1.xpose.msra.mxu0 0.0
        %7116 = vmatprep.subr.mxu0 0.0
        %7117 = vmatpush1.xpose.msra.mxu0 0.0
        %7118 = vmatprep.subr.mxu0 0.0
        %7119 = vmatpush1.xpose.msra.mxu0 0.0
        %7120 = vmatprep.subr.mxu0 0.0
        %7121 = vmatpush1.xpose.msra.mxu0 0.0
        %7122 = vmatprep.subr.mxu0 0.0
        %7123 = vmatpush1.xpose.msra.mxu0 0.0
        %7124 = vmatprep.subr.mxu0 0.0
        %7125 = vmatpush1.xpose.msra.mxu0 0.0
        %7126 = vmatprep.subr.mxu0 0.0
        %7127 = vmatpush1.xpose.msra.mxu0 0.0
        %7128 = vmatprep.subr.mxu0 0.0
        %7129 = vmatpush1.xpose.msra.mxu0 0.0
        %7130 = vmatprep.subr.mxu0 0.0
        %7131 = vmatpush1.xpose.msra.mxu0 0.0
        %7132 = vmatprep.subr.mxu0 0.0
        %7133 = vmatpush1.xpose.msra.mxu0 %v7100
        %7134 = vmatprep.subr.mxu0 0.0
        %7135 = vmatpush2.xpose.msra.mxu0 0.0
        %7136 = vmatprep.subr.mxu0 0.0
        %7137 = vmatpush2.xpose.msra.mxu0 0.0
        %7138 = vmatprep.subr.mxu0 0.0
        %7139 = vmatpush2.xpose.msra.mxu0 0.0
        %7140 = vmatprep.subr.mxu0 0.0
        %7141 = vmatpush2.xpose.msra.mxu0 0.0
        %7142 = vmatprep.subr.mxu0 0.0
        %7143 = vmatpush2.xpose.msra.mxu0 0.0
        %7144 = vmatprep.subr.mxu0 0.0
        %7145 = vmatpush2.xpose.msra.mxu0 0.0
        %7146 = vmatprep.subr.mxu0 0.0
        %7147 = vmatpush2.xpose.msra.mxu0 0.0
        %7148 = vmatprep.subr.mxu0 0.0
        %7149 = vmatpush2.xpose.msra.mxu0 0.0
        %7150 = vmatprep.subr.mxu0 0.0
        %7151 = vmatpush2.xpose.msra.mxu0 0.0
        %7152 = vmatprep.subr.mxu0 0.0
        %7153 = vmatpush2.xpose.msra.mxu0 0.0
        %7154 = vmatprep.subr.mxu0 0.0
        %7155 = vmatpush2.xpose.msra.mxu0 0.0
        %7156 = vmatprep.subr.mxu0 0.0
        %7157 = vmatpush2.xpose.msra.mxu0 0.0
        %7158 = vmatprep.subr.mxu0 0.0
        %7159 = vmatpush2.xpose.msra.mxu0 0.0
        %7160 = vmatprep.subr.mxu0 0.0
        %7161 = vmatpush2.xpose.msra.mxu0 0.0
        %7162 = vmatprep.subr.mxu0 0.0
        %7163 = vmatpush2.xpose.msra.mxu0 0.0
        %7164 = vmatprep.subr.mxu0 0.0
        %7165 = vmatpush2.xpose.msra.mxu0 0.0
        %7166 = vmatprep.mubr.f32.mxu0 0.0
        %7167 = vmatmul.mubr.f32.gmra.mxu0 %v7097
        %v7168 = vpop.f32.mrf.mxu0
        %v7169 = vadd.f32 0.0, %v7168
        %v7170 = vpop.f32.mrf.mxu0
        %7171 = vdwg.mxu0
        %v7172 = vadd.f32 %v7093, %v7169
        %s7173 = scalar_lea.vmem %s16, 8
        %v7174 = vld [vmem:[%s7173] sm:$0x3]
        %v7175 = vrot.slane %v6855, 4
        %v7176 = vsel %vm6553, %v7175, 0
        %v7179 = vsel %vm6553, %v7174, 0
        %7181 = vmatprep.subr.mxu0 0.0
        %7182 = vmatpush1.xpose.msra.mxu0 0.0
        %7183 = vmatprep.subr.mxu0 0.0
        %7184 = vmatpush1.xpose.msra.mxu0 0.0
        %7185 = vmatprep.subr.mxu0 0.0
        %7186 = vmatpush1.xpose.msra.mxu0 0.0
        %7187 = vmatprep.subr.mxu0 0.0
        %7188 = vmatpush1.xpose.msra.mxu0 0.0
        %7189 = vmatprep.subr.mxu0 0.0
        %7190 = vmatpush1.xpose.msra.mxu0 0.0
        %7191 = vmatprep.subr.mxu0 0.0
        %7192 = vmatpush1.xpose.msra.mxu0 0.0
        %7193 = vmatprep.subr.mxu0 0.0
        %7194 = vmatpush1.xpose.msra.mxu0 0.0
        %7195 = vmatprep.subr.mxu0 0.0
        %7196 = vmatpush1.xpose.msra.mxu0 0.0
        %7197 = vmatprep.subr.mxu0 0.0
        %7198 = vmatpush1.xpose.msra.mxu0 0.0
        %7199 = vmatprep.subr.mxu0 0.0
        %7200 = vmatpush1.xpose.msra.mxu0 0.0
        %7201 = vmatprep.subr.mxu0 0.0
        %7202 = vmatpush1.xpose.msra.mxu0 0.0
        %7203 = vmatprep.subr.mxu0 0.0
        %7204 = vmatpush1.xpose.msra.mxu0 0.0
        %7205 = vmatprep.subr.mxu0 0.0
        %7206 = vmatpush1.xpose.msra.mxu0 0.0
        %7207 = vmatprep.subr.mxu0 0.0
        %7208 = vmatpush1.xpose.msra.mxu0 0.0
        %7209 = vmatprep.subr.mxu0 0.0
        %7210 = vmatpush1.xpose.msra.mxu0 0.0
        %7211 = vmatprep.subr.mxu0 0.0
        %7212 = vmatpush1.xpose.msra.mxu0 %v7179
        %7213 = vmatprep.subr.mxu0 0.0
        %7214 = vmatpush2.xpose.msra.mxu0 0.0
        %7215 = vmatprep.subr.mxu0 0.0
        %7216 = vmatpush2.xpose.msra.mxu0 0.0
        %7217 = vmatprep.subr.mxu0 0.0
        %7218 = vmatpush2.xpose.msra.mxu0 0.0
        %7219 = vmatprep.subr.mxu0 0.0
        %7220 = vmatpush2.xpose.msra.mxu0 0.0
        %7221 = vmatprep.subr.mxu0 0.0
        %7222 = vmatpush2.xpose.msra.mxu0 0.0
        %7223 = vmatprep.subr.mxu0 0.0
        %7224 = vmatpush2.xpose.msra.mxu0 0.0
        %7225 = vmatprep.subr.mxu0 0.0
        %7226 = vmatpush2.xpose.msra.mxu0 0.0
        %7227 = vmatprep.subr.mxu0 0.0
        %7228 = vmatpush2.xpose.msra.mxu0 0.0
        %7229 = vmatprep.subr.mxu0 0.0
        %7230 = vmatpush2.xpose.msra.mxu0 0.0
        %7231 = vmatprep.subr.mxu0 0.0
        %7232 = vmatpush2.xpose.msra.mxu0 0.0
        %7233 = vmatprep.subr.mxu0 0.0
        %7234 = vmatpush2.xpose.msra.mxu0 0.0
        %7235 = vmatprep.subr.mxu0 0.0
        %7236 = vmatpush2.xpose.msra.mxu0 0.0
        %7237 = vmatprep.subr.mxu0 0.0
        %7238 = vmatpush2.xpose.msra.mxu0 0.0
        %7239 = vmatprep.subr.mxu0 0.0
        %7240 = vmatpush2.xpose.msra.mxu0 0.0
        %7241 = vmatprep.subr.mxu0 0.0
        %7242 = vmatpush2.xpose.msra.mxu0 0.0
        %7243 = vmatprep.subr.mxu0 0.0
        %7244 = vmatpush2.xpose.msra.mxu0 0.0
        %7245 = vmatprep.mubr.f32.mxu0 0.0
        %7246 = vmatmul.mubr.f32.gmra.mxu0 %v7176
        %v7247 = vpop.f32.mrf.mxu0
        %v7248 = vadd.f32 0.0, %v7247
        %v7249 = vpop.f32.mrf.mxu0
        %7250 = vdwg.mxu0
        %v7251 = vadd.f32 %v7172, %v7248
        %s7252 = scalar_lea.vmem %s16, 10
        %v7253 = vld [vmem:[%s7252] sm:$0x3]
        %v7254 = vrot.slane %v6855, 5
        %v7255 = vsel %vm6553, %v7254, 0
        %v7258 = vsel %vm6553, %v7253, 0
        %7260 = vmatprep.subr.mxu0 0.0
        %7261 = vmatpush1.xpose.msra.mxu0 0.0
        %7262 = vmatprep.subr.mxu0 0.0
        %7263 = vmatpush1.xpose.msra.mxu0 0.0
        %7264 = vmatprep.subr.mxu0 0.0
        %7265 = vmatpush1.xpose.msra.mxu0 0.0
        %7266 = vmatprep.subr.mxu0 0.0
        %7267 = vmatpush1.xpose.msra.mxu0 0.0
        %7268 = vmatprep.subr.mxu0 0.0
        %7269 = vmatpush1.xpose.msra.mxu0 0.0
        %7270 = vmatprep.subr.mxu0 0.0
        %7271 = vmatpush1.xpose.msra.mxu0 0.0
        %7272 = vmatprep.subr.mxu0 0.0
        %7273 = vmatpush1.xpose.msra.mxu0 0.0
        %7274 = vmatprep.subr.mxu0 0.0
        %7275 = vmatpush1.xpose.msra.mxu0 0.0
        %7276 = vmatprep.subr.mxu0 0.0
        %7277 = vmatpush1.xpose.msra.mxu0 0.0
        %7278 = vmatprep.subr.mxu0 0.0
        %7279 = vmatpush1.xpose.msra.mxu0 0.0
        %7280 = vmatprep.subr.mxu0 0.0
        %7281 = vmatpush1.xpose.msra.mxu0 0.0
        %7282 = vmatprep.subr.mxu0 0.0
        %7283 = vmatpush1.xpose.msra.mxu0 0.0
        %7284 = vmatprep.subr.mxu0 0.0
        %7285 = vmatpush1.xpose.msra.mxu0 0.0
        %7286 = vmatprep.subr.mxu0 0.0
        %7287 = vmatpush1.xpose.msra.mxu0 0.0
        %7288 = vmatprep.subr.mxu0 0.0
        %7289 = vmatpush1.xpose.msra.mxu0 0.0
        %7290 = vmatprep.subr.mxu0 0.0
        %7291 = vmatpush1.xpose.msra.mxu0 %v7258
        %7292 = vmatprep.subr.mxu0 0.0
        %7293 = vmatpush2.xpose.msra.mxu0 0.0
        %7294 = vmatprep.subr.mxu0 0.0
        %7295 = vmatpush2.xpose.msra.mxu0 0.0
        %7296 = vmatprep.subr.mxu0 0.0
        %7297 = vmatpush2.xpose.msra.mxu0 0.0
        %7298 = vmatprep.subr.mxu0 0.0
        %7299 = vmatpush2.xpose.msra.mxu0 0.0
        %7300 = vmatprep.subr.mxu0 0.0
        %7301 = vmatpush2.xpose.msra.mxu0 0.0
        %7302 = vmatprep.subr.mxu0 0.0
        %7303 = vmatpush2.xpose.msra.mxu0 0.0
        %7304 = vmatprep.subr.mxu0 0.0
        %7305 = vmatpush2.xpose.msra.mxu0 0.0
        %7306 = vmatprep.subr.mxu0 0.0
        %7307 = vmatpush2.xpose.msra.mxu0 0.0
        %7308 = vmatprep.subr.mxu0 0.0
        %7309 = vmatpush2.xpose.msra.mxu0 0.0
        %7310 = vmatprep.subr.mxu0 0.0
        %7311 = vmatpush2.xpose.msra.mxu0 0.0
        %7312 = vmatprep.subr.mxu0 0.0
        %7313 = vmatpush2.xpose.msra.mxu0 0.0
        %7314 = vmatprep.subr.mxu0 0.0
        %7315 = vmatpush2.xpose.msra.mxu0 0.0
        %7316 = vmatprep.subr.mxu0 0.0
        %7317 = vmatpush2.xpose.msra.mxu0 0.0
        %7318 = vmatprep.subr.mxu0 0.0
        %7319 = vmatpush2.xpose.msra.mxu0 0.0
        %7320 = vmatprep.subr.mxu0 0.0
        %7321 = vmatpush2.xpose.msra.mxu0 0.0
        %7322 = vmatprep.subr.mxu0 0.0
        %7323 = vmatpush2.xpose.msra.mxu0 0.0
        %7324 = vmatprep.mubr.f32.mxu0 0.0
        %7325 = vmatmul.mubr.f32.gmra.mxu0 %v7255
        %v7326 = vpop.f32.mrf.mxu0
        %v7327 = vadd.f32 0.0, %v7326
        %v7328 = vpop.f32.mrf.mxu0
        %7329 = vdwg.mxu0
        %v7330 = vadd.f32 %v7251, %v7327
        %s7331 = scalar_lea.vmem %s16, 12
        %v7332 = vld [vmem:[%s7331] sm:$0x3]
        %v7333 = vrot.slane %v6855, 6
        %v7334 = vsel %vm6553, %v7333, 0
        %v7337 = vsel %vm6553, %v7332, 0
        %7339 = vmatprep.subr.mxu0 0.0
        %7340 = vmatpush1.xpose.msra.mxu0 0.0
        %7341 = vmatprep.subr.mxu0 0.0
        %7342 = vmatpush1.xpose.msra.mxu0 0.0
        %7343 = vmatprep.subr.mxu0 0.0
        %7344 = vmatpush1.xpose.msra.mxu0 0.0
        %7345 = vmatprep.subr.mxu0 0.0
        %7346 = vmatpush1.xpose.msra.mxu0 0.0
        %7347 = vmatprep.subr.mxu0 0.0
        %7348 = vmatpush1.xpose.msra.mxu0 0.0
        %7349 = vmatprep.subr.mxu0 0.0
        %7350 = vmatpush1.xpose.msra.mxu0 0.0
        %7351 = vmatprep.subr.mxu0 0.0
        %7352 = vmatpush1.xpose.msra.mxu0 0.0
        %7353 = vmatprep.subr.mxu0 0.0
        %7354 = vmatpush1.xpose.msra.mxu0 0.0
        %7355 = vmatprep.subr.mxu0 0.0
        %7356 = vmatpush1.xpose.msra.mxu0 0.0
        %7357 = vmatprep.subr.mxu0 0.0
        %7358 = vmatpush1.xpose.msra.mxu0 0.0
        %7359 = vmatprep.subr.mxu0 0.0
        %7360 = vmatpush1.xpose.msra.mxu0 0.0
        %7361 = vmatprep.subr.mxu0 0.0
        %7362 = vmatpush1.xpose.msra.mxu0 0.0
        %7363 = vmatprep.subr.mxu0 0.0
        %7364 = vmatpush1.xpose.msra.mxu0 0.0
        %7365 = vmatprep.subr.mxu0 0.0
        %7366 = vmatpush1.xpose.msra.mxu0 0.0
        %7367 = vmatprep.subr.mxu0 0.0
        %7368 = vmatpush1.xpose.msra.mxu0 0.0
        %7369 = vmatprep.subr.mxu0 0.0
        %7370 = vmatpush1.xpose.msra.mxu0 %v7337
        %7371 = vmatprep.subr.mxu0 0.0
        %7372 = vmatpush2.xpose.msra.mxu0 0.0
        %7373 = vmatprep.subr.mxu0 0.0
        %7374 = vmatpush2.xpose.msra.mxu0 0.0
        %7375 = vmatprep.subr.mxu0 0.0
        %7376 = vmatpush2.xpose.msra.mxu0 0.0
        %7377 = vmatprep.subr.mxu0 0.0
        %7378 = vmatpush2.xpose.msra.mxu0 0.0
        %7379 = vmatprep.subr.mxu0 0.0
        %7380 = vmatpush2.xpose.msra.mxu0 0.0
        %7381 = vmatprep.subr.mxu0 0.0
        %7382 = vmatpush2.xpose.msra.mxu0 0.0
        %7383 = vmatprep.subr.mxu0 0.0
        %7384 = vmatpush2.xpose.msra.mxu0 0.0
        %7385 = vmatprep.subr.mxu0 0.0
        %7386 = vmatpush2.xpose.msra.mxu0 0.0
        %7387 = vmatprep.subr.mxu0 0.0
        %7388 = vmatpush2.xpose.msra.mxu0 0.0
        %7389 = vmatprep.subr.mxu0 0.0
        %7390 = vmatpush2.xpose.msra.mxu0 0.0
        %7391 = vmatprep.subr.mxu0 0.0
        %7392 = vmatpush2.xpose.msra.mxu0 0.0
        %7393 = vmatprep.subr.mxu0 0.0
        %7394 = vmatpush2.xpose.msra.mxu0 0.0
        %7395 = vmatprep.subr.mxu0 0.0
        %7396 = vmatpush2.xpose.msra.mxu0 0.0
        %7397 = vmatprep.subr.mxu0 0.0
        %7398 = vmatpush2.xpose.msra.mxu0 0.0
        %7399 = vmatprep.subr.mxu0 0.0
        %7400 = vmatpush2.xpose.msra.mxu0 0.0
        %7401 = vmatprep.subr.mxu0 0.0
        %7402 = vmatpush2.xpose.msra.mxu0 0.0
        %7403 = vmatprep.mubr.f32.mxu0 0.0
        %7404 = vmatmul.mubr.f32.gmra.mxu0 %v7334
        %v7405 = vpop.f32.mrf.mxu0
        %v7406 = vadd.f32 0.0, %v7405
        %v7407 = vpop.f32.mrf.mxu0
        %7408 = vdwg.mxu0
        %v7409 = vadd.f32 %v7330, %v7406
        %s7410 = scalar_lea.vmem %s16, 14
        %v7411 = vld [vmem:[%s7410] sm:$0x3]
        %v7412 = vrot.slane %v6855, 7
        %v7413 = vsel %vm6553, %v7412, 0
        %v7416 = vsel %vm6553, %v7411, 0
        %7418 = vmatprep.subr.mxu0 0.0
        %7419 = vmatpush1.xpose.msra.mxu0 0.0
        %7420 = vmatprep.subr.mxu0 0.0
        %7421 = vmatpush1.xpose.msra.mxu0 0.0
        %7422 = vmatprep.subr.mxu0 0.0
        %7423 = vmatpush1.xpose.msra.mxu0 0.0
        %7424 = vmatprep.subr.mxu0 0.0
        %7425 = vmatpush1.xpose.msra.mxu0 0.0
        %7426 = vmatprep.subr.mxu0 0.0
        %7427 = vmatpush1.xpose.msra.mxu0 0.0
        %7428 = vmatprep.subr.mxu0 0.0
        %7429 = vmatpush1.xpose.msra.mxu0 0.0
        %7430 = vmatprep.subr.mxu0 0.0
        %7431 = vmatpush1.xpose.msra.mxu0 0.0
        %7432 = vmatprep.subr.mxu0 0.0
        %7433 = vmatpush1.xpose.msra.mxu0 0.0
        %7434 = vmatprep.subr.mxu0 0.0
        %7435 = vmatpush1.xpose.msra.mxu0 0.0
        %7436 = vmatprep.subr.mxu0 0.0
        %7437 = vmatpush1.xpose.msra.mxu0 0.0
        %7438 = vmatprep.subr.mxu0 0.0
        %7439 = vmatpush1.xpose.msra.mxu0 0.0
        %7440 = vmatprep.subr.mxu0 0.0
        %7441 = vmatpush1.xpose.msra.mxu0 0.0
        %7442 = vmatprep.subr.mxu0 0.0
        %7443 = vmatpush1.xpose.msra.mxu0 0.0
        %7444 = vmatprep.subr.mxu0 0.0
        %7445 = vmatpush1.xpose.msra.mxu0 0.0
        %7446 = vmatprep.subr.mxu0 0.0
        %7447 = vmatpush1.xpose.msra.mxu0 0.0
        %7448 = vmatprep.subr.mxu0 0.0
        %7449 = vmatpush1.xpose.msra.mxu0 %v7416
        %7450 = vmatprep.subr.mxu0 0.0
        %7451 = vmatpush2.xpose.msra.mxu0 0.0
        %7452 = vmatprep.subr.mxu0 0.0
        %7453 = vmatpush2.xpose.msra.mxu0 0.0
        %7454 = vmatprep.subr.mxu0 0.0
        %7455 = vmatpush2.xpose.msra.mxu0 0.0
        %7456 = vmatprep.subr.mxu0 0.0
        %7457 = vmatpush2.xpose.msra.mxu0 0.0
        %7458 = vmatprep.subr.mxu0 0.0
        %7459 = vmatpush2.xpose.msra.mxu0 0.0
        %7460 = vmatprep.subr.mxu0 0.0
        %7461 = vmatpush2.xpose.msra.mxu0 0.0
        %7462 = vmatprep.subr.mxu0 0.0
        %7463 = vmatpush2.xpose.msra.mxu0 0.0
        %7464 = vmatprep.subr.mxu0 0.0
        %7465 = vmatpush2.xpose.msra.mxu0 0.0
        %7466 = vmatprep.subr.mxu0 0.0
        %7467 = vmatpush2.xpose.msra.mxu0 0.0
        %7468 = vmatprep.subr.mxu0 0.0
        %7469 = vmatpush2.xpose.msra.mxu0 0.0
        %7470 = vmatprep.subr.mxu0 0.0
        %7471 = vmatpush2.xpose.msra.mxu0 0.0
        %7472 = vmatprep.subr.mxu0 0.0
        %7473 = vmatpush2.xpose.msra.mxu0 0.0
        %7474 = vmatprep.subr.mxu0 0.0
        %7475 = vmatpush2.xpose.msra.mxu0 0.0
        %7476 = vmatprep.subr.mxu0 0.0
        %7477 = vmatpush2.xpose.msra.mxu0 0.0
        %7478 = vmatprep.subr.mxu0 0.0
        %7479 = vmatpush2.xpose.msra.mxu0 0.0
        %7480 = vmatprep.subr.mxu0 0.0
        %7481 = vmatpush2.xpose.msra.mxu0 0.0
        %7482 = vmatprep.mubr.f32.mxu0 0.0
        %7483 = vmatmul.mubr.f32.gmra.mxu0 %v7413
        %v7484 = vpop.f32.mrf.mxu0
        %v7485 = vadd.f32 0.0, %v7484
        %v7486 = vpop.f32.mrf.mxu0
        %7487 = vdwg.mxu0
        %v7488 = vadd.f32 %v7409, %v7485
        %s7489 = scalar_lea.vmem %s16, 16
        %v7490 = vld [vmem:[%s7489] sm:$0x3]
        %v7492 = vsel %vm6553, %v6856, 0
        %v7495 = vsel %vm6553, %v7490, 0
        %7497 = vmatprep.subr.mxu0 0.0
        %7498 = vmatpush1.xpose.msra.mxu0 0.0
        %7499 = vmatprep.subr.mxu0 0.0
        %7500 = vmatpush1.xpose.msra.mxu0 0.0
        %7501 = vmatprep.subr.mxu0 0.0
        %7502 = vmatpush1.xpose.msra.mxu0 0.0
        %7503 = vmatprep.subr.mxu0 0.0
        %7504 = vmatpush1.xpose.msra.mxu0 0.0
        %7505 = vmatprep.subr.mxu0 0.0
        %7506 = vmatpush1.xpose.msra.mxu0 0.0
        %7507 = vmatprep.subr.mxu0 0.0
        %7508 = vmatpush1.xpose.msra.mxu0 0.0
        %7509 = vmatprep.subr.mxu0 0.0
        %7510 = vmatpush1.xpose.msra.mxu0 0.0
        %7511 = vmatprep.subr.mxu0 0.0
        %7512 = vmatpush1.xpose.msra.mxu0 0.0
        %7513 = vmatprep.subr.mxu0 0.0
        %7514 = vmatpush1.xpose.msra.mxu0 0.0
        %7515 = vmatprep.subr.mxu0 0.0
        %7516 = vmatpush1.xpose.msra.mxu0 0.0
        %7517 = vmatprep.subr.mxu0 0.0
        %7518 = vmatpush1.xpose.msra.mxu0 0.0
        %7519 = vmatprep.subr.mxu0 0.0
        %7520 = vmatpush1.xpose.msra.mxu0 0.0
        %7521 = vmatprep.subr.mxu0 0.0
        %7522 = vmatpush1.xpose.msra.mxu0 0.0
        %7523 = vmatprep.subr.mxu0 0.0
        %7524 = vmatpush1.xpose.msra.mxu0 0.0
        %7525 = vmatprep.subr.mxu0 0.0
        %7526 = vmatpush1.xpose.msra.mxu0 0.0
        %7527 = vmatprep.subr.mxu0 0.0
        %7528 = vmatpush1.xpose.msra.mxu0 %v7495
        %7529 = vmatprep.subr.mxu0 0.0
        %7530 = vmatpush2.xpose.msra.mxu0 0.0
        %7531 = vmatprep.subr.mxu0 0.0
        %7532 = vmatpush2.xpose.msra.mxu0 0.0
        %7533 = vmatprep.subr.mxu0 0.0
        %7534 = vmatpush2.xpose.msra.mxu0 0.0
        %7535 = vmatprep.subr.mxu0 0.0
        %7536 = vmatpush2.xpose.msra.mxu0 0.0
        %7537 = vmatprep.subr.mxu0 0.0
        %7538 = vmatpush2.xpose.msra.mxu0 0.0
        %7539 = vmatprep.subr.mxu0 0.0
        %7540 = vmatpush2.xpose.msra.mxu0 0.0
        %7541 = vmatprep.subr.mxu0 0.0
        %7542 = vmatpush2.xpose.msra.mxu0 0.0
        %7543 = vmatprep.subr.mxu0 0.0
        %7544 = vmatpush2.xpose.msra.mxu0 0.0
        %7545 = vmatprep.subr.mxu0 0.0
        %7546 = vmatpush2.xpose.msra.mxu0 0.0
        %7547 = vmatprep.subr.mxu0 0.0
        %7548 = vmatpush2.xpose.msra.mxu0 0.0
        %7549 = vmatprep.subr.mxu0 0.0
        %7550 = vmatpush2.xpose.msra.mxu0 0.0
        %7551 = vmatprep.subr.mxu0 0.0
        %7552 = vmatpush2.xpose.msra.mxu0 0.0
        %7553 = vmatprep.subr.mxu0 0.0
        %7554 = vmatpush2.xpose.msra.mxu0 0.0
        %7555 = vmatprep.subr.mxu0 0.0
        %7556 = vmatpush2.xpose.msra.mxu0 0.0
        %7557 = vmatprep.subr.mxu0 0.0
        %7558 = vmatpush2.xpose.msra.mxu0 0.0
        %7559 = vmatprep.subr.mxu0 0.0
        %7560 = vmatpush2.xpose.msra.mxu0 0.0
        %7561 = vmatprep.mubr.f32.mxu0 0.0
        %7562 = vmatmul.mubr.f32.gmra.mxu0 %v7492
        %v7563 = vpop.f32.mrf.mxu0
        %v7564 = vadd.f32 0.0, %v7563
        %v7565 = vpop.f32.mrf.mxu0
        %7566 = vdwg.mxu0
        %v7567 = vadd.f32 %v7488, %v7564
        %vm7568 = vcmask 8192
        %v7569 = vsel %vm7568, %v7567, -inf
        %7570 = vmax.xlane.f32.xlu0 %v7569
        %v7571 = vpop.xlane.xlu0 %7570
        %v7572 = vsub.f32 %v7567, %v7571
        %v7573 = vmul.f32 %v7572, 1.442695
        %v7574 = vpow.pop %v7573
        %v7575 = vsel %vm7568, %v7574, 0.0
        %7576 = vadd.xlane.f32.xlu0 %v7575
        %v7577 = vpop.xlane.xlu0 %7576
        %v7578 = vlog2.pop %v7577
        %v7579 = vmul.f32 %v7578, 0.6931472
        %v7580 = vsub.f32 %v7572, %v7579
        %7581 = vst.msk [vmem:[%s567] sm:$0x1] %vm7568, %v7580
        %s7582 = sand.u32 %s423, 1
        %s7583 = scalar_lea.sflag [#allocation3], %s7582
        %s7584 = sand.u32 %s423, 1
        %s7585 = scalar_lea.vmem [#allocation2], %s7584
        // Predicated region
        $region93: #{basic_tt_forward.1} parent=91 // pred_check
          %p7586 = pneg %p433
        $region94: #{basic_tt_forward.1} parent=91 // pred_check_branch
          %7588 = sbr.rel (%p7586) target = $region96
        $region95: #{basic_tt_forward.1} parent=91 // pred_region
          %s7590 = ssub.s32 16, 16
          %7591 = vsyncadd %s7583, %s7590
          %s7592 = smul.addr %s32, 16
          %s7593 = scalar_lea.hbm %s18, %s7592
          %s7595 = sshll.u32 %s7585, 4
          %s7596 = int_to_ptr.vmem [resolvable:$true] %s7595
          %7598 = dma.vmem_to_hbm [thread:$0]  %s7596, 16, %s7593, %s7583
        $region96: #{basic_tt_forward.1} parent=91 // pred_fallthru
          _
      $region92: #{basic_tt_forward.1} parent=5 // pred_fallthru
        _
      %p7599 = scmp.le.s32.totalorder 2, %s27
      // Predicated region
      $region97: #{basic_tt_forward.1} parent=5 // pred_check
        %p7600 = pneg %p7599
      $region98: #{basic_tt_forward.1} parent=5 // pred_check_branch
        %7602 = sbr.rel (%p7600) target = $region100
      $region99: #{basic_tt_forward.1} parent=5 // pred_region
        %s7603 = ssub.s32 %s27, 2
        // Predicated region
        $region101: #{basic_tt_forward.1} parent=99 // pred_check
          %p7604 = pneg %p439
        $region102: #{basic_tt_forward.1} parent=99 // pred_check_branch
          %7606 = sbr.rel (%p7604) target = $region104
        $region103: #{basic_tt_forward.1} parent=99 // pred_region
          %s7607 = sand.u32 %s424, 1
          %s7608 = scalar_lea.sflag [#allocation3], %s7607
          %s7609 = sand.u32 %s424, 1
          %s7610 = scalar_lea.vmem [#allocation2], %s7609
          %7611 = dma.done %s7608, 16
        $region104: #{basic_tt_forward.1} parent=99 // pred_fallthru
          _
      $region100: #{basic_tt_forward.1} parent=5 // pred_fallthru
        _
    $region6: #{basic_tt_forward.1} parent=1 // loop_footer
      %s31 = sadd.s32 1, %s27
    $region7: #{basic_tt_forward.1} parent=1 // loop_footer_branch
      %26 = sbr.rel target = $region3
    $region8: #{basic_tt_forward.1} parent=1 // loop_exit
      _
    %7612 = vsyncpa [#allocation3], 1
    %s7613 = scalar_lea.sflag [#allocation3], 1
    %7614 = vsyncpa %s7613, 1

</llo_original>
